<compile_context>
chip_gen: v7x
topology: tpu7x:2x2x1
jax: 0.10.0
libtpu: 0.0.40
codegen_flags: <defaults>
</compile_context>

<pallas_src>
import functools

import jax
import jax.numpy as jnp
from jax import lax
from jax.experimental import pallas as pl
from jax.experimental.pallas import tpu as pltpu

LEAKY_SLOPE = 0.01
BN_EPS = 1e-5
VMEM_LIMIT = 8 * 1024 * 1024      # actual working set ~2 MiB; generous headroom


def _leaky(x):
    return jnp.where(x >= 0, x, LEAKY_SLOPE * x)


def _fold_bn(conv_bias, gamma, beta, mean, var):
    sc = gamma / jnp.sqrt(var + BN_EPS)
    sh = (conv_bias - mean) * sc + beta
    return sc, sh


# ---------------------------------------------------------------------------
# Fused kernel: one grid step per batch.
#   xu_ref : (D, H, W*C) unpadded input, (W, C) flattened into lanes.
#   xs_ref : (5, Dp, Hp, W*C) scratch; slab i is the zero-padded input window
#            whose lane origin is shifted by i*C lanes (i = 0..4).
#   u1_ref : (D, H, W*C) scratch holding the dilation-1 branch.
# ---------------------------------------------------------------------------
def _sk_fused_kernel(xu_ref, w1_ref, w2_ref, sc1_ref, sh1_ref, sc2_ref, sh2_ref,
                     fcw_ref, fcb_ref, bnsc_ref, bnsh_ref,
                     fc1w_ref, fc1b_ref, fc2w_ref, fc2b_ref,
                     o_ref,
                     xs_ref, u1_ref,
                     *, D, H, W, C, inv_n, apply_bn):
    WC = W * C

    # ---- phase 0: build the 5 lane-shifted, zero-padded slabs (roll hoist) ----
    xs_ref[...] = jnp.zeros_like(xs_ref)
    xu = xu_ref[...]                                          # (D, H, WC)
    lane = lax.broadcasted_iota(jnp.int32, (1, 1, WC), 2)

    def rshift(v, s):          # zero-fill shift right by s lanes
        return jnp.where(lane < s, 0.0, pltpu.roll(v, s, axis=2))

    def lshift(v, s):          # zero-fill shift left by s lanes
        return jnp.where(lane >= WC - s, 0.0, pltpu.roll(v, WC - s, axis=2))

    dsl = pl.ds(2, D)
    hsl = pl.ds(2, H)
    xs_ref[0, dsl, hsl, :] = rshift(xu, 2 * C)     # lane origin shifted by 0
    xs_ref[1, dsl, hsl, :] = rshift(xu, C)         # shift C
    xs_ref[2, dsl, hsl, :] = xu                    # shift 2C (== unshifted input)
    xs_ref[3, dsl, hsl, :] = lshift(xu, C)         # shift 3C
    xs_ref[4, dsl, hsl, :] = lshift(xu, 2 * C)     # shift 4C

    # ---- phase 1: depthwise 3x3x3 conv, dilation 1 (pad 1) -> u1 --------------
    acc = jnp.zeros((D, H, WC), jnp.float32)
    for kd in range(3):
        for kh in range(3):
            for kw in range(3):
                k = (kd * 3 + kh) * 3 + kw
                tap = xs_ref[1 + kw, pl.ds(1 + kd, D), pl.ds(1 + kh, H), :]
                acc = acc + tap * w1_ref[pl.ds(k, 1), :]
    u1_ref[...] = _leaky(acc * sc1_ref[...] + sh1_ref[...])

    # ---- phase 2: depthwise 3x3x3 conv, dilation 2 (pad 2) -> u2 --------------
    acc = jnp.zeros((D, H, WC), jnp.float32)
    for kd in range(3):
        for kh in range(3):
            for kw in range(3):
                k = (kd * 3 + kh) * 3 + kw
                tap = xs_ref[2 * kw, pl.ds(2 * kd, D), pl.ds(2 * kh, H), :]
                acc = acc + tap * w2_ref[pl.ds(k, 1), :]
    u2 = _leaky(acc * sc2_ref[...] + sh2_ref[...])

    # ---- phase 3: GAP -> fc -> (BN1d) -> LeakyReLU -> fc1/fc2 -> softmax -------
    u1 = u1_ref[...]
    s = jnp.sum((u1 + u2).reshape(D * H, WC), axis=0, keepdims=True)   # (1, WC)
    # Lane-tiled fc weight folds the W lane replicas of the spatial sum.
    z = jnp.dot(s * inv_n, fcw_ref[...],
                preferred_element_type=jnp.float32) + fcb_ref[...]
    if apply_bn:                                   # batch > 1 branch (static)
        z = z * bnsc_ref[...] + bnsh_ref[...]
    z = _leaky(z)
    s1 = jnp.dot(z, fc1w_ref[...], preferred_element_type=jnp.float32) + fc1b_ref[...]
    s2 = jnp.dot(z, fc2w_ref[...], preferred_element_type=jnp.float32) + fc2b_ref[...]
    m = jnp.maximum(s1, s2)
    e1 = jnp.exp(s1 - m)
    e2 = jnp.exp(s2 - m)
    inv = 1.0 / (e1 + e2)                          # exact; once per batch
    a_t = e1 * inv                                 # already lane-tiled (1, WC)
    b_t = e2 * inv

    # ---- phase 4: weighted combination, lane-dense store -----------------------
    o_ref[...] = u1 * a_t + u2 * b_t


# ---------------------------------------------------------------------------
# Wrapper: parameter folding / layout plumbing (NCDHW in, NCDHW out)
# ---------------------------------------------------------------------------
def sk_attention_forward(x_ncdhw, P, groups):
    B, Cin, D, H, W = x_ncdhw.shape
    planes = P['conv1_w'].shape[0]
    d = P['fc_w'].shape[0]
    if not (groups == Cin == planes):
        # TODO(synk): general grouped (non-depthwise) conv path (block-diagonal
        # per-group matmuls); the module's default config groups == planes is depthwise.
        raise NotImplementedError("only depthwise grouped conv (groups == inplanes == planes)")
    C = planes
    WC = W * C
    Dp, Hp = D + 4, H + 4

    # NCDHW -> (B, D, H, W*C) lane-dense layout. Padding is done in-kernel, so this
    # transpose is the only wrapper-side data movement on the input.
    # TODO(synk): accept/emit a channels-last layout end to end to drop both transposes.
    xu = jnp.transpose(x_ncdhw, (0, 2, 3, 4, 1)).astype(jnp.float32).reshape(B, D, H, WC)

    # Tiny parameter folds (once, in XLA).
    def tap_table(w):                    # (C, 1, 3, 3, 3) -> (27, W*C)
        return jnp.tile(w.reshape(C, 27).T, (1, W))

    def tile_c(v):                       # (C,) -> (1, W*C)
        return jnp.tile(v, W)[None, :]

    w1t = tap_table(P['conv1_w'])
    w2t = tap_table(P['conv2_w'])
    sc1, sh1 = _fold_bn(P['conv1_b'], P['bn1_g'], P['bn1_b'], P['bn1_m'], P['bn1_v'])
    sc2, sh2 = _fold_bn(P['conv2_b'], P['bn2_g'], P['bn2_b'], P['bn2_m'], P['bn2_v'])
    sc1t, sh1t = tile_c(sc1), tile_c(sh1)
    sc2t, sh2t = tile_c(sc2), tile_c(sh2)

    fcw_t = jnp.tile(P['fc_w'].T, (W, 1))              # (W*C, d): folds lane replicas
    bn_sc = P['fcbn_g'] / jnp.sqrt(P['fcbn_v'] + BN_EPS)
    bn_sh = P['fcbn_b'] - P['fcbn_m'] * bn_sc
    fc1w_t = jnp.tile(P['fc1_w'].T, (1, W))            # (d, W*C): lane-tiled outputs
    fc2w_t = jnp.tile(P['fc2_w'].T, (1, W))
    fc1b_t = tile_c(P['fc1_b'])
    fc2b_t = tile_c(P['fc2_b'])

    kernel = functools.partial(
        _sk_fused_kernel, D=D, H=H, W=W, C=C,
        inv_n=1.0 / float(D * H * W), apply_bn=(B != 1))

    const = lambda b: (0, 0)
    out_flat = pl.pallas_call(
        kernel,
        out_shape=jax.ShapeDtypeStruct((B, D, H, WC), jnp.float32),
        grid_spec=pltpu.PrefetchScalarGridSpec(
            num_scalar_prefetch=0, grid=(B,),
            in_specs=[
                pl.BlockSpec((None, D, H, WC), lambda b: (b, 0, 0, 0)),   # xu
                pl.BlockSpec((27, WC), const),                             # w1t
                pl.BlockSpec((27, WC), const),                             # w2t
                pl.BlockSpec((1, WC), const),                              # sc1t
                pl.BlockSpec((1, WC), const),                              # sh1t
                pl.BlockSpec((1, WC), const),                              # sc2t
                pl.BlockSpec((1, WC), const),                              # sh2t
                pl.BlockSpec((WC, d), const),                              # fcw_t
                pl.BlockSpec((1, d), const),                               # fc_b
                pl.BlockSpec((1, d), const),                               # bn_sc
                pl.BlockSpec((1, d), const),                               # bn_sh
                pl.BlockSpec((d, WC), const),                              # fc1w_t
                pl.BlockSpec((1, WC), const),                              # fc1b_t
                pl.BlockSpec((d, WC), const),                              # fc2w_t
                pl.BlockSpec((1, WC), const),                              # fc2b_t
            ],
            out_specs=pl.BlockSpec((None, D, H, WC), lambda b: (b, 0, 0, 0)),
            scratch_shapes=[
                pltpu.VMEM((5, Dp, Hp, WC), jnp.float32),   # shifted padded slabs
                pltpu.VMEM((D, H, WC), jnp.float32),        # u1
            ]),
        compiler_params=pltpu.CompilerParams(
            dimension_semantics=("parallel",),
            vmem_limit_bytes=VMEM_LIMIT),
    )(xu, w1t, w2t, sc1t, sh1t, sc2t, sh2t,
      fcw_t, P['fc_b'][None], bn_sc[None], bn_sh[None],
      fc1w_t, fc1b_t, fc2w_t, fc2b_t)

    out = out_flat.reshape(B, D, H, W, C)
    return jnp.transpose(out, (0, 4, 1, 2, 3))             # back to NCDHW


# ---------------------------------------------------------------------------
# Deterministic parameter init (shapes from SKAttentionModule.__init__)
# ---------------------------------------------------------------------------
def init_params(key, inplanes, planes, groups, d):
    ks = jax.random.split(key, 22)

    def n(k, shape, s=0.1):
        return jax.random.normal(k, shape, jnp.float32) * s

    cin_pg = inplanes // groups
    return dict(
        conv1_w=n(ks[0], (planes, cin_pg, 3, 3, 3)),
        conv1_b=n(ks[1], (planes,)),
        bn1_g=1.0 + n(ks[2], (planes,), 0.05),
        bn1_b=n(ks[3], (planes,), 0.05),
        bn1_m=n(ks[4], (planes,), 0.05),
        bn1_v=1.0 + jnp.abs(n(ks[5], (planes,), 0.05)),
        conv2_w=n(ks[6], (planes, cin_pg, 3, 3, 3)),
        conv2_b=n(ks[7], (planes,)),
        bn2_g=1.0 + n(ks[8], (planes,), 0.05),
        bn2_b=n(ks[9], (planes,), 0.05),
        bn2_m=n(ks[10], (planes,), 0.05),
        bn2_v=1.0 + jnp.abs(n(ks[11], (planes,), 0.05)),
        fc_w=n(ks[12], (d, planes)),
        fc_b=n(ks[13], (d,)),
        fcbn_g=1.0 + n(ks[14], (d,), 0.05),
        fcbn_b=n(ks[15], (d,), 0.05),
        fcbn_m=n(ks[16], (d,), 0.05),
        fcbn_v=1.0 + jnp.abs(n(ks[17], (d,), 0.05)),
        fc1_w=n(ks[18], (planes, d)),
        fc1_b=n(ks[19], (planes,)),
        fc2_w=n(ks[20], (planes, d)),
        fc2_b=n(ks[21], (planes,)),
    )


# ---------------------------------------------------------------------------
# Pure-JAX reference (mirrors the PyTorch forward, inference-mode BN)
# ---------------------------------------------------------------------------
def reference_forward(x, P, groups):
    def bn5(y, g, b, m, v):
        sh = (None, slice(None), None, None, None)
        return (y - m[sh]) / jnp.sqrt(v[sh] + BN_EPS) * g[sh] + b[sh]

    dn = ('NCDHW', 'OIDHW', 'NCDHW')
    u1 = lax.conv_general_dilated(x, P['conv1_w'], (1, 1, 1), [(1, 1)] * 3,
                                  dimension_numbers=dn, feature_group_count=groups)
    u1 = u1 + P['conv1_b'][None, :, None, None, None]
    u1 = _leaky(bn5(u1, P['bn1_g'], P['bn1_b'], P['bn1_m'], P['bn1_v']))
    u2 = lax.conv_general_dilated(x, P['conv2_w'], (1, 1, 1), [(2, 2)] * 3,
                                  rhs_dilation=(2, 2, 2),
                                  dimension_numbers=dn, feature_group_count=groups)
    u2 = u2 + P['conv2_b'][None, :, None, None, None]
    u2 = _leaky(bn5(u2, P['bn2_g'], P['bn2_b'], P['bn2_m'], P['bn2_v']))
    u = u1 + u2
    s = u.mean(axis=(2, 3, 4))
    z = s @ P['fc_w'].T + P['fc_b']
    if x.shape[0] != 1:
        z = (z - P['fcbn_m']) / jnp.sqrt(P['fcbn_v'] + BN_EPS) * P['fcbn_g'] + P['fcbn_b']
    z = _leaky(z)
    s1 = z @ P['fc1_w'].T + P['fc1_b']
    s2 = z @ P['fc2_w'].T + P['fc2_b']
    attn = jax.nn.softmax(jnp.stack([s1, s2], axis=1), axis=1)
    a = attn[:, 0][:, :, None, None, None]
    b = attn[:, 1][:, :, None, None, None]
    return u1 * a + u2 * b


if __name__ == "__main__":
    # groups=32 forces channel counts that are multiples of 32 (depthwise here).
    inplanes = planes = 32
    groups = 32
    ratio = 16
    d = max(planes // ratio, 32)          # = 32
    B, D, H, W = 2, 8, 8, 8

    key = jax.random.PRNGKey(0)
    kx, kp = jax.random.split(key)
    x = jax.random.normal(kx, (B, inplanes, D, H, W), jnp.float32)
    P = init_params(kp, inplanes, planes, groups, d)

    fwd = jax.jit(sk_attention_forward, static_argnums=2)
    out = jax.block_until_ready(fwd(x, P, groups))
    ref = jax.block_until_ready(reference_forward(x, P, groups))

    assert out.shape == (B, planes, D, H, W)
    err = float(jnp.max(jnp.abs(out - ref)))
    assert err < 5e-2, f"max abs err {err}"
    print("KERNEL_OK")
</pallas_src>

<mosaic_0001>
module attributes {stable_mosaic.version = 11 : i64} {
  func.func @_sk_fused_kernel(%arg0: i32, %arg1: memref<1x8x8x256xf32, #tpu.memory_space<vmem>>, %arg2: memref<27x256xf32, #tpu.memory_space<vmem>>, %arg3: memref<27x256xf32, #tpu.memory_space<vmem>>, %arg4: memref<1x256xf32, #tpu.memory_space<vmem>>, %arg5: memref<1x256xf32, #tpu.memory_space<vmem>>, %arg6: memref<1x256xf32, #tpu.memory_space<vmem>>, %arg7: memref<1x256xf32, #tpu.memory_space<vmem>>, %arg8: memref<256x32xf32, #tpu.memory_space<vmem>>, %arg9: memref<1x32xf32, #tpu.memory_space<vmem>>, %arg10: memref<1x32xf32, #tpu.memory_space<vmem>>, %arg11: memref<1x32xf32, #tpu.memory_space<vmem>>, %arg12: memref<32x256xf32, #tpu.memory_space<vmem>>, %arg13: memref<1x256xf32, #tpu.memory_space<vmem>>, %arg14: memref<32x256xf32, #tpu.memory_space<vmem>>, %arg15: memref<1x256xf32, #tpu.memory_space<vmem>>, %arg16: memref<1x8x8x256xf32, #tpu.memory_space<vmem>>, %arg17: memref<5x12x12x256xf32, #tpu.memory_space<vmem>>, %arg18: memref<8x8x256xf32, #tpu.memory_space<vmem>>) attributes {dimension_semantics = [#tpu.dimension_semantics<parallel>], iteration_bounds = array<i64: 2>, scalar_prefetch = 0 : i64, scratch_operands = 2 : i64, tpu.core_type = #tpu.core_type<tc>, window_params = [{transform_indices = @transform_0, window_bounds = array<i64: 1, 8, 8, 256>}, {pipeline_mode = #tpu.pipeline_mode<synchronous>, transform_indices = @transform_1, window_bounds = array<i64: 27, 256>}, {pipeline_mode = #tpu.pipeline_mode<synchronous>, transform_indices = @transform_2, window_bounds = array<i64: 27, 256>}, {pipeline_mode = #tpu.pipeline_mode<synchronous>, transform_indices = @transform_3, window_bounds = array<i64: 1, 256>}, {pipeline_mode = #tpu.pipeline_mode<synchronous>, transform_indices = @transform_4, window_bounds = array<i64: 1, 256>}, {pipeline_mode = #tpu.pipeline_mode<synchronous>, transform_indices = @transform_5, window_bounds = array<i64: 1, 256>}, {pipeline_mode = #tpu.pipeline_mode<synchronous>, transform_indices = @transform_6, window_bounds = array<i64: 1, 256>}, {pipeline_mode = #tpu.pipeline_mode<synchronous>, transform_indices = @transform_7, window_bounds = array<i64: 256, 32>}, {pipeline_mode = #tpu.pipeline_mode<synchronous>, transform_indices = @transform_8, window_bounds = array<i64: 1, 32>}, {pipeline_mode = #tpu.pipeline_mode<synchronous>, transform_indices = @transform_9, window_bounds = array<i64: 1, 32>}, {pipeline_mode = #tpu.pipeline_mode<synchronous>, transform_indices = @transform_10, window_bounds = array<i64: 1, 32>}, {pipeline_mode = #tpu.pipeline_mode<synchronous>, transform_indices = @transform_11, window_bounds = array<i64: 32, 256>}, {pipeline_mode = #tpu.pipeline_mode<synchronous>, transform_indices = @transform_12, window_bounds = array<i64: 1, 256>}, {pipeline_mode = #tpu.pipeline_mode<synchronous>, transform_indices = @transform_13, window_bounds = array<i64: 32, 256>}, {pipeline_mode = #tpu.pipeline_mode<synchronous>, transform_indices = @transform_14, window_bounds = array<i64: 1, 256>}, {transform_indices = @transform_15, window_bounds = array<i64: 1, 8, 8, 256>}]} {
    %cst = arith.constant 0.000000e+00 : f32
    %0 = vector.broadcast %cst : f32 to vector<5x12x12x256xf32>
    %c0 = arith.constant 0 : index
    %c0_0 = arith.constant 0 : index
    %c0_1 = arith.constant 0 : index
    %c0_2 = arith.constant 0 : index
    %1 = vector.load %arg17[%c0, %c0_0, %c0_1, %c0_2] : memref<5x12x12x256xf32, #tpu.memory_space<vmem>>, vector<5x12x12x256xf32>
    tpu.vector_store %arg17[%c0, %c0_0, %c0_1, %c0_2], %0 {strides = array<i32>} : memref<5x12x12x256xf32, #tpu.memory_space<vmem>>, vector<5x12x12x256xf32>,
    %c0_3 = arith.constant 0 : index
    %c0_4 = arith.constant 0 : index
    %c0_5 = arith.constant 0 : index
    %c0_6 = arith.constant 0 : index
    %2 = vector.load %arg1[%c0_3, %c0_4, %c0_5, %c0_6] : memref<1x8x8x256xf32, #tpu.memory_space<vmem>>, vector<1x8x8x256xf32>
    %3 = vector.shape_cast %2 : vector<1x8x8x256xf32> to vector<8x8x256xf32>
    %4 = tpu.iota {dimensions = array<i32: 2>} : vector<1x1x256xi32>
    %c64_i32 = arith.constant 64 : i32
    %5 = vector.broadcast %c64_i32 : i32 to vector<1x1x256xi32>
    %6 = arith.cmpi slt, %4, %5 : vector<1x1x256xi32>
    %c64_i32_7 = arith.constant 64 : i32
    %7 = tpu.dynamic_rotate %3 by %c64_i32_7 dim 2 : vector<8x8x256xf32>, i32 -> vector<8x8x256xf32>
    %cst_8 = arith.constant 0.000000e+00 : f32
    %8 = vector.shape_cast %6 : vector<1x1x256xi1> to vector<1x1x256xi1>
    %9 = vector.broadcast %8 : vector<1x1x256xi1> to vector<8x8x256xi1>
    %10 = vector.broadcast %cst_8 : f32 to vector<8x8x256xf32>
    %11 = arith.select %9, %10, %7 : vector<8x8x256xi1>, vector<8x8x256xf32>
    %c0_9 = arith.constant 0 : index
    %c2 = arith.constant 2 : index
    %c2_10 = arith.constant 2 : index
    %c0_11 = arith.constant 0 : index
    %12 = vector.load %arg17[%c0_9, %c2, %c2_10, %c0_11] : memref<5x12x12x256xf32, #tpu.memory_space<vmem>>, vector<1x8x8x256xf32>
    %13 = vector.shape_cast %12 : vector<1x8x8x256xf32> to vector<8x8x256xf32>
    %14 = vector.shape_cast %11 : vector<8x8x256xf32> to vector<1x8x8x256xf32>
    tpu.vector_store %arg17[%c0_9, %c2, %c2_10, %c0_11], %14 {strides = array<i32>} : memref<5x12x12x256xf32, #tpu.memory_space<vmem>>, vector<1x8x8x256xf32>,
    %c32_i32 = arith.constant 32 : i32
    %15 = vector.broadcast %c32_i32 : i32 to vector<1x1x256xi32>
    %16 = arith.cmpi slt, %4, %15 : vector<1x1x256xi32>
    %c32_i32_12 = arith.constant 32 : i32
    %17 = tpu.dynamic_rotate %3 by %c32_i32_12 dim 2 : vector<8x8x256xf32>, i32 -> vector<8x8x256xf32>
    %cst_13 = arith.constant 0.000000e+00 : f32
    %18 = vector.shape_cast %16 : vector<1x1x256xi1> to vector<1x1x256xi1>
    %19 = vector.broadcast %18 : vector<1x1x256xi1> to vector<8x8x256xi1>
    %20 = vector.broadcast %cst_13 : f32 to vector<8x8x256xf32>
    %21 = arith.select %19, %20, %17 : vector<8x8x256xi1>, vector<8x8x256xf32>
    %c1 = arith.constant 1 : index
    %c2_14 = arith.constant 2 : index
    %c2_15 = arith.constant 2 : index
    %c0_16 = arith.constant 0 : index
    %22 = vector.load %arg17[%c1, %c2_14, %c2_15, %c0_16] : memref<5x12x12x256xf32, #tpu.memory_space<vmem>>, vector<1x8x8x256xf32>
    %23 = vector.shape_cast %22 : vector<1x8x8x256xf32> to vector<8x8x256xf32>
    %24 = vector.shape_cast %21 : vector<8x8x256xf32> to vector<1x8x8x256xf32>
    tpu.vector_store %arg17[%c1, %c2_14, %c2_15, %c0_16], %24 {strides = array<i32>} : memref<5x12x12x256xf32, #tpu.memory_space<vmem>>, vector<1x8x8x256xf32>,
    %c2_17 = arith.constant 2 : index
    %c2_18 = arith.constant 2 : index
    %c2_19 = arith.constant 2 : index
    %c0_20 = arith.constant 0 : index
    %25 = vector.load %arg17[%c2_17, %c2_18, %c2_19, %c0_20] : memref<5x12x12x256xf32, #tpu.memory_space<vmem>>, vector<1x8x8x256xf32>
    %26 = vector.shape_cast %25 : vector<1x8x8x256xf32> to vector<8x8x256xf32>
    %27 = vector.shape_cast %3 : vector<8x8x256xf32> to vector<1x8x8x256xf32>
    tpu.vector_store %arg17[%c2_17, %c2_18, %c2_19, %c0_20], %27 {strides = array<i32>} : memref<5x12x12x256xf32, #tpu.memory_space<vmem>>, vector<1x8x8x256xf32>,
    %c224_i32 = arith.constant 224 : i32
    %28 = vector.broadcast %c224_i32 : i32 to vector<1x1x256xi32>
    %29 = arith.cmpi sge, %4, %28 : vector<1x1x256xi32>
    %c224_i32_21 = arith.constant 224 : i32
    %30 = tpu.dynamic_rotate %3 by %c224_i32_21 dim 2 : vector<8x8x256xf32>, i32 -> vector<8x8x256xf32>
    %cst_22 = arith.constant 0.000000e+00 : f32
    %31 = vector.shape_cast %29 : vector<1x1x256xi1> to vector<1x1x256xi1>
    %32 = vector.broadcast %31 : vector<1x1x256xi1> to vector<8x8x256xi1>
    %33 = vector.broadcast %cst_22 : f32 to vector<8x8x256xf32>
    %34 = arith.select %32, %33, %30 : vector<8x8x256xi1>, vector<8x8x256xf32>
    %c3 = arith.constant 3 : index
    %c2_23 = arith.constant 2 : index
    %c2_24 = arith.constant 2 : index
    %c0_25 = arith.constant 0 : index
    %35 = vector.load %arg17[%c3, %c2_23, %c2_24, %c0_25] : memref<5x12x12x256xf32, #tpu.memory_space<vmem>>, vector<1x8x8x256xf32>
    %36 = vector.shape_cast %35 : vector<1x8x8x256xf32> to vector<8x8x256xf32>
    %37 = vector.shape_cast %34 : vector<8x8x256xf32> to vector<1x8x8x256xf32>
    tpu.vector_store %arg17[%c3, %c2_23, %c2_24, %c0_25], %37 {strides = array<i32>} : memref<5x12x12x256xf32, #tpu.memory_space<vmem>>, vector<1x8x8x256xf32>,
    %c192_i32 = arith.constant 192 : i32
    %38 = vector.broadcast %c192_i32 : i32 to vector<1x1x256xi32>
    %39 = arith.cmpi sge, %4, %38 : vector<1x1x256xi32>
    %c192_i32_26 = arith.constant 192 : i32
    %40 = tpu.dynamic_rotate %3 by %c192_i32_26 dim 2 : vector<8x8x256xf32>, i32 -> vector<8x8x256xf32>
    %cst_27 = arith.constant 0.000000e+00 : f32
    %41 = vector.shape_cast %39 : vector<1x1x256xi1> to vector<1x1x256xi1>
    %42 = vector.broadcast %41 : vector<1x1x256xi1> to vector<8x8x256xi1>
    %43 = vector.broadcast %cst_27 : f32 to vector<8x8x256xf32>
    %44 = arith.select %42, %43, %40 : vector<8x8x256xi1>, vector<8x8x256xf32>
    %c4 = arith.constant 4 : index
    %c2_28 = arith.constant 2 : index
    %c2_29 = arith.constant 2 : index
    %c0_30 = arith.constant 0 : index
    %45 = vector.load %arg17[%c4, %c2_28, %c2_29, %c0_30] : memref<5x12x12x256xf32, #tpu.memory_space<vmem>>, vector<1x8x8x256xf32>
    %46 = vector.shape_cast %45 : vector<1x8x8x256xf32> to vector<8x8x256xf32>
    %47 = vector.shape_cast %44 : vector<8x8x256xf32> to vector<1x8x8x256xf32>
    tpu.vector_store %arg17[%c4, %c2_28, %c2_29, %c0_30], %47 {strides = array<i32>} : memref<5x12x12x256xf32, #tpu.memory_space<vmem>>, vector<1x8x8x256xf32>,
    %cst_31 = arith.constant 0.000000e+00 : f32
    %48 = vector.broadcast %cst_31 : f32 to vector<8x8x256xf32>
    %c1_32 = arith.constant 1 : index
    %c1_33 = arith.constant 1 : index
    %c1_34 = arith.constant 1 : index
    %c0_35 = arith.constant 0 : index
    %49 = vector.load %arg17[%c1_32, %c1_33, %c1_34, %c0_35] : memref<5x12x12x256xf32, #tpu.memory_space<vmem>>, vector<1x8x8x256xf32>
    %50 = vector.shape_cast %49 : vector<1x8x8x256xf32> to vector<8x8x256xf32>
    %c0_36 = arith.constant 0 : index
    %c0_37 = arith.constant 0 : index
    %51 = vector.load %arg2[%c0_36, %c0_37] : memref<27x256xf32, #tpu.memory_space<vmem>>, vector<1x256xf32>
    %52 = vector.shape_cast %51 : vector<1x256xf32> to vector<1x1x256xf32>
    %53 = vector.broadcast %52 : vector<1x1x256xf32> to vector<8x8x256xf32>
    %54 = arith.mulf %50, %53 : vector<8x8x256xf32>
    %55 = arith.addf %48, %54 : vector<8x8x256xf32>
    %c2_38 = arith.constant 2 : index
    %c1_39 = arith.constant 1 : index
    %c1_40 = arith.constant 1 : index
    %c0_41 = arith.constant 0 : index
    %56 = vector.load %arg17[%c2_38, %c1_39, %c1_40, %c0_41] : memref<5x12x12x256xf32, #tpu.memory_space<vmem>>, vector<1x8x8x256xf32>
    %57 = vector.shape_cast %56 : vector<1x8x8x256xf32> to vector<8x8x256xf32>
    %c1_42 = arith.constant 1 : index
    %c0_43 = arith.constant 0 : index
    %58 = vector.load %arg2[%c1_42, %c0_43] : memref<27x256xf32, #tpu.memory_space<vmem>>, vector<1x256xf32>
    %59 = vector.shape_cast %58 : vector<1x256xf32> to vector<1x1x256xf32>
    %60 = vector.broadcast %59 : vector<1x1x256xf32> to vector<8x8x256xf32>
    %61 = arith.mulf %57, %60 : vector<8x8x256xf32>
    %62 = arith.addf %55, %61 : vector<8x8x256xf32>
    %c3_44 = arith.constant 3 : index
    %c1_45 = arith.constant 1 : index
    %c1_46 = arith.constant 1 : index
    %c0_47 = arith.constant 0 : index
    %63 = vector.load %arg17[%c3_44, %c1_45, %c1_46, %c0_47] : memref<5x12x12x256xf32, #tpu.memory_space<vmem>>, vector<1x8x8x256xf32>
    %64 = vector.shape_cast %63 : vector<1x8x8x256xf32> to vector<8x8x256xf32>
    %c2_48 = arith.constant 2 : index
    %c0_49 = arith.constant 0 : index
    %65 = vector.load %arg2[%c2_48, %c0_49] : memref<27x256xf32, #tpu.memory_space<vmem>>, vector<1x256xf32>
    %66 = vector.shape_cast %65 : vector<1x256xf32> to vector<1x1x256xf32>
    %67 = vector.broadcast %66 : vector<1x1x256xf32> to vector<8x8x256xf32>
    %68 = arith.mulf %64, %67 : vector<8x8x256xf32>
    %69 = arith.addf %62, %68 : vector<8x8x256xf32>
    %c1_50 = arith.constant 1 : index
    %c1_51 = arith.constant 1 : index
    %c2_52 = arith.constant 2 : index
    %c0_53 = arith.constant 0 : index
    %70 = vector.load %arg17[%c1_50, %c1_51, %c2_52, %c0_53] : memref<5x12x12x256xf32, #tpu.memory_space<vmem>>, vector<1x8x8x256xf32>
    %71 = vector.shape_cast %70 : vector<1x8x8x256xf32> to vector<8x8x256xf32>
    %c3_54 = arith.constant 3 : index
    %c0_55 = arith.constant 0 : index
    %72 = vector.load %arg2[%c3_54, %c0_55] : memref<27x256xf32, #tpu.memory_space<vmem>>, vector<1x256xf32>
    %73 = vector.shape_cast %72 : vector<1x256xf32> to vector<1x1x256xf32>
    %74 = vector.broadcast %73 : vector<1x1x256xf32> to vector<8x8x256xf32>
    %75 = arith.mulf %71, %74 : vector<8x8x256xf32>
    %76 = arith.addf %69, %75 : vector<8x8x256xf32>
    %c2_56 = arith.constant 2 : index
    %c1_57 = arith.constant 1 : index
    %c2_58 = arith.constant 2 : index
    %c0_59 = arith.constant 0 : index
    %77 = vector.load %arg17[%c2_56, %c1_57, %c2_58, %c0_59] : memref<5x12x12x256xf32, #tpu.memory_space<vmem>>, vector<1x8x8x256xf32>
    %78 = vector.shape_cast %77 : vector<1x8x8x256xf32> to vector<8x8x256xf32>
    %c4_60 = arith.constant 4 : index
    %c0_61 = arith.constant 0 : index
    %79 = vector.load %arg2[%c4_60, %c0_61] : memref<27x256xf32, #tpu.memory_space<vmem>>, vector<1x256xf32>
    %80 = vector.shape_cast %79 : vector<1x256xf32> to vector<1x1x256xf32>
    %81 = vector.broadcast %80 : vector<1x1x256xf32> to vector<8x8x256xf32>
    %82 = arith.mulf %78, %81 : vector<8x8x256xf32>
    %83 = arith.addf %76, %82 : vector<8x8x256xf32>
    %c3_62 = arith.constant 3 : index
    %c1_63 = arith.constant 1 : index
    %c2_64 = arith.constant 2 : index
    %c0_65 = arith.constant 0 : index
    %84 = vector.load %arg17[%c3_62, %c1_63, %c2_64, %c0_65] : memref<5x12x12x256xf32, #tpu.memory_space<vmem>>, vector<1x8x8x256xf32>
    %85 = vector.shape_cast %84 : vector<1x8x8x256xf32> to vector<8x8x256xf32>
    %c5 = arith.constant 5 : index
    %c0_66 = arith.constant 0 : index
    %86 = vector.load %arg2[%c5, %c0_66] : memref<27x256xf32, #tpu.memory_space<vmem>>, vector<1x256xf32>
    %87 = vector.shape_cast %86 : vector<1x256xf32> to vector<1x1x256xf32>
    %88 = vector.broadcast %87 : vector<1x1x256xf32> to vector<8x8x256xf32>
    %89 = arith.mulf %85, %88 : vector<8x8x256xf32>
    %90 = arith.addf %83, %89 : vector<8x8x256xf32>
    %c1_67 = arith.constant 1 : index
    %c1_68 = arith.constant 1 : index
    %c3_69 = arith.constant 3 : index
    %c0_70 = arith.constant 0 : index
    %91 = vector.load %arg17[%c1_67, %c1_68, %c3_69, %c0_70] : memref<5x12x12x256xf32, #tpu.memory_space<vmem>>, vector<1x8x8x256xf32>
    %92 = vector.shape_cast %91 : vector<1x8x8x256xf32> to vector<8x8x256xf32>
    %c6 = arith.constant 6 : index
    %c0_71 = arith.constant 0 : index
    %93 = vector.load %arg2[%c6, %c0_71] : memref<27x256xf32, #tpu.memory_space<vmem>>, vector<1x256xf32>
    %94 = vector.shape_cast %93 : vector<1x256xf32> to vector<1x1x256xf32>
    %95 = vector.broadcast %94 : vector<1x1x256xf32> to vector<8x8x256xf32>
    %96 = arith.mulf %92, %95 : vector<8x8x256xf32>
    %97 = arith.addf %90, %96 : vector<8x8x256xf32>
    %c2_72 = arith.constant 2 : index
    %c1_73 = arith.constant 1 : index
    %c3_74 = arith.constant 3 : index
    %c0_75 = arith.constant 0 : index
    %98 = vector.load %arg17[%c2_72, %c1_73, %c3_74, %c0_75] : memref<5x12x12x256xf32, #tpu.memory_space<vmem>>, vector<1x8x8x256xf32>
    %99 = vector.shape_cast %98 : vector<1x8x8x256xf32> to vector<8x8x256xf32>
    %c7 = arith.constant 7 : index
    %c0_76 = arith.constant 0 : index
    %100 = vector.load %arg2[%c7, %c0_76] : memref<27x256xf32, #tpu.memory_space<vmem>>, vector<1x256xf32>
    %101 = vector.shape_cast %100 : vector<1x256xf32> to vector<1x1x256xf32>
    %102 = vector.broadcast %101 : vector<1x1x256xf32> to vector<8x8x256xf32>
    %103 = arith.mulf %99, %102 : vector<8x8x256xf32>
    %104 = arith.addf %97, %103 : vector<8x8x256xf32>
    %c3_77 = arith.constant 3 : index
    %c1_78 = arith.constant 1 : index
    %c3_79 = arith.constant 3 : index
    %c0_80 = arith.constant 0 : index
    %105 = vector.load %arg17[%c3_77, %c1_78, %c3_79, %c0_80] : memref<5x12x12x256xf32, #tpu.memory_space<vmem>>, vector<1x8x8x256xf32>
    %106 = vector.shape_cast %105 : vector<1x8x8x256xf32> to vector<8x8x256xf32>
    %c8 = arith.constant 8 : index
    %c0_81 = arith.constant 0 : index
    %107 = vector.load %arg2[%c8, %c0_81] : memref<27x256xf32, #tpu.memory_space<vmem>>, vector<1x256xf32>
    %108 = vector.shape_cast %107 : vector<1x256xf32> to vector<1x1x256xf32>
    %109 = vector.broadcast %108 : vector<1x1x256xf32> to vector<8x8x256xf32>
    %110 = arith.mulf %106, %109 : vector<8x8x256xf32>
    %111 = arith.addf %104, %110 : vector<8x8x256xf32>
    %c1_82 = arith.constant 1 : index
    %c2_83 = arith.constant 2 : index
    %c1_84 = arith.constant 1 : index
    %c0_85 = arith.constant 0 : index
    %112 = vector.load %arg17[%c1_82, %c2_83, %c1_84, %c0_85] : memref<5x12x12x256xf32, #tpu.memory_space<vmem>>, vector<1x8x8x256xf32>
    %113 = vector.shape_cast %112 : vector<1x8x8x256xf32> to vector<8x8x256xf32>
    %c9 = arith.constant 9 : index
    %c0_86 = arith.constant 0 : index
    %114 = vector.load %arg2[%c9, %c0_86] : memref<27x256xf32, #tpu.memory_space<vmem>>, vector<1x256xf32>
    %115 = vector.shape_cast %114 : vector<1x256xf32> to vector<1x1x256xf32>
    %116 = vector.broadcast %115 : vector<1x1x256xf32> to vector<8x8x256xf32>
    %117 = arith.mulf %113, %116 : vector<8x8x256xf32>
    %118 = arith.addf %111, %117 : vector<8x8x256xf32>
    %c2_87 = arith.constant 2 : index
    %c2_88 = arith.constant 2 : index
    %c1_89 = arith.constant 1 : index
    %c0_90 = arith.constant 0 : index
    %119 = vector.load %arg17[%c2_87, %c2_88, %c1_89, %c0_90] : memref<5x12x12x256xf32, #tpu.memory_space<vmem>>, vector<1x8x8x256xf32>
    %120 = vector.shape_cast %119 : vector<1x8x8x256xf32> to vector<8x8x256xf32>
    %c10 = arith.constant 10 : index
    %c0_91 = arith.constant 0 : index
    %121 = vector.load %arg2[%c10, %c0_91] : memref<27x256xf32, #tpu.memory_space<vmem>>, vector<1x256xf32>
    %122 = vector.shape_cast %121 : vector<1x256xf32> to vector<1x1x256xf32>
    %123 = vector.broadcast %122 : vector<1x1x256xf32> to vector<8x8x256xf32>
    %124 = arith.mulf %120, %123 : vector<8x8x256xf32>
    %125 = arith.addf %118, %124 : vector<8x8x256xf32>
    %c3_92 = arith.constant 3 : index
    %c2_93 = arith.constant 2 : index
    %c1_94 = arith.constant 1 : index
    %c0_95 = arith.constant 0 : index
    %126 = vector.load %arg17[%c3_92, %c2_93, %c1_94, %c0_95] : memref<5x12x12x256xf32, #tpu.memory_space<vmem>>, vector<1x8x8x256xf32>
    %127 = vector.shape_cast %126 : vector<1x8x8x256xf32> to vector<8x8x256xf32>
    %c11 = arith.constant 11 : index
    %c0_96 = arith.constant 0 : index
    %128 = vector.load %arg2[%c11, %c0_96] : memref<27x256xf32, #tpu.memory_space<vmem>>, vector<1x256xf32>
    %129 = vector.shape_cast %128 : vector<1x256xf32> to vector<1x1x256xf32>
    %130 = vector.broadcast %129 : vector<1x1x256xf32> to vector<8x8x256xf32>
    %131 = arith.mulf %127, %130 : vector<8x8x256xf32>
    %132 = arith.addf %125, %131 : vector<8x8x256xf32>
    %c1_97 = arith.constant 1 : index
    %c2_98 = arith.constant 2 : index
    %c2_99 = arith.constant 2 : index
    %c0_100 = arith.constant 0 : index
    %133 = vector.load %arg17[%c1_97, %c2_98, %c2_99, %c0_100] : memref<5x12x12x256xf32, #tpu.memory_space<vmem>>, vector<1x8x8x256xf32>
    %134 = vector.shape_cast %133 : vector<1x8x8x256xf32> to vector<8x8x256xf32>
    %c12 = arith.constant 12 : index
    %c0_101 = arith.constant 0 : index
    %135 = vector.load %arg2[%c12, %c0_101] : memref<27x256xf32, #tpu.memory_space<vmem>>, vector<1x256xf32>
    %136 = vector.shape_cast %135 : vector<1x256xf32> to vector<1x1x256xf32>
    %137 = vector.broadcast %136 : vector<1x1x256xf32> to vector<8x8x256xf32>
    %138 = arith.mulf %134, %137 : vector<8x8x256xf32>
    %139 = arith.addf %132, %138 : vector<8x8x256xf32>
    %c2_102 = arith.constant 2 : index
    %c2_103 = arith.constant 2 : index
    %c2_104 = arith.constant 2 : index
    %c0_105 = arith.constant 0 : index
    %140 = vector.load %arg17[%c2_102, %c2_103, %c2_104, %c0_105] : memref<5x12x12x256xf32, #tpu.memory_space<vmem>>, vector<1x8x8x256xf32>
    %141 = vector.shape_cast %140 : vector<1x8x8x256xf32> to vector<8x8x256xf32>
    %c13 = arith.constant 13 : index
    %c0_106 = arith.constant 0 : index
    %142 = vector.load %arg2[%c13, %c0_106] : memref<27x256xf32, #tpu.memory_space<vmem>>, vector<1x256xf32>
    %143 = vector.shape_cast %142 : vector<1x256xf32> to vector<1x1x256xf32>
    %144 = vector.broadcast %143 : vector<1x1x256xf32> to vector<8x8x256xf32>
    %145 = arith.mulf %141, %144 : vector<8x8x256xf32>
    %146 = arith.addf %139, %145 : vector<8x8x256xf32>
    %c3_107 = arith.constant 3 : index
    %c2_108 = arith.constant 2 : index
    %c2_109 = arith.constant 2 : index
    %c0_110 = arith.constant 0 : index
    %147 = vector.load %arg17[%c3_107, %c2_108, %c2_109, %c0_110] : memref<5x12x12x256xf32, #tpu.memory_space<vmem>>, vector<1x8x8x256xf32>
    %148 = vector.shape_cast %147 : vector<1x8x8x256xf32> to vector<8x8x256xf32>
    %c14 = arith.constant 14 : index
    %c0_111 = arith.constant 0 : index
    %149 = vector.load %arg2[%c14, %c0_111] : memref<27x256xf32, #tpu.memory_space<vmem>>, vector<1x256xf32>
    %150 = vector.shape_cast %149 : vector<1x256xf32> to vector<1x1x256xf32>
    %151 = vector.broadcast %150 : vector<1x1x256xf32> to vector<8x8x256xf32>
    %152 = arith.mulf %148, %151 : vector<8x8x256xf32>
    %153 = arith.addf %146, %152 : vector<8x8x256xf32>
    %c1_112 = arith.constant 1 : index
    %c2_113 = arith.constant 2 : index
    %c3_114 = arith.constant 3 : index
    %c0_115 = arith.constant 0 : index
    %154 = vector.load %arg17[%c1_112, %c2_113, %c3_114, %c0_115] : memref<5x12x12x256xf32, #tpu.memory_space<vmem>>, vector<1x8x8x256xf32>
    %155 = vector.shape_cast %154 : vector<1x8x8x256xf32> to vector<8x8x256xf32>
    %c15 = arith.constant 15 : index
    %c0_116 = arith.constant 0 : index
    %156 = vector.load %arg2[%c15, %c0_116] : memref<27x256xf32, #tpu.memory_space<vmem>>, vector<1x256xf32>
    %157 = vector.shape_cast %156 : vector<1x256xf32> to vector<1x1x256xf32>
    %158 = vector.broadcast %157 : vector<1x1x256xf32> to vector<8x8x256xf32>
    %159 = arith.mulf %155, %158 : vector<8x8x256xf32>
    %160 = arith.addf %153, %159 : vector<8x8x256xf32>
    %c2_117 = arith.constant 2 : index
    %c2_118 = arith.constant 2 : index
    %c3_119 = arith.constant 3 : index
    %c0_120 = arith.constant 0 : index
    %161 = vector.load %arg17[%c2_117, %c2_118, %c3_119, %c0_120] : memref<5x12x12x256xf32, #tpu.memory_space<vmem>>, vector<1x8x8x256xf32>
    %162 = vector.shape_cast %161 : vector<1x8x8x256xf32> to vector<8x8x256xf32>
    %c16 = arith.constant 16 : index
    %c0_121 = arith.constant 0 : index
    %163 = vector.load %arg2[%c16, %c0_121] : memref<27x256xf32, #tpu.memory_space<vmem>>, vector<1x256xf32>
    %164 = vector.shape_cast %163 : vector<1x256xf32> to vector<1x1x256xf32>
    %165 = vector.broadcast %164 : vector<1x1x256xf32> to vector<8x8x256xf32>
    %166 = arith.mulf %162, %165 : vector<8x8x256xf32>
    %167 = arith.addf %160, %166 : vector<8x8x256xf32>
    %c3_122 = arith.constant 3 : index
    %c2_123 = arith.constant 2 : index
    %c3_124 = arith.constant 3 : index
    %c0_125 = arith.constant 0 : index
    %168 = vector.load %arg17[%c3_122, %c2_123, %c3_124, %c0_125] : memref<5x12x12x256xf32, #tpu.memory_space<vmem>>, vector<1x8x8x256xf32>
    %169 = vector.shape_cast %168 : vector<1x8x8x256xf32> to vector<8x8x256xf32>
    %c17 = arith.constant 17 : index
    %c0_126 = arith.constant 0 : index
    %170 = vector.load %arg2[%c17, %c0_126] : memref<27x256xf32, #tpu.memory_space<vmem>>, vector<1x256xf32>
    %171 = vector.shape_cast %170 : vector<1x256xf32> to vector<1x1x256xf32>
    %172 = vector.broadcast %171 : vector<1x1x256xf32> to vector<8x8x256xf32>
    %173 = arith.mulf %169, %172 : vector<8x8x256xf32>
    %174 = arith.addf %167, %173 : vector<8x8x256xf32>
    %c1_127 = arith.constant 1 : index
    %c3_128 = arith.constant 3 : index
    %c1_129 = arith.constant 1 : index
    %c0_130 = arith.constant 0 : index
    %175 = vector.load %arg17[%c1_127, %c3_128, %c1_129, %c0_130] : memref<5x12x12x256xf32, #tpu.memory_space<vmem>>, vector<1x8x8x256xf32>
    %176 = vector.shape_cast %175 : vector<1x8x8x256xf32> to vector<8x8x256xf32>
    %c18 = arith.constant 18 : index
    %c0_131 = arith.constant 0 : index
    %177 = vector.load %arg2[%c18, %c0_131] : memref<27x256xf32, #tpu.memory_space<vmem>>, vector<1x256xf32>
    %178 = vector.shape_cast %177 : vector<1x256xf32> to vector<1x1x256xf32>
    %179 = vector.broadcast %178 : vector<1x1x256xf32> to vector<8x8x256xf32>
    %180 = arith.mulf %176, %179 : vector<8x8x256xf32>
    %181 = arith.addf %174, %180 : vector<8x8x256xf32>
    %c2_132 = arith.constant 2 : index
    %c3_133 = arith.constant 3 : index
    %c1_134 = arith.constant 1 : index
    %c0_135 = arith.constant 0 : index
    %182 = vector.load %arg17[%c2_132, %c3_133, %c1_134, %c0_135] : memref<5x12x12x256xf32, #tpu.memory_space<vmem>>, vector<1x8x8x256xf32>
    %183 = vector.shape_cast %182 : vector<1x8x8x256xf32> to vector<8x8x256xf32>
    %c19 = arith.constant 19 : index
    %c0_136 = arith.constant 0 : index
    %184 = vector.load %arg2[%c19, %c0_136] : memref<27x256xf32, #tpu.memory_space<vmem>>, vector<1x256xf32>
    %185 = vector.shape_cast %184 : vector<1x256xf32> to vector<1x1x256xf32>
    %186 = vector.broadcast %185 : vector<1x1x256xf32> to vector<8x8x256xf32>
    %187 = arith.mulf %183, %186 : vector<8x8x256xf32>
    %188 = arith.addf %181, %187 : vector<8x8x256xf32>
    %c3_137 = arith.constant 3 : index
    %c3_138 = arith.constant 3 : index
    %c1_139 = arith.constant 1 : index
    %c0_140 = arith.constant 0 : index
    %189 = vector.load %arg17[%c3_137, %c3_138, %c1_139, %c0_140] : memref<5x12x12x256xf32, #tpu.memory_space<vmem>>, vector<1x8x8x256xf32>
    %190 = vector.shape_cast %189 : vector<1x8x8x256xf32> to vector<8x8x256xf32>
    %c20 = arith.constant 20 : index
    %c0_141 = arith.constant 0 : index
    %191 = vector.load %arg2[%c20, %c0_141] : memref<27x256xf32, #tpu.memory_space<vmem>>, vector<1x256xf32>
    %192 = vector.shape_cast %191 : vector<1x256xf32> to vector<1x1x256xf32>
    %193 = vector.broadcast %192 : vector<1x1x256xf32> to vector<8x8x256xf32>
    %194 = arith.mulf %190, %193 : vector<8x8x256xf32>
    %195 = arith.addf %188, %194 : vector<8x8x256xf32>
    %c1_142 = arith.constant 1 : index
    %c3_143 = arith.constant 3 : index
    %c2_144 = arith.constant 2 : index
    %c0_145 = arith.constant 0 : index
    %196 = vector.load %arg17[%c1_142, %c3_143, %c2_144, %c0_145] : memref<5x12x12x256xf32, #tpu.memory_space<vmem>>, vector<1x8x8x256xf32>
    %197 = vector.shape_cast %196 : vector<1x8x8x256xf32> to vector<8x8x256xf32>
    %c21 = arith.constant 21 : index
    %c0_146 = arith.constant 0 : index
    %198 = vector.load %arg2[%c21, %c0_146] : memref<27x256xf32, #tpu.memory_space<vmem>>, vector<1x256xf32>
    %199 = vector.shape_cast %198 : vector<1x256xf32> to vector<1x1x256xf32>
    %200 = vector.broadcast %199 : vector<1x1x256xf32> to vector<8x8x256xf32>
    %201 = arith.mulf %197, %200 : vector<8x8x256xf32>
    %202 = arith.addf %195, %201 : vector<8x8x256xf32>
    %c2_147 = arith.constant 2 : index
    %c3_148 = arith.constant 3 : index
    %c2_149 = arith.constant 2 : index
    %c0_150 = arith.constant 0 : index
    %203 = vector.load %arg17[%c2_147, %c3_148, %c2_149, %c0_150] : memref<5x12x12x256xf32, #tpu.memory_space<vmem>>, vector<1x8x8x256xf32>
    %204 = vector.shape_cast %203 : vector<1x8x8x256xf32> to vector<8x8x256xf32>
    %c22 = arith.constant 22 : index
    %c0_151 = arith.constant 0 : index
    %205 = vector.load %arg2[%c22, %c0_151] : memref<27x256xf32, #tpu.memory_space<vmem>>, vector<1x256xf32>
    %206 = vector.shape_cast %205 : vector<1x256xf32> to vector<1x1x256xf32>
    %207 = vector.broadcast %206 : vector<1x1x256xf32> to vector<8x8x256xf32>
    %208 = arith.mulf %204, %207 : vector<8x8x256xf32>
    %209 = arith.addf %202, %208 : vector<8x8x256xf32>
    %c3_152 = arith.constant 3 : index
    %c3_153 = arith.constant 3 : index
    %c2_154 = arith.constant 2 : index
    %c0_155 = arith.constant 0 : index
    %210 = vector.load %arg17[%c3_152, %c3_153, %c2_154, %c0_155] : memref<5x12x12x256xf32, #tpu.memory_space<vmem>>, vector<1x8x8x256xf32>
    %211 = vector.shape_cast %210 : vector<1x8x8x256xf32> to vector<8x8x256xf32>
    %c23 = arith.constant 23 : index
    %c0_156 = arith.constant 0 : index
    %212 = vector.load %arg2[%c23, %c0_156] : memref<27x256xf32, #tpu.memory_space<vmem>>, vector<1x256xf32>
    %213 = vector.shape_cast %212 : vector<1x256xf32> to vector<1x1x256xf32>
    %214 = vector.broadcast %213 : vector<1x1x256xf32> to vector<8x8x256xf32>
    %215 = arith.mulf %211, %214 : vector<8x8x256xf32>
    %216 = arith.addf %209, %215 : vector<8x8x256xf32>
    %c1_157 = arith.constant 1 : index
    %c3_158 = arith.constant 3 : index
    %c3_159 = arith.constant 3 : index
    %c0_160 = arith.constant 0 : index
    %217 = vector.load %arg17[%c1_157, %c3_158, %c3_159, %c0_160] : memref<5x12x12x256xf32, #tpu.memory_space<vmem>>, vector<1x8x8x256xf32>
    %218 = vector.shape_cast %217 : vector<1x8x8x256xf32> to vector<8x8x256xf32>
    %c24 = arith.constant 24 : index
    %c0_161 = arith.constant 0 : index
    %219 = vector.load %arg2[%c24, %c0_161] : memref<27x256xf32, #tpu.memory_space<vmem>>, vector<1x256xf32>
    %220 = vector.shape_cast %219 : vector<1x256xf32> to vector<1x1x256xf32>
    %221 = vector.broadcast %220 : vector<1x1x256xf32> to vector<8x8x256xf32>
    %222 = arith.mulf %218, %221 : vector<8x8x256xf32>
    %223 = arith.addf %216, %222 : vector<8x8x256xf32>
    %c2_162 = arith.constant 2 : index
    %c3_163 = arith.constant 3 : index
    %c3_164 = arith.constant 3 : index
    %c0_165 = arith.constant 0 : index
    %224 = vector.load %arg17[%c2_162, %c3_163, %c3_164, %c0_165] : memref<5x12x12x256xf32, #tpu.memory_space<vmem>>, vector<1x8x8x256xf32>
    %225 = vector.shape_cast %224 : vector<1x8x8x256xf32> to vector<8x8x256xf32>
    %c25 = arith.constant 25 : index
    %c0_166 = arith.constant 0 : index
    %226 = vector.load %arg2[%c25, %c0_166] : memref<27x256xf32, #tpu.memory_space<vmem>>, vector<1x256xf32>
    %227 = vector.shape_cast %226 : vector<1x256xf32> to vector<1x1x256xf32>
    %228 = vector.broadcast %227 : vector<1x1x256xf32> to vector<8x8x256xf32>
    %229 = arith.mulf %225, %228 : vector<8x8x256xf32>
    %230 = arith.addf %223, %229 : vector<8x8x256xf32>
    %c3_167 = arith.constant 3 : index
    %c3_168 = arith.constant 3 : index
    %c3_169 = arith.constant 3 : index
    %c0_170 = arith.constant 0 : index
    %231 = vector.load %arg17[%c3_167, %c3_168, %c3_169, %c0_170] : memref<5x12x12x256xf32, #tpu.memory_space<vmem>>, vector<1x8x8x256xf32>
    %232 = vector.shape_cast %231 : vector<1x8x8x256xf32> to vector<8x8x256xf32>
    %c26 = arith.constant 26 : index
    %c0_171 = arith.constant 0 : index
    %233 = vector.load %arg2[%c26, %c0_171] : memref<27x256xf32, #tpu.memory_space<vmem>>, vector<1x256xf32>
    %234 = vector.shape_cast %233 : vector<1x256xf32> to vector<1x1x256xf32>
    %235 = vector.broadcast %234 : vector<1x1x256xf32> to vector<8x8x256xf32>
    %236 = arith.mulf %232, %235 : vector<8x8x256xf32>
    %237 = arith.addf %230, %236 : vector<8x8x256xf32>
    %c0_172 = arith.constant 0 : index
    %c0_173 = arith.constant 0 : index
    %238 = vector.load %arg4[%c0_172, %c0_173] : memref<1x256xf32, #tpu.memory_space<vmem>>, vector<1x256xf32>
    %239 = vector.shape_cast %238 : vector<1x256xf32> to vector<1x1x256xf32>
    %240 = vector.broadcast %239 : vector<1x1x256xf32> to vector<8x8x256xf32>
    %241 = arith.mulf %237, %240 : vector<8x8x256xf32>
    %c0_174 = arith.constant 0 : index
    %c0_175 = arith.constant 0 : index
    %242 = vector.load %arg5[%c0_174, %c0_175] : memref<1x256xf32, #tpu.memory_space<vmem>>, vector<1x256xf32>
    %243 = vector.shape_cast %242 : vector<1x256xf32> to vector<1x1x256xf32>
    %244 = vector.broadcast %243 : vector<1x1x256xf32> to vector<8x8x256xf32>
    %245 = arith.addf %241, %244 : vector<8x8x256xf32>
    %cst_176 = arith.constant 0.000000e+00 : f32
    %246 = vector.broadcast %cst_176 : f32 to vector<8x8x256xf32>
    %247 = arith.cmpf oge, %245, %246 : vector<8x8x256xf32>
    %cst_177 = arith.constant 0.00999999977 : f32
    %248 = vector.broadcast %cst_177 : f32 to vector<8x8x256xf32>
    %249 = arith.mulf %248, %245 : vector<8x8x256xf32>
    %250 = arith.select %247, %245, %249 : vector<8x8x256xi1>, vector<8x8x256xf32>
    %c0_178 = arith.constant 0 : index
    %c0_179 = arith.constant 0 : index
    %c0_180 = arith.constant 0 : index
    %251 = vector.load %arg18[%c0_178, %c0_179, %c0_180] : memref<8x8x256xf32, #tpu.memory_space<vmem>>, vector<8x8x256xf32>
    tpu.vector_store %arg18[%c0_178, %c0_179, %c0_180], %250 {strides = array<i32>} : memref<8x8x256xf32, #tpu.memory_space<vmem>>, vector<8x8x256xf32>,
    %cst_181 = arith.constant 0.000000e+00 : f32
    %252 = vector.broadcast %cst_181 : f32 to vector<8x8x256xf32>
    %c0_182 = arith.constant 0 : index
    %c0_183 = arith.constant 0 : index
    %c0_184 = arith.constant 0 : index
    %c0_185 = arith.constant 0 : index
    %253 = vector.load %arg17[%c0_182, %c0_183, %c0_184, %c0_185] : memref<5x12x12x256xf32, #tpu.memory_space<vmem>>, vector<1x8x8x256xf32>
    %254 = vector.shape_cast %253 : vector<1x8x8x256xf32> to vector<8x8x256xf32>
    %c0_186 = arith.constant 0 : index
    %c0_187 = arith.constant 0 : index
    %255 = vector.load %arg3[%c0_186, %c0_187] : memref<27x256xf32, #tpu.memory_space<vmem>>, vector<1x256xf32>
    %256 = vector.shape_cast %255 : vector<1x256xf32> to vector<1x1x256xf32>
    %257 = vector.broadcast %256 : vector<1x1x256xf32> to vector<8x8x256xf32>
    %258 = arith.mulf %254, %257 : vector<8x8x256xf32>
    %259 = arith.addf %252, %258 : vector<8x8x256xf32>
    %c2_188 = arith.constant 2 : index
    %c0_189 = arith.constant 0 : index
    %c0_190 = arith.constant 0 : index
    %c0_191 = arith.constant 0 : index
    %260 = vector.load %arg17[%c2_188, %c0_189, %c0_190, %c0_191] : memref<5x12x12x256xf32, #tpu.memory_space<vmem>>, vector<1x8x8x256xf32>
    %261 = vector.shape_cast %260 : vector<1x8x8x256xf32> to vector<8x8x256xf32>
    %c1_192 = arith.constant 1 : index
    %c0_193 = arith.constant 0 : index
    %262 = vector.load %arg3[%c1_192, %c0_193] : memref<27x256xf32, #tpu.memory_space<vmem>>, vector<1x256xf32>
    %263 = vector.shape_cast %262 : vector<1x256xf32> to vector<1x1x256xf32>
    %264 = vector.broadcast %263 : vector<1x1x256xf32> to vector<8x8x256xf32>
    %265 = arith.mulf %261, %264 : vector<8x8x256xf32>
    %266 = arith.addf %259, %265 : vector<8x8x256xf32>
    %c4_194 = arith.constant 4 : index
    %c0_195 = arith.constant 0 : index
    %c0_196 = arith.constant 0 : index
    %c0_197 = arith.constant 0 : index
    %267 = vector.load %arg17[%c4_194, %c0_195, %c0_196, %c0_197] : memref<5x12x12x256xf32, #tpu.memory_space<vmem>>, vector<1x8x8x256xf32>
    %268 = vector.shape_cast %267 : vector<1x8x8x256xf32> to vector<8x8x256xf32>
    %c2_198 = arith.constant 2 : index
    %c0_199 = arith.constant 0 : index
    %269 = vector.load %arg3[%c2_198, %c0_199] : memref<27x256xf32, #tpu.memory_space<vmem>>, vector<1x256xf32>
    %270 = vector.shape_cast %269 : vector<1x256xf32> to vector<1x1x256xf32>
    %271 = vector.broadcast %270 : vector<1x1x256xf32> to vector<8x8x256xf32>
    %272 = arith.mulf %268, %271 : vector<8x8x256xf32>
    %273 = arith.addf %266, %272 : vector<8x8x256xf32>
    %c0_200 = arith.constant 0 : index
    %c0_201 = arith.constant 0 : index
    %c2_202 = arith.constant 2 : index
    %c0_203 = arith.constant 0 : index
    %274 = vector.load %arg17[%c0_200, %c0_201, %c2_202, %c0_203] : memref<5x12x12x256xf32, #tpu.memory_space<vmem>>, vector<1x8x8x256xf32>
    %275 = vector.shape_cast %274 : vector<1x8x8x256xf32> to vector<8x8x256xf32>
    %c3_204 = arith.constant 3 : index
    %c0_205 = arith.constant 0 : index
    %276 = vector.load %arg3[%c3_204, %c0_205] : memref<27x256xf32, #tpu.memory_space<vmem>>, vector<1x256xf32>
    %277 = vector.shape_cast %276 : vector<1x256xf32> to vector<1x1x256xf32>
    %278 = vector.broadcast %277 : vector<1x1x256xf32> to vector<8x8x256xf32>
    %279 = arith.mulf %275, %278 : vector<8x8x256xf32>
    %280 = arith.addf %273, %279 : vector<8x8x256xf32>
    %c2_206 = arith.constant 2 : index
    %c0_207 = arith.constant 0 : index
    %c2_208 = arith.constant 2 : index
    %c0_209 = arith.constant 0 : index
    %281 = vector.load %arg17[%c2_206, %c0_207, %c2_208, %c0_209] : memref<5x12x12x256xf32, #tpu.memory_space<vmem>>, vector<1x8x8x256xf32>
    %282 = vector.shape_cast %281 : vector<1x8x8x256xf32> to vector<8x8x256xf32>
    %c4_210 = arith.constant 4 : index
    %c0_211 = arith.constant 0 : index
    %283 = vector.load %arg3[%c4_210, %c0_211] : memref<27x256xf32, #tpu.memory_space<vmem>>, vector<1x256xf32>
    %284 = vector.shape_cast %283 : vector<1x256xf32> to vector<1x1x256xf32>
    %285 = vector.broadcast %284 : vector<1x1x256xf32> to vector<8x8x256xf32>
    %286 = arith.mulf %282, %285 : vector<8x8x256xf32>
    %287 = arith.addf %280, %286 : vector<8x8x256xf32>
    %c4_212 = arith.constant 4 : index
    %c0_213 = arith.constant 0 : index
    %c2_214 = arith.constant 2 : index
    %c0_215 = arith.constant 0 : index
    %288 = vector.load %arg17[%c4_212, %c0_213, %c2_214, %c0_215] : memref<5x12x12x256xf32, #tpu.memory_space<vmem>>, vector<1x8x8x256xf32>
    %289 = vector.shape_cast %288 : vector<1x8x8x256xf32> to vector<8x8x256xf32>
    %c5_216 = arith.constant 5 : index
    %c0_217 = arith.constant 0 : index
    %290 = vector.load %arg3[%c5_216, %c0_217] : memref<27x256xf32, #tpu.memory_space<vmem>>, vector<1x256xf32>
    %291 = vector.shape_cast %290 : vector<1x256xf32> to vector<1x1x256xf32>
    %292 = vector.broadcast %291 : vector<1x1x256xf32> to vector<8x8x256xf32>
    %293 = arith.mulf %289, %292 : vector<8x8x256xf32>
    %294 = arith.addf %287, %293 : vector<8x8x256xf32>
    %c0_218 = arith.constant 0 : index
    %c0_219 = arith.constant 0 : index
    %c4_220 = arith.constant 4 : index
    %c0_221 = arith.constant 0 : index
    %295 = vector.load %arg17[%c0_218, %c0_219, %c4_220, %c0_221] : memref<5x12x12x256xf32, #tpu.memory_space<vmem>>, vector<1x8x8x256xf32>
    %296 = vector.shape_cast %295 : vector<1x8x8x256xf32> to vector<8x8x256xf32>
    %c6_222 = arith.constant 6 : index
    %c0_223 = arith.constant 0 : index
    %297 = vector.load %arg3[%c6_222, %c0_223] : memref<27x256xf32, #tpu.memory_space<vmem>>, vector<1x256xf32>
    %298 = vector.shape_cast %297 : vector<1x256xf32> to vector<1x1x256xf32>
    %299 = vector.broadcast %298 : vector<1x1x256xf32> to vector<8x8x256xf32>
    %300 = arith.mulf %296, %299 : vector<8x8x256xf32>
    %301 = arith.addf %294, %300 : vector<8x8x256xf32>
    %c2_224 = arith.constant 2 : index
    %c0_225 = arith.constant 0 : index
    %c4_226 = arith.constant 4 : index
    %c0_227 = arith.constant 0 : index
    %302 = vector.load %arg17[%c2_224, %c0_225, %c4_226, %c0_227] : memref<5x12x12x256xf32, #tpu.memory_space<vmem>>, vector<1x8x8x256xf32>
    %303 = vector.shape_cast %302 : vector<1x8x8x256xf32> to vector<8x8x256xf32>
    %c7_228 = arith.constant 7 : index
    %c0_229 = arith.constant 0 : index
    %304 = vector.load %arg3[%c7_228, %c0_229] : memref<27x256xf32, #tpu.memory_space<vmem>>, vector<1x256xf32>
    %305 = vector.shape_cast %304 : vector<1x256xf32> to vector<1x1x256xf32>
    %306 = vector.broadcast %305 : vector<1x1x256xf32> to vector<8x8x256xf32>
    %307 = arith.mulf %303, %306 : vector<8x8x256xf32>
    %308 = arith.addf %301, %307 : vector<8x8x256xf32>
    %c4_230 = arith.constant 4 : index
    %c0_231 = arith.constant 0 : index
    %c4_232 = arith.constant 4 : index
    %c0_233 = arith.constant 0 : index
    %309 = vector.load %arg17[%c4_230, %c0_231, %c4_232, %c0_233] : memref<5x12x12x256xf32, #tpu.memory_space<vmem>>, vector<1x8x8x256xf32>
    %310 = vector.shape_cast %309 : vector<1x8x8x256xf32> to vector<8x8x256xf32>
    %c8_234 = arith.constant 8 : index
    %c0_235 = arith.constant 0 : index
    %311 = vector.load %arg3[%c8_234, %c0_235] : memref<27x256xf32, #tpu.memory_space<vmem>>, vector<1x256xf32>
    %312 = vector.shape_cast %311 : vector<1x256xf32> to vector<1x1x256xf32>
    %313 = vector.broadcast %312 : vector<1x1x256xf32> to vector<8x8x256xf32>
    %314 = arith.mulf %310, %313 : vector<8x8x256xf32>
    %315 = arith.addf %308, %314 : vector<8x8x256xf32>
    %c0_236 = arith.constant 0 : index
    %c2_237 = arith.constant 2 : index
    %c0_238 = arith.constant 0 : index
    %c0_239 = arith.constant 0 : index
    %316 = vector.load %arg17[%c0_236, %c2_237, %c0_238, %c0_239] : memref<5x12x12x256xf32, #tpu.memory_space<vmem>>, vector<1x8x8x256xf32>
    %317 = vector.shape_cast %316 : vector<1x8x8x256xf32> to vector<8x8x256xf32>
    %c9_240 = arith.constant 9 : index
    %c0_241 = arith.constant 0 : index
    %318 = vector.load %arg3[%c9_240, %c0_241] : memref<27x256xf32, #tpu.memory_space<vmem>>, vector<1x256xf32>
    %319 = vector.shape_cast %318 : vector<1x256xf32> to vector<1x1x256xf32>
    %320 = vector.broadcast %319 : vector<1x1x256xf32> to vector<8x8x256xf32>
    %321 = arith.mulf %317, %320 : vector<8x8x256xf32>
    %322 = arith.addf %315, %321 : vector<8x8x256xf32>
    %c2_242 = arith.constant 2 : index
    %c2_243 = arith.constant 2 : index
    %c0_244 = arith.constant 0 : index
    %c0_245 = arith.constant 0 : index
    %323 = vector.load %arg17[%c2_242, %c2_243, %c0_244, %c0_245] : memref<5x12x12x256xf32, #tpu.memory_space<vmem>>, vector<1x8x8x256xf32>
    %324 = vector.shape_cast %323 : vector<1x8x8x256xf32> to vector<8x8x256xf32>
    %c10_246 = arith.constant 10 : index
    %c0_247 = arith.constant 0 : index
    %325 = vector.load %arg3[%c10_246, %c0_247] : memref<27x256xf32, #tpu.memory_space<vmem>>, vector<1x256xf32>
    %326 = vector.shape_cast %325 : vector<1x256xf32> to vector<1x1x256xf32>
    %327 = vector.broadcast %326 : vector<1x1x256xf32> to vector<8x8x256xf32>
    %328 = arith.mulf %324, %327 : vector<8x8x256xf32>
    %329 = arith.addf %322, %328 : vector<8x8x256xf32>
    %c4_248 = arith.constant 4 : index
    %c2_249 = arith.constant 2 : index
    %c0_250 = arith.constant 0 : index
    %c0_251 = arith.constant 0 : index
    %330 = vector.load %arg17[%c4_248, %c2_249, %c0_250, %c0_251] : memref<5x12x12x256xf32, #tpu.memory_space<vmem>>, vector<1x8x8x256xf32>
    %331 = vector.shape_cast %330 : vector<1x8x8x256xf32> to vector<8x8x256xf32>
    %c11_252 = arith.constant 11 : index
    %c0_253 = arith.constant 0 : index
    %332 = vector.load %arg3[%c11_252, %c0_253] : memref<27x256xf32, #tpu.memory_space<vmem>>, vector<1x256xf32>
    %333 = vector.shape_cast %332 : vector<1x256xf32> to vector<1x1x256xf32>
    %334 = vector.broadcast %333 : vector<1x1x256xf32> to vector<8x8x256xf32>
    %335 = arith.mulf %331, %334 : vector<8x8x256xf32>
    %336 = arith.addf %329, %335 : vector<8x8x256xf32>
    %c0_254 = arith.constant 0 : index
    %c2_255 = arith.constant 2 : index
    %c2_256 = arith.constant 2 : index
    %c0_257 = arith.constant 0 : index
    %337 = vector.load %arg17[%c0_254, %c2_255, %c2_256, %c0_257] : memref<5x12x12x256xf32, #tpu.memory_space<vmem>>, vector<1x8x8x256xf32>
    %338 = vector.shape_cast %337 : vector<1x8x8x256xf32> to vector<8x8x256xf32>
    %c12_258 = arith.constant 12 : index
    %c0_259 = arith.constant 0 : index
    %339 = vector.load %arg3[%c12_258, %c0_259] : memref<27x256xf32, #tpu.memory_space<vmem>>, vector<1x256xf32>
    %340 = vector.shape_cast %339 : vector<1x256xf32> to vector<1x1x256xf32>
    %341 = vector.broadcast %340 : vector<1x1x256xf32> to vector<8x8x256xf32>
    %342 = arith.mulf %338, %341 : vector<8x8x256xf32>
    %343 = arith.addf %336, %342 : vector<8x8x256xf32>
    %c2_260 = arith.constant 2 : index
    %c2_261 = arith.constant 2 : index
    %c2_262 = arith.constant 2 : index
    %c0_263 = arith.constant 0 : index
    %344 = vector.load %arg17[%c2_260, %c2_261, %c2_262, %c0_263] : memref<5x12x12x256xf32, #tpu.memory_space<vmem>>, vector<1x8x8x256xf32>
    %345 = vector.shape_cast %344 : vector<1x8x8x256xf32> to vector<8x8x256xf32>
    %c13_264 = arith.constant 13 : index
    %c0_265 = arith.constant 0 : index
    %346 = vector.load %arg3[%c13_264, %c0_265] : memref<27x256xf32, #tpu.memory_space<vmem>>, vector<1x256xf32>
    %347 = vector.shape_cast %346 : vector<1x256xf32> to vector<1x1x256xf32>
    %348 = vector.broadcast %347 : vector<1x1x256xf32> to vector<8x8x256xf32>
    %349 = arith.mulf %345, %348 : vector<8x8x256xf32>
    %350 = arith.addf %343, %349 : vector<8x8x256xf32>
    %c4_266 = arith.constant 4 : index
    %c2_267 = arith.constant 2 : index
    %c2_268 = arith.constant 2 : index
    %c0_269 = arith.constant 0 : index
    %351 = vector.load %arg17[%c4_266, %c2_267, %c2_268, %c0_269] : memref<5x12x12x256xf32, #tpu.memory_space<vmem>>, vector<1x8x8x256xf32>
    %352 = vector.shape_cast %351 : vector<1x8x8x256xf32> to vector<8x8x256xf32>
    %c14_270 = arith.constant 14 : index
    %c0_271 = arith.constant 0 : index
    %353 = vector.load %arg3[%c14_270, %c0_271] : memref<27x256xf32, #tpu.memory_space<vmem>>, vector<1x256xf32>
    %354 = vector.shape_cast %353 : vector<1x256xf32> to vector<1x1x256xf32>
    %355 = vector.broadcast %354 : vector<1x1x256xf32> to vector<8x8x256xf32>
    %356 = arith.mulf %352, %355 : vector<8x8x256xf32>
    %357 = arith.addf %350, %356 : vector<8x8x256xf32>
    %c0_272 = arith.constant 0 : index
    %c2_273 = arith.constant 2 : index
    %c4_274 = arith.constant 4 : index
    %c0_275 = arith.constant 0 : index
    %358 = vector.load %arg17[%c0_272, %c2_273, %c4_274, %c0_275] : memref<5x12x12x256xf32, #tpu.memory_space<vmem>>, vector<1x8x8x256xf32>
    %359 = vector.shape_cast %358 : vector<1x8x8x256xf32> to vector<8x8x256xf32>
    %c15_276 = arith.constant 15 : index
    %c0_277 = arith.constant 0 : index
    %360 = vector.load %arg3[%c15_276, %c0_277] : memref<27x256xf32, #tpu.memory_space<vmem>>, vector<1x256xf32>
    %361 = vector.shape_cast %360 : vector<1x256xf32> to vector<1x1x256xf32>
    %362 = vector.broadcast %361 : vector<1x1x256xf32> to vector<8x8x256xf32>
    %363 = arith.mulf %359, %362 : vector<8x8x256xf32>
    %364 = arith.addf %357, %363 : vector<8x8x256xf32>
    %c2_278 = arith.constant 2 : index
    %c2_279 = arith.constant 2 : index
    %c4_280 = arith.constant 4 : index
    %c0_281 = arith.constant 0 : index
    %365 = vector.load %arg17[%c2_278, %c2_279, %c4_280, %c0_281] : memref<5x12x12x256xf32, #tpu.memory_space<vmem>>, vector<1x8x8x256xf32>
    %366 = vector.shape_cast %365 : vector<1x8x8x256xf32> to vector<8x8x256xf32>
    %c16_282 = arith.constant 16 : index
    %c0_283 = arith.constant 0 : index
    %367 = vector.load %arg3[%c16_282, %c0_283] : memref<27x256xf32, #tpu.memory_space<vmem>>, vector<1x256xf32>
    %368 = vector.shape_cast %367 : vector<1x256xf32> to vector<1x1x256xf32>
    %369 = vector.broadcast %368 : vector<1x1x256xf32> to vector<8x8x256xf32>
    %370 = arith.mulf %366, %369 : vector<8x8x256xf32>
    %371 = arith.addf %364, %370 : vector<8x8x256xf32>
    %c4_284 = arith.constant 4 : index
    %c2_285 = arith.constant 2 : index
    %c4_286 = arith.constant 4 : index
    %c0_287 = arith.constant 0 : index
    %372 = vector.load %arg17[%c4_284, %c2_285, %c4_286, %c0_287] : memref<5x12x12x256xf32, #tpu.memory_space<vmem>>, vector<1x8x8x256xf32>
    %373 = vector.shape_cast %372 : vector<1x8x8x256xf32> to vector<8x8x256xf32>
    %c17_288 = arith.constant 17 : index
    %c0_289 = arith.constant 0 : index
    %374 = vector.load %arg3[%c17_288, %c0_289] : memref<27x256xf32, #tpu.memory_space<vmem>>, vector<1x256xf32>
    %375 = vector.shape_cast %374 : vector<1x256xf32> to vector<1x1x256xf32>
    %376 = vector.broadcast %375 : vector<1x1x256xf32> to vector<8x8x256xf32>
    %377 = arith.mulf %373, %376 : vector<8x8x256xf32>
    %378 = arith.addf %371, %377 : vector<8x8x256xf32>
    %c0_290 = arith.constant 0 : index
    %c4_291 = arith.constant 4 : index
    %c0_292 = arith.constant 0 : index
    %c0_293 = arith.constant 0 : index
    %379 = vector.load %arg17[%c0_290, %c4_291, %c0_292, %c0_293] : memref<5x12x12x256xf32, #tpu.memory_space<vmem>>, vector<1x8x8x256xf32>
    %380 = vector.shape_cast %379 : vector<1x8x8x256xf32> to vector<8x8x256xf32>
    %c18_294 = arith.constant 18 : index
    %c0_295 = arith.constant 0 : index
    %381 = vector.load %arg3[%c18_294, %c0_295] : memref<27x256xf32, #tpu.memory_space<vmem>>, vector<1x256xf32>
    %382 = vector.shape_cast %381 : vector<1x256xf32> to vector<1x1x256xf32>
    %383 = vector.broadcast %382 : vector<1x1x256xf32> to vector<8x8x256xf32>
    %384 = arith.mulf %380, %383 : vector<8x8x256xf32>
    %385 = arith.addf %378, %384 : vector<8x8x256xf32>
    %c2_296 = arith.constant 2 : index
    %c4_297 = arith.constant 4 : index
    %c0_298 = arith.constant 0 : index
    %c0_299 = arith.constant 0 : index
    %386 = vector.load %arg17[%c2_296, %c4_297, %c0_298, %c0_299] : memref<5x12x12x256xf32, #tpu.memory_space<vmem>>, vector<1x8x8x256xf32>
    %387 = vector.shape_cast %386 : vector<1x8x8x256xf32> to vector<8x8x256xf32>
    %c19_300 = arith.constant 19 : index
    %c0_301 = arith.constant 0 : index
    %388 = vector.load %arg3[%c19_300, %c0_301] : memref<27x256xf32, #tpu.memory_space<vmem>>, vector<1x256xf32>
    %389 = vector.shape_cast %388 : vector<1x256xf32> to vector<1x1x256xf32>
    %390 = vector.broadcast %389 : vector<1x1x256xf32> to vector<8x8x256xf32>
    %391 = arith.mulf %387, %390 : vector<8x8x256xf32>
    %392 = arith.addf %385, %391 : vector<8x8x256xf32>
    %c4_302 = arith.constant 4 : index
    %c4_303 = arith.constant 4 : index
    %c0_304 = arith.constant 0 : index
    %c0_305 = arith.constant 0 : index
    %393 = vector.load %arg17[%c4_302, %c4_303, %c0_304, %c0_305] : memref<5x12x12x256xf32, #tpu.memory_space<vmem>>, vector<1x8x8x256xf32>
    %394 = vector.shape_cast %393 : vector<1x8x8x256xf32> to vector<8x8x256xf32>
    %c20_306 = arith.constant 20 : index
    %c0_307 = arith.constant 0 : index
    %395 = vector.load %arg3[%c20_306, %c0_307] : memref<27x256xf32, #tpu.memory_space<vmem>>, vector<1x256xf32>
    %396 = vector.shape_cast %395 : vector<1x256xf32> to vector<1x1x256xf32>
    %397 = vector.broadcast %396 : vector<1x1x256xf32> to vector<8x8x256xf32>
    %398 = arith.mulf %394, %397 : vector<8x8x256xf32>
    %399 = arith.addf %392, %398 : vector<8x8x256xf32>
    %c0_308 = arith.constant 0 : index
    %c4_309 = arith.constant 4 : index
    %c2_310 = arith.constant 2 : index
    %c0_311 = arith.constant 0 : index
    %400 = vector.load %arg17[%c0_308, %c4_309, %c2_310, %c0_311] : memref<5x12x12x256xf32, #tpu.memory_space<vmem>>, vector<1x8x8x256xf32>
    %401 = vector.shape_cast %400 : vector<1x8x8x256xf32> to vector<8x8x256xf32>
    %c21_312 = arith.constant 21 : index
    %c0_313 = arith.constant 0 : index
    %402 = vector.load %arg3[%c21_312, %c0_313] : memref<27x256xf32, #tpu.memory_space<vmem>>, vector<1x256xf32>
    %403 = vector.shape_cast %402 : vector<1x256xf32> to vector<1x1x256xf32>
    %404 = vector.broadcast %403 : vector<1x1x256xf32> to vector<8x8x256xf32>
    %405 = arith.mulf %401, %404 : vector<8x8x256xf32>
    %406 = arith.addf %399, %405 : vector<8x8x256xf32>
    %c2_314 = arith.constant 2 : index
    %c4_315 = arith.constant 4 : index
    %c2_316 = arith.constant 2 : index
    %c0_317 = arith.constant 0 : index
    %407 = vector.load %arg17[%c2_314, %c4_315, %c2_316, %c0_317] : memref<5x12x12x256xf32, #tpu.memory_space<vmem>>, vector<1x8x8x256xf32>
    %408 = vector.shape_cast %407 : vector<1x8x8x256xf32> to vector<8x8x256xf32>
    %c22_318 = arith.constant 22 : index
    %c0_319 = arith.constant 0 : index
    %409 = vector.load %arg3[%c22_318, %c0_319] : memref<27x256xf32, #tpu.memory_space<vmem>>, vector<1x256xf32>
    %410 = vector.shape_cast %409 : vector<1x256xf32> to vector<1x1x256xf32>
    %411 = vector.broadcast %410 : vector<1x1x256xf32> to vector<8x8x256xf32>
    %412 = arith.mulf %408, %411 : vector<8x8x256xf32>
    %413 = arith.addf %406, %412 : vector<8x8x256xf32>
    %c4_320 = arith.constant 4 : index
    %c4_321 = arith.constant 4 : index
    %c2_322 = arith.constant 2 : index
    %c0_323 = arith.constant 0 : index
    %414 = vector.load %arg17[%c4_320, %c4_321, %c2_322, %c0_323] : memref<5x12x12x256xf32, #tpu.memory_space<vmem>>, vector<1x8x8x256xf32>
    %415 = vector.shape_cast %414 : vector<1x8x8x256xf32> to vector<8x8x256xf32>
    %c23_324 = arith.constant 23 : index
    %c0_325 = arith.constant 0 : index
    %416 = vector.load %arg3[%c23_324, %c0_325] : memref<27x256xf32, #tpu.memory_space<vmem>>, vector<1x256xf32>
    %417 = vector.shape_cast %416 : vector<1x256xf32> to vector<1x1x256xf32>
    %418 = vector.broadcast %417 : vector<1x1x256xf32> to vector<8x8x256xf32>
    %419 = arith.mulf %415, %418 : vector<8x8x256xf32>
    %420 = arith.addf %413, %419 : vector<8x8x256xf32>
    %c0_326 = arith.constant 0 : index
    %c4_327 = arith.constant 4 : index
    %c4_328 = arith.constant 4 : index
    %c0_329 = arith.constant 0 : index
    %421 = vector.load %arg17[%c0_326, %c4_327, %c4_328, %c0_329] : memref<5x12x12x256xf32, #tpu.memory_space<vmem>>, vector<1x8x8x256xf32>
    %422 = vector.shape_cast %421 : vector<1x8x8x256xf32> to vector<8x8x256xf32>
    %c24_330 = arith.constant 24 : index
    %c0_331 = arith.constant 0 : index
    %423 = vector.load %arg3[%c24_330, %c0_331] : memref<27x256xf32, #tpu.memory_space<vmem>>, vector<1x256xf32>
    %424 = vector.shape_cast %423 : vector<1x256xf32> to vector<1x1x256xf32>
    %425 = vector.broadcast %424 : vector<1x1x256xf32> to vector<8x8x256xf32>
    %426 = arith.mulf %422, %425 : vector<8x8x256xf32>
    %427 = arith.addf %420, %426 : vector<8x8x256xf32>
    %c2_332 = arith.constant 2 : index
    %c4_333 = arith.constant 4 : index
    %c4_334 = arith.constant 4 : index
    %c0_335 = arith.constant 0 : index
    %428 = vector.load %arg17[%c2_332, %c4_333, %c4_334, %c0_335] : memref<5x12x12x256xf32, #tpu.memory_space<vmem>>, vector<1x8x8x256xf32>
    %429 = vector.shape_cast %428 : vector<1x8x8x256xf32> to vector<8x8x256xf32>
    %c25_336 = arith.constant 25 : index
    %c0_337 = arith.constant 0 : index
    %430 = vector.load %arg3[%c25_336, %c0_337] : memref<27x256xf32, #tpu.memory_space<vmem>>, vector<1x256xf32>
    %431 = vector.shape_cast %430 : vector<1x256xf32> to vector<1x1x256xf32>
    %432 = vector.broadcast %431 : vector<1x1x256xf32> to vector<8x8x256xf32>
    %433 = arith.mulf %429, %432 : vector<8x8x256xf32>
    %434 = arith.addf %427, %433 : vector<8x8x256xf32>
    %c4_338 = arith.constant 4 : index
    %c4_339 = arith.constant 4 : index
    %c4_340 = arith.constant 4 : index
    %c0_341 = arith.constant 0 : index
    %435 = vector.load %arg17[%c4_338, %c4_339, %c4_340, %c0_341] : memref<5x12x12x256xf32, #tpu.memory_space<vmem>>, vector<1x8x8x256xf32>
    %436 = vector.shape_cast %435 : vector<1x8x8x256xf32> to vector<8x8x256xf32>
    %c26_342 = arith.constant 26 : index
    %c0_343 = arith.constant 0 : index
    %437 = vector.load %arg3[%c26_342, %c0_343] : memref<27x256xf32, #tpu.memory_space<vmem>>, vector<1x256xf32>
    %438 = vector.shape_cast %437 : vector<1x256xf32> to vector<1x1x256xf32>
    %439 = vector.broadcast %438 : vector<1x1x256xf32> to vector<8x8x256xf32>
    %440 = arith.mulf %436, %439 : vector<8x8x256xf32>
    %441 = arith.addf %434, %440 : vector<8x8x256xf32>
    %c0_344 = arith.constant 0 : index
    %c0_345 = arith.constant 0 : index
    %442 = vector.load %arg6[%c0_344, %c0_345] : memref<1x256xf32, #tpu.memory_space<vmem>>, vector<1x256xf32>
    %443 = vector.shape_cast %442 : vector<1x256xf32> to vector<1x1x256xf32>
    %444 = vector.broadcast %443 : vector<1x1x256xf32> to vector<8x8x256xf32>
    %445 = arith.mulf %441, %444 : vector<8x8x256xf32>
    %c0_346 = arith.constant 0 : index
    %c0_347 = arith.constant 0 : index
    %446 = vector.load %arg7[%c0_346, %c0_347] : memref<1x256xf32, #tpu.memory_space<vmem>>, vector<1x256xf32>
    %447 = vector.shape_cast %446 : vector<1x256xf32> to vector<1x1x256xf32>
    %448 = vector.broadcast %447 : vector<1x1x256xf32> to vector<8x8x256xf32>
    %449 = arith.addf %445, %448 : vector<8x8x256xf32>
    %cst_348 = arith.constant 0.000000e+00 : f32
    %450 = vector.broadcast %cst_348 : f32 to vector<8x8x256xf32>
    %451 = arith.cmpf oge, %449, %450 : vector<8x8x256xf32>
    %cst_349 = arith.constant 0.00999999977 : f32
    %452 = vector.broadcast %cst_349 : f32 to vector<8x8x256xf32>
    %453 = arith.mulf %452, %449 : vector<8x8x256xf32>
    %454 = arith.select %451, %449, %453 : vector<8x8x256xi1>, vector<8x8x256xf32>
    %c0_350 = arith.constant 0 : index
    %c0_351 = arith.constant 0 : index
    %c0_352 = arith.constant 0 : index
    %455 = vector.load %arg18[%c0_350, %c0_351, %c0_352] : memref<8x8x256xf32, #tpu.memory_space<vmem>>, vector<8x8x256xf32>
    %456 = arith.addf %455, %454 : vector<8x8x256xf32>
    %457 = vector.shape_cast %456 : vector<8x8x256xf32> to vector<64x256xf32>
    %cst_353 = arith.constant dense<0.000000e+00> : vector<256xf32>
    %458 = vector.multi_reduction <add>, %457, %cst_353 [0] : vector<64x256xf32> to vector<256xf32>
    %459 = vector.shape_cast %458 : vector<256xf32> to vector<1x256xf32>
    %cst_354 = arith.constant 0.001953125 : f32
    %460 = vector.broadcast %cst_354 : f32 to vector<1x256xf32>
    %461 = arith.mulf %459, %460 : vector<1x256xf32>
    %c0_355 = arith.constant 0 : index
    %c0_356 = arith.constant 0 : index
    %462 = vector.load %arg8[%c0_355, %c0_356] : memref<256x32xf32, #tpu.memory_space<vmem>>, vector<256x32xf32>
    %cst_357 = arith.constant dense<0.000000e+00> : vector<1x32xf32>
    %463 = tpu.matmul %461, %462, %cst_357 {dimension_numbers = #tpu.dot_dimension_numbers<[1], [0], [0], [1], [0, 0, 1, 1], [], []>} : vector<1x256xf32>, vector<256x32xf32>, vector<1x32xf32> -> vector<1x32xf32>
    %c0_358 = arith.constant 0 : index
    %c0_359 = arith.constant 0 : index
    %464 = vector.load %arg9[%c0_358, %c0_359] : memref<1x32xf32, #tpu.memory_space<vmem>>, vector<1x32xf32>
    %465 = arith.addf %463, %464 : vector<1x32xf32>
    %c0_360 = arith.constant 0 : index
    %c0_361 = arith.constant 0 : index
    %466 = vector.load %arg10[%c0_360, %c0_361] : memref<1x32xf32, #tpu.memory_space<vmem>>, vector<1x32xf32>
    %467 = arith.mulf %465, %466 : vector<1x32xf32>
    %c0_362 = arith.constant 0 : index
    %c0_363 = arith.constant 0 : index
    %468 = vector.load %arg11[%c0_362, %c0_363] : memref<1x32xf32, #tpu.memory_space<vmem>>, vector<1x32xf32>
    %469 = arith.addf %467, %468 : vector<1x32xf32>
    %cst_364 = arith.constant 0.000000e+00 : f32
    %470 = vector.broadcast %cst_364 : f32 to vector<1x32xf32>
    %471 = arith.cmpf oge, %469, %470 : vector<1x32xf32>
    %cst_365 = arith.constant 0.00999999977 : f32
    %472 = vector.broadcast %cst_365 : f32 to vector<1x32xf32>
    %473 = arith.mulf %472, %469 : vector<1x32xf32>
    %474 = arith.select %471, %469, %473 : vector<1x32xi1>, vector<1x32xf32>
    %c0_366 = arith.constant 0 : index
    %c0_367 = arith.constant 0 : index
    %475 = vector.load %arg12[%c0_366, %c0_367] : memref<32x256xf32, #tpu.memory_space<vmem>>, vector<32x256xf32>
    %cst_368 = arith.constant dense<0.000000e+00> : vector<1x256xf32>
    %476 = tpu.matmul %474, %475, %cst_368 {dimension_numbers = #tpu.dot_dimension_numbers<[1], [0], [0], [1], [0, 0, 1, 1], [], []>} : vector<1x32xf32>, vector<32x256xf32>, vector<1x256xf32> -> vector<1x256xf32>
    %c0_369 = arith.constant 0 : index
    %c0_370 = arith.constant 0 : index
    %477 = vector.load %arg13[%c0_369, %c0_370] : memref<1x256xf32, #tpu.memory_space<vmem>>, vector<1x256xf32>
    %478 = arith.addf %476, %477 : vector<1x256xf32>
    %c0_371 = arith.constant 0 : index
    %c0_372 = arith.constant 0 : index
    %479 = vector.load %arg14[%c0_371, %c0_372] : memref<32x256xf32, #tpu.memory_space<vmem>>, vector<32x256xf32>
    %cst_373 = arith.constant dense<0.000000e+00> : vector<1x256xf32>
    %480 = tpu.matmul %474, %479, %cst_373 {dimension_numbers = #tpu.dot_dimension_numbers<[1], [0], [0], [1], [0, 0, 1, 1], [], []>} : vector<1x32xf32>, vector<32x256xf32>, vector<1x256xf32> -> vector<1x256xf32>
    %c0_374 = arith.constant 0 : index
    %c0_375 = arith.constant 0 : index
    %481 = vector.load %arg15[%c0_374, %c0_375] : memref<1x256xf32, #tpu.memory_space<vmem>>, vector<1x256xf32>
    %482 = arith.addf %480, %481 : vector<1x256xf32>
    %483 = arith.maximumf %478, %482 : vector<1x256xf32>
    %484 = arith.subf %478, %483 : vector<1x256xf32>
    %485 = math.exp %484 : vector<1x256xf32>
    %486 = arith.subf %482, %483 : vector<1x256xf32>
    %487 = math.exp %486 : vector<1x256xf32>
    %488 = arith.addf %485, %487 : vector<1x256xf32>
    %cst_376 = arith.constant 1.000000e+00 : f32
    %489 = vector.broadcast %cst_376 : f32 to vector<1x256xf32>
    %490 = arith.divf %489, %488 : vector<1x256xf32>
    %491 = arith.mulf %485, %490 : vector<1x256xf32>
    %492 = arith.mulf %487, %490 : vector<1x256xf32>
    %493 = vector.shape_cast %491 : vector<1x256xf32> to vector<1x1x256xf32>
    %494 = vector.broadcast %493 : vector<1x1x256xf32> to vector<8x8x256xf32>
    %495 = arith.mulf %455, %494 : vector<8x8x256xf32>
    %496 = vector.shape_cast %492 : vector<1x256xf32> to vector<1x1x256xf32>
    %497 = vector.broadcast %496 : vector<1x1x256xf32> to vector<8x8x256xf32>
    %498 = arith.mulf %454, %497 : vector<8x8x256xf32>
    %499 = arith.addf %495, %498 : vector<8x8x256xf32>
    %c0_377 = arith.constant 0 : index
    %c0_378 = arith.constant 0 : index
    %c0_379 = arith.constant 0 : index
    %c0_380 = arith.constant 0 : index
    %500 = vector.load %arg16[%c0_377, %c0_378, %c0_379, %c0_380] : memref<1x8x8x256xf32, #tpu.memory_space<vmem>>, vector<1x8x8x256xf32>
    %501 = vector.shape_cast %500 : vector<1x8x8x256xf32> to vector<8x8x256xf32>
    %502 = vector.shape_cast %499 : vector<8x8x256xf32> to vector<1x8x8x256xf32>
    tpu.vector_store %arg16[%c0_377, %c0_378, %c0_379, %c0_380], %502 {strides = array<i32>} : memref<1x8x8x256xf32, #tpu.memory_space<vmem>>, vector<1x8x8x256xf32>,
    return
  }
  func.func @transform_0(%arg0: i32) -> (i32, i32, i32, i32) {
    %c0_i32 = arith.constant 0 : i32
    %c0_i32_0 = arith.constant 0 : i32
    %c0_i32_1 = arith.constant 0 : i32
    %c0_i32_2 = arith.constant 0 : i32
    return %arg0, %c0_i32, %c0_i32_0, %c0_i32_1 : i32, i32, i32, i32
  }
  func.func @transform_1(%arg0: i32) -> (i32, i32) {
    %c0_i32 = arith.constant 0 : i32
    %c0_i32_0 = arith.constant 0 : i32
    %c0_i32_1 = arith.constant 0 : i32
    return %c0_i32, %c0_i32_0 : i32, i32
  }
  func.func @transform_2(%arg0: i32) -> (i32, i32) {
    %c0_i32 = arith.constant 0 : i32
    %c0_i32_0 = arith.constant 0 : i32
    %c0_i32_1 = arith.constant 0 : i32
    return %c0_i32, %c0_i32_0 : i32, i32
  }
  func.func @transform_3(%arg0: i32) -> (i32, i32) {
    %c0_i32 = arith.constant 0 : i32
    %c0_i32_0 = arith.constant 0 : i32
    %c0_i32_1 = arith.constant 0 : i32
    return %c0_i32, %c0_i32_0 : i32, i32
  }
  func.func @transform_4(%arg0: i32) -> (i32, i32) {
    %c0_i32 = arith.constant 0 : i32
    %c0_i32_0 = arith.constant 0 : i32
    %c0_i32_1 = arith.constant 0 : i32
    return %c0_i32, %c0_i32_0 : i32, i32
  }
  func.func @transform_5(%arg0: i32) -> (i32, i32) {
    %c0_i32 = arith.constant 0 : i32
    %c0_i32_0 = arith.constant 0 : i32
    %c0_i32_1 = arith.constant 0 : i32
    return %c0_i32, %c0_i32_0 : i32, i32
  }
  func.func @transform_6(%arg0: i32) -> (i32, i32) {
    %c0_i32 = arith.constant 0 : i32
    %c0_i32_0 = arith.constant 0 : i32
    %c0_i32_1 = arith.constant 0 : i32
    return %c0_i32, %c0_i32_0 : i32, i32
  }
  func.func @transform_7(%arg0: i32) -> (i32, i32) {
    %c0_i32 = arith.constant 0 : i32
    %c0_i32_0 = arith.constant 0 : i32
    %c0_i32_1 = arith.constant 0 : i32
    return %c0_i32, %c0_i32_0 : i32, i32
  }
  func.func @transform_8(%arg0: i32) -> (i32, i32) {
    %c0_i32 = arith.constant 0 : i32
    %c0_i32_0 = arith.constant 0 : i32
    %c0_i32_1 = arith.constant 0 : i32
    return %c0_i32, %c0_i32_0 : i32, i32
  }
  func.func @transform_9(%arg0: i32) -> (i32, i32) {
    %c0_i32 = arith.constant 0 : i32
    %c0_i32_0 = arith.constant 0 : i32
    %c0_i32_1 = arith.constant 0 : i32
    return %c0_i32, %c0_i32_0 : i32, i32
  }
  func.func @transform_10(%arg0: i32) -> (i32, i32) {
    %c0_i32 = arith.constant 0 : i32
    %c0_i32_0 = arith.constant 0 : i32
    %c0_i32_1 = arith.constant 0 : i32
    return %c0_i32, %c0_i32_0 : i32, i32
  }
  func.func @transform_11(%arg0: i32) -> (i32, i32) {
    %c0_i32 = arith.constant 0 : i32
    %c0_i32_0 = arith.constant 0 : i32
    %c0_i32_1 = arith.constant 0 : i32
    return %c0_i32, %c0_i32_0 : i32, i32
  }
  func.func @transform_12(%arg0: i32) -> (i32, i32) {
    %c0_i32 = arith.constant 0 : i32
    %c0_i32_0 = arith.constant 0 : i32
    %c0_i32_1 = arith.constant 0 : i32
    return %c0_i32, %c0_i32_0 : i32, i32
  }
  func.func @transform_13(%arg0: i32) -> (i32, i32) {
    %c0_i32 = arith.constant 0 : i32
    %c0_i32_0 = arith.constant 0 : i32
    %c0_i32_1 = arith.constant 0 : i32
    return %c0_i32, %c0_i32_0 : i32, i32
  }
  func.func @transform_14(%arg0: i32) -> (i32, i32) {
    %c0_i32 = arith.constant 0 : i32
    %c0_i32_0 = arith.constant 0 : i32
    %c0_i32_1 = arith.constant 0 : i32
    return %c0_i32, %c0_i32_0 : i32, i32
  }
  func.func @transform_15(%arg0: i32) -> (i32, i32, i32, i32) {
    %c0_i32 = arith.constant 0 : i32
    %c0_i32_0 = arith.constant 0 : i32
    %c0_i32_1 = arith.constant 0 : i32
    %c0_i32_2 = arith.constant 0 : i32
    return %arg0, %c0_i32, %c0_i32_0, %c0_i32_1 : i32, i32, i32, i32
  }
}

</mosaic_0001>

<llo_original>
// kernel: tile.83
$region0: #{tile.83}
  #allocation0 [shape = 's32[1]{0}', space=sflag, size = 0x4, scoped, tag = 'scoped memory for tile.83']
  %s0 = inlined_call_operand.vmem [shape: f32[32], index: 0, kind: input, shape index: {}]
  %s1 = inlined_call_operand.vmem [shape: f32[8,32], index: 1, kind: output, shape index: {}]
  // Predicated region
  $region2: #{tile.83} parent=0 // pred_check
    _
  $region3: #{tile.83} parent=0 // pred_check_branch
    %3 = sbr.rel (0) target = $region5
  $region4: #{tile.83} parent=0 // pred_region
    _
  $region5: #{tile.83} parent=0 // pred_fallthru
    _
  %v4 = vld [vmem:[%s0] ss:$0 sm:$0xff]
  %5 = vst [vmem:[%s1] sm:$0xff] %v4

// kernel: tile.84
$region0: #{tile.84}
  %s0 = inlined_call_operand.vmem [shape: f32[8,32], index: 0, kind: input, shape index: {}]
  %s1 = inlined_call_operand.vmem [shape: f32[1,256], index: 1, kind: output, shape index: {}]
  $region1: #{tile.84} parent=0
    #allocation0 [shape = 'u8[8192]{0}', space=vmem, size = 0x2000, scoped, tag = 'scoped mem for output reshape']
    %s2 = smov 3
    %v3 = vld [vmem:[%s0] ss:$4 sm:%s2]
    %vm4 = vcmask 261120
    %5 = vst.msk [vmem:[#allocation0] ss:$8 sm:$0x3] %vm4, %v3
    %s6 = scalar_lea.vmem %s0, 3
    %s7 = smov 3
    %v8 = vld [vmem:[%s6] ss:$4 sm:%s7]
    %9 = vrot.lane.b32.xlu0 %v8, 96
    %v10 = vpop.permute.xlu0 %9
    %vm11 = vcmask 1048320
    %12 = vst.msk [vmem:[#allocation0] ss:$8 sm:$0x3] %vm11, %v10
    %s13 = scalar_lea.vmem %s0, 2
    %s14 = smov 3
    %v15 = vld [vmem:[%s13] ss:$4 sm:%s14]
    %16 = vrot.lane.b32.xlu0 %v15, 64
    %v17 = vpop.permute.xlu0 %16
    %vm18 = vcmask 785920
    %19 = vst.msk [vmem:[#allocation0] ss:$8 sm:$0x3] %vm18, %v17
    %s20 = scalar_lea.vmem %s0, 1
    %s21 = smov 3
    %v22 = vld [vmem:[%s20] ss:$4 sm:%s21]
    %23 = vrot.lane.b32.xlu0 %v22, 32
    %v24 = vpop.permute.xlu0 %23
    %vm25 = vcmask 523520
    %26 = vst.msk [vmem:[#allocation0] ss:$8 sm:$0x3] %vm25, %v24
    %s28 = sshllo.u32 0, 1
    %v30 = vld [vmem:[#allocation0] sm:%s28]
    %s31 = sshllo.u32 0, 1
    %32 = vst [vmem:[%s1] sm:%s31] %v30
    %s33 = scalar_lea.vmem [#allocation0], 8
    %v34 = vld [vmem:[%s33] sm:%s28]
    %s35 = sshllo.u32 0, 1
    %s36 = scalar_lea.vmem %s1, 1
    %37 = vst [vmem:[%s36] sm:%s35] %v34

// kernel: tile.64
$region0: #{tile.64}
  %s0 = inlined_call_operand.vmem [shape: f32[27,8,32], index: 0, kind: input, shape index: {}]
  %s1 = inlined_call_operand.vmem [shape: f32[27,256], index: 1, kind: output, shape index: {}]
  %v2 = vld [vmem:[%s0] ss:$4 sm:$0xff]
  %vm3 = vcmask 261120
  %4 = vst.msk [vmem:[%s1] ss:$8 sm:$0x3] %vm3, %v2
  %s5 = scalar_lea.vmem %s1, 4294967281
  %6 = vst.msk [vmem:[%s5] ss:$8 sm:$0xc] %vm3, %v2
  %s7 = scalar_lea.vmem %s1, 4294967266
  %8 = vst.msk [vmem:[%s7] ss:$8 sm:$0x30] %vm3, %v2
  %s9 = scalar_lea.vmem %s1, 4294967251
  %10 = vst.msk [vmem:[%s9] ss:$8 sm:$0xc0] %vm3, %v2
  %s11 = scalar_lea.vmem %s0, 32
  %v12 = vld [vmem:[%s11] ss:$4 sm:$0xff]
  %vm13 = vcmask 261120
  %s14 = scalar_lea.vmem %s1, 4
  %15 = vst.msk [vmem:[%s14] ss:$8 sm:$0x3] %vm13, %v12
  %s16 = scalar_lea.vmem %s1, 4294967285
  %17 = vst.msk [vmem:[%s16] ss:$8 sm:$0xc] %vm13, %v12
  %s18 = scalar_lea.vmem %s1, 4294967270
  %19 = vst.msk [vmem:[%s18] ss:$8 sm:$0x30] %vm13, %v12
  %s20 = scalar_lea.vmem %s1, 4294967255
  %21 = vst.msk [vmem:[%s20] ss:$8 sm:$0xc0] %vm13, %v12
  %s22 = scalar_lea.vmem %s0, 64
  %v23 = vld [vmem:[%s22] ss:$4 sm:$0xff]
  %vm24 = vcmask 261120
  %s25 = scalar_lea.vmem %s1, 16
  %26 = vst.msk [vmem:[%s25] ss:$8 sm:$0x3] %vm24, %v23
  %s27 = scalar_lea.vmem %s1, 1
  %28 = vst.msk [vmem:[%s27] ss:$8 sm:$0xc] %vm24, %v23
  %s29 = scalar_lea.vmem %s1, 4294967282
  %30 = vst.msk [vmem:[%s29] ss:$8 sm:$0x30] %vm24, %v23
  %s31 = scalar_lea.vmem %s1, 4294967267
  %32 = vst.msk [vmem:[%s31] ss:$8 sm:$0xc0] %vm24, %v23
  %s33 = scalar_lea.vmem %s0, 96
  %v34 = vld [vmem:[%s33] ss:$4 sm:$0xff]
  %vm35 = vcmask 261120
  %s36 = scalar_lea.vmem %s1, 20
  %37 = vst.msk [vmem:[%s36] ss:$8 sm:$0x3] %vm35, %v34
  %s38 = scalar_lea.vmem %s1, 5
  %39 = vst.msk [vmem:[%s38] ss:$8 sm:$0xc] %vm35, %v34
  %s40 = scalar_lea.vmem %s1, 4294967286
  %41 = vst.msk [vmem:[%s40] ss:$8 sm:$0x30] %vm35, %v34
  %s42 = scalar_lea.vmem %s1, 4294967271
  %43 = vst.msk [vmem:[%s42] ss:$8 sm:$0xc0] %vm35, %v34
  %s44 = scalar_lea.vmem %s0, 128
  %v45 = vld [vmem:[%s44] ss:$4 sm:$0xff]
  %vm46 = vcmask 261120
  %s47 = scalar_lea.vmem %s1, 32
  %48 = vst.msk [vmem:[%s47] ss:$8 sm:$0x3] %vm46, %v45
  %s49 = scalar_lea.vmem %s1, 17
  %50 = vst.msk [vmem:[%s49] ss:$8 sm:$0xc] %vm46, %v45
  %s51 = scalar_lea.vmem %s1, 2
  %52 = vst.msk [vmem:[%s51] ss:$8 sm:$0x30] %vm46, %v45
  %s53 = scalar_lea.vmem %s1, 4294967283
  %54 = vst.msk [vmem:[%s53] ss:$8 sm:$0xc0] %vm46, %v45
  %s55 = scalar_lea.vmem %s0, 160
  %v56 = vld [vmem:[%s55] ss:$4 sm:$0xff]
  %vm57 = vcmask 261120
  %s58 = scalar_lea.vmem %s1, 36
  %59 = vst.msk [vmem:[%s58] ss:$8 sm:$0x3] %vm57, %v56
  %s60 = scalar_lea.vmem %s1, 21
  %61 = vst.msk [vmem:[%s60] ss:$8 sm:$0xc] %vm57, %v56
  %s62 = scalar_lea.vmem %s1, 6
  %63 = vst.msk [vmem:[%s62] ss:$8 sm:$0x30] %vm57, %v56
  %s64 = scalar_lea.vmem %s1, 4294967287
  %65 = vst.msk [vmem:[%s64] ss:$8 sm:$0xc0] %vm57, %v56
  %s66 = scalar_lea.vmem %s0, 192
  %v67 = vld [vmem:[%s66] ss:$4 sm:$0x3f]
  %vm68 = vcmask 261120
  %s69 = scalar_lea.vmem %s1, 48
  %70 = vst.msk [vmem:[%s69] ss:$8 sm:$0x3] %vm68, %v67
  %s71 = scalar_lea.vmem %s1, 33
  %72 = vst.msk [vmem:[%s71] ss:$8 sm:$0xc] %vm68, %v67
  %s73 = scalar_lea.vmem %s1, 18
  %74 = vst.msk [vmem:[%s73] ss:$8 sm:$0x30] %vm68, %v67
  %s75 = scalar_lea.vmem %s0, 3
  %v76 = vld [vmem:[%s75] ss:$8 sm:$0xf]
  %s77 = scalar_lea.vmem %s0, 3
  %v78 = vld [vmem:[%s77] ss:$8 sm:$0xf0]
  %vm79 = vcmask 1047556
  %v80 = vsel %vm79, %v78, %v76
  %81 = vrot.lane.b32.xlu0 %v80, 96
  %v82 = vpop.permute.xlu0 %81
  %vm83 = vcmask 1048320
  %84 = vst.msk [vmem:[%s1] sm:$0xff] %vm83, %v82
  %s85 = scalar_lea.vmem %s0, 131
  %v86 = vld [vmem:[%s85] ss:$8 sm:$0xf]
  %s87 = scalar_lea.vmem %s0, 131
  %v88 = vld [vmem:[%s87] ss:$8 sm:$0xf0]
  %vm89 = vcmask 1047556
  %v90 = vsel %vm89, %v88, %v86
  %91 = vrot.lane.b32.xlu0 %v90, 96
  %v92 = vpop.permute.xlu0 %91
  %vm93 = vcmask 1048320
  %s94 = scalar_lea.vmem %s1, 32
  %95 = vst.msk [vmem:[%s94] sm:$0xff] %vm93, %v92
  %s96 = scalar_lea.vmem %s0, 7
  %v97 = vld [vmem:[%s96] ss:$8 sm:$0xf]
  %s98 = scalar_lea.vmem %s0, 7
  %v99 = vld [vmem:[%s98] ss:$8 sm:$0xf0]
  %vm100 = vcmask 1047556
  %v101 = vsel %vm100, %v99, %v97
  %102 = vrot.lane.b32.xlu0 %v101, 96
  %v103 = vpop.permute.xlu0 %102
  %vm104 = vcmask 1048320
  %s105 = scalar_lea.vmem %s1, 8
  %106 = vst.msk [vmem:[%s105] sm:$0xff] %vm104, %v103
  %s107 = scalar_lea.vmem %s0, 135
  %v108 = vld [vmem:[%s107] ss:$8 sm:$0xf]
  %s109 = scalar_lea.vmem %s0, 135
  %v110 = vld [vmem:[%s109] ss:$8 sm:$0xf0]
  %vm111 = vcmask 1047556
  %v112 = vsel %vm111, %v110, %v108
  %113 = vrot.lane.b32.xlu0 %v112, 96
  %v114 = vpop.permute.xlu0 %113
  %vm115 = vcmask 1048320
  %s116 = scalar_lea.vmem %s1, 40
  %117 = vst.msk [vmem:[%s116] sm:$0xff] %vm115, %v114
  %s118 = scalar_lea.vmem %s0, 67
  %v119 = vld [vmem:[%s118] ss:$8 sm:$0xf]
  %s120 = scalar_lea.vmem %s0, 67
  %v121 = vld [vmem:[%s120] ss:$8 sm:$0xf0]
  %vm122 = vcmask 1047556
  %v123 = vsel %vm122, %v121, %v119
  %124 = vrot.lane.b32.xlu0 %v123, 96
  %v125 = vpop.permute.xlu0 %124
  %vm126 = vcmask 1048320
  %s127 = scalar_lea.vmem %s1, 16
  %128 = vst.msk [vmem:[%s127] sm:$0xff] %vm126, %v125
  %s129 = scalar_lea.vmem %s0, 195
  %v130 = vld [vmem:[%s129] ss:$8 sm:$0x7]
  %s131 = scalar_lea.vmem %s0, 47
  %v132 = vld [vmem:[%s131] ss:$8 sm:$0x78]
  %vm133 = vcmask 1046531
  %v134 = vsel %vm133, %v132, %v130
  %s135 = scalar_lea.vmem %s0, 96
  %v136 = vld [vmem:[%s135] sm:$0x80]
  %vm137 = vcmask 1047559
  %v138 = vsel %vm137, %v136, %v134
  %139 = vrot.lane.b32.xlu0 %v138, 96
  %v140 = vpop.permute.xlu0 %139
  %vm141 = vcmask 1048320
  %s142 = scalar_lea.vmem %s1, 48
  %143 = vst.msk [vmem:[%s142] sm:$0x7] %vm141, %v140
  %s144 = scalar_lea.vmem %s1, 21
  %145 = vst.msk [vmem:[%s144] sm:$0xf8] %vm141, %v140
  %s146 = scalar_lea.vmem %s0, 199
  %v147 = vld [vmem:[%s146] ss:$8 sm:$0x7]
  %s148 = scalar_lea.vmem %s0, 87
  %v149 = vld [vmem:[%s148] ss:$8 sm:$0x38]
  %vm150 = vcmask 1045507
  %v151 = vsel %vm150, %v149, %v147
  %152 = vrot.lane.b32.xlu0 %v151, 96
  %v153 = vpop.permute.xlu0 %152
  %vm154 = vcmask 1048320
  %s155 = scalar_lea.vmem %s1, 56
  %156 = vst.msk [vmem:[%s155] sm:$0x7] %vm154, %v153
  %s157 = scalar_lea.vmem %s1, 26
  %158 = vst.msk [vmem:[%s157] sm:$0x38] %vm154, %v153
  %s159 = scalar_lea.vmem %s0, 2
  %v160 = vld [vmem:[%s159] ss:$8 sm:$0xf]
  %s161 = scalar_lea.vmem %s0, 2
  %v162 = vld [vmem:[%s161] ss:$8 sm:$0xf0]
  %vm163 = vcmask 1047556
  %v164 = vsel %vm163, %v162, %v160
  %165 = vrot.lane.b32.xlu0 %v164, 64
  %v166 = vpop.permute.xlu0 %165
  %vm167 = vcmask 785920
  %168 = vst.msk [vmem:[%s1] sm:$0xff] %vm167, %v166
  %s169 = scalar_lea.vmem %s0, 130
  %v170 = vld [vmem:[%s169] ss:$8 sm:$0xf]
  %s171 = scalar_lea.vmem %s0, 130
  %v172 = vld [vmem:[%s171] ss:$8 sm:$0xf0]
  %vm173 = vcmask 1047556
  %v174 = vsel %vm173, %v172, %v170
  %175 = vrot.lane.b32.xlu0 %v174, 64
  %v176 = vpop.permute.xlu0 %175
  %vm177 = vcmask 785920
  %s178 = scalar_lea.vmem %s1, 32
  %179 = vst.msk [vmem:[%s178] sm:$0xff] %vm177, %v176
  %s180 = scalar_lea.vmem %s0, 6
  %v181 = vld [vmem:[%s180] ss:$8 sm:$0xf]
  %s182 = scalar_lea.vmem %s0, 6
  %v183 = vld [vmem:[%s182] ss:$8 sm:$0xf0]
  %vm184 = vcmask 1047556
  %v185 = vsel %vm184, %v183, %v181
  %186 = vrot.lane.b32.xlu0 %v185, 64
  %v187 = vpop.permute.xlu0 %186
  %vm188 = vcmask 785920
  %s189 = scalar_lea.vmem %s1, 8
  %190 = vst.msk [vmem:[%s189] sm:$0xff] %vm188, %v187
  %s191 = scalar_lea.vmem %s0, 134
  %v192 = vld [vmem:[%s191] ss:$8 sm:$0xf]
  %s193 = scalar_lea.vmem %s0, 134
  %v194 = vld [vmem:[%s193] ss:$8 sm:$0xf0]
  %vm195 = vcmask 1047556
  %v196 = vsel %vm195, %v194, %v192
  %197 = vrot.lane.b32.xlu0 %v196, 64
  %v198 = vpop.permute.xlu0 %197
  %vm199 = vcmask 785920
  %s200 = scalar_lea.vmem %s1, 40
  %201 = vst.msk [vmem:[%s200] sm:$0xff] %vm199, %v198
  %s202 = scalar_lea.vmem %s0, 66
  %v203 = vld [vmem:[%s202] ss:$8 sm:$0xf]
  %s204 = scalar_lea.vmem %s0, 66
  %v205 = vld [vmem:[%s204] ss:$8 sm:$0xf0]
  %vm206 = vcmask 1047556
  %v207 = vsel %vm206, %v205, %v203
  %208 = vrot.lane.b32.xlu0 %v207, 64
  %v209 = vpop.permute.xlu0 %208
  %vm210 = vcmask 785920
  %s211 = scalar_lea.vmem %s1, 16
  %212 = vst.msk [vmem:[%s211] sm:$0xff] %vm210, %v209
  %s213 = scalar_lea.vmem %s0, 194
  %v214 = vld [vmem:[%s213] ss:$8 sm:$0x7]
  %s215 = scalar_lea.vmem %s0, 46
  %v216 = vld [vmem:[%s215] ss:$8 sm:$0x78]
  %vm217 = vcmask 1046531
  %v218 = vsel %vm217, %v216, %v214
  %s219 = scalar_lea.vmem %s0, 95
  %v220 = vld [vmem:[%s219] sm:$0x80]
  %vm221 = vcmask 1047559
  %v222 = vsel %vm221, %v220, %v218
  %223 = vrot.lane.b32.xlu0 %v222, 64
  %v224 = vpop.permute.xlu0 %223
  %vm225 = vcmask 785920
  %s226 = scalar_lea.vmem %s1, 48
  %227 = vst.msk [vmem:[%s226] sm:$0x7] %vm225, %v224
  %s228 = scalar_lea.vmem %s1, 21
  %229 = vst.msk [vmem:[%s228] sm:$0xf8] %vm225, %v224
  %s230 = scalar_lea.vmem %s0, 198
  %v231 = vld [vmem:[%s230] ss:$8 sm:$0x7]
  %s232 = scalar_lea.vmem %s0, 86
  %v233 = vld [vmem:[%s232] ss:$8 sm:$0x38]
  %vm234 = vcmask 1045507
  %v235 = vsel %vm234, %v233, %v231
  %236 = vrot.lane.b32.xlu0 %v235, 64
  %v237 = vpop.permute.xlu0 %236
  %vm238 = vcmask 785920
  %s239 = scalar_lea.vmem %s1, 56
  %240 = vst.msk [vmem:[%s239] sm:$0x7] %vm238, %v237
  %s241 = scalar_lea.vmem %s1, 26
  %242 = vst.msk [vmem:[%s241] sm:$0x38] %vm238, %v237
  %s243 = scalar_lea.vmem %s0, 1
  %v244 = vld [vmem:[%s243] ss:$8 sm:$0xf]
  %s245 = scalar_lea.vmem %s0, 1
  %v246 = vld [vmem:[%s245] ss:$8 sm:$0xf0]
  %vm247 = vcmask 1047556
  %v248 = vsel %vm247, %v246, %v244
  %249 = vrot.lane.b32.xlu0 %v248, 32
  %v250 = vpop.permute.xlu0 %249
  %vm251 = vcmask 523520
  %252 = vst.msk [vmem:[%s1] sm:$0xff] %vm251, %v250
  %s253 = scalar_lea.vmem %s0, 129
  %v254 = vld [vmem:[%s253] ss:$8 sm:$0xf]
  %s255 = scalar_lea.vmem %s0, 129
  %v256 = vld [vmem:[%s255] ss:$8 sm:$0xf0]
  %vm257 = vcmask 1047556
  %v258 = vsel %vm257, %v256, %v254
  %259 = vrot.lane.b32.xlu0 %v258, 32
  %v260 = vpop.permute.xlu0 %259
  %vm261 = vcmask 523520
  %s262 = scalar_lea.vmem %s1, 32
  %263 = vst.msk [vmem:[%s262] sm:$0xff] %vm261, %v260
  %s264 = scalar_lea.vmem %s0, 5
  %v265 = vld [vmem:[%s264] ss:$8 sm:$0xf]
  %s266 = scalar_lea.vmem %s0, 5
  %v267 = vld [vmem:[%s266] ss:$8 sm:$0xf0]
  %vm268 = vcmask 1047556
  %v269 = vsel %vm268, %v267, %v265
  %270 = vrot.lane.b32.xlu0 %v269, 32
  %v271 = vpop.permute.xlu0 %270
  %vm272 = vcmask 523520
  %s273 = scalar_lea.vmem %s1, 8
  %274 = vst.msk [vmem:[%s273] sm:$0xff] %vm272, %v271
  %s275 = scalar_lea.vmem %s0, 133
  %v276 = vld [vmem:[%s275] ss:$8 sm:$0xf]
  %s277 = scalar_lea.vmem %s0, 133
  %v278 = vld [vmem:[%s277] ss:$8 sm:$0xf0]
  %vm279 = vcmask 1047556
  %v280 = vsel %vm279, %v278, %v276
  %281 = vrot.lane.b32.xlu0 %v280, 32
  %v282 = vpop.permute.xlu0 %281
  %vm283 = vcmask 523520
  %s284 = scalar_lea.vmem %s1, 40
  %285 = vst.msk [vmem:[%s284] sm:$0xff] %vm283, %v282
  %s286 = scalar_lea.vmem %s0, 65
  %v287 = vld [vmem:[%s286] ss:$8 sm:$0xf]
  %s288 = scalar_lea.vmem %s0, 65
  %v289 = vld [vmem:[%s288] ss:$8 sm:$0xf0]
  %vm290 = vcmask 1047556
  %v291 = vsel %vm290, %v289, %v287
  %292 = vrot.lane.b32.xlu0 %v291, 32
  %v293 = vpop.permute.xlu0 %292
  %vm294 = vcmask 523520
  %s295 = scalar_lea.vmem %s1, 16
  %296 = vst.msk [vmem:[%s295] sm:$0xff] %vm294, %v293
  %s297 = scalar_lea.vmem %s0, 193
  %v298 = vld [vmem:[%s297] ss:$8 sm:$0x7]
  %s299 = scalar_lea.vmem %s0, 45
  %v300 = vld [vmem:[%s299] ss:$8 sm:$0x78]
  %vm301 = vcmask 1046531
  %v302 = vsel %vm301, %v300, %v298
  %s303 = scalar_lea.vmem %s0, 94
  %v304 = vld [vmem:[%s303] sm:$0x80]
  %vm305 = vcmask 1047559
  %v306 = vsel %vm305, %v304, %v302
  %307 = vrot.lane.b32.xlu0 %v306, 32
  %v308 = vpop.permute.xlu0 %307
  %vm309 = vcmask 523520
  %s310 = scalar_lea.vmem %s1, 48
  %311 = vst.msk [vmem:[%s310] sm:$0x7] %vm309, %v308
  %s312 = scalar_lea.vmem %s1, 21
  %313 = vst.msk [vmem:[%s312] sm:$0xf8] %vm309, %v308
  %s314 = scalar_lea.vmem %s0, 197
  %v315 = vld [vmem:[%s314] ss:$8 sm:$0x7]
  %s316 = scalar_lea.vmem %s0, 85
  %v317 = vld [vmem:[%s316] ss:$8 sm:$0x38]
  %vm318 = vcmask 1045507
  %v319 = vsel %vm318, %v317, %v315
  %320 = vrot.lane.b32.xlu0 %v319, 32
  %v321 = vpop.permute.xlu0 %320
  %vm322 = vcmask 523520
  %s323 = scalar_lea.vmem %s1, 56
  %324 = vst.msk [vmem:[%s323] sm:$0x7] %vm322, %v321
  %s325 = scalar_lea.vmem %s1, 26
  %326 = vst.msk [vmem:[%s325] sm:$0x38] %vm322, %v321

// kernel: tile.99
$region0: #{tile.99}
  %s0 = inlined_call_operand.vmem [shape: f32[32,8,32], index: 0, kind: input, shape index: {}]
  %s1 = inlined_call_operand.vmem [shape: f32[32,256], index: 1, kind: output, shape index: {}]
  %v2 = vld [vmem:[%s0] ss:$4 sm:$0xff]
  %vm3 = vcmask 261120
  %4 = vst.msk [vmem:[%s1] ss:$8 sm:$0x3] %vm3, %v2
  %s5 = scalar_lea.vmem %s1, 4294967281
  %6 = vst.msk [vmem:[%s5] ss:$8 sm:$0xc] %vm3, %v2
  %s7 = scalar_lea.vmem %s1, 4294967266
  %8 = vst.msk [vmem:[%s7] ss:$8 sm:$0x30] %vm3, %v2
  %s9 = scalar_lea.vmem %s1, 4294967251
  %10 = vst.msk [vmem:[%s9] ss:$8 sm:$0xc0] %vm3, %v2
  %s11 = scalar_lea.vmem %s0, 32
  %v12 = vld [vmem:[%s11] ss:$4 sm:$0xff]
  %vm13 = vcmask 261120
  %s14 = scalar_lea.vmem %s1, 4
  %15 = vst.msk [vmem:[%s14] ss:$8 sm:$0x3] %vm13, %v12
  %s16 = scalar_lea.vmem %s1, 4294967285
  %17 = vst.msk [vmem:[%s16] ss:$8 sm:$0xc] %vm13, %v12
  %s18 = scalar_lea.vmem %s1, 4294967270
  %19 = vst.msk [vmem:[%s18] ss:$8 sm:$0x30] %vm13, %v12
  %s20 = scalar_lea.vmem %s1, 4294967255
  %21 = vst.msk [vmem:[%s20] ss:$8 sm:$0xc0] %vm13, %v12
  %s22 = scalar_lea.vmem %s0, 64
  %v23 = vld [vmem:[%s22] ss:$4 sm:$0xff]
  %vm24 = vcmask 261120
  %s25 = scalar_lea.vmem %s1, 16
  %26 = vst.msk [vmem:[%s25] ss:$8 sm:$0x3] %vm24, %v23
  %s27 = scalar_lea.vmem %s1, 1
  %28 = vst.msk [vmem:[%s27] ss:$8 sm:$0xc] %vm24, %v23
  %s29 = scalar_lea.vmem %s1, 4294967282
  %30 = vst.msk [vmem:[%s29] ss:$8 sm:$0x30] %vm24, %v23
  %s31 = scalar_lea.vmem %s1, 4294967267
  %32 = vst.msk [vmem:[%s31] ss:$8 sm:$0xc0] %vm24, %v23
  %s33 = scalar_lea.vmem %s0, 96
  %v34 = vld [vmem:[%s33] ss:$4 sm:$0xff]
  %vm35 = vcmask 261120
  %s36 = scalar_lea.vmem %s1, 20
  %37 = vst.msk [vmem:[%s36] ss:$8 sm:$0x3] %vm35, %v34
  %s38 = scalar_lea.vmem %s1, 5
  %39 = vst.msk [vmem:[%s38] ss:$8 sm:$0xc] %vm35, %v34
  %s40 = scalar_lea.vmem %s1, 4294967286
  %41 = vst.msk [vmem:[%s40] ss:$8 sm:$0x30] %vm35, %v34
  %s42 = scalar_lea.vmem %s1, 4294967271
  %43 = vst.msk [vmem:[%s42] ss:$8 sm:$0xc0] %vm35, %v34
  %s44 = scalar_lea.vmem %s0, 128
  %v45 = vld [vmem:[%s44] ss:$4 sm:$0xff]
  %vm46 = vcmask 261120
  %s47 = scalar_lea.vmem %s1, 32
  %48 = vst.msk [vmem:[%s47] ss:$8 sm:$0x3] %vm46, %v45
  %s49 = scalar_lea.vmem %s1, 17
  %50 = vst.msk [vmem:[%s49] ss:$8 sm:$0xc] %vm46, %v45
  %s51 = scalar_lea.vmem %s1, 2
  %52 = vst.msk [vmem:[%s51] ss:$8 sm:$0x30] %vm46, %v45
  %s53 = scalar_lea.vmem %s1, 4294967283
  %54 = vst.msk [vmem:[%s53] ss:$8 sm:$0xc0] %vm46, %v45
  %s55 = scalar_lea.vmem %s0, 160
  %v56 = vld [vmem:[%s55] ss:$4 sm:$0xff]
  %vm57 = vcmask 261120
  %s58 = scalar_lea.vmem %s1, 36
  %59 = vst.msk [vmem:[%s58] ss:$8 sm:$0x3] %vm57, %v56
  %s60 = scalar_lea.vmem %s1, 21
  %61 = vst.msk [vmem:[%s60] ss:$8 sm:$0xc] %vm57, %v56
  %s62 = scalar_lea.vmem %s1, 6
  %63 = vst.msk [vmem:[%s62] ss:$8 sm:$0x30] %vm57, %v56
  %s64 = scalar_lea.vmem %s1, 4294967287
  %65 = vst.msk [vmem:[%s64] ss:$8 sm:$0xc0] %vm57, %v56
  %s66 = scalar_lea.vmem %s0, 192
  %v67 = vld [vmem:[%s66] ss:$4 sm:$0xff]
  %vm68 = vcmask 261120
  %s69 = scalar_lea.vmem %s1, 48
  %70 = vst.msk [vmem:[%s69] ss:$8 sm:$0x3] %vm68, %v67
  %s71 = scalar_lea.vmem %s1, 33
  %72 = vst.msk [vmem:[%s71] ss:$8 sm:$0xc] %vm68, %v67
  %s73 = scalar_lea.vmem %s1, 18
  %74 = vst.msk [vmem:[%s73] ss:$8 sm:$0x30] %vm68, %v67
  %s75 = scalar_lea.vmem %s1, 3
  %76 = vst.msk [vmem:[%s75] ss:$8 sm:$0xc0] %vm68, %v67
  %s77 = scalar_lea.vmem %s0, 224
  %v78 = vld [vmem:[%s77] ss:$4 sm:$0xff]
  %vm79 = vcmask 261120
  %s80 = scalar_lea.vmem %s1, 52
  %81 = vst.msk [vmem:[%s80] ss:$8 sm:$0x3] %vm79, %v78
  %s82 = scalar_lea.vmem %s1, 37
  %83 = vst.msk [vmem:[%s82] ss:$8 sm:$0xc] %vm79, %v78
  %s84 = scalar_lea.vmem %s1, 22
  %85 = vst.msk [vmem:[%s84] ss:$8 sm:$0x30] %vm79, %v78
  %s86 = scalar_lea.vmem %s1, 7
  %87 = vst.msk [vmem:[%s86] ss:$8 sm:$0xc0] %vm79, %v78
  %s88 = scalar_lea.vmem %s0, 3
  %v89 = vld [vmem:[%s88] ss:$8 sm:$0xf]
  %s90 = scalar_lea.vmem %s0, 3
  %v91 = vld [vmem:[%s90] ss:$8 sm:$0xf0]
  %vm92 = vcmask 1047556
  %v93 = vsel %vm92, %v91, %v89
  %94 = vrot.lane.b32.xlu0 %v93, 96
  %v95 = vpop.permute.xlu0 %94
  %vm96 = vcmask 1048320
  %97 = vst.msk [vmem:[%s1] sm:$0xff] %vm96, %v95
  %s98 = scalar_lea.vmem %s0, 131
  %v99 = vld [vmem:[%s98] ss:$8 sm:$0xf]
  %s100 = scalar_lea.vmem %s0, 131
  %v101 = vld [vmem:[%s100] ss:$8 sm:$0xf0]
  %vm102 = vcmask 1047556
  %v103 = vsel %vm102, %v101, %v99
  %104 = vrot.lane.b32.xlu0 %v103, 96
  %v105 = vpop.permute.xlu0 %104
  %vm106 = vcmask 1048320
  %s107 = scalar_lea.vmem %s1, 32
  %108 = vst.msk [vmem:[%s107] sm:$0xff] %vm106, %v105
  %s109 = scalar_lea.vmem %s0, 7
  %v110 = vld [vmem:[%s109] ss:$8 sm:$0xf]
  %s111 = scalar_lea.vmem %s0, 7
  %v112 = vld [vmem:[%s111] ss:$8 sm:$0xf0]
  %vm113 = vcmask 1047556
  %v114 = vsel %vm113, %v112, %v110
  %115 = vrot.lane.b32.xlu0 %v114, 96
  %v116 = vpop.permute.xlu0 %115
  %vm117 = vcmask 1048320
  %s118 = scalar_lea.vmem %s1, 8
  %119 = vst.msk [vmem:[%s118] sm:$0xff] %vm117, %v116
  %s120 = scalar_lea.vmem %s0, 135
  %v121 = vld [vmem:[%s120] ss:$8 sm:$0xf]
  %s122 = scalar_lea.vmem %s0, 135
  %v123 = vld [vmem:[%s122] ss:$8 sm:$0xf0]
  %vm124 = vcmask 1047556
  %v125 = vsel %vm124, %v123, %v121
  %126 = vrot.lane.b32.xlu0 %v125, 96
  %v127 = vpop.permute.xlu0 %126
  %vm128 = vcmask 1048320
  %s129 = scalar_lea.vmem %s1, 40
  %130 = vst.msk [vmem:[%s129] sm:$0xff] %vm128, %v127
  %s131 = scalar_lea.vmem %s0, 67
  %v132 = vld [vmem:[%s131] ss:$8 sm:$0xf]
  %s133 = scalar_lea.vmem %s0, 67
  %v134 = vld [vmem:[%s133] ss:$8 sm:$0xf0]
  %vm135 = vcmask 1047556
  %v136 = vsel %vm135, %v134, %v132
  %137 = vrot.lane.b32.xlu0 %v136, 96
  %v138 = vpop.permute.xlu0 %137
  %vm139 = vcmask 1048320
  %s140 = scalar_lea.vmem %s1, 16
  %141 = vst.msk [vmem:[%s140] sm:$0xff] %vm139, %v138
  %s142 = scalar_lea.vmem %s0, 195
  %v143 = vld [vmem:[%s142] ss:$8 sm:$0xf]
  %s144 = scalar_lea.vmem %s0, 195
  %v145 = vld [vmem:[%s144] ss:$8 sm:$0xf0]
  %vm146 = vcmask 1047556
  %v147 = vsel %vm146, %v145, %v143
  %148 = vrot.lane.b32.xlu0 %v147, 96
  %v149 = vpop.permute.xlu0 %148
  %vm150 = vcmask 1048320
  %s151 = scalar_lea.vmem %s1, 48
  %152 = vst.msk [vmem:[%s151] sm:$0xff] %vm150, %v149
  %s153 = scalar_lea.vmem %s0, 71
  %v154 = vld [vmem:[%s153] ss:$8 sm:$0xf]
  %s155 = scalar_lea.vmem %s0, 71
  %v156 = vld [vmem:[%s155] ss:$8 sm:$0xf0]
  %vm157 = vcmask 1047556
  %v158 = vsel %vm157, %v156, %v154
  %159 = vrot.lane.b32.xlu0 %v158, 96
  %v160 = vpop.permute.xlu0 %159
  %vm161 = vcmask 1048320
  %s162 = scalar_lea.vmem %s1, 24
  %163 = vst.msk [vmem:[%s162] sm:$0xff] %vm161, %v160
  %s164 = scalar_lea.vmem %s0, 199
  %v165 = vld [vmem:[%s164] ss:$8 sm:$0xf]
  %s166 = scalar_lea.vmem %s0, 199
  %v167 = vld [vmem:[%s166] ss:$8 sm:$0xf0]
  %vm168 = vcmask 1047556
  %v169 = vsel %vm168, %v167, %v165
  %170 = vrot.lane.b32.xlu0 %v169, 96
  %v171 = vpop.permute.xlu0 %170
  %vm172 = vcmask 1048320
  %s173 = scalar_lea.vmem %s1, 56
  %174 = vst.msk [vmem:[%s173] sm:$0xff] %vm172, %v171
  %s175 = scalar_lea.vmem %s0, 2
  %v176 = vld [vmem:[%s175] ss:$8 sm:$0xf]
  %s177 = scalar_lea.vmem %s0, 2
  %v178 = vld [vmem:[%s177] ss:$8 sm:$0xf0]
  %vm179 = vcmask 1047556
  %v180 = vsel %vm179, %v178, %v176
  %181 = vrot.lane.b32.xlu0 %v180, 64
  %v182 = vpop.permute.xlu0 %181
  %vm183 = vcmask 785920
  %184 = vst.msk [vmem:[%s1] sm:$0xff] %vm183, %v182
  %s185 = scalar_lea.vmem %s0, 130
  %v186 = vld [vmem:[%s185] ss:$8 sm:$0xf]
  %s187 = scalar_lea.vmem %s0, 130
  %v188 = vld [vmem:[%s187] ss:$8 sm:$0xf0]
  %vm189 = vcmask 1047556
  %v190 = vsel %vm189, %v188, %v186
  %191 = vrot.lane.b32.xlu0 %v190, 64
  %v192 = vpop.permute.xlu0 %191
  %vm193 = vcmask 785920
  %s194 = scalar_lea.vmem %s1, 32
  %195 = vst.msk [vmem:[%s194] sm:$0xff] %vm193, %v192
  %s196 = scalar_lea.vmem %s0, 6
  %v197 = vld [vmem:[%s196] ss:$8 sm:$0xf]
  %s198 = scalar_lea.vmem %s0, 6
  %v199 = vld [vmem:[%s198] ss:$8 sm:$0xf0]
  %vm200 = vcmask 1047556
  %v201 = vsel %vm200, %v199, %v197
  %202 = vrot.lane.b32.xlu0 %v201, 64
  %v203 = vpop.permute.xlu0 %202
  %vm204 = vcmask 785920
  %s205 = scalar_lea.vmem %s1, 8
  %206 = vst.msk [vmem:[%s205] sm:$0xff] %vm204, %v203
  %s207 = scalar_lea.vmem %s0, 134
  %v208 = vld [vmem:[%s207] ss:$8 sm:$0xf]
  %s209 = scalar_lea.vmem %s0, 134
  %v210 = vld [vmem:[%s209] ss:$8 sm:$0xf0]
  %vm211 = vcmask 1047556
  %v212 = vsel %vm211, %v210, %v208
  %213 = vrot.lane.b32.xlu0 %v212, 64
  %v214 = vpop.permute.xlu0 %213
  %vm215 = vcmask 785920
  %s216 = scalar_lea.vmem %s1, 40
  %217 = vst.msk [vmem:[%s216] sm:$0xff] %vm215, %v214
  %s218 = scalar_lea.vmem %s0, 66
  %v219 = vld [vmem:[%s218] ss:$8 sm:$0xf]
  %s220 = scalar_lea.vmem %s0, 66
  %v221 = vld [vmem:[%s220] ss:$8 sm:$0xf0]
  %vm222 = vcmask 1047556
  %v223 = vsel %vm222, %v221, %v219
  %224 = vrot.lane.b32.xlu0 %v223, 64
  %v225 = vpop.permute.xlu0 %224
  %vm226 = vcmask 785920
  %s227 = scalar_lea.vmem %s1, 16
  %228 = vst.msk [vmem:[%s227] sm:$0xff] %vm226, %v225
  %s229 = scalar_lea.vmem %s0, 194
  %v230 = vld [vmem:[%s229] ss:$8 sm:$0xf]
  %s231 = scalar_lea.vmem %s0, 194
  %v232 = vld [vmem:[%s231] ss:$8 sm:$0xf0]
  %vm233 = vcmask 1047556
  %v234 = vsel %vm233, %v232, %v230
  %235 = vrot.lane.b32.xlu0 %v234, 64
  %v236 = vpop.permute.xlu0 %235
  %vm237 = vcmask 785920
  %s238 = scalar_lea.vmem %s1, 48
  %239 = vst.msk [vmem:[%s238] sm:$0xff] %vm237, %v236
  %s240 = scalar_lea.vmem %s0, 70
  %v241 = vld [vmem:[%s240] ss:$8 sm:$0xf]
  %s242 = scalar_lea.vmem %s0, 70
  %v243 = vld [vmem:[%s242] ss:$8 sm:$0xf0]
  %vm244 = vcmask 1047556
  %v245 = vsel %vm244, %v243, %v241
  %246 = vrot.lane.b32.xlu0 %v245, 64
  %v247 = vpop.permute.xlu0 %246
  %vm248 = vcmask 785920
  %s249 = scalar_lea.vmem %s1, 24
  %250 = vst.msk [vmem:[%s249] sm:$0xff] %vm248, %v247
  %s251 = scalar_lea.vmem %s0, 198
  %v252 = vld [vmem:[%s251] ss:$8 sm:$0xf]
  %s253 = scalar_lea.vmem %s0, 198
  %v254 = vld [vmem:[%s253] ss:$8 sm:$0xf0]
  %vm255 = vcmask 1047556
  %v256 = vsel %vm255, %v254, %v252
  %257 = vrot.lane.b32.xlu0 %v256, 64
  %v258 = vpop.permute.xlu0 %257
  %vm259 = vcmask 785920
  %s260 = scalar_lea.vmem %s1, 56
  %261 = vst.msk [vmem:[%s260] sm:$0xff] %vm259, %v258
  %s262 = scalar_lea.vmem %s0, 1
  %v263 = vld [vmem:[%s262] ss:$8 sm:$0xf]
  %s264 = scalar_lea.vmem %s0, 1
  %v265 = vld [vmem:[%s264] ss:$8 sm:$0xf0]
  %vm266 = vcmask 1047556
  %v267 = vsel %vm266, %v265, %v263
  %268 = vrot.lane.b32.xlu0 %v267, 32
  %v269 = vpop.permute.xlu0 %268
  %vm270 = vcmask 523520
  %271 = vst.msk [vmem:[%s1] sm:$0xff] %vm270, %v269
  %s272 = scalar_lea.vmem %s0, 129
  %v273 = vld [vmem:[%s272] ss:$8 sm:$0xf]
  %s274 = scalar_lea.vmem %s0, 129
  %v275 = vld [vmem:[%s274] ss:$8 sm:$0xf0]
  %vm276 = vcmask 1047556
  %v277 = vsel %vm276, %v275, %v273
  %278 = vrot.lane.b32.xlu0 %v277, 32
  %v279 = vpop.permute.xlu0 %278
  %vm280 = vcmask 523520
  %s281 = scalar_lea.vmem %s1, 32
  %282 = vst.msk [vmem:[%s281] sm:$0xff] %vm280, %v279
  %s283 = scalar_lea.vmem %s0, 5
  %v284 = vld [vmem:[%s283] ss:$8 sm:$0xf]
  %s285 = scalar_lea.vmem %s0, 5
  %v286 = vld [vmem:[%s285] ss:$8 sm:$0xf0]
  %vm287 = vcmask 1047556
  %v288 = vsel %vm287, %v286, %v284
  %289 = vrot.lane.b32.xlu0 %v288, 32
  %v290 = vpop.permute.xlu0 %289
  %vm291 = vcmask 523520
  %s292 = scalar_lea.vmem %s1, 8
  %293 = vst.msk [vmem:[%s292] sm:$0xff] %vm291, %v290
  %s294 = scalar_lea.vmem %s0, 133
  %v295 = vld [vmem:[%s294] ss:$8 sm:$0xf]
  %s296 = scalar_lea.vmem %s0, 133
  %v297 = vld [vmem:[%s296] ss:$8 sm:$0xf0]
  %vm298 = vcmask 1047556
  %v299 = vsel %vm298, %v297, %v295
  %300 = vrot.lane.b32.xlu0 %v299, 32
  %v301 = vpop.permute.xlu0 %300
  %vm302 = vcmask 523520
  %s303 = scalar_lea.vmem %s1, 40
  %304 = vst.msk [vmem:[%s303] sm:$0xff] %vm302, %v301
  %s305 = scalar_lea.vmem %s0, 65
  %v306 = vld [vmem:[%s305] ss:$8 sm:$0xf]
  %s307 = scalar_lea.vmem %s0, 65
  %v308 = vld [vmem:[%s307] ss:$8 sm:$0xf0]
  %vm309 = vcmask 1047556
  %v310 = vsel %vm309, %v308, %v306
  %311 = vrot.lane.b32.xlu0 %v310, 32
  %v312 = vpop.permute.xlu0 %311
  %vm313 = vcmask 523520
  %s314 = scalar_lea.vmem %s1, 16
  %315 = vst.msk [vmem:[%s314] sm:$0xff] %vm313, %v312
  %s316 = scalar_lea.vmem %s0, 193
  %v317 = vld [vmem:[%s316] ss:$8 sm:$0xf]
  %s318 = scalar_lea.vmem %s0, 193
  %v319 = vld [vmem:[%s318] ss:$8 sm:$0xf0]
  %vm320 = vcmask 1047556
  %v321 = vsel %vm320, %v319, %v317
  %322 = vrot.lane.b32.xlu0 %v321, 32
  %v323 = vpop.permute.xlu0 %322
  %vm324 = vcmask 523520
  %s325 = scalar_lea.vmem %s1, 48
  %326 = vst.msk [vmem:[%s325] sm:$0xff] %vm324, %v323
  %s327 = scalar_lea.vmem %s0, 69
  %v328 = vld [vmem:[%s327] ss:$8 sm:$0xf]
  %s329 = scalar_lea.vmem %s0, 69
  %v330 = vld [vmem:[%s329] ss:$8 sm:$0xf0]
  %vm331 = vcmask 1047556
  %v332 = vsel %vm331, %v330, %v328
  %333 = vrot.lane.b32.xlu0 %v332, 32
  %v334 = vpop.permute.xlu0 %333
  %vm335 = vcmask 523520
  %s336 = scalar_lea.vmem %s1, 24
  %337 = vst.msk [vmem:[%s336] sm:$0xff] %vm335, %v334
  %s338 = scalar_lea.vmem %s0, 197
  %v339 = vld [vmem:[%s338] ss:$8 sm:$0xf]
  %s340 = scalar_lea.vmem %s0, 197
  %v341 = vld [vmem:[%s340] ss:$8 sm:$0xf0]
  %vm342 = vcmask 1047556
  %v343 = vsel %vm342, %v341, %v339
  %344 = vrot.lane.b32.xlu0 %v343, 32
  %v345 = vpop.permute.xlu0 %344
  %vm346 = vcmask 523520
  %s347 = scalar_lea.vmem %s1, 56
  %348 = vst.msk [vmem:[%s347] sm:$0xff] %vm346, %v345

// kernel: sk_attention_forward.1
$region0: #{sk_attention_forward.1}
  #allocation0 [shape = 'u32[]', space=smem, size = 0x4, offset = 0x4, fixed_abs, tag = 'smem constant byte address 0x4 - core index']
  #allocation1 [shape = 'u32[144,128]{1,0:T(1,128)}', space=vmem, size = 0x12000, scoped, tag = 'internal scratch']
  #allocation2 [shape = 'f32[5,12,12,256]{3,2,1,0:T(8,128)}', space=vmem, size = 0xf0000, scoped, tag = 'scratch operand']
  #allocation3 [shape = 'f32[8,8,256]{2,1,0:T(8,128)}', space=vmem, size = 0x10000, scoped, tag = 'scratch operand']
  %s0 = inlined_call_operand.vmem [shape: f32[2,8,8,256], index: 0, kind: input, shape index: {}]
  %s1 = inlined_call_operand.vmem [shape: f32[27,256], index: 1, kind: input, shape index: {}]
  %s2 = inlined_call_operand.vmem [shape: f32[27,256], index: 2, kind: input, shape index: {}]
  %s3 = inlined_call_operand.vmem [shape: f32[1,256], index: 3, kind: input, shape index: {}]
  %s4 = inlined_call_operand.vmem [shape: f32[1,256], index: 4, kind: input, shape index: {}]
  %s5 = inlined_call_operand.vmem [shape: f32[1,256], index: 5, kind: input, shape index: {}]
  %s6 = inlined_call_operand.vmem [shape: f32[1,256], index: 6, kind: input, shape index: {}]
  %s7 = inlined_call_operand.vmem [shape: f32[256,32], index: 7, kind: input, shape index: {}]
  %s8 = inlined_call_operand.vmem [shape: f32[1,32], index: 8, kind: input, shape index: {}]
  %s9 = inlined_call_operand.vmem [shape: f32[1,32], index: 9, kind: input, shape index: {}]
  %s10 = inlined_call_operand.vmem [shape: f32[1,32], index: 10, kind: input, shape index: {}]
  %s11 = inlined_call_operand.vmem [shape: f32[32,256], index: 11, kind: input, shape index: {}]
  %s12 = inlined_call_operand.vmem [shape: f32[1,256], index: 12, kind: input, shape index: {}]
  %s13 = inlined_call_operand.vmem [shape: f32[32,256], index: 13, kind: input, shape index: {}]
  %s14 = inlined_call_operand.vmem [shape: f32[1,256], index: 14, kind: input, shape index: {}]
  %s15 = inlined_call_operand.vmem [shape: f32[2,8,8,256], index: 15, kind: output, shape index: {}]
  %s16 = sld [smem:[#allocation0]]
  $region93: #{sk_attention_forward.1} parent=0
    _
  %s18 = ssub.s32 1, %s16
  %s19 = scalar_select 0, %s18, %s16
  loop: start=0, step=1, limit=4
  $region2: #{sk_attention_forward.1} parent=0 // loop_pre_header
    _
  $region3: #{sk_attention_forward.1} parent=0 // loop_header
    %s21 = sphi 0, %s25
    %p22 = scmp.ge.s32.totalorder %s21, 4
    %s31 = sphi 0, %s33
    %s34 = sphi 0, %s31
    %s35 = sphi 0, %s34
    %s51 = sphi 0, %s35
    %s55 = sphi 0, %s55
    %s57 = sphi 0, %s55
    %s58 = sphi 0, %s57
    %s72 = sphi 0, %s58
    %s76 = sphi 0, %s76
    %s78 = sphi 0, %s76
    %s79 = sphi 0, %s78
    %s93 = sphi 0, %s79
    %s97 = sphi 0, %s97
    %s99 = sphi 0, %s97
    %s100 = sphi 0, %s99
    %s114 = sphi 0, %s100
    %s118 = sphi 0, %s118
    %s120 = sphi 0, %s118
    %s121 = sphi 0, %s120
    %s135 = sphi 0, %s121
    %s139 = sphi 0, %s139
    %s141 = sphi 0, %s139
    %s142 = sphi 0, %s141
    %s156 = sphi 0, %s142
    %s160 = sphi 0, %s160
    %s162 = sphi 0, %s160
    %s163 = sphi 0, %s162
    %s177 = sphi 0, %s163
    %s181 = sphi 0, %s181
    %s183 = sphi 0, %s181
    %s184 = sphi 0, %s183
    %s198 = sphi 0, %s184
    %s202 = sphi 0, %s202
    %s204 = sphi 0, %s202
    %s205 = sphi 0, %s204
    %s219 = sphi 0, %s205
    %s223 = sphi 0, %s223
    %s225 = sphi 0, %s223
    %s226 = sphi 0, %s225
    %s240 = sphi 0, %s226
    %s244 = sphi 0, %s244
    %s246 = sphi 0, %s244
    %s247 = sphi 0, %s246
    %s261 = sphi 0, %s247
    %s265 = sphi 0, %s265
    %s267 = sphi 0, %s265
    %s268 = sphi 0, %s267
    %s282 = sphi 0, %s268
    %s286 = sphi 0, %s286
    %s288 = sphi 0, %s286
    %s289 = sphi 0, %s288
    %s303 = sphi 0, %s289
    %s307 = sphi 0, %s307
    %s309 = sphi 0, %s307
    %s310 = sphi 0, %s309
    %s324 = sphi 0, %s310
    %s328 = sphi 0, %s328
    %s330 = sphi 0, %s328
    %s331 = sphi 0, %s330
    %s345 = sphi 0, %s331
    %s351 = sphi 0, %s353
    %s354 = sphi 0, %s351
    %s355 = sphi 0, %s354
    %s371 = sphi 0, %s355
  $region4: #{sk_attention_forward.1} parent=0 // loop_header_branch
    %24 = sbr.rel (%p22) target = $region8
  $region5: #{sk_attention_forward.1} parent=0 // loop_body
    %s26 = ssub.s32 %s21, 1
    %s27 = ssub.s32 %s21, 2
    %s28 = sadd.s32 %s21, 1
    %s29 = ssub.s32 %s21, %s28
    %p30 = scmp.eq.s32.totalorder %s29, 0
    %s32 = sadd.s32 %s31, 1
    %s33 = scalar_select %p30, %s31, %s32
    %p36 = pneg %p30
    %p37 = scmp.eq.s32.totalorder %s21, 1
    %p38 = por %p36, %p37
    %p39 = scmp.ne.s32.totalorder %s31, %s34
    %p40 = scmp.eq.s32.totalorder %s21, 0
    %p41 = por %p39, %p40
    %p42 = scmp.ne.s32.totalorder %s31, %s34
    %p43 = scmp.eq.s32.totalorder %s26, 1
    %p44 = por %p42, %p43
    %p45 = scmp.ne.s32.totalorder %s34, %s35
    %p46 = scmp.eq.s32.totalorder %s26, 0
    %p47 = por %p45, %p46
    %p48 = scmp.ne.s32.totalorder %s34, %s35
    %p49 = scmp.eq.s32.totalorder %s27, 1
    %p50 = por %p48, %p49
    %p52 = scmp.ne.s32.totalorder %s35, %s51
    %p53 = scmp.eq.s32.totalorder %s27, 0
    %p54 = por %p52, %p53
    %s56 = sadd.s32 %s55, 1
    %p59 = scmp.eq.s32.totalorder %s21, 1
    %p60 = scmp.ne.s32.totalorder %s55, %s57
    %p61 = scmp.eq.s32.totalorder %s21, 0
    %p62 = por %p60, %p61
    %p63 = scmp.ne.s32.totalorder %s55, %s57
    %p64 = scmp.eq.s32.totalorder %s26, 1
    %p65 = por %p63, %p64
    %p66 = scmp.ne.s32.totalorder %s57, %s58
    %p67 = scmp.eq.s32.totalorder %s26, 0
    %p68 = por %p66, %p67
    %p69 = scmp.ne.s32.totalorder %s57, %s58
    %p70 = scmp.eq.s32.totalorder %s27, 1
    %p71 = por %p69, %p70
    %p73 = scmp.ne.s32.totalorder %s58, %s72
    %p74 = scmp.eq.s32.totalorder %s27, 0
    %p75 = por %p73, %p74
    %s77 = sadd.s32 %s76, 1
    %p80 = scmp.eq.s32.totalorder %s21, 1
    %p81 = scmp.ne.s32.totalorder %s76, %s78
    %p82 = scmp.eq.s32.totalorder %s21, 0
    %p83 = por %p81, %p82
    %p84 = scmp.ne.s32.totalorder %s76, %s78
    %p85 = scmp.eq.s32.totalorder %s26, 1
    %p86 = por %p84, %p85
    %p87 = scmp.ne.s32.totalorder %s78, %s79
    %p88 = scmp.eq.s32.totalorder %s26, 0
    %p89 = por %p87, %p88
    %p90 = scmp.ne.s32.totalorder %s78, %s79
    %p91 = scmp.eq.s32.totalorder %s27, 1
    %p92 = por %p90, %p91
    %p94 = scmp.ne.s32.totalorder %s79, %s93
    %p95 = scmp.eq.s32.totalorder %s27, 0
    %p96 = por %p94, %p95
    %s98 = sadd.s32 %s97, 1
    %p101 = scmp.eq.s32.totalorder %s21, 1
    %p102 = scmp.ne.s32.totalorder %s97, %s99
    %p103 = scmp.eq.s32.totalorder %s21, 0
    %p104 = por %p102, %p103
    %p105 = scmp.ne.s32.totalorder %s97, %s99
    %p106 = scmp.eq.s32.totalorder %s26, 1
    %p107 = por %p105, %p106
    %p108 = scmp.ne.s32.totalorder %s99, %s100
    %p109 = scmp.eq.s32.totalorder %s26, 0
    %p110 = por %p108, %p109
    %p111 = scmp.ne.s32.totalorder %s99, %s100
    %p112 = scmp.eq.s32.totalorder %s27, 1
    %p113 = por %p111, %p112
    %p115 = scmp.ne.s32.totalorder %s100, %s114
    %p116 = scmp.eq.s32.totalorder %s27, 0
    %p117 = por %p115, %p116
    %s119 = sadd.s32 %s118, 1
    %p122 = scmp.eq.s32.totalorder %s21, 1
    %p123 = scmp.ne.s32.totalorder %s118, %s120
    %p124 = scmp.eq.s32.totalorder %s21, 0
    %p125 = por %p123, %p124
    %p126 = scmp.ne.s32.totalorder %s118, %s120
    %p127 = scmp.eq.s32.totalorder %s26, 1
    %p128 = por %p126, %p127
    %p129 = scmp.ne.s32.totalorder %s120, %s121
    %p130 = scmp.eq.s32.totalorder %s26, 0
    %p131 = por %p129, %p130
    %p132 = scmp.ne.s32.totalorder %s120, %s121
    %p133 = scmp.eq.s32.totalorder %s27, 1
    %p134 = por %p132, %p133
    %p136 = scmp.ne.s32.totalorder %s121, %s135
    %p137 = scmp.eq.s32.totalorder %s27, 0
    %p138 = por %p136, %p137
    %s140 = sadd.s32 %s139, 1
    %p143 = scmp.eq.s32.totalorder %s21, 1
    %p144 = scmp.ne.s32.totalorder %s139, %s141
    %p145 = scmp.eq.s32.totalorder %s21, 0
    %p146 = por %p144, %p145
    %p147 = scmp.ne.s32.totalorder %s139, %s141
    %p148 = scmp.eq.s32.totalorder %s26, 1
    %p149 = por %p147, %p148
    %p150 = scmp.ne.s32.totalorder %s141, %s142
    %p151 = scmp.eq.s32.totalorder %s26, 0
    %p152 = por %p150, %p151
    %p153 = scmp.ne.s32.totalorder %s141, %s142
    %p154 = scmp.eq.s32.totalorder %s27, 1
    %p155 = por %p153, %p154
    %p157 = scmp.ne.s32.totalorder %s142, %s156
    %p158 = scmp.eq.s32.totalorder %s27, 0
    %p159 = por %p157, %p158
    %s161 = sadd.s32 %s160, 1
    %p164 = scmp.eq.s32.totalorder %s21, 1
    %p165 = scmp.ne.s32.totalorder %s160, %s162
    %p166 = scmp.eq.s32.totalorder %s21, 0
    %p167 = por %p165, %p166
    %p168 = scmp.ne.s32.totalorder %s160, %s162
    %p169 = scmp.eq.s32.totalorder %s26, 1
    %p170 = por %p168, %p169
    %p171 = scmp.ne.s32.totalorder %s162, %s163
    %p172 = scmp.eq.s32.totalorder %s26, 0
    %p173 = por %p171, %p172
    %p174 = scmp.ne.s32.totalorder %s162, %s163
    %p175 = scmp.eq.s32.totalorder %s27, 1
    %p176 = por %p174, %p175
    %p178 = scmp.ne.s32.totalorder %s163, %s177
    %p179 = scmp.eq.s32.totalorder %s27, 0
    %p180 = por %p178, %p179
    %s182 = sadd.s32 %s181, 1
    %p185 = scmp.eq.s32.totalorder %s21, 1
    %p186 = scmp.ne.s32.totalorder %s181, %s183
    %p187 = scmp.eq.s32.totalorder %s21, 0
    %p188 = por %p186, %p187
    %p189 = scmp.ne.s32.totalorder %s181, %s183
    %p190 = scmp.eq.s32.totalorder %s26, 1
    %p191 = por %p189, %p190
    %p192 = scmp.ne.s32.totalorder %s183, %s184
    %p193 = scmp.eq.s32.totalorder %s26, 0
    %p194 = por %p192, %p193
    %p195 = scmp.ne.s32.totalorder %s183, %s184
    %p196 = scmp.eq.s32.totalorder %s27, 1
    %p197 = por %p195, %p196
    %p199 = scmp.ne.s32.totalorder %s184, %s198
    %p200 = scmp.eq.s32.totalorder %s27, 0
    %p201 = por %p199, %p200
    %s203 = sadd.s32 %s202, 1
    %p206 = scmp.eq.s32.totalorder %s21, 1
    %p207 = scmp.ne.s32.totalorder %s202, %s204
    %p208 = scmp.eq.s32.totalorder %s21, 0
    %p209 = por %p207, %p208
    %p210 = scmp.ne.s32.totalorder %s202, %s204
    %p211 = scmp.eq.s32.totalorder %s26, 1
    %p212 = por %p210, %p211
    %p213 = scmp.ne.s32.totalorder %s204, %s205
    %p214 = scmp.eq.s32.totalorder %s26, 0
    %p215 = por %p213, %p214
    %p216 = scmp.ne.s32.totalorder %s204, %s205
    %p217 = scmp.eq.s32.totalorder %s27, 1
    %p218 = por %p216, %p217
    %p220 = scmp.ne.s32.totalorder %s205, %s219
    %p221 = scmp.eq.s32.totalorder %s27, 0
    %p222 = por %p220, %p221
    %s224 = sadd.s32 %s223, 1
    %p227 = scmp.eq.s32.totalorder %s21, 1
    %p228 = scmp.ne.s32.totalorder %s223, %s225
    %p229 = scmp.eq.s32.totalorder %s21, 0
    %p230 = por %p228, %p229
    %p231 = scmp.ne.s32.totalorder %s223, %s225
    %p232 = scmp.eq.s32.totalorder %s26, 1
    %p233 = por %p231, %p232
    %p234 = scmp.ne.s32.totalorder %s225, %s226
    %p235 = scmp.eq.s32.totalorder %s26, 0
    %p236 = por %p234, %p235
    %p237 = scmp.ne.s32.totalorder %s225, %s226
    %p238 = scmp.eq.s32.totalorder %s27, 1
    %p239 = por %p237, %p238
    %p241 = scmp.ne.s32.totalorder %s226, %s240
    %p242 = scmp.eq.s32.totalorder %s27, 0
    %p243 = por %p241, %p242
    %s245 = sadd.s32 %s244, 1
    %p248 = scmp.eq.s32.totalorder %s21, 1
    %p249 = scmp.ne.s32.totalorder %s244, %s246
    %p250 = scmp.eq.s32.totalorder %s21, 0
    %p251 = por %p249, %p250
    %p252 = scmp.ne.s32.totalorder %s244, %s246
    %p253 = scmp.eq.s32.totalorder %s26, 1
    %p254 = por %p252, %p253
    %p255 = scmp.ne.s32.totalorder %s246, %s247
    %p256 = scmp.eq.s32.totalorder %s26, 0
    %p257 = por %p255, %p256
    %p258 = scmp.ne.s32.totalorder %s246, %s247
    %p259 = scmp.eq.s32.totalorder %s27, 1
    %p260 = por %p258, %p259
    %p262 = scmp.ne.s32.totalorder %s247, %s261
    %p263 = scmp.eq.s32.totalorder %s27, 0
    %p264 = por %p262, %p263
    %s266 = sadd.s32 %s265, 1
    %p269 = scmp.eq.s32.totalorder %s21, 1
    %p270 = scmp.ne.s32.totalorder %s265, %s267
    %p271 = scmp.eq.s32.totalorder %s21, 0
    %p272 = por %p270, %p271
    %p273 = scmp.ne.s32.totalorder %s265, %s267
    %p274 = scmp.eq.s32.totalorder %s26, 1
    %p275 = por %p273, %p274
    %p276 = scmp.ne.s32.totalorder %s267, %s268
    %p277 = scmp.eq.s32.totalorder %s26, 0
    %p278 = por %p276, %p277
    %p279 = scmp.ne.s32.totalorder %s267, %s268
    %p280 = scmp.eq.s32.totalorder %s27, 1
    %p281 = por %p279, %p280
    %p283 = scmp.ne.s32.totalorder %s268, %s282
    %p284 = scmp.eq.s32.totalorder %s27, 0
    %p285 = por %p283, %p284
    %s287 = sadd.s32 %s286, 1
    %p290 = scmp.eq.s32.totalorder %s21, 1
    %p291 = scmp.ne.s32.totalorder %s286, %s288
    %p292 = scmp.eq.s32.totalorder %s21, 0
    %p293 = por %p291, %p292
    %p294 = scmp.ne.s32.totalorder %s286, %s288
    %p295 = scmp.eq.s32.totalorder %s26, 1
    %p296 = por %p294, %p295
    %p297 = scmp.ne.s32.totalorder %s288, %s289
    %p298 = scmp.eq.s32.totalorder %s26, 0
    %p299 = por %p297, %p298
    %p300 = scmp.ne.s32.totalorder %s288, %s289
    %p301 = scmp.eq.s32.totalorder %s27, 1
    %p302 = por %p300, %p301
    %p304 = scmp.ne.s32.totalorder %s289, %s303
    %p305 = scmp.eq.s32.totalorder %s27, 0
    %p306 = por %p304, %p305
    %s308 = sadd.s32 %s307, 1
    %p311 = scmp.eq.s32.totalorder %s21, 1
    %p312 = scmp.ne.s32.totalorder %s307, %s309
    %p313 = scmp.eq.s32.totalorder %s21, 0
    %p314 = por %p312, %p313
    %p315 = scmp.ne.s32.totalorder %s307, %s309
    %p316 = scmp.eq.s32.totalorder %s26, 1
    %p317 = por %p315, %p316
    %p318 = scmp.ne.s32.totalorder %s309, %s310
    %p319 = scmp.eq.s32.totalorder %s26, 0
    %p320 = por %p318, %p319
    %p321 = scmp.ne.s32.totalorder %s309, %s310
    %p322 = scmp.eq.s32.totalorder %s27, 1
    %p323 = por %p321, %p322
    %p325 = scmp.ne.s32.totalorder %s310, %s324
    %p326 = scmp.eq.s32.totalorder %s27, 0
    %p327 = por %p325, %p326
    %s329 = sadd.s32 %s328, 1
    %p332 = scmp.eq.s32.totalorder %s21, 1
    %p333 = scmp.ne.s32.totalorder %s328, %s330
    %p334 = scmp.eq.s32.totalorder %s21, 0
    %p335 = por %p333, %p334
    %p336 = scmp.ne.s32.totalorder %s328, %s330
    %p337 = scmp.eq.s32.totalorder %s26, 1
    %p338 = por %p336, %p337
    %p339 = scmp.ne.s32.totalorder %s330, %s331
    %p340 = scmp.eq.s32.totalorder %s26, 0
    %p341 = por %p339, %p340
    %p342 = scmp.ne.s32.totalorder %s330, %s331
    %p343 = scmp.eq.s32.totalorder %s27, 1
    %p344 = por %p342, %p343
    %p346 = scmp.ne.s32.totalorder %s331, %s345
    %p347 = scmp.eq.s32.totalorder %s27, 0
    %p348 = por %p346, %p347
    %s349 = ssub.s32 %s21, %s28
    %p350 = scmp.eq.s32.totalorder %s349, 0
    %s352 = sadd.s32 %s351, 1
    %s353 = scalar_select %p350, %s351, %s352
    %p356 = pneg %p350
    %p357 = scmp.eq.s32.totalorder %s21, 1
    %p358 = por %p356, %p357
    %p359 = scmp.ne.s32.totalorder %s351, %s354
    %p360 = scmp.eq.s32.totalorder %s21, 0
    %p361 = por %p359, %p360
    %p362 = scmp.ne.s32.totalorder %s351, %s354
    %p363 = scmp.eq.s32.totalorder %s26, 1
    %p364 = por %p362, %p363
    %p365 = scmp.ne.s32.totalorder %s354, %s355
    %p366 = scmp.eq.s32.totalorder %s26, 0
    %p367 = por %p365, %p366
    %p368 = scmp.ne.s32.totalorder %s354, %s355
    %p369 = scmp.eq.s32.totalorder %s27, 1
    %p370 = por %p368, %p369
    %p372 = scmp.ne.s32.totalorder %s355, %s371
    %p373 = scmp.eq.s32.totalorder %s27, 0
    %p374 = por %p372, %p373
    %p375 = scmp.le.s32.totalorder 1, %s21
    %p376 = scmp.lt.s32.totalorder %s21, 3
    %p377 = pnand %p375, %p376
    %p378 = pneg %p377
    // Predicated region
    $region9: #{sk_attention_forward.1} parent=5 // pred_check
      _
    $region10: #{sk_attention_forward.1} parent=5 // pred_check_branch
      %380 = sbr.rel (%p377) target = $region12
    $region11: #{sk_attention_forward.1} parent=5 // pred_region
      %s381 = ssub.s32 %s21, 1
      // Predicated region
      $region13: #{sk_attention_forward.1} parent=11 // pred_check
        %p382 = pneg %p68
      $region14: #{sk_attention_forward.1} parent=11 // pred_check_branch
        %384 = sbr.rel (%p382) target = $region16
      $region15: #{sk_attention_forward.1} parent=11 // pred_region
        _
      $region16: #{sk_attention_forward.1} parent=11 // pred_fallthru
        _
      // Predicated region
      $region17: #{sk_attention_forward.1} parent=11 // pred_check
        %p385 = pneg %p89
      $region18: #{sk_attention_forward.1} parent=11 // pred_check_branch
        %387 = sbr.rel (%p385) target = $region20
      $region19: #{sk_attention_forward.1} parent=11 // pred_region
        _
      $region20: #{sk_attention_forward.1} parent=11 // pred_fallthru
        _
      // Predicated region
      $region21: #{sk_attention_forward.1} parent=11 // pred_check
        %p388 = pneg %p110
      $region22: #{sk_attention_forward.1} parent=11 // pred_check_branch
        %390 = sbr.rel (%p388) target = $region24
      $region23: #{sk_attention_forward.1} parent=11 // pred_region
        _
      $region24: #{sk_attention_forward.1} parent=11 // pred_fallthru
        _
      // Predicated region
      $region25: #{sk_attention_forward.1} parent=11 // pred_check
        %p391 = pneg %p131
      $region26: #{sk_attention_forward.1} parent=11 // pred_check_branch
        %393 = sbr.rel (%p391) target = $region28
      $region27: #{sk_attention_forward.1} parent=11 // pred_region
        _
      $region28: #{sk_attention_forward.1} parent=11 // pred_fallthru
        _
      // Predicated region
      $region29: #{sk_attention_forward.1} parent=11 // pred_check
        %p394 = pneg %p152
      $region30: #{sk_attention_forward.1} parent=11 // pred_check_branch
        %396 = sbr.rel (%p394) target = $region32
      $region31: #{sk_attention_forward.1} parent=11 // pred_region
        _
      $region32: #{sk_attention_forward.1} parent=11 // pred_fallthru
        _
      // Predicated region
      $region33: #{sk_attention_forward.1} parent=11 // pred_check
        %p397 = pneg %p173
      $region34: #{sk_attention_forward.1} parent=11 // pred_check_branch
        %399 = sbr.rel (%p397) target = $region36
      $region35: #{sk_attention_forward.1} parent=11 // pred_region
        _
      $region36: #{sk_attention_forward.1} parent=11 // pred_fallthru
        _
      // Predicated region
      $region37: #{sk_attention_forward.1} parent=11 // pred_check
        %p400 = pneg %p194
      $region38: #{sk_attention_forward.1} parent=11 // pred_check_branch
        %402 = sbr.rel (%p400) target = $region40
      $region39: #{sk_attention_forward.1} parent=11 // pred_region
        _
      $region40: #{sk_attention_forward.1} parent=11 // pred_fallthru
        _
      // Predicated region
      $region41: #{sk_attention_forward.1} parent=11 // pred_check
        %p403 = pneg %p215
      $region42: #{sk_attention_forward.1} parent=11 // pred_check_branch
        %405 = sbr.rel (%p403) target = $region44
      $region43: #{sk_attention_forward.1} parent=11 // pred_region
        _
      $region44: #{sk_attention_forward.1} parent=11 // pred_fallthru
        _
      // Predicated region
      $region45: #{sk_attention_forward.1} parent=11 // pred_check
        %p406 = pneg %p236
      $region46: #{sk_attention_forward.1} parent=11 // pred_check_branch
        %408 = sbr.rel (%p406) target = $region48
      $region47: #{sk_attention_forward.1} parent=11 // pred_region
        _
      $region48: #{sk_attention_forward.1} parent=11 // pred_fallthru
        _
      // Predicated region
      $region49: #{sk_attention_forward.1} parent=11 // pred_check
        %p409 = pneg %p257
      $region50: #{sk_attention_forward.1} parent=11 // pred_check_branch
        %411 = sbr.rel (%p409) target = $region52
      $region51: #{sk_attention_forward.1} parent=11 // pred_region
        _
      $region52: #{sk_attention_forward.1} parent=11 // pred_fallthru
        _
      // Predicated region
      $region53: #{sk_attention_forward.1} parent=11 // pred_check
        %p412 = pneg %p278
      $region54: #{sk_attention_forward.1} parent=11 // pred_check_branch
        %414 = sbr.rel (%p412) target = $region56
      $region55: #{sk_attention_forward.1} parent=11 // pred_region
        _
      $region56: #{sk_attention_forward.1} parent=11 // pred_fallthru
        _
      // Predicated region
      $region57: #{sk_attention_forward.1} parent=11 // pred_check
        %p415 = pneg %p299
      $region58: #{sk_attention_forward.1} parent=11 // pred_check_branch
        %417 = sbr.rel (%p415) target = $region60
      $region59: #{sk_attention_forward.1} parent=11 // pred_region
        _
      $region60: #{sk_attention_forward.1} parent=11 // pred_fallthru
        _
      // Predicated region
      $region61: #{sk_attention_forward.1} parent=11 // pred_check
        %p418 = pneg %p320
      $region62: #{sk_attention_forward.1} parent=11 // pred_check_branch
        %420 = sbr.rel (%p418) target = $region64
      $region63: #{sk_attention_forward.1} parent=11 // pred_region
        _
      $region64: #{sk_attention_forward.1} parent=11 // pred_fallthru
        _
      // Predicated region
      $region65: #{sk_attention_forward.1} parent=11 // pred_check
        %p421 = pneg %p341
      $region66: #{sk_attention_forward.1} parent=11 // pred_check_branch
        %423 = sbr.rel (%p421) target = $region68
      $region67: #{sk_attention_forward.1} parent=11 // pred_region
        _
      $region68: #{sk_attention_forward.1} parent=11 // pred_fallthru
        _
    $region12: #{sk_attention_forward.1} parent=5 // pred_fallthru
      _
    %p424 = scmp.lt.s32.totalorder %s21, 2
    // Predicated region
    $region69: #{sk_attention_forward.1} parent=5 // pred_check
      %p425 = pneg %p424
    $region70: #{sk_attention_forward.1} parent=5 // pred_check_branch
      %427 = sbr.rel (%p425) target = $region72
    $region71: #{sk_attention_forward.1} parent=5 // pred_region
      // Predicated region
      $region73: #{sk_attention_forward.1} parent=71 // pred_check
        %p428 = pneg %p41
      $region74: #{sk_attention_forward.1} parent=71 // pred_check_branch
        %430 = sbr.rel (%p428) target = $region76
      $region75: #{sk_attention_forward.1} parent=71 // pred_region
        %p431 = scmp.lt.s32.totalorder %s21, 1
        %s432 = scalar_select %p431, %s21, 1
        %s433 = smul.addr %s432, 16
        %s434 = smul.addr %s433, 8
        %s435 = scalar_lea.vmem %s0, %s434
      $region76: #{sk_attention_forward.1} parent=71 // pred_fallthru
        _
    $region72: #{sk_attention_forward.1} parent=5 // pred_fallthru
      _
    %p436 = scmp.le.s32.totalorder 1, %s21
    %p437 = scmp.lt.s32.totalorder %s21, 3
    %p438 = pnand %p436, %p437
    %p439 = pneg %p438
    // Predicated region
    $region77: #{sk_attention_forward.1} parent=5 // pred_check
      _
    $region78: #{sk_attention_forward.1} parent=5 // pred_check_branch
      %441 = sbr.rel (%p438) target = $region80
    $region79: #{sk_attention_forward.1} parent=5 // pred_region
      %s442 = ssub.s32 %s21, 1
      %p443 = scmp.lt.s32.totalorder %s26, 1
      %s444 = scalar_select %p443, %s26, 1
      %s445 = smul.addr %s444, 16
      %s446 = smul.addr %s445, 8
      %s447 = scalar_lea.vmem %s0, %s446
      %p448 = pneg %p47
      %p449 = pneg %p44
      %p450 = pneg %p68
      %p451 = pneg %p65
      %p452 = pneg %p89
      %p453 = pneg %p86
      %p454 = pneg %p110
      %p455 = pneg %p107
      %p456 = pneg %p131
      %p457 = pneg %p128
      %p458 = pneg %p152
      %p459 = pneg %p149
      %p460 = pneg %p173
      %p461 = pneg %p170
      %p462 = pneg %p194
      %p463 = pneg %p191
      %p464 = pneg %p215
      %p465 = pneg %p212
      %p466 = pneg %p236
      %p467 = pneg %p233
      %p468 = pneg %p257
      %p469 = pneg %p254
      %p470 = pneg %p278
      %p471 = pneg %p275
      %p472 = pneg %p299
      %p473 = pneg %p296
      %p474 = pneg %p320
      %p475 = pneg %p317
      %p476 = pneg %p341
      %p477 = pneg %p338
      %p478 = pneg %p367
      %p479 = pneg %p364
      %p480 = scmp.lt.s32.totalorder %s26, 1
      %s481 = scalar_select %p480, %s26, 1
      %s482 = smul.addr %s481, 16
      %s483 = smul.addr %s482, 8
      %s484 = scalar_lea.vmem %s15, %s483
      %p485 = scmp.lt.s32.totalorder %s26, 1
      %s486 = scalar_select %p485, %s26, 1
      %s487 = smul.addr %s486, 16
      %s488 = smul.addr %s487, 8
      %s489 = scalar_lea.vmem %s0, %s488
      %p490 = scmp.lt.s32.totalorder %s26, 1
      %s491 = scalar_select %p490, %s26, 1
      %s492 = smul.addr %s491, 16
      %s493 = smul.addr %s492, 8
      %s494 = scalar_lea.vmem %s15, %s493
      %495 = vst [vmem:[#allocation2] sm:$0xff] 0.0
      %496 = vst [vmem:[#allocation2 + $0x8] sm:$0xff] 0.0
      %497 = vst [vmem:[#allocation2 + $0x10] sm:$0xf] 0.0
      %498 = vst [vmem:[#allocation2 + $0x18] sm:$0xf] 0.0
      %499 = vst [vmem:[#allocation2 + $0x20] sm:$0xff] 0.0
      %500 = vst [vmem:[#allocation2 + $0x28] sm:$0xff] 0.0
      %501 = vst [vmem:[#allocation2 + $0x30] sm:$0xf] 0.0
      %502 = vst [vmem:[#allocation2 + $0x38] sm:$0xf] 0.0
      %503 = vst [vmem:[#allocation2 + $0x40] sm:$0xff] 0.0
      %504 = vst [vmem:[#allocation2 + $0x48] sm:$0xff] 0.0
      %505 = vst [vmem:[#allocation2 + $0x50] sm:$0xf] 0.0
      %506 = vst [vmem:[#allocation2 + $0x58] sm:$0xf] 0.0
      %507 = vst [vmem:[#allocation2 + $0x60] sm:$0xff] 0.0
      %508 = vst [vmem:[#allocation2 + $0x68] sm:$0xff] 0.0
      %509 = vst [vmem:[#allocation2 + $0x70] sm:$0xf] 0.0
      %510 = vst [vmem:[#allocation2 + $0x78] sm:$0xf] 0.0
      %511 = vst [vmem:[#allocation2 + $0x80] sm:$0xff] 0.0
      %512 = vst [vmem:[#allocation2 + $0x88] sm:$0xff] 0.0
      %513 = vst [vmem:[#allocation2 + $0x90] sm:$0xf] 0.0
      %514 = vst [vmem:[#allocation2 + $0x98] sm:$0xf] 0.0
      %515 = vst [vmem:[#allocation2 + $0xa0] sm:$0xff] 0.0
      %516 = vst [vmem:[#allocation2 + $0xa8] sm:$0xff] 0.0
      %517 = vst [vmem:[#allocation2 + $0xb0] sm:$0xf] 0.0
      %518 = vst [vmem:[#allocation2 + $0xb8] sm:$0xf] 0.0
      %519 = vst [vmem:[#allocation2 + $0xc0] sm:$0xff] 0.0
      %520 = vst [vmem:[#allocation2 + $0xc8] sm:$0xff] 0.0
      %521 = vst [vmem:[#allocation2 + $0xd0] sm:$0xf] 0.0
      %522 = vst [vmem:[#allocation2 + $0xd8] sm:$0xf] 0.0
      %523 = vst [vmem:[#allocation2 + $0xe0] sm:$0xff] 0.0
      %524 = vst [vmem:[#allocation2 + $0xe8] sm:$0xff] 0.0
      %525 = vst [vmem:[#allocation2 + $0xf0] sm:$0xf] 0.0
      %526 = vst [vmem:[#allocation2 + $0xf8] sm:$0xf] 0.0
      %527 = vst [vmem:[#allocation2 + $0x100] sm:$0xff] 0.0
      %528 = vst [vmem:[#allocation2 + $0x108] sm:$0xff] 0.0
      %529 = vst [vmem:[#allocation2 + $0x110] sm:$0xf] 0.0
      %530 = vst [vmem:[#allocation2 + $0x118] sm:$0xf] 0.0
      %531 = vst [vmem:[#allocation2 + $0x120] sm:$0xff] 0.0
      %532 = vst [vmem:[#allocation2 + $0x128] sm:$0xff] 0.0
      %533 = vst [vmem:[#allocation2 + $0x130] sm:$0xf] 0.0
      %534 = vst [vmem:[#allocation2 + $0x138] sm:$0xf] 0.0
      %535 = vst [vmem:[#allocation2 + $0x140] sm:$0xff] 0.0
      %536 = vst [vmem:[#allocation2 + $0x148] sm:$0xff] 0.0
      %537 = vst [vmem:[#allocation2 + $0x150] sm:$0xf] 0.0
      %538 = vst [vmem:[#allocation2 + $0x158] sm:$0xf] 0.0
      %539 = vst [vmem:[#allocation2 + $0x160] sm:$0xff] 0.0
      %540 = vst [vmem:[#allocation2 + $0x168] sm:$0xff] 0.0
      %541 = vst [vmem:[#allocation2 + $0x170] sm:$0xf] 0.0
      %542 = vst [vmem:[#allocation2 + $0x178] sm:$0xf] 0.0
      %543 = vst [vmem:[#allocation2 + $0x180] sm:$0xff] 0.0
      %544 = vst [vmem:[#allocation2 + $0x188] sm:$0xff] 0.0
      %545 = vst [vmem:[#allocation2 + $0x190] sm:$0xf] 0.0
      %546 = vst [vmem:[#allocation2 + $0x198] sm:$0xf] 0.0
      %547 = vst [vmem:[#allocation2 + $0x1a0] sm:$0xff] 0.0
      %548 = vst [vmem:[#allocation2 + $0x1a8] sm:$0xff] 0.0
      %549 = vst [vmem:[#allocation2 + $0x1b0] sm:$0xf] 0.0
      %550 = vst [vmem:[#allocation2 + $0x1b8] sm:$0xf] 0.0
      %551 = vst [vmem:[#allocation2 + $0x1c0] sm:$0xff] 0.0
      %552 = vst [vmem:[#allocation2 + $0x1c8] sm:$0xff] 0.0
      %553 = vst [vmem:[#allocation2 + $0x1d0] sm:$0xf] 0.0
      %554 = vst [vmem:[#allocation2 + $0x1d8] sm:$0xf] 0.0
      %555 = vst [vmem:[#allocation2 + $0x1e0] sm:$0xff] 0.0
      %556 = vst [vmem:[#allocation2 + $0x1e8] sm:$0xff] 0.0
      %557 = vst [vmem:[#allocation2 + $0x1f0] sm:$0xf] 0.0
      %558 = vst [vmem:[#allocation2 + $0x1f8] sm:$0xf] 0.0
      %559 = vst [vmem:[#allocation2 + $0x200] sm:$0xff] 0.0
      %560 = vst [vmem:[#allocation2 + $0x208] sm:$0xff] 0.0
      %561 = vst [vmem:[#allocation2 + $0x210] sm:$0xf] 0.0
      %562 = vst [vmem:[#allocation2 + $0x218] sm:$0xf] 0.0
      %563 = vst [vmem:[#allocation2 + $0x220] sm:$0xff] 0.0
      %564 = vst [vmem:[#allocation2 + $0x228] sm:$0xff] 0.0
      %565 = vst [vmem:[#allocation2 + $0x230] sm:$0xf] 0.0
      %566 = vst [vmem:[#allocation2 + $0x238] sm:$0xf] 0.0
      %567 = vst [vmem:[#allocation2 + $0x240] sm:$0xff] 0.0
      %568 = vst [vmem:[#allocation2 + $0x248] sm:$0xff] 0.0
      %569 = vst [vmem:[#allocation2 + $0x250] sm:$0xf] 0.0
      %570 = vst [vmem:[#allocation2 + $0x258] sm:$0xf] 0.0
      %571 = vst [vmem:[#allocation2 + $0x260] sm:$0xff] 0.0
      %572 = vst [vmem:[#allocation2 + $0x268] sm:$0xff] 0.0
      %573 = vst [vmem:[#allocation2 + $0x270] sm:$0xf] 0.0
      %574 = vst [vmem:[#allocation2 + $0x278] sm:$0xf] 0.0
      %575 = vst [vmem:[#allocation2 + $0x280] sm:$0xff] 0.0
      %576 = vst [vmem:[#allocation2 + $0x288] sm:$0xff] 0.0
      %577 = vst [vmem:[#allocation2 + $0x290] sm:$0xf] 0.0
      %578 = vst [vmem:[#allocation2 + $0x298] sm:$0xf] 0.0
      %579 = vst [vmem:[#allocation2 + $0x2a0] sm:$0xff] 0.0
      %580 = vst [vmem:[#allocation2 + $0x2a8] sm:$0xff] 0.0
      %581 = vst [vmem:[#allocation2 + $0x2b0] sm:$0xf] 0.0
      %582 = vst [vmem:[#allocation2 + $0x2b8] sm:$0xf] 0.0
      %583 = vst [vmem:[#allocation2 + $0x2c0] sm:$0xff] 0.0
      %584 = vst [vmem:[#allocation2 + $0x2c8] sm:$0xff] 0.0
      %585 = vst [vmem:[#allocation2 + $0x2d0] sm:$0xf] 0.0
      %586 = vst [vmem:[#allocation2 + $0x2d8] sm:$0xf] 0.0
      %587 = vst [vmem:[#allocation2 + $0x2e0] sm:$0xff] 0.0
      %588 = vst [vmem:[#allocation2 + $0x2e8] sm:$0xff] 0.0
      %589 = vst [vmem:[#allocation2 + $0x2f0] sm:$0xf] 0.0
      %590 = vst [vmem:[#allocation2 + $0x2f8] sm:$0xf] 0.0
      %591 = vst [vmem:[#allocation2 + $0x300] sm:$0xff] 0.0
      %592 = vst [vmem:[#allocation2 + $0x308] sm:$0xff] 0.0
      %593 = vst [vmem:[#allocation2 + $0x310] sm:$0xf] 0.0
      %594 = vst [vmem:[#allocation2 + $0x318] sm:$0xf] 0.0
      %595 = vst [vmem:[#allocation2 + $0x320] sm:$0xff] 0.0
      %596 = vst [vmem:[#allocation2 + $0x328] sm:$0xff] 0.0
      %597 = vst [vmem:[#allocation2 + $0x330] sm:$0xf] 0.0
      %598 = vst [vmem:[#allocation2 + $0x338] sm:$0xf] 0.0
      %599 = vst [vmem:[#allocation2 + $0x340] sm:$0xff] 0.0
      %600 = vst [vmem:[#allocation2 + $0x348] sm:$0xff] 0.0
      %601 = vst [vmem:[#allocation2 + $0x350] sm:$0xf] 0.0
      %602 = vst [vmem:[#allocation2 + $0x358] sm:$0xf] 0.0
      %603 = vst [vmem:[#allocation2 + $0x360] sm:$0xff] 0.0
      %604 = vst [vmem:[#allocation2 + $0x368] sm:$0xff] 0.0
      %605 = vst [vmem:[#allocation2 + $0x370] sm:$0xf] 0.0
      %606 = vst [vmem:[#allocation2 + $0x378] sm:$0xf] 0.0
      %607 = vst [vmem:[#allocation2 + $0x380] sm:$0xff] 0.0
      %608 = vst [vmem:[#allocation2 + $0x388] sm:$0xff] 0.0
      %609 = vst [vmem:[#allocation2 + $0x390] sm:$0xf] 0.0
      %610 = vst [vmem:[#allocation2 + $0x398] sm:$0xf] 0.0
      %611 = vst [vmem:[#allocation2 + $0x3a0] sm:$0xff] 0.0
      %612 = vst [vmem:[#allocation2 + $0x3a8] sm:$0xff] 0.0
      %613 = vst [vmem:[#allocation2 + $0x3b0] sm:$0xf] 0.0
      %614 = vst [vmem:[#allocation2 + $0x3b8] sm:$0xf] 0.0
      %615 = vst [vmem:[#allocation2 + $0x3c0] sm:$0xff] 0.0
      %616 = vst [vmem:[#allocation2 + $0x3c8] sm:$0xff] 0.0
      %617 = vst [vmem:[#allocation2 + $0x3d0] sm:$0xf] 0.0
      %618 = vst [vmem:[#allocation2 + $0x3d8] sm:$0xf] 0.0
      %619 = vst [vmem:[#allocation2 + $0x3e0] sm:$0xff] 0.0
      %620 = vst [vmem:[#allocation2 + $0x3e8] sm:$0xff] 0.0
      %621 = vst [vmem:[#allocation2 + $0x3f0] sm:$0xf] 0.0
      %622 = vst [vmem:[#allocation2 + $0x3f8] sm:$0xf] 0.0
      %623 = vst [vmem:[#allocation2 + $0x400] sm:$0xff] 0.0
      %624 = vst [vmem:[#allocation2 + $0x408] sm:$0xff] 0.0
      %625 = vst [vmem:[#allocation2 + $0x410] sm:$0xf] 0.0
      %626 = vst [vmem:[#allocation2 + $0x418] sm:$0xf] 0.0
      %627 = vst [vmem:[#allocation2 + $0x420] sm:$0xff] 0.0
      %628 = vst [vmem:[#allocation2 + $0x428] sm:$0xff] 0.0
      %629 = vst [vmem:[#allocation2 + $0x430] sm:$0xf] 0.0
      %630 = vst [vmem:[#allocation2 + $0x438] sm:$0xf] 0.0
      %631 = vst [vmem:[#allocation2 + $0x440] sm:$0xff] 0.0
      %632 = vst [vmem:[#allocation2 + $0x448] sm:$0xff] 0.0
      %633 = vst [vmem:[#allocation2 + $0x450] sm:$0xf] 0.0
      %634 = vst [vmem:[#allocation2 + $0x458] sm:$0xf] 0.0
      %635 = vst [vmem:[#allocation2 + $0x460] sm:$0xff] 0.0
      %636 = vst [vmem:[#allocation2 + $0x468] sm:$0xff] 0.0
      %637 = vst [vmem:[#allocation2 + $0x470] sm:$0xf] 0.0
      %638 = vst [vmem:[#allocation2 + $0x478] sm:$0xf] 0.0
      %639 = vst [vmem:[#allocation2 + $0x480] sm:$0xff] 0.0
      %640 = vst [vmem:[#allocation2 + $0x488] sm:$0xff] 0.0
      %641 = vst [vmem:[#allocation2 + $0x490] sm:$0xf] 0.0
      %642 = vst [vmem:[#allocation2 + $0x498] sm:$0xf] 0.0
      %643 = vst [vmem:[#allocation2 + $0x4a0] sm:$0xff] 0.0
      %644 = vst [vmem:[#allocation2 + $0x4a8] sm:$0xff] 0.0
      %645 = vst [vmem:[#allocation2 + $0x4b0] sm:$0xf] 0.0
      %646 = vst [vmem:[#allocation2 + $0x4b8] sm:$0xf] 0.0
      %647 = vst [vmem:[#allocation2 + $0x4c0] sm:$0xff] 0.0
      %648 = vst [vmem:[#allocation2 + $0x4c8] sm:$0xff] 0.0
      %649 = vst [vmem:[#allocation2 + $0x4d0] sm:$0xf] 0.0
      %650 = vst [vmem:[#allocation2 + $0x4d8] sm:$0xf] 0.0
      %651 = vst [vmem:[#allocation2 + $0x4e0] sm:$0xff] 0.0
      %652 = vst [vmem:[#allocation2 + $0x4e8] sm:$0xff] 0.0
      %653 = vst [vmem:[#allocation2 + $0x4f0] sm:$0xf] 0.0
      %654 = vst [vmem:[#allocation2 + $0x4f8] sm:$0xf] 0.0
      %655 = vst [vmem:[#allocation2 + $0x500] sm:$0xff] 0.0
      %656 = vst [vmem:[#allocation2 + $0x508] sm:$0xff] 0.0
      %657 = vst [vmem:[#allocation2 + $0x510] sm:$0xf] 0.0
      %658 = vst [vmem:[#allocation2 + $0x518] sm:$0xf] 0.0
      %659 = vst [vmem:[#allocation2 + $0x520] sm:$0xff] 0.0
      %660 = vst [vmem:[#allocation2 + $0x528] sm:$0xff] 0.0
      %661 = vst [vmem:[#allocation2 + $0x530] sm:$0xf] 0.0
      %662 = vst [vmem:[#allocation2 + $0x538] sm:$0xf] 0.0
      %663 = vst [vmem:[#allocation2 + $0x540] sm:$0xff] 0.0
      %664 = vst [vmem:[#allocation2 + $0x548] sm:$0xff] 0.0
      %665 = vst [vmem:[#allocation2 + $0x550] sm:$0xf] 0.0
      %666 = vst [vmem:[#allocation2 + $0x558] sm:$0xf] 0.0
      %667 = vst [vmem:[#allocation2 + $0x560] sm:$0xff] 0.0
      %668 = vst [vmem:[#allocation2 + $0x568] sm:$0xff] 0.0
      %669 = vst [vmem:[#allocation2 + $0x570] sm:$0xf] 0.0
      %670 = vst [vmem:[#allocation2 + $0x578] sm:$0xf] 0.0
      %671 = vst [vmem:[#allocation2 + $0x580] sm:$0xff] 0.0
      %672 = vst [vmem:[#allocation2 + $0x588] sm:$0xff] 0.0
      %673 = vst [vmem:[#allocation2 + $0x590] sm:$0xf] 0.0
      %674 = vst [vmem:[#allocation2 + $0x598] sm:$0xf] 0.0
      %675 = vst [vmem:[#allocation2 + $0x5a0] sm:$0xff] 0.0
      %676 = vst [vmem:[#allocation2 + $0x5a8] sm:$0xff] 0.0
      %677 = vst [vmem:[#allocation2 + $0x5b0] sm:$0xf] 0.0
      %678 = vst [vmem:[#allocation2 + $0x5b8] sm:$0xf] 0.0
      %679 = vst [vmem:[#allocation2 + $0x5c0] sm:$0xff] 0.0
      %680 = vst [vmem:[#allocation2 + $0x5c8] sm:$0xff] 0.0
      %681 = vst [vmem:[#allocation2 + $0x5d0] sm:$0xf] 0.0
      %682 = vst [vmem:[#allocation2 + $0x5d8] sm:$0xf] 0.0
      %683 = vst [vmem:[#allocation2 + $0x5e0] sm:$0xff] 0.0
      %684 = vst [vmem:[#allocation2 + $0x5e8] sm:$0xff] 0.0
      %685 = vst [vmem:[#allocation2 + $0x5f0] sm:$0xf] 0.0
      %686 = vst [vmem:[#allocation2 + $0x5f8] sm:$0xf] 0.0
      %687 = vst [vmem:[#allocation2 + $0x600] sm:$0xff] 0.0
      %688 = vst [vmem:[#allocation2 + $0x608] sm:$0xff] 0.0
      %689 = vst [vmem:[#allocation2 + $0x610] sm:$0xf] 0.0
      %690 = vst [vmem:[#allocation2 + $0x618] sm:$0xf] 0.0
      %691 = vst [vmem:[#allocation2 + $0x620] sm:$0xff] 0.0
      %692 = vst [vmem:[#allocation2 + $0x628] sm:$0xff] 0.0
      %693 = vst [vmem:[#allocation2 + $0x630] sm:$0xf] 0.0
      %694 = vst [vmem:[#allocation2 + $0x638] sm:$0xf] 0.0
      %695 = vst [vmem:[#allocation2 + $0x640] sm:$0xff] 0.0
      %696 = vst [vmem:[#allocation2 + $0x648] sm:$0xff] 0.0
      %697 = vst [vmem:[#allocation2 + $0x650] sm:$0xf] 0.0
      %698 = vst [vmem:[#allocation2 + $0x658] sm:$0xf] 0.0
      %699 = vst [vmem:[#allocation2 + $0x660] sm:$0xff] 0.0
      %700 = vst [vmem:[#allocation2 + $0x668] sm:$0xff] 0.0
      %701 = vst [vmem:[#allocation2 + $0x670] sm:$0xf] 0.0
      %702 = vst [vmem:[#allocation2 + $0x678] sm:$0xf] 0.0
      %703 = vst [vmem:[#allocation2 + $0x680] sm:$0xff] 0.0
      %704 = vst [vmem:[#allocation2 + $0x688] sm:$0xff] 0.0
      %705 = vst [vmem:[#allocation2 + $0x690] sm:$0xf] 0.0
      %706 = vst [vmem:[#allocation2 + $0x698] sm:$0xf] 0.0
      %707 = vst [vmem:[#allocation2 + $0x6a0] sm:$0xff] 0.0
      %708 = vst [vmem:[#allocation2 + $0x6a8] sm:$0xff] 0.0
      %709 = vst [vmem:[#allocation2 + $0x6b0] sm:$0xf] 0.0
      %710 = vst [vmem:[#allocation2 + $0x6b8] sm:$0xf] 0.0
      %711 = vst [vmem:[#allocation2 + $0x6c0] sm:$0xff] 0.0
      %712 = vst [vmem:[#allocation2 + $0x6c8] sm:$0xff] 0.0
      %713 = vst [vmem:[#allocation2 + $0x6d0] sm:$0xf] 0.0
      %714 = vst [vmem:[#allocation2 + $0x6d8] sm:$0xf] 0.0
      %715 = vst [vmem:[#allocation2 + $0x6e0] sm:$0xff] 0.0
      %716 = vst [vmem:[#allocation2 + $0x6e8] sm:$0xff] 0.0
      %717 = vst [vmem:[#allocation2 + $0x6f0] sm:$0xf] 0.0
      %718 = vst [vmem:[#allocation2 + $0x6f8] sm:$0xf] 0.0
      %719 = vst [vmem:[#allocation2 + $0x700] sm:$0xff] 0.0
      %720 = vst [vmem:[#allocation2 + $0x708] sm:$0xff] 0.0
      %721 = vst [vmem:[#allocation2 + $0x710] sm:$0xf] 0.0
      %722 = vst [vmem:[#allocation2 + $0x718] sm:$0xf] 0.0
      %723 = vst [vmem:[#allocation2 + $0x720] sm:$0xff] 0.0
      %724 = vst [vmem:[#allocation2 + $0x728] sm:$0xff] 0.0
      %725 = vst [vmem:[#allocation2 + $0x730] sm:$0xf] 0.0
      %726 = vst [vmem:[#allocation2 + $0x738] sm:$0xf] 0.0
      %727 = vst [vmem:[#allocation2 + $0x740] sm:$0xff] 0.0
      %728 = vst [vmem:[#allocation2 + $0x748] sm:$0xff] 0.0
      %729 = vst [vmem:[#allocation2 + $0x750] sm:$0xf] 0.0
      %730 = vst [vmem:[#allocation2 + $0x758] sm:$0xf] 0.0
      %731 = vst [vmem:[#allocation2 + $0x760] sm:$0xff] 0.0
      %732 = vst [vmem:[#allocation2 + $0x768] sm:$0xff] 0.0
      %733 = vst [vmem:[#allocation2 + $0x770] sm:$0xf] 0.0
      %734 = vst [vmem:[#allocation2 + $0x778] sm:$0xf] 0.0
      %v735 = vld [vmem:[%s489] sm:$0xff]
      %v736 = vld [vmem:[%s489 + $0x8] sm:$0xff]
      %v737 = vld [vmem:[%s489 + $0x10] sm:$0xff]
      %v738 = vld [vmem:[%s489 + $0x18] sm:$0xff]
      %v739 = vld [vmem:[%s489 + $0x20] sm:$0xff]
      %v740 = vld [vmem:[%s489 + $0x28] sm:$0xff]
      %v741 = vld [vmem:[%s489 + $0x30] sm:$0xff]
      %v742 = vld [vmem:[%s489 + $0x38] sm:$0xff]
      %v743 = vld [vmem:[%s489 + $0x40] sm:$0xff]
      %v744 = vld [vmem:[%s489 + $0x48] sm:$0xff]
      %v745 = vld [vmem:[%s489 + $0x50] sm:$0xff]
      %v746 = vld [vmem:[%s489 + $0x58] sm:$0xff]
      %v747 = vld [vmem:[%s489 + $0x60] sm:$0xff]
      %v748 = vld [vmem:[%s489 + $0x68] sm:$0xff]
      %v749 = vld [vmem:[%s489 + $0x70] sm:$0xff]
      %v750 = vld [vmem:[%s489 + $0x78] sm:$0xff]
      %v751 = vlaneseq
      %v752 = vand.u32 %v751, 127
      %v753 = vadd.s32 %v752, 128
      %vm754 = vcmp.lt.s32.totalorder %v752, 64
      %vm755 = vcmp.lt.s32.totalorder %v753, 64
      %756 = vrot.lane.b32.xlu0 %v735, 64
      %v757 = vpop.permute.xlu0 %756
      %758 = vrot.lane.b32.xlu0 %v737, 64
      %v759 = vpop.permute.xlu0 %758
      %760 = vrot.lane.b32.xlu0 %v739, 64
      %v761 = vpop.permute.xlu0 %760
      %762 = vrot.lane.b32.xlu0 %v741, 64
      %v763 = vpop.permute.xlu0 %762
      %764 = vrot.lane.b32.xlu0 %v743, 64
      %v765 = vpop.permute.xlu0 %764
      %766 = vrot.lane.b32.xlu0 %v745, 64
      %v767 = vpop.permute.xlu0 %766
      %768 = vrot.lane.b32.xlu0 %v747, 64
      %v769 = vpop.permute.xlu0 %768
      %770 = vrot.lane.b32.xlu0 %v749, 64
      %v771 = vpop.permute.xlu0 %770
      %772 = vrot.lane.b32.xlu0 %v736, 64
      %v773 = vpop.permute.xlu0 %772
      %774 = vrot.lane.b32.xlu0 %v738, 64
      %v775 = vpop.permute.xlu0 %774
      %776 = vrot.lane.b32.xlu0 %v740, 64
      %v777 = vpop.permute.xlu0 %776
      %778 = vrot.lane.b32.xlu0 %v742, 64
      %v779 = vpop.permute.xlu0 %778
      %780 = vrot.lane.b32.xlu0 %v744, 64
      %v781 = vpop.permute.xlu0 %780
      %782 = vrot.lane.b32.xlu0 %v746, 64
      %v783 = vpop.permute.xlu0 %782
      %784 = vrot.lane.b32.xlu0 %v748, 64
      %v785 = vpop.permute.xlu0 %784
      %786 = vrot.lane.b32.xlu0 %v750, 64
      %v787 = vpop.permute.xlu0 %786
      %v788 = vsel %vm754, %v757, %v773
      %v789 = vsel %vm754, %v759, %v775
      %v790 = vsel %vm754, %v761, %v777
      %v791 = vsel %vm754, %v763, %v779
      %v792 = vsel %vm754, %v765, %v781
      %v793 = vsel %vm754, %v767, %v783
      %v794 = vsel %vm754, %v769, %v785
      %v795 = vsel %vm754, %v771, %v787
      %v796 = vsel %vm754, %v773, %v757
      %v797 = vsel %vm754, %v775, %v759
      %v798 = vsel %vm754, %v777, %v761
      %v799 = vsel %vm754, %v779, %v763
      %v800 = vsel %vm754, %v781, %v765
      %v801 = vsel %vm754, %v783, %v767
      %v802 = vsel %vm754, %v785, %v769
      %v803 = vsel %vm754, %v787, %v771
      %v804 = vsel %vm754, 1, 0
      %v805 = vsel %vm755, 1, 0
      %vm806 = vcmp.eq.s32.totalorder %v804, 1
      %vm807 = vcmp.eq.s32.totalorder %v805, 1
      %v808 = vsel %vm806, 0.0, %v796
      %v809 = vsel %vm807, 0.0, %v788
      %v810 = vsel %vm806, 0.0, %v797
      %v811 = vsel %vm807, 0.0, %v789
      %v812 = vsel %vm806, 0.0, %v798
      %v813 = vsel %vm807, 0.0, %v790
      %v814 = vsel %vm806, 0.0, %v799
      %v815 = vsel %vm807, 0.0, %v791
      %v816 = vsel %vm806, 0.0, %v800
      %v817 = vsel %vm807, 0.0, %v792
      %v818 = vsel %vm806, 0.0, %v801
      %v819 = vsel %vm807, 0.0, %v793
      %v820 = vsel %vm806, 0.0, %v802
      %v821 = vsel %vm807, 0.0, %v794
      %v822 = vsel %vm806, 0.0, %v803
      %v823 = vsel %vm807, 0.0, %v795
      %v840 = vrot.slane %v808, 6
      %v841 = vrot.slane %v809, 6
      %v842 = vrot.slane %v810, 6
      %v843 = vrot.slane %v811, 6
      %v844 = vrot.slane %v812, 6
      %v845 = vrot.slane %v813, 6
      %v846 = vrot.slane %v814, 6
      %v847 = vrot.slane %v815, 6
      %v848 = vrot.slane %v816, 6
      %v849 = vrot.slane %v817, 6
      %v850 = vrot.slane %v818, 6
      %v851 = vrot.slane %v819, 6
      %v852 = vrot.slane %v820, 6
      %v853 = vrot.slane %v821, 6
      %v854 = vrot.slane %v822, 6
      %v855 = vrot.slane %v823, 6
      %s872 = scalar_lea.vmem [#allocation2], 64
      %873 = vst [vmem:[%s872] sm:$0xfc] %v840
      %874 = vst [vmem:[%s872 + $0x8] sm:$0xfc] %v841
      %875 = vst [vmem:[%s872 + $0x10] sm:$0x3] %v840
      %876 = vst [vmem:[%s872 + $0x18] sm:$0x3] %v841
      %877 = vst [vmem:[%s872 + $0x20] sm:$0xfc] %v842
      %878 = vst [vmem:[%s872 + $0x28] sm:$0xfc] %v843
      %879 = vst [vmem:[%s872 + $0x30] sm:$0x3] %v842
      %880 = vst [vmem:[%s872 + $0x38] sm:$0x3] %v843
      %881 = vst [vmem:[%s872 + $0x40] sm:$0xfc] %v844
      %882 = vst [vmem:[%s872 + $0x48] sm:$0xfc] %v845
      %883 = vst [vmem:[%s872 + $0x50] sm:$0x3] %v844
      %884 = vst [vmem:[%s872 + $0x58] sm:$0x3] %v845
      %885 = vst [vmem:[%s872 + $0x60] sm:$0xfc] %v846
      %886 = vst [vmem:[%s872 + $0x68] sm:$0xfc] %v847
      %887 = vst [vmem:[%s872 + $0x70] sm:$0x3] %v846
      %888 = vst [vmem:[%s872 + $0x78] sm:$0x3] %v847
      %889 = vst [vmem:[%s872 + $0x80] sm:$0xfc] %v848
      %890 = vst [vmem:[%s872 + $0x88] sm:$0xfc] %v849
      %891 = vst [vmem:[%s872 + $0x90] sm:$0x3] %v848
      %892 = vst [vmem:[%s872 + $0x98] sm:$0x3] %v849
      %893 = vst [vmem:[%s872 + $0xa0] sm:$0xfc] %v850
      %894 = vst [vmem:[%s872 + $0xa8] sm:$0xfc] %v851
      %895 = vst [vmem:[%s872 + $0xb0] sm:$0x3] %v850
      %896 = vst [vmem:[%s872 + $0xb8] sm:$0x3] %v851
      %897 = vst [vmem:[%s872 + $0xc0] sm:$0xfc] %v852
      %898 = vst [vmem:[%s872 + $0xc8] sm:$0xfc] %v853
      %899 = vst [vmem:[%s872 + $0xd0] sm:$0x3] %v852
      %900 = vst [vmem:[%s872 + $0xd8] sm:$0x3] %v853
      %901 = vst [vmem:[%s872 + $0xe0] sm:$0xfc] %v854
      %902 = vst [vmem:[%s872 + $0xe8] sm:$0xfc] %v855
      %903 = vst [vmem:[%s872 + $0xf0] sm:$0x3] %v854
      %904 = vst [vmem:[%s872 + $0xf8] sm:$0x3] %v855
      %vm905 = vcmp.lt.s32.totalorder %v752, 32
      %vm906 = vcmp.lt.s32.totalorder %v753, 32
      %907 = vrot.lane.b32.xlu0 %v735, 32
      %v908 = vpop.permute.xlu0 %907
      %909 = vrot.lane.b32.xlu0 %v737, 32
      %v910 = vpop.permute.xlu0 %909
      %911 = vrot.lane.b32.xlu0 %v739, 32
      %v912 = vpop.permute.xlu0 %911
      %913 = vrot.lane.b32.xlu0 %v741, 32
      %v914 = vpop.permute.xlu0 %913
      %915 = vrot.lane.b32.xlu0 %v743, 32
      %v916 = vpop.permute.xlu0 %915
      %917 = vrot.lane.b32.xlu0 %v745, 32
      %v918 = vpop.permute.xlu0 %917
      %919 = vrot.lane.b32.xlu0 %v747, 32
      %v920 = vpop.permute.xlu0 %919
      %921 = vrot.lane.b32.xlu0 %v749, 32
      %v922 = vpop.permute.xlu0 %921
      %923 = vrot.lane.b32.xlu0 %v736, 32
      %v924 = vpop.permute.xlu0 %923
      %925 = vrot.lane.b32.xlu0 %v738, 32
      %v926 = vpop.permute.xlu0 %925
      %927 = vrot.lane.b32.xlu0 %v740, 32
      %v928 = vpop.permute.xlu0 %927
      %929 = vrot.lane.b32.xlu0 %v742, 32
      %v930 = vpop.permute.xlu0 %929
      %931 = vrot.lane.b32.xlu0 %v744, 32
      %v932 = vpop.permute.xlu0 %931
      %933 = vrot.lane.b32.xlu0 %v746, 32
      %v934 = vpop.permute.xlu0 %933
      %935 = vrot.lane.b32.xlu0 %v748, 32
      %v936 = vpop.permute.xlu0 %935
      %937 = vrot.lane.b32.xlu0 %v750, 32
      %v938 = vpop.permute.xlu0 %937
      %v939 = vsel %vm905, %v908, %v924
      %v940 = vsel %vm905, %v910, %v926
      %v941 = vsel %vm905, %v912, %v928
      %v942 = vsel %vm905, %v914, %v930
      %v943 = vsel %vm905, %v916, %v932
      %v944 = vsel %vm905, %v918, %v934
      %v945 = vsel %vm905, %v920, %v936
      %v946 = vsel %vm905, %v922, %v938
      %v947 = vsel %vm905, %v924, %v908
      %v948 = vsel %vm905, %v926, %v910
      %v949 = vsel %vm905, %v928, %v912
      %v950 = vsel %vm905, %v930, %v914
      %v951 = vsel %vm905, %v932, %v916
      %v952 = vsel %vm905, %v934, %v918
      %v953 = vsel %vm905, %v936, %v920
      %v954 = vsel %vm905, %v938, %v922
      %v955 = vsel %vm905, 1, 0
      %v956 = vsel %vm906, 1, 0
      %vm957 = vcmp.eq.s32.totalorder %v955, 1
      %vm958 = vcmp.eq.s32.totalorder %v956, 1
      %v959 = vsel %vm957, 0.0, %v947
      %v960 = vsel %vm958, 0.0, %v939
      %v961 = vsel %vm957, 0.0, %v948
      %v962 = vsel %vm958, 0.0, %v940
      %v963 = vsel %vm957, 0.0, %v949
      %v964 = vsel %vm958, 0.0, %v941
      %v965 = vsel %vm957, 0.0, %v950
      %v966 = vsel %vm958, 0.0, %v942
      %v967 = vsel %vm957, 0.0, %v951
      %v968 = vsel %vm958, 0.0, %v943
      %v969 = vsel %vm957, 0.0, %v952
      %v970 = vsel %vm958, 0.0, %v944
      %v971 = vsel %vm957, 0.0, %v953
      %v972 = vsel %vm958, 0.0, %v945
      %v973 = vsel %vm957, 0.0, %v954
      %v974 = vsel %vm958, 0.0, %v946
      %v991 = vrot.slane %v959, 6
      %v992 = vrot.slane %v960, 6
      %v993 = vrot.slane %v961, 6
      %v994 = vrot.slane %v962, 6
      %v995 = vrot.slane %v963, 6
      %v996 = vrot.slane %v964, 6
      %v997 = vrot.slane %v965, 6
      %v998 = vrot.slane %v966, 6
      %v999 = vrot.slane %v967, 6
      %v1000 = vrot.slane %v968, 6
      %v1001 = vrot.slane %v969, 6
      %v1002 = vrot.slane %v970, 6
      %v1003 = vrot.slane %v971, 6
      %v1004 = vrot.slane %v972, 6
      %v1005 = vrot.slane %v973, 6
      %v1006 = vrot.slane %v974, 6
      %s1023 = scalar_lea.vmem [#allocation2], 448
      %1024 = vst [vmem:[%s1023] sm:$0xfc] %v991
      %1025 = vst [vmem:[%s1023 + $0x8] sm:$0xfc] %v992
      %1026 = vst [vmem:[%s1023 + $0x10] sm:$0x3] %v991
      %1027 = vst [vmem:[%s1023 + $0x18] sm:$0x3] %v992
      %1028 = vst [vmem:[%s1023 + $0x20] sm:$0xfc] %v993
      %1029 = vst [vmem:[%s1023 + $0x28] sm:$0xfc] %v994
      %1030 = vst [vmem:[%s1023 + $0x30] sm:$0x3] %v993
      %1031 = vst [vmem:[%s1023 + $0x38] sm:$0x3] %v994
      %1032 = vst [vmem:[%s1023 + $0x40] sm:$0xfc] %v995
      %1033 = vst [vmem:[%s1023 + $0x48] sm:$0xfc] %v996
      %1034 = vst [vmem:[%s1023 + $0x50] sm:$0x3] %v995
      %1035 = vst [vmem:[%s1023 + $0x58] sm:$0x3] %v996
      %1036 = vst [vmem:[%s1023 + $0x60] sm:$0xfc] %v997
      %1037 = vst [vmem:[%s1023 + $0x68] sm:$0xfc] %v998
      %1038 = vst [vmem:[%s1023 + $0x70] sm:$0x3] %v997
      %1039 = vst [vmem:[%s1023 + $0x78] sm:$0x3] %v998
      %1040 = vst [vmem:[%s1023 + $0x80] sm:$0xfc] %v999
      %1041 = vst [vmem:[%s1023 + $0x88] sm:$0xfc] %v1000
      %1042 = vst [vmem:[%s1023 + $0x90] sm:$0x3] %v999
      %1043 = vst [vmem:[%s1023 + $0x98] sm:$0x3] %v1000
      %1044 = vst [vmem:[%s1023 + $0xa0] sm:$0xfc] %v1001
      %1045 = vst [vmem:[%s1023 + $0xa8] sm:$0xfc] %v1002
      %1046 = vst [vmem:[%s1023 + $0xb0] sm:$0x3] %v1001
      %1047 = vst [vmem:[%s1023 + $0xb8] sm:$0x3] %v1002
      %1048 = vst [vmem:[%s1023 + $0xc0] sm:$0xfc] %v1003
      %1049 = vst [vmem:[%s1023 + $0xc8] sm:$0xfc] %v1004
      %1050 = vst [vmem:[%s1023 + $0xd0] sm:$0x3] %v1003
      %1051 = vst [vmem:[%s1023 + $0xd8] sm:$0x3] %v1004
      %1052 = vst [vmem:[%s1023 + $0xe0] sm:$0xfc] %v1005
      %1053 = vst [vmem:[%s1023 + $0xe8] sm:$0xfc] %v1006
      %1054 = vst [vmem:[%s1023 + $0xf0] sm:$0x3] %v1005
      %1055 = vst [vmem:[%s1023 + $0xf8] sm:$0x3] %v1006
      %v1072 = vrot.slane %v735, 6
      %v1073 = vrot.slane %v736, 6
      %v1074 = vrot.slane %v737, 6
      %v1075 = vrot.slane %v738, 6
      %v1076 = vrot.slane %v739, 6
      %v1077 = vrot.slane %v740, 6
      %v1078 = vrot.slane %v741, 6
      %v1079 = vrot.slane %v742, 6
      %v1080 = vrot.slane %v743, 6
      %v1081 = vrot.slane %v744, 6
      %v1082 = vrot.slane %v745, 6
      %v1083 = vrot.slane %v746, 6
      %v1084 = vrot.slane %v747, 6
      %v1085 = vrot.slane %v748, 6
      %v1086 = vrot.slane %v749, 6
      %v1087 = vrot.slane %v750, 6
      %s1104 = scalar_lea.vmem [#allocation2], 832
      %1105 = vst [vmem:[%s1104] sm:$0xfc] %v1072
      %1106 = vst [vmem:[%s1104 + $0x8] sm:$0xfc] %v1073
      %1107 = vst [vmem:[%s1104 + $0x10] sm:$0x3] %v1072
      %1108 = vst [vmem:[%s1104 + $0x18] sm:$0x3] %v1073
      %1109 = vst [vmem:[%s1104 + $0x20] sm:$0xfc] %v1074
      %1110 = vst [vmem:[%s1104 + $0x28] sm:$0xfc] %v1075
      %1111 = vst [vmem:[%s1104 + $0x30] sm:$0x3] %v1074
      %1112 = vst [vmem:[%s1104 + $0x38] sm:$0x3] %v1075
      %1113 = vst [vmem:[%s1104 + $0x40] sm:$0xfc] %v1076
      %1114 = vst [vmem:[%s1104 + $0x48] sm:$0xfc] %v1077
      %1115 = vst [vmem:[%s1104 + $0x50] sm:$0x3] %v1076
      %1116 = vst [vmem:[%s1104 + $0x58] sm:$0x3] %v1077
      %1117 = vst [vmem:[%s1104 + $0x60] sm:$0xfc] %v1078
      %1118 = vst [vmem:[%s1104 + $0x68] sm:$0xfc] %v1079
      %1119 = vst [vmem:[%s1104 + $0x70] sm:$0x3] %v1078
      %1120 = vst [vmem:[%s1104 + $0x78] sm:$0x3] %v1079
      %1121 = vst [vmem:[%s1104 + $0x80] sm:$0xfc] %v1080
      %1122 = vst [vmem:[%s1104 + $0x88] sm:$0xfc] %v1081
      %1123 = vst [vmem:[%s1104 + $0x90] sm:$0x3] %v1080
      %1124 = vst [vmem:[%s1104 + $0x98] sm:$0x3] %v1081
      %1125 = vst [vmem:[%s1104 + $0xa0] sm:$0xfc] %v1082
      %1126 = vst [vmem:[%s1104 + $0xa8] sm:$0xfc] %v1083
      %1127 = vst [vmem:[%s1104 + $0xb0] sm:$0x3] %v1082
      %1128 = vst [vmem:[%s1104 + $0xb8] sm:$0x3] %v1083
      %1129 = vst [vmem:[%s1104 + $0xc0] sm:$0xfc] %v1084
      %1130 = vst [vmem:[%s1104 + $0xc8] sm:$0xfc] %v1085
      %1131 = vst [vmem:[%s1104 + $0xd0] sm:$0x3] %v1084
      %1132 = vst [vmem:[%s1104 + $0xd8] sm:$0x3] %v1085
      %1133 = vst [vmem:[%s1104 + $0xe0] sm:$0xfc] %v1086
      %1134 = vst [vmem:[%s1104 + $0xe8] sm:$0xfc] %v1087
      %1135 = vst [vmem:[%s1104 + $0xf0] sm:$0x3] %v1086
      %1136 = vst [vmem:[%s1104 + $0xf8] sm:$0x3] %v1087
      %vm1137 = vcmp.ge.s32.totalorder %v752, 224
      %vm1138 = vcmp.ge.s32.totalorder %v753, 224
      %1139 = vrot.lane.b32.xlu0 %v735, 96
      %v1140 = vpop.permute.xlu0 %1139
      %1141 = vrot.lane.b32.xlu0 %v737, 96
      %v1142 = vpop.permute.xlu0 %1141
      %1143 = vrot.lane.b32.xlu0 %v739, 96
      %v1144 = vpop.permute.xlu0 %1143
      %1145 = vrot.lane.b32.xlu0 %v741, 96
      %v1146 = vpop.permute.xlu0 %1145
      %1147 = vrot.lane.b32.xlu0 %v743, 96
      %v1148 = vpop.permute.xlu0 %1147
      %1149 = vrot.lane.b32.xlu0 %v745, 96
      %v1150 = vpop.permute.xlu0 %1149
      %1151 = vrot.lane.b32.xlu0 %v747, 96
      %v1152 = vpop.permute.xlu0 %1151
      %1153 = vrot.lane.b32.xlu0 %v749, 96
      %v1154 = vpop.permute.xlu0 %1153
      %1155 = vrot.lane.b32.xlu0 %v736, 96
      %v1156 = vpop.permute.xlu0 %1155
      %1157 = vrot.lane.b32.xlu0 %v738, 96
      %v1158 = vpop.permute.xlu0 %1157
      %1159 = vrot.lane.b32.xlu0 %v740, 96
      %v1160 = vpop.permute.xlu0 %1159
      %1161 = vrot.lane.b32.xlu0 %v742, 96
      %v1162 = vpop.permute.xlu0 %1161
      %1163 = vrot.lane.b32.xlu0 %v744, 96
      %v1164 = vpop.permute.xlu0 %1163
      %1165 = vrot.lane.b32.xlu0 %v746, 96
      %v1166 = vpop.permute.xlu0 %1165
      %1167 = vrot.lane.b32.xlu0 %v748, 96
      %v1168 = vpop.permute.xlu0 %1167
      %1169 = vrot.lane.b32.xlu0 %v750, 96
      %v1170 = vpop.permute.xlu0 %1169
      %vm1171 = vcmp.lt.s32.totalorder %v752, 96
      %v1172 = vsel %vm1171, %v1140, %v1156
      %v1173 = vsel %vm1171, %v1142, %v1158
      %v1174 = vsel %vm1171, %v1144, %v1160
      %v1175 = vsel %vm1171, %v1146, %v1162
      %v1176 = vsel %vm1171, %v1148, %v1164
      %v1177 = vsel %vm1171, %v1150, %v1166
      %v1178 = vsel %vm1171, %v1152, %v1168
      %v1179 = vsel %vm1171, %v1154, %v1170
      %v1180 = vsel %vm1171, %v1156, %v1140
      %v1181 = vsel %vm1171, %v1158, %v1142
      %v1182 = vsel %vm1171, %v1160, %v1144
      %v1183 = vsel %vm1171, %v1162, %v1146
      %v1184 = vsel %vm1171, %v1164, %v1148
      %v1185 = vsel %vm1171, %v1166, %v1150
      %v1186 = vsel %vm1171, %v1168, %v1152
      %v1187 = vsel %vm1171, %v1170, %v1154
      %v1188 = vsel %vm1137, 1, 0
      %v1189 = vsel %vm1138, 1, 0
      %vm1190 = vcmp.eq.s32.totalorder %v1188, 1
      %vm1191 = vcmp.eq.s32.totalorder %v1189, 1
      %v1192 = vsel %vm1190, 0.0, %v1172
      %v1193 = vsel %vm1191, 0.0, %v1180
      %v1194 = vsel %vm1190, 0.0, %v1173
      %v1195 = vsel %vm1191, 0.0, %v1181
      %v1196 = vsel %vm1190, 0.0, %v1174
      %v1197 = vsel %vm1191, 0.0, %v1182
      %v1198 = vsel %vm1190, 0.0, %v1175
      %v1199 = vsel %vm1191, 0.0, %v1183
      %v1200 = vsel %vm1190, 0.0, %v1176
      %v1201 = vsel %vm1191, 0.0, %v1184
      %v1202 = vsel %vm1190, 0.0, %v1177
      %v1203 = vsel %vm1191, 0.0, %v1185
      %v1204 = vsel %vm1190, 0.0, %v1178
      %v1205 = vsel %vm1191, 0.0, %v1186
      %v1206 = vsel %vm1190, 0.0, %v1179
      %v1207 = vsel %vm1191, 0.0, %v1187
      %v1224 = vrot.slane %v1192, 6
      %v1225 = vrot.slane %v1193, 6
      %v1226 = vrot.slane %v1194, 6
      %v1227 = vrot.slane %v1195, 6
      %v1228 = vrot.slane %v1196, 6
      %v1229 = vrot.slane %v1197, 6
      %v1230 = vrot.slane %v1198, 6
      %v1231 = vrot.slane %v1199, 6
      %v1232 = vrot.slane %v1200, 6
      %v1233 = vrot.slane %v1201, 6
      %v1234 = vrot.slane %v1202, 6
      %v1235 = vrot.slane %v1203, 6
      %v1236 = vrot.slane %v1204, 6
      %v1237 = vrot.slane %v1205, 6
      %v1238 = vrot.slane %v1206, 6
      %v1239 = vrot.slane %v1207, 6
      %s1256 = scalar_lea.vmem [#allocation2], 1216
      %1257 = vst [vmem:[%s1256] sm:$0xfc] %v1224
      %1258 = vst [vmem:[%s1256 + $0x8] sm:$0xfc] %v1225
      %1259 = vst [vmem:[%s1256 + $0x10] sm:$0x3] %v1224
      %1260 = vst [vmem:[%s1256 + $0x18] sm:$0x3] %v1225
      %1261 = vst [vmem:[%s1256 + $0x20] sm:$0xfc] %v1226
      %1262 = vst [vmem:[%s1256 + $0x28] sm:$0xfc] %v1227
      %1263 = vst [vmem:[%s1256 + $0x30] sm:$0x3] %v1226
      %1264 = vst [vmem:[%s1256 + $0x38] sm:$0x3] %v1227
      %1265 = vst [vmem:[%s1256 + $0x40] sm:$0xfc] %v1228
      %1266 = vst [vmem:[%s1256 + $0x48] sm:$0xfc] %v1229
      %1267 = vst [vmem:[%s1256 + $0x50] sm:$0x3] %v1228
      %1268 = vst [vmem:[%s1256 + $0x58] sm:$0x3] %v1229
      %1269 = vst [vmem:[%s1256 + $0x60] sm:$0xfc] %v1230
      %1270 = vst [vmem:[%s1256 + $0x68] sm:$0xfc] %v1231
      %1271 = vst [vmem:[%s1256 + $0x70] sm:$0x3] %v1230
      %1272 = vst [vmem:[%s1256 + $0x78] sm:$0x3] %v1231
      %1273 = vst [vmem:[%s1256 + $0x80] sm:$0xfc] %v1232
      %1274 = vst [vmem:[%s1256 + $0x88] sm:$0xfc] %v1233
      %1275 = vst [vmem:[%s1256 + $0x90] sm:$0x3] %v1232
      %1276 = vst [vmem:[%s1256 + $0x98] sm:$0x3] %v1233
      %1277 = vst [vmem:[%s1256 + $0xa0] sm:$0xfc] %v1234
      %1278 = vst [vmem:[%s1256 + $0xa8] sm:$0xfc] %v1235
      %1279 = vst [vmem:[%s1256 + $0xb0] sm:$0x3] %v1234
      %1280 = vst [vmem:[%s1256 + $0xb8] sm:$0x3] %v1235
      %1281 = vst [vmem:[%s1256 + $0xc0] sm:$0xfc] %v1236
      %1282 = vst [vmem:[%s1256 + $0xc8] sm:$0xfc] %v1237
      %1283 = vst [vmem:[%s1256 + $0xd0] sm:$0x3] %v1236
      %1284 = vst [vmem:[%s1256 + $0xd8] sm:$0x3] %v1237
      %1285 = vst [vmem:[%s1256 + $0xe0] sm:$0xfc] %v1238
      %1286 = vst [vmem:[%s1256 + $0xe8] sm:$0xfc] %v1239
      %1287 = vst [vmem:[%s1256 + $0xf0] sm:$0x3] %v1238
      %1288 = vst [vmem:[%s1256 + $0xf8] sm:$0x3] %v1239
      %vm1289 = vcmp.ge.s32.totalorder %v752, 192
      %vm1290 = vcmp.ge.s32.totalorder %v753, 192
      %v1291 = vsel %vm1289, 1, 0
      %v1292 = vsel %vm1290, 1, 0
      %vm1293 = vcmp.eq.s32.totalorder %v1291, 1
      %vm1294 = vcmp.eq.s32.totalorder %v1292, 1
      %v1295 = vsel %vm1293, 0.0, %v788
      %v1296 = vsel %vm1294, 0.0, %v796
      %v1297 = vsel %vm1293, 0.0, %v789
      %v1298 = vsel %vm1294, 0.0, %v797
      %v1299 = vsel %vm1293, 0.0, %v790
      %v1300 = vsel %vm1294, 0.0, %v798
      %v1301 = vsel %vm1293, 0.0, %v791
      %v1302 = vsel %vm1294, 0.0, %v799
      %v1303 = vsel %vm1293, 0.0, %v792
      %v1304 = vsel %vm1294, 0.0, %v800
      %v1305 = vsel %vm1293, 0.0, %v793
      %v1306 = vsel %vm1294, 0.0, %v801
      %v1307 = vsel %vm1293, 0.0, %v794
      %v1308 = vsel %vm1294, 0.0, %v802
      %v1309 = vsel %vm1293, 0.0, %v795
      %v1310 = vsel %vm1294, 0.0, %v803
      %v1327 = vrot.slane %v1295, 6
      %v1328 = vrot.slane %v1296, 6
      %v1329 = vrot.slane %v1297, 6
      %v1330 = vrot.slane %v1298, 6
      %v1331 = vrot.slane %v1299, 6
      %v1332 = vrot.slane %v1300, 6
      %v1333 = vrot.slane %v1301, 6
      %v1334 = vrot.slane %v1302, 6
      %v1335 = vrot.slane %v1303, 6
      %v1336 = vrot.slane %v1304, 6
      %v1337 = vrot.slane %v1305, 6
      %v1338 = vrot.slane %v1306, 6
      %v1339 = vrot.slane %v1307, 6
      %v1340 = vrot.slane %v1308, 6
      %v1341 = vrot.slane %v1309, 6
      %v1342 = vrot.slane %v1310, 6
      %s1359 = scalar_lea.vmem [#allocation2], 1600
      %1360 = vst [vmem:[%s1359] sm:$0xfc] %v1327
      %1361 = vst [vmem:[%s1359 + $0x8] sm:$0xfc] %v1328
      %1362 = vst [vmem:[%s1359 + $0x10] sm:$0x3] %v1327
      %1363 = vst [vmem:[%s1359 + $0x18] sm:$0x3] %v1328
      %1364 = vst [vmem:[%s1359 + $0x20] sm:$0xfc] %v1329
      %1365 = vst [vmem:[%s1359 + $0x28] sm:$0xfc] %v1330
      %1366 = vst [vmem:[%s1359 + $0x30] sm:$0x3] %v1329
      %1367 = vst [vmem:[%s1359 + $0x38] sm:$0x3] %v1330
      %1368 = vst [vmem:[%s1359 + $0x40] sm:$0xfc] %v1331
      %1369 = vst [vmem:[%s1359 + $0x48] sm:$0xfc] %v1332
      %1370 = vst [vmem:[%s1359 + $0x50] sm:$0x3] %v1331
      %1371 = vst [vmem:[%s1359 + $0x58] sm:$0x3] %v1332
      %1372 = vst [vmem:[%s1359 + $0x60] sm:$0xfc] %v1333
      %1373 = vst [vmem:[%s1359 + $0x68] sm:$0xfc] %v1334
      %1374 = vst [vmem:[%s1359 + $0x70] sm:$0x3] %v1333
      %1375 = vst [vmem:[%s1359 + $0x78] sm:$0x3] %v1334
      %1376 = vst [vmem:[%s1359 + $0x80] sm:$0xfc] %v1335
      %1377 = vst [vmem:[%s1359 + $0x88] sm:$0xfc] %v1336
      %1378 = vst [vmem:[%s1359 + $0x90] sm:$0x3] %v1335
      %1379 = vst [vmem:[%s1359 + $0x98] sm:$0x3] %v1336
      %1380 = vst [vmem:[%s1359 + $0xa0] sm:$0xfc] %v1337
      %1381 = vst [vmem:[%s1359 + $0xa8] sm:$0xfc] %v1338
      %1382 = vst [vmem:[%s1359 + $0xb0] sm:$0x3] %v1337
      %1383 = vst [vmem:[%s1359 + $0xb8] sm:$0x3] %v1338
      %1384 = vst [vmem:[%s1359 + $0xc0] sm:$0xfc] %v1339
      %1385 = vst [vmem:[%s1359 + $0xc8] sm:$0xfc] %v1340
      %1386 = vst [vmem:[%s1359 + $0xd0] sm:$0x3] %v1339
      %1387 = vst [vmem:[%s1359 + $0xd8] sm:$0x3] %v1340
      %1388 = vst [vmem:[%s1359 + $0xe0] sm:$0xfc] %v1341
      %1389 = vst [vmem:[%s1359 + $0xe8] sm:$0xfc] %v1342
      %1390 = vst [vmem:[%s1359 + $0xf0] sm:$0x3] %v1341
      %1391 = vst [vmem:[%s1359 + $0xf8] sm:$0x3] %v1342
      %s1392 = scalar_lea.vmem [#allocation2], 416
      %v1393 = vld [vmem:[%s1392] sm:$0xfe]
      %v1394 = vld [vmem:[%s1392 + $0x8] sm:$0xfe]
      %v1395 = vld [vmem:[%s1392 + $0x10] sm:$0x1]
      %v1396 = vld [vmem:[%s1392 + $0x18] sm:$0x1]
      %v1397 = vld [vmem:[%s1392 + $0x20] sm:$0xfe]
      %v1398 = vld [vmem:[%s1392 + $0x28] sm:$0xfe]
      %v1399 = vld [vmem:[%s1392 + $0x30] sm:$0x1]
      %v1400 = vld [vmem:[%s1392 + $0x38] sm:$0x1]
      %v1401 = vld [vmem:[%s1392 + $0x40] sm:$0xfe]
      %v1402 = vld [vmem:[%s1392 + $0x48] sm:$0xfe]
      %v1403 = vld [vmem:[%s1392 + $0x50] sm:$0x1]
      %v1404 = vld [vmem:[%s1392 + $0x58] sm:$0x1]
      %v1405 = vld [vmem:[%s1392 + $0x60] sm:$0xfe]
      %v1406 = vld [vmem:[%s1392 + $0x68] sm:$0xfe]
      %v1407 = vld [vmem:[%s1392 + $0x70] sm:$0x1]
      %v1408 = vld [vmem:[%s1392 + $0x78] sm:$0x1]
      %v1409 = vld [vmem:[%s1392 + $0x80] sm:$0xfe]
      %v1410 = vld [vmem:[%s1392 + $0x88] sm:$0xfe]
      %v1411 = vld [vmem:[%s1392 + $0x90] sm:$0x1]
      %v1412 = vld [vmem:[%s1392 + $0x98] sm:$0x1]
      %v1413 = vld [vmem:[%s1392 + $0xa0] sm:$0xfe]
      %v1414 = vld [vmem:[%s1392 + $0xa8] sm:$0xfe]
      %v1415 = vld [vmem:[%s1392 + $0xb0] sm:$0x1]
      %v1416 = vld [vmem:[%s1392 + $0xb8] sm:$0x1]
      %v1417 = vld [vmem:[%s1392 + $0xc0] sm:$0xfe]
      %v1418 = vld [vmem:[%s1392 + $0xc8] sm:$0xfe]
      %v1419 = vld [vmem:[%s1392 + $0xd0] sm:$0x1]
      %v1420 = vld [vmem:[%s1392 + $0xd8] sm:$0x1]
      %v1421 = vld [vmem:[%s1392 + $0xe0] sm:$0xfe]
      %v1422 = vld [vmem:[%s1392 + $0xe8] sm:$0xfe]
      %v1423 = vld [vmem:[%s1392 + $0xf0] sm:$0x1]
      %v1424 = vld [vmem:[%s1392 + $0xf8] sm:$0x1]
      %v1425 = vld [vmem:[%s1] ss:$8 sm:$0x3]
      %v1427 = vlaneseq
      %v1428 = vshrl.u32 %v1427, 7
      %v1429 = vsub.s32 0, %v1428
      %v1430 = vrot.slane %v1425, %v1429
      %v1431 = vlaneseq
      %v1432 = vshrl.u32 %v1431, 7
      %v1433 = vsub.s32 1, %v1432
      %v1434 = vrot.slane %v1425, %v1433
      %v1437 = vmul.f32 %v1393, %v1430
      %v1438 = vmul.f32 %v1394, %v1434
      %v1439 = vmul.f32 %v1395, %v1430
      %v1440 = vmul.f32 %v1396, %v1434
      %v1441 = vmul.f32 %v1397, %v1430
      %v1442 = vmul.f32 %v1398, %v1434
      %v1443 = vmul.f32 %v1399, %v1430
      %v1444 = vmul.f32 %v1400, %v1434
      %v1445 = vmul.f32 %v1401, %v1430
      %v1446 = vmul.f32 %v1402, %v1434
      %v1447 = vmul.f32 %v1403, %v1430
      %v1448 = vmul.f32 %v1404, %v1434
      %v1449 = vmul.f32 %v1405, %v1430
      %v1450 = vmul.f32 %v1406, %v1434
      %v1451 = vmul.f32 %v1407, %v1430
      %v1452 = vmul.f32 %v1408, %v1434
      %v1453 = vmul.f32 %v1409, %v1430
      %v1454 = vmul.f32 %v1410, %v1434
      %v1455 = vmul.f32 %v1411, %v1430
      %v1456 = vmul.f32 %v1412, %v1434
      %v1457 = vmul.f32 %v1413, %v1430
      %v1458 = vmul.f32 %v1414, %v1434
      %v1459 = vmul.f32 %v1415, %v1430
      %v1460 = vmul.f32 %v1416, %v1434
      %v1461 = vmul.f32 %v1417, %v1430
      %v1462 = vmul.f32 %v1418, %v1434
      %v1463 = vmul.f32 %v1419, %v1430
      %v1464 = vmul.f32 %v1420, %v1434
      %v1465 = vmul.f32 %v1421, %v1430
      %v1466 = vmul.f32 %v1422, %v1434
      %v1467 = vmul.f32 %v1423, %v1430
      %v1468 = vmul.f32 %v1424, %v1434
      %v1469 = vadd.f32 %v1437, 0.0
      %v1470 = vadd.f32 %v1438, 0.0
      %v1471 = vadd.f32 %v1439, 0.0
      %v1472 = vadd.f32 %v1440, 0.0
      %v1473 = vadd.f32 %v1441, 0.0
      %v1474 = vadd.f32 %v1442, 0.0
      %v1475 = vadd.f32 %v1443, 0.0
      %v1476 = vadd.f32 %v1444, 0.0
      %v1477 = vadd.f32 %v1445, 0.0
      %v1478 = vadd.f32 %v1446, 0.0
      %v1479 = vadd.f32 %v1447, 0.0
      %v1480 = vadd.f32 %v1448, 0.0
      %v1481 = vadd.f32 %v1449, 0.0
      %v1482 = vadd.f32 %v1450, 0.0
      %v1483 = vadd.f32 %v1451, 0.0
      %v1484 = vadd.f32 %v1452, 0.0
      %v1485 = vadd.f32 %v1453, 0.0
      %v1486 = vadd.f32 %v1454, 0.0
      %v1487 = vadd.f32 %v1455, 0.0
      %v1488 = vadd.f32 %v1456, 0.0
      %v1489 = vadd.f32 %v1457, 0.0
      %v1490 = vadd.f32 %v1458, 0.0
      %v1491 = vadd.f32 %v1459, 0.0
      %v1492 = vadd.f32 %v1460, 0.0
      %v1493 = vadd.f32 %v1461, 0.0
      %v1494 = vadd.f32 %v1462, 0.0
      %v1495 = vadd.f32 %v1463, 0.0
      %v1496 = vadd.f32 %v1464, 0.0
      %v1497 = vadd.f32 %v1465, 0.0
      %v1498 = vadd.f32 %v1466, 0.0
      %v1499 = vadd.f32 %v1467, 0.0
      %v1500 = vadd.f32 %v1468, 0.0
      %s1501 = scalar_lea.vmem [#allocation2], 800
      %v1502 = vld [vmem:[%s1501] sm:$0xfe]
      %v1503 = vld [vmem:[%s1501 + $0x8] sm:$0xfe]
      %v1504 = vld [vmem:[%s1501 + $0x10] sm:$0x1]
      %v1505 = vld [vmem:[%s1501 + $0x18] sm:$0x1]
      %v1506 = vld [vmem:[%s1501 + $0x20] sm:$0xfe]
      %v1507 = vld [vmem:[%s1501 + $0x28] sm:$0xfe]
      %v1508 = vld [vmem:[%s1501 + $0x30] sm:$0x1]
      %v1509 = vld [vmem:[%s1501 + $0x38] sm:$0x1]
      %v1510 = vld [vmem:[%s1501 + $0x40] sm:$0xfe]
      %v1511 = vld [vmem:[%s1501 + $0x48] sm:$0xfe]
      %v1512 = vld [vmem:[%s1501 + $0x50] sm:$0x1]
      %v1513 = vld [vmem:[%s1501 + $0x58] sm:$0x1]
      %v1514 = vld [vmem:[%s1501 + $0x60] sm:$0xfe]
      %v1515 = vld [vmem:[%s1501 + $0x68] sm:$0xfe]
      %v1516 = vld [vmem:[%s1501 + $0x70] sm:$0x1]
      %v1517 = vld [vmem:[%s1501 + $0x78] sm:$0x1]
      %v1518 = vld [vmem:[%s1501 + $0x80] sm:$0xfe]
      %v1519 = vld [vmem:[%s1501 + $0x88] sm:$0xfe]
      %v1520 = vld [vmem:[%s1501 + $0x90] sm:$0x1]
      %v1521 = vld [vmem:[%s1501 + $0x98] sm:$0x1]
      %v1522 = vld [vmem:[%s1501 + $0xa0] sm:$0xfe]
      %v1523 = vld [vmem:[%s1501 + $0xa8] sm:$0xfe]
      %v1524 = vld [vmem:[%s1501 + $0xb0] sm:$0x1]
      %v1525 = vld [vmem:[%s1501 + $0xb8] sm:$0x1]
      %v1526 = vld [vmem:[%s1501 + $0xc0] sm:$0xfe]
      %v1527 = vld [vmem:[%s1501 + $0xc8] sm:$0xfe]
      %v1528 = vld [vmem:[%s1501 + $0xd0] sm:$0x1]
      %v1529 = vld [vmem:[%s1501 + $0xd8] sm:$0x1]
      %v1530 = vld [vmem:[%s1501 + $0xe0] sm:$0xfe]
      %v1531 = vld [vmem:[%s1501 + $0xe8] sm:$0xfe]
      %v1532 = vld [vmem:[%s1501 + $0xf0] sm:$0x1]
      %v1533 = vld [vmem:[%s1501 + $0xf8] sm:$0x1]
      %s1534 = scalar_lea.vmem %s1, 1
      %v1535 = vld [vmem:[%s1534] ss:$8 sm:$0x3]
      %v1537 = vlaneseq
      %v1538 = vshrl.u32 %v1537, 7
      %v1539 = vsub.s32 0, %v1538
      %v1540 = vrot.slane %v1535, %v1539
      %v1541 = vlaneseq
      %v1542 = vshrl.u32 %v1541, 7
      %v1543 = vsub.s32 1, %v1542
      %v1544 = vrot.slane %v1535, %v1543
      %v1547 = vmul.f32 %v1502, %v1540
      %v1548 = vmul.f32 %v1503, %v1544
      %v1549 = vmul.f32 %v1504, %v1540
      %v1550 = vmul.f32 %v1505, %v1544
      %v1551 = vmul.f32 %v1506, %v1540
      %v1552 = vmul.f32 %v1507, %v1544
      %v1553 = vmul.f32 %v1508, %v1540
      %v1554 = vmul.f32 %v1509, %v1544
      %v1555 = vmul.f32 %v1510, %v1540
      %v1556 = vmul.f32 %v1511, %v1544
      %v1557 = vmul.f32 %v1512, %v1540
      %v1558 = vmul.f32 %v1513, %v1544
      %v1559 = vmul.f32 %v1514, %v1540
      %v1560 = vmul.f32 %v1515, %v1544
      %v1561 = vmul.f32 %v1516, %v1540
      %v1562 = vmul.f32 %v1517, %v1544
      %v1563 = vmul.f32 %v1518, %v1540
      %v1564 = vmul.f32 %v1519, %v1544
      %v1565 = vmul.f32 %v1520, %v1540
      %v1566 = vmul.f32 %v1521, %v1544
      %v1567 = vmul.f32 %v1522, %v1540
      %v1568 = vmul.f32 %v1523, %v1544
      %v1569 = vmul.f32 %v1524, %v1540
      %v1570 = vmul.f32 %v1525, %v1544
      %v1571 = vmul.f32 %v1526, %v1540
      %v1572 = vmul.f32 %v1527, %v1544
      %v1573 = vmul.f32 %v1528, %v1540
      %v1574 = vmul.f32 %v1529, %v1544
      %v1575 = vmul.f32 %v1530, %v1540
      %v1576 = vmul.f32 %v1531, %v1544
      %v1577 = vmul.f32 %v1532, %v1540
      %v1578 = vmul.f32 %v1533, %v1544
      %v1579 = vadd.f32 %v1469, %v1547
      %v1580 = vadd.f32 %v1470, %v1548
      %v1581 = vadd.f32 %v1471, %v1549
      %v1582 = vadd.f32 %v1472, %v1550
      %v1583 = vadd.f32 %v1473, %v1551
      %v1584 = vadd.f32 %v1474, %v1552
      %v1585 = vadd.f32 %v1475, %v1553
      %v1586 = vadd.f32 %v1476, %v1554
      %v1587 = vadd.f32 %v1477, %v1555
      %v1588 = vadd.f32 %v1478, %v1556
      %v1589 = vadd.f32 %v1479, %v1557
      %v1590 = vadd.f32 %v1480, %v1558
      %v1591 = vadd.f32 %v1481, %v1559
      %v1592 = vadd.f32 %v1482, %v1560
      %v1593 = vadd.f32 %v1483, %v1561
      %v1594 = vadd.f32 %v1484, %v1562
      %v1595 = vadd.f32 %v1485, %v1563
      %v1596 = vadd.f32 %v1486, %v1564
      %v1597 = vadd.f32 %v1487, %v1565
      %v1598 = vadd.f32 %v1488, %v1566
      %v1599 = vadd.f32 %v1489, %v1567
      %v1600 = vadd.f32 %v1490, %v1568
      %v1601 = vadd.f32 %v1491, %v1569
      %v1602 = vadd.f32 %v1492, %v1570
      %v1603 = vadd.f32 %v1493, %v1571
      %v1604 = vadd.f32 %v1494, %v1572
      %v1605 = vadd.f32 %v1495, %v1573
      %v1606 = vadd.f32 %v1496, %v1574
      %v1607 = vadd.f32 %v1497, %v1575
      %v1608 = vadd.f32 %v1498, %v1576
      %v1609 = vadd.f32 %v1499, %v1577
      %v1610 = vadd.f32 %v1500, %v1578
      %s1611 = scalar_lea.vmem [#allocation2], 1184
      %v1612 = vld [vmem:[%s1611] sm:$0xfe]
      %v1613 = vld [vmem:[%s1611 + $0x8] sm:$0xfe]
      %v1614 = vld [vmem:[%s1611 + $0x10] sm:$0x1]
      %v1615 = vld [vmem:[%s1611 + $0x18] sm:$0x1]
      %v1616 = vld [vmem:[%s1611 + $0x20] sm:$0xfe]
      %v1617 = vld [vmem:[%s1611 + $0x28] sm:$0xfe]
      %v1618 = vld [vmem:[%s1611 + $0x30] sm:$0x1]
      %v1619 = vld [vmem:[%s1611 + $0x38] sm:$0x1]
      %v1620 = vld [vmem:[%s1611 + $0x40] sm:$0xfe]
      %v1621 = vld [vmem:[%s1611 + $0x48] sm:$0xfe]
      %v1622 = vld [vmem:[%s1611 + $0x50] sm:$0x1]
      %v1623 = vld [vmem:[%s1611 + $0x58] sm:$0x1]
      %v1624 = vld [vmem:[%s1611 + $0x60] sm:$0xfe]
      %v1625 = vld [vmem:[%s1611 + $0x68] sm:$0xfe]
      %v1626 = vld [vmem:[%s1611 + $0x70] sm:$0x1]
      %v1627 = vld [vmem:[%s1611 + $0x78] sm:$0x1]
      %v1628 = vld [vmem:[%s1611 + $0x80] sm:$0xfe]
      %v1629 = vld [vmem:[%s1611 + $0x88] sm:$0xfe]
      %v1630 = vld [vmem:[%s1611 + $0x90] sm:$0x1]
      %v1631 = vld [vmem:[%s1611 + $0x98] sm:$0x1]
      %v1632 = vld [vmem:[%s1611 + $0xa0] sm:$0xfe]
      %v1633 = vld [vmem:[%s1611 + $0xa8] sm:$0xfe]
      %v1634 = vld [vmem:[%s1611 + $0xb0] sm:$0x1]
      %v1635 = vld [vmem:[%s1611 + $0xb8] sm:$0x1]
      %v1636 = vld [vmem:[%s1611 + $0xc0] sm:$0xfe]
      %v1637 = vld [vmem:[%s1611 + $0xc8] sm:$0xfe]
      %v1638 = vld [vmem:[%s1611 + $0xd0] sm:$0x1]
      %v1639 = vld [vmem:[%s1611 + $0xd8] sm:$0x1]
      %v1640 = vld [vmem:[%s1611 + $0xe0] sm:$0xfe]
      %v1641 = vld [vmem:[%s1611 + $0xe8] sm:$0xfe]
      %v1642 = vld [vmem:[%s1611 + $0xf0] sm:$0x1]
      %v1643 = vld [vmem:[%s1611 + $0xf8] sm:$0x1]
      %s1644 = scalar_lea.vmem %s1, 2
      %v1645 = vld [vmem:[%s1644] ss:$8 sm:$0x3]
      %v1647 = vlaneseq
      %v1648 = vshrl.u32 %v1647, 7
      %v1649 = vsub.s32 0, %v1648
      %v1650 = vrot.slane %v1645, %v1649
      %v1651 = vlaneseq
      %v1652 = vshrl.u32 %v1651, 7
      %v1653 = vsub.s32 1, %v1652
      %v1654 = vrot.slane %v1645, %v1653
      %v1657 = vmul.f32 %v1612, %v1650
      %v1658 = vmul.f32 %v1613, %v1654
      %v1659 = vmul.f32 %v1614, %v1650
      %v1660 = vmul.f32 %v1615, %v1654
      %v1661 = vmul.f32 %v1616, %v1650
      %v1662 = vmul.f32 %v1617, %v1654
      %v1663 = vmul.f32 %v1618, %v1650
      %v1664 = vmul.f32 %v1619, %v1654
      %v1665 = vmul.f32 %v1620, %v1650
      %v1666 = vmul.f32 %v1621, %v1654
      %v1667 = vmul.f32 %v1622, %v1650
      %v1668 = vmul.f32 %v1623, %v1654
      %v1669 = vmul.f32 %v1624, %v1650
      %v1670 = vmul.f32 %v1625, %v1654
      %v1671 = vmul.f32 %v1626, %v1650
      %v1672 = vmul.f32 %v1627, %v1654
      %v1673 = vmul.f32 %v1628, %v1650
      %v1674 = vmul.f32 %v1629, %v1654
      %v1675 = vmul.f32 %v1630, %v1650
      %v1676 = vmul.f32 %v1631, %v1654
      %v1677 = vmul.f32 %v1632, %v1650
      %v1678 = vmul.f32 %v1633, %v1654
      %v1679 = vmul.f32 %v1634, %v1650
      %v1680 = vmul.f32 %v1635, %v1654
      %v1681 = vmul.f32 %v1636, %v1650
      %v1682 = vmul.f32 %v1637, %v1654
      %v1683 = vmul.f32 %v1638, %v1650
      %v1684 = vmul.f32 %v1639, %v1654
      %v1685 = vmul.f32 %v1640, %v1650
      %v1686 = vmul.f32 %v1641, %v1654
      %v1687 = vmul.f32 %v1642, %v1650
      %v1688 = vmul.f32 %v1643, %v1654
      %v1689 = vadd.f32 %v1579, %v1657
      %v1690 = vadd.f32 %v1580, %v1658
      %v1691 = vadd.f32 %v1581, %v1659
      %v1692 = vadd.f32 %v1582, %v1660
      %v1693 = vadd.f32 %v1583, %v1661
      %v1694 = vadd.f32 %v1584, %v1662
      %v1695 = vadd.f32 %v1585, %v1663
      %v1696 = vadd.f32 %v1586, %v1664
      %v1697 = vadd.f32 %v1587, %v1665
      %v1698 = vadd.f32 %v1588, %v1666
      %v1699 = vadd.f32 %v1589, %v1667
      %v1700 = vadd.f32 %v1590, %v1668
      %v1701 = vadd.f32 %v1591, %v1669
      %v1702 = vadd.f32 %v1592, %v1670
      %v1703 = vadd.f32 %v1593, %v1671
      %v1704 = vadd.f32 %v1594, %v1672
      %v1705 = vadd.f32 %v1595, %v1673
      %v1706 = vadd.f32 %v1596, %v1674
      %v1707 = vadd.f32 %v1597, %v1675
      %v1708 = vadd.f32 %v1598, %v1676
      %v1709 = vadd.f32 %v1599, %v1677
      %v1710 = vadd.f32 %v1600, %v1678
      %v1711 = vadd.f32 %v1601, %v1679
      %v1712 = vadd.f32 %v1602, %v1680
      %v1713 = vadd.f32 %v1603, %v1681
      %v1714 = vadd.f32 %v1604, %v1682
      %v1715 = vadd.f32 %v1605, %v1683
      %v1716 = vadd.f32 %v1606, %v1684
      %v1717 = vadd.f32 %v1607, %v1685
      %v1718 = vadd.f32 %v1608, %v1686
      %v1719 = vadd.f32 %v1609, %v1687
      %v1720 = vadd.f32 %v1610, %v1688
      %v1721 = vld [vmem:[%s1392] sm:$0xfc]
      %v1722 = vld [vmem:[%s1392 + $0x8] sm:$0xfc]
      %v1723 = vld [vmem:[%s1392 + $0x10] sm:$0x3]
      %v1724 = vld [vmem:[%s1392 + $0x18] sm:$0x3]
      %v1725 = vld [vmem:[%s1392 + $0x20] sm:$0xfc]
      %v1726 = vld [vmem:[%s1392 + $0x28] sm:$0xfc]
      %v1727 = vld [vmem:[%s1392 + $0x30] sm:$0x3]
      %v1728 = vld [vmem:[%s1392 + $0x38] sm:$0x3]
      %v1729 = vld [vmem:[%s1392 + $0x40] sm:$0xfc]
      %v1730 = vld [vmem:[%s1392 + $0x48] sm:$0xfc]
      %v1731 = vld [vmem:[%s1392 + $0x50] sm:$0x3]
      %v1732 = vld [vmem:[%s1392 + $0x58] sm:$0x3]
      %v1733 = vld [vmem:[%s1392 + $0x60] sm:$0xfc]
      %v1734 = vld [vmem:[%s1392 + $0x68] sm:$0xfc]
      %v1735 = vld [vmem:[%s1392 + $0x70] sm:$0x3]
      %v1736 = vld [vmem:[%s1392 + $0x78] sm:$0x3]
      %v1737 = vld [vmem:[%s1392 + $0x80] sm:$0xfc]
      %v1738 = vld [vmem:[%s1392 + $0x88] sm:$0xfc]
      %v1739 = vld [vmem:[%s1392 + $0x90] sm:$0x3]
      %v1740 = vld [vmem:[%s1392 + $0x98] sm:$0x3]
      %v1741 = vld [vmem:[%s1392 + $0xa0] sm:$0xfc]
      %v1742 = vld [vmem:[%s1392 + $0xa8] sm:$0xfc]
      %v1743 = vld [vmem:[%s1392 + $0xb0] sm:$0x3]
      %v1744 = vld [vmem:[%s1392 + $0xb8] sm:$0x3]
      %v1745 = vld [vmem:[%s1392 + $0xc0] sm:$0xfc]
      %v1746 = vld [vmem:[%s1392 + $0xc8] sm:$0xfc]
      %v1747 = vld [vmem:[%s1392 + $0xd0] sm:$0x3]
      %v1748 = vld [vmem:[%s1392 + $0xd8] sm:$0x3]
      %v1749 = vld [vmem:[%s1392 + $0xe0] sm:$0xfc]
      %v1750 = vld [vmem:[%s1392 + $0xe8] sm:$0xfc]
      %v1751 = vld [vmem:[%s1392 + $0xf0] sm:$0x3]
      %v1752 = vld [vmem:[%s1392 + $0xf8] sm:$0x3]
      %s1753 = scalar_lea.vmem %s1, 3
      %v1754 = vld [vmem:[%s1753] ss:$8 sm:$0x3]
      %v1756 = vlaneseq
      %v1757 = vshrl.u32 %v1756, 7
      %v1758 = vsub.s32 0, %v1757
      %v1759 = vrot.slane %v1754, %v1758
      %v1760 = vlaneseq
      %v1761 = vshrl.u32 %v1760, 7
      %v1762 = vsub.s32 1, %v1761
      %v1763 = vrot.slane %v1754, %v1762
      %v1766 = vmul.f32 %v1721, %v1759
      %v1767 = vmul.f32 %v1722, %v1763
      %v1768 = vmul.f32 %v1723, %v1759
      %v1769 = vmul.f32 %v1724, %v1763
      %v1770 = vmul.f32 %v1725, %v1759
      %v1771 = vmul.f32 %v1726, %v1763
      %v1772 = vmul.f32 %v1727, %v1759
      %v1773 = vmul.f32 %v1728, %v1763
      %v1774 = vmul.f32 %v1729, %v1759
      %v1775 = vmul.f32 %v1730, %v1763
      %v1776 = vmul.f32 %v1731, %v1759
      %v1777 = vmul.f32 %v1732, %v1763
      %v1778 = vmul.f32 %v1733, %v1759
      %v1779 = vmul.f32 %v1734, %v1763
      %v1780 = vmul.f32 %v1735, %v1759
      %v1781 = vmul.f32 %v1736, %v1763
      %v1782 = vmul.f32 %v1737, %v1759
      %v1783 = vmul.f32 %v1738, %v1763
      %v1784 = vmul.f32 %v1739, %v1759
      %v1785 = vmul.f32 %v1740, %v1763
      %v1786 = vmul.f32 %v1741, %v1759
      %v1787 = vmul.f32 %v1742, %v1763
      %v1788 = vmul.f32 %v1743, %v1759
      %v1789 = vmul.f32 %v1744, %v1763
      %v1790 = vmul.f32 %v1745, %v1759
      %v1791 = vmul.f32 %v1746, %v1763
      %v1792 = vmul.f32 %v1747, %v1759
      %v1793 = vmul.f32 %v1748, %v1763
      %v1794 = vmul.f32 %v1749, %v1759
      %v1795 = vmul.f32 %v1750, %v1763
      %v1796 = vmul.f32 %v1751, %v1759
      %v1797 = vmul.f32 %v1752, %v1763
      %vm1830 = vcmask 1046528
      %v1831 = vrot.slane %v1766, 1
      %v1832 = vrot.slane %v1768, 1
      %v1833 = vsel %vm1830, %v1831, %v1832
      %v1834 = vrot.slane %v1767, 1
      %v1835 = vrot.slane %v1769, 1
      %v1836 = vsel %vm1830, %v1834, %v1835
      %v1837 = vrot.slane %v1770, 1
      %v1838 = vrot.slane %v1772, 1
      %v1839 = vsel %vm1830, %v1837, %v1838
      %v1840 = vrot.slane %v1771, 1
      %v1841 = vrot.slane %v1773, 1
      %v1842 = vsel %vm1830, %v1840, %v1841
      %v1843 = vrot.slane %v1774, 1
      %v1844 = vrot.slane %v1776, 1
      %v1845 = vsel %vm1830, %v1843, %v1844
      %v1846 = vrot.slane %v1775, 1
      %v1847 = vrot.slane %v1777, 1
      %v1848 = vsel %vm1830, %v1846, %v1847
      %v1849 = vrot.slane %v1778, 1
      %v1850 = vrot.slane %v1780, 1
      %v1851 = vsel %vm1830, %v1849, %v1850
      %v1852 = vrot.slane %v1779, 1
      %v1853 = vrot.slane %v1781, 1
      %v1854 = vsel %vm1830, %v1852, %v1853
      %v1855 = vrot.slane %v1782, 1
      %v1856 = vrot.slane %v1784, 1
      %v1857 = vsel %vm1830, %v1855, %v1856
      %v1858 = vrot.slane %v1783, 1
      %v1859 = vrot.slane %v1785, 1
      %v1860 = vsel %vm1830, %v1858, %v1859
      %v1861 = vrot.slane %v1786, 1
      %v1862 = vrot.slane %v1788, 1
      %v1863 = vsel %vm1830, %v1861, %v1862
      %v1864 = vrot.slane %v1787, 1
      %v1865 = vrot.slane %v1789, 1
      %v1866 = vsel %vm1830, %v1864, %v1865
      %v1867 = vrot.slane %v1790, 1
      %v1868 = vrot.slane %v1792, 1
      %v1869 = vsel %vm1830, %v1867, %v1868
      %v1870 = vrot.slane %v1791, 1
      %v1871 = vrot.slane %v1793, 1
      %v1872 = vsel %vm1830, %v1870, %v1871
      %v1873 = vrot.slane %v1794, 1
      %v1874 = vrot.slane %v1796, 1
      %v1875 = vsel %vm1830, %v1873, %v1874
      %v1876 = vrot.slane %v1795, 1
      %v1877 = vrot.slane %v1797, 1
      %v1878 = vsel %vm1830, %v1876, %v1877
      %v1911 = vadd.f32 %v1689, %v1833
      %v1912 = vadd.f32 %v1690, %v1836
      %v1913 = vadd.f32 %v1691, %v1832
      %v1914 = vadd.f32 %v1692, %v1835
      %v1915 = vadd.f32 %v1693, %v1839
      %v1916 = vadd.f32 %v1694, %v1842
      %v1917 = vadd.f32 %v1695, %v1838
      %v1918 = vadd.f32 %v1696, %v1841
      %v1919 = vadd.f32 %v1697, %v1845
      %v1920 = vadd.f32 %v1698, %v1848
      %v1921 = vadd.f32 %v1699, %v1844
      %v1922 = vadd.f32 %v1700, %v1847
      %v1923 = vadd.f32 %v1701, %v1851
      %v1924 = vadd.f32 %v1702, %v1854
      %v1925 = vadd.f32 %v1703, %v1850
      %v1926 = vadd.f32 %v1704, %v1853
      %v1927 = vadd.f32 %v1705, %v1857
      %v1928 = vadd.f32 %v1706, %v1860
      %v1929 = vadd.f32 %v1707, %v1856
      %v1930 = vadd.f32 %v1708, %v1859
      %v1931 = vadd.f32 %v1709, %v1863
      %v1932 = vadd.f32 %v1710, %v1866
      %v1933 = vadd.f32 %v1711, %v1862
      %v1934 = vadd.f32 %v1712, %v1865
      %v1935 = vadd.f32 %v1713, %v1869
      %v1936 = vadd.f32 %v1714, %v1872
      %v1937 = vadd.f32 %v1715, %v1868
      %v1938 = vadd.f32 %v1716, %v1871
      %v1939 = vadd.f32 %v1717, %v1875
      %v1940 = vadd.f32 %v1718, %v1878
      %v1941 = vadd.f32 %v1719, %v1874
      %v1942 = vadd.f32 %v1720, %v1877
      %v1943 = vld [vmem:[%s1501] sm:$0xfc]
      %v1944 = vld [vmem:[%s1501 + $0x8] sm:$0xfc]
      %v1945 = vld [vmem:[%s1501 + $0x10] sm:$0x3]
      %v1946 = vld [vmem:[%s1501 + $0x18] sm:$0x3]
      %v1947 = vld [vmem:[%s1501 + $0x20] sm:$0xfc]
      %v1948 = vld [vmem:[%s1501 + $0x28] sm:$0xfc]
      %v1949 = vld [vmem:[%s1501 + $0x30] sm:$0x3]
      %v1950 = vld [vmem:[%s1501 + $0x38] sm:$0x3]
      %v1951 = vld [vmem:[%s1501 + $0x40] sm:$0xfc]
      %v1952 = vld [vmem:[%s1501 + $0x48] sm:$0xfc]
      %v1953 = vld [vmem:[%s1501 + $0x50] sm:$0x3]
      %v1954 = vld [vmem:[%s1501 + $0x58] sm:$0x3]
      %v1955 = vld [vmem:[%s1501 + $0x60] sm:$0xfc]
      %v1956 = vld [vmem:[%s1501 + $0x68] sm:$0xfc]
      %v1957 = vld [vmem:[%s1501 + $0x70] sm:$0x3]
      %v1958 = vld [vmem:[%s1501 + $0x78] sm:$0x3]
      %v1959 = vld [vmem:[%s1501 + $0x80] sm:$0xfc]
      %v1960 = vld [vmem:[%s1501 + $0x88] sm:$0xfc]
      %v1961 = vld [vmem:[%s1501 + $0x90] sm:$0x3]
      %v1962 = vld [vmem:[%s1501 + $0x98] sm:$0x3]
      %v1963 = vld [vmem:[%s1501 + $0xa0] sm:$0xfc]
      %v1964 = vld [vmem:[%s1501 + $0xa8] sm:$0xfc]
      %v1965 = vld [vmem:[%s1501 + $0xb0] sm:$0x3]
      %v1966 = vld [vmem:[%s1501 + $0xb8] sm:$0x3]
      %v1967 = vld [vmem:[%s1501 + $0xc0] sm:$0xfc]
      %v1968 = vld [vmem:[%s1501 + $0xc8] sm:$0xfc]
      %v1969 = vld [vmem:[%s1501 + $0xd0] sm:$0x3]
      %v1970 = vld [vmem:[%s1501 + $0xd8] sm:$0x3]
      %v1971 = vld [vmem:[%s1501 + $0xe0] sm:$0xfc]
      %v1972 = vld [vmem:[%s1501 + $0xe8] sm:$0xfc]
      %v1973 = vld [vmem:[%s1501 + $0xf0] sm:$0x3]
      %v1974 = vld [vmem:[%s1501 + $0xf8] sm:$0x3]
      %s1975 = scalar_lea.vmem %s1, 4
      %v1976 = vld [vmem:[%s1975] ss:$8 sm:$0x3]
      %v1978 = vlaneseq
      %v1979 = vshrl.u32 %v1978, 7
      %v1980 = vsub.s32 0, %v1979
      %v1981 = vrot.slane %v1976, %v1980
      %v1982 = vlaneseq
      %v1983 = vshrl.u32 %v1982, 7
      %v1984 = vsub.s32 1, %v1983
      %v1985 = vrot.slane %v1976, %v1984
      %v1988 = vmul.f32 %v1943, %v1981
      %v1989 = vmul.f32 %v1944, %v1985
      %v1990 = vmul.f32 %v1945, %v1981
      %v1991 = vmul.f32 %v1946, %v1985
      %v1992 = vmul.f32 %v1947, %v1981
      %v1993 = vmul.f32 %v1948, %v1985
      %v1994 = vmul.f32 %v1949, %v1981
      %v1995 = vmul.f32 %v1950, %v1985
      %v1996 = vmul.f32 %v1951, %v1981
      %v1997 = vmul.f32 %v1952, %v1985
      %v1998 = vmul.f32 %v1953, %v1981
      %v1999 = vmul.f32 %v1954, %v1985
      %v2000 = vmul.f32 %v1955, %v1981
      %v2001 = vmul.f32 %v1956, %v1985
      %v2002 = vmul.f32 %v1957, %v1981
      %v2003 = vmul.f32 %v1958, %v1985
      %v2004 = vmul.f32 %v1959, %v1981
      %v2005 = vmul.f32 %v1960, %v1985
      %v2006 = vmul.f32 %v1961, %v1981
      %v2007 = vmul.f32 %v1962, %v1985
      %v2008 = vmul.f32 %v1963, %v1981
      %v2009 = vmul.f32 %v1964, %v1985
      %v2010 = vmul.f32 %v1965, %v1981
      %v2011 = vmul.f32 %v1966, %v1985
      %v2012 = vmul.f32 %v1967, %v1981
      %v2013 = vmul.f32 %v1968, %v1985
      %v2014 = vmul.f32 %v1969, %v1981
      %v2015 = vmul.f32 %v1970, %v1985
      %v2016 = vmul.f32 %v1971, %v1981
      %v2017 = vmul.f32 %v1972, %v1985
      %v2018 = vmul.f32 %v1973, %v1981
      %v2019 = vmul.f32 %v1974, %v1985
      %v2052 = vrot.slane %v1988, 1
      %v2053 = vrot.slane %v1990, 1
      %v2054 = vsel %vm1830, %v2052, %v2053
      %v2055 = vrot.slane %v1989, 1
      %v2056 = vrot.slane %v1991, 1
      %v2057 = vsel %vm1830, %v2055, %v2056
      %v2058 = vrot.slane %v1992, 1
      %v2059 = vrot.slane %v1994, 1
      %v2060 = vsel %vm1830, %v2058, %v2059
      %v2061 = vrot.slane %v1993, 1
      %v2062 = vrot.slane %v1995, 1
      %v2063 = vsel %vm1830, %v2061, %v2062
      %v2064 = vrot.slane %v1996, 1
      %v2065 = vrot.slane %v1998, 1
      %v2066 = vsel %vm1830, %v2064, %v2065
      %v2067 = vrot.slane %v1997, 1
      %v2068 = vrot.slane %v1999, 1
      %v2069 = vsel %vm1830, %v2067, %v2068
      %v2070 = vrot.slane %v2000, 1
      %v2071 = vrot.slane %v2002, 1
      %v2072 = vsel %vm1830, %v2070, %v2071
      %v2073 = vrot.slane %v2001, 1
      %v2074 = vrot.slane %v2003, 1
      %v2075 = vsel %vm1830, %v2073, %v2074
      %v2076 = vrot.slane %v2004, 1
      %v2077 = vrot.slane %v2006, 1
      %v2078 = vsel %vm1830, %v2076, %v2077
      %v2079 = vrot.slane %v2005, 1
      %v2080 = vrot.slane %v2007, 1
      %v2081 = vsel %vm1830, %v2079, %v2080
      %v2082 = vrot.slane %v2008, 1
      %v2083 = vrot.slane %v2010, 1
      %v2084 = vsel %vm1830, %v2082, %v2083
      %v2085 = vrot.slane %v2009, 1
      %v2086 = vrot.slane %v2011, 1
      %v2087 = vsel %vm1830, %v2085, %v2086
      %v2088 = vrot.slane %v2012, 1
      %v2089 = vrot.slane %v2014, 1
      %v2090 = vsel %vm1830, %v2088, %v2089
      %v2091 = vrot.slane %v2013, 1
      %v2092 = vrot.slane %v2015, 1
      %v2093 = vsel %vm1830, %v2091, %v2092
      %v2094 = vrot.slane %v2016, 1
      %v2095 = vrot.slane %v2018, 1
      %v2096 = vsel %vm1830, %v2094, %v2095
      %v2097 = vrot.slane %v2017, 1
      %v2098 = vrot.slane %v2019, 1
      %v2099 = vsel %vm1830, %v2097, %v2098
      %v2132 = vadd.f32 %v1911, %v2054
      %v2133 = vadd.f32 %v1912, %v2057
      %v2134 = vadd.f32 %v1913, %v2053
      %v2135 = vadd.f32 %v1914, %v2056
      %v2136 = vadd.f32 %v1915, %v2060
      %v2137 = vadd.f32 %v1916, %v2063
      %v2138 = vadd.f32 %v1917, %v2059
      %v2139 = vadd.f32 %v1918, %v2062
      %v2140 = vadd.f32 %v1919, %v2066
      %v2141 = vadd.f32 %v1920, %v2069
      %v2142 = vadd.f32 %v1921, %v2065
      %v2143 = vadd.f32 %v1922, %v2068
      %v2144 = vadd.f32 %v1923, %v2072
      %v2145 = vadd.f32 %v1924, %v2075
      %v2146 = vadd.f32 %v1925, %v2071
      %v2147 = vadd.f32 %v1926, %v2074
      %v2148 = vadd.f32 %v1927, %v2078
      %v2149 = vadd.f32 %v1928, %v2081
      %v2150 = vadd.f32 %v1929, %v2077
      %v2151 = vadd.f32 %v1930, %v2080
      %v2152 = vadd.f32 %v1931, %v2084
      %v2153 = vadd.f32 %v1932, %v2087
      %v2154 = vadd.f32 %v1933, %v2083
      %v2155 = vadd.f32 %v1934, %v2086
      %v2156 = vadd.f32 %v1935, %v2090
      %v2157 = vadd.f32 %v1936, %v2093
      %v2158 = vadd.f32 %v1937, %v2089
      %v2159 = vadd.f32 %v1938, %v2092
      %v2160 = vadd.f32 %v1939, %v2096
      %v2161 = vadd.f32 %v1940, %v2099
      %v2162 = vadd.f32 %v1941, %v2095
      %v2163 = vadd.f32 %v1942, %v2098
      %v2164 = vld [vmem:[%s1611] sm:$0xfc]
      %v2165 = vld [vmem:[%s1611 + $0x8] sm:$0xfc]
      %v2166 = vld [vmem:[%s1611 + $0x10] sm:$0x3]
      %v2167 = vld [vmem:[%s1611 + $0x18] sm:$0x3]
      %v2168 = vld [vmem:[%s1611 + $0x20] sm:$0xfc]
      %v2169 = vld [vmem:[%s1611 + $0x28] sm:$0xfc]
      %v2170 = vld [vmem:[%s1611 + $0x30] sm:$0x3]
      %v2171 = vld [vmem:[%s1611 + $0x38] sm:$0x3]
      %v2172 = vld [vmem:[%s1611 + $0x40] sm:$0xfc]
      %v2173 = vld [vmem:[%s1611 + $0x48] sm:$0xfc]
      %v2174 = vld [vmem:[%s1611 + $0x50] sm:$0x3]
      %v2175 = vld [vmem:[%s1611 + $0x58] sm:$0x3]
      %v2176 = vld [vmem:[%s1611 + $0x60] sm:$0xfc]
      %v2177 = vld [vmem:[%s1611 + $0x68] sm:$0xfc]
      %v2178 = vld [vmem:[%s1611 + $0x70] sm:$0x3]
      %v2179 = vld [vmem:[%s1611 + $0x78] sm:$0x3]
      %v2180 = vld [vmem:[%s1611 + $0x80] sm:$0xfc]
      %v2181 = vld [vmem:[%s1611 + $0x88] sm:$0xfc]
      %v2182 = vld [vmem:[%s1611 + $0x90] sm:$0x3]
      %v2183 = vld [vmem:[%s1611 + $0x98] sm:$0x3]
      %v2184 = vld [vmem:[%s1611 + $0xa0] sm:$0xfc]
      %v2185 = vld [vmem:[%s1611 + $0xa8] sm:$0xfc]
      %v2186 = vld [vmem:[%s1611 + $0xb0] sm:$0x3]
      %v2187 = vld [vmem:[%s1611 + $0xb8] sm:$0x3]
      %v2188 = vld [vmem:[%s1611 + $0xc0] sm:$0xfc]
      %v2189 = vld [vmem:[%s1611 + $0xc8] sm:$0xfc]
      %v2190 = vld [vmem:[%s1611 + $0xd0] sm:$0x3]
      %v2191 = vld [vmem:[%s1611 + $0xd8] sm:$0x3]
      %v2192 = vld [vmem:[%s1611 + $0xe0] sm:$0xfc]
      %v2193 = vld [vmem:[%s1611 + $0xe8] sm:$0xfc]
      %v2194 = vld [vmem:[%s1611 + $0xf0] sm:$0x3]
      %v2195 = vld [vmem:[%s1611 + $0xf8] sm:$0x3]
      %s2196 = scalar_lea.vmem %s1, 5
      %v2197 = vld [vmem:[%s2196] ss:$8 sm:$0x3]
      %v2199 = vlaneseq
      %v2200 = vshrl.u32 %v2199, 7
      %v2201 = vsub.s32 0, %v2200
      %v2202 = vrot.slane %v2197, %v2201
      %v2203 = vlaneseq
      %v2204 = vshrl.u32 %v2203, 7
      %v2205 = vsub.s32 1, %v2204
      %v2206 = vrot.slane %v2197, %v2205
      %v2209 = vmul.f32 %v2164, %v2202
      %v2210 = vmul.f32 %v2165, %v2206
      %v2211 = vmul.f32 %v2166, %v2202
      %v2212 = vmul.f32 %v2167, %v2206
      %v2213 = vmul.f32 %v2168, %v2202
      %v2214 = vmul.f32 %v2169, %v2206
      %v2215 = vmul.f32 %v2170, %v2202
      %v2216 = vmul.f32 %v2171, %v2206
      %v2217 = vmul.f32 %v2172, %v2202
      %v2218 = vmul.f32 %v2173, %v2206
      %v2219 = vmul.f32 %v2174, %v2202
      %v2220 = vmul.f32 %v2175, %v2206
      %v2221 = vmul.f32 %v2176, %v2202
      %v2222 = vmul.f32 %v2177, %v2206
      %v2223 = vmul.f32 %v2178, %v2202
      %v2224 = vmul.f32 %v2179, %v2206
      %v2225 = vmul.f32 %v2180, %v2202
      %v2226 = vmul.f32 %v2181, %v2206
      %v2227 = vmul.f32 %v2182, %v2202
      %v2228 = vmul.f32 %v2183, %v2206
      %v2229 = vmul.f32 %v2184, %v2202
      %v2230 = vmul.f32 %v2185, %v2206
      %v2231 = vmul.f32 %v2186, %v2202
      %v2232 = vmul.f32 %v2187, %v2206
      %v2233 = vmul.f32 %v2188, %v2202
      %v2234 = vmul.f32 %v2189, %v2206
      %v2235 = vmul.f32 %v2190, %v2202
      %v2236 = vmul.f32 %v2191, %v2206
      %v2237 = vmul.f32 %v2192, %v2202
      %v2238 = vmul.f32 %v2193, %v2206
      %v2239 = vmul.f32 %v2194, %v2202
      %v2240 = vmul.f32 %v2195, %v2206
      %v2273 = vrot.slane %v2209, 1
      %v2274 = vrot.slane %v2211, 1
      %v2275 = vsel %vm1830, %v2273, %v2274
      %v2276 = vrot.slane %v2210, 1
      %v2277 = vrot.slane %v2212, 1
      %v2278 = vsel %vm1830, %v2276, %v2277
      %v2279 = vrot.slane %v2213, 1
      %v2280 = vrot.slane %v2215, 1
      %v2281 = vsel %vm1830, %v2279, %v2280
      %v2282 = vrot.slane %v2214, 1
      %v2283 = vrot.slane %v2216, 1
      %v2284 = vsel %vm1830, %v2282, %v2283
      %v2285 = vrot.slane %v2217, 1
      %v2286 = vrot.slane %v2219, 1
      %v2287 = vsel %vm1830, %v2285, %v2286
      %v2288 = vrot.slane %v2218, 1
      %v2289 = vrot.slane %v2220, 1
      %v2290 = vsel %vm1830, %v2288, %v2289
      %v2291 = vrot.slane %v2221, 1
      %v2292 = vrot.slane %v2223, 1
      %v2293 = vsel %vm1830, %v2291, %v2292
      %v2294 = vrot.slane %v2222, 1
      %v2295 = vrot.slane %v2224, 1
      %v2296 = vsel %vm1830, %v2294, %v2295
      %v2297 = vrot.slane %v2225, 1
      %v2298 = vrot.slane %v2227, 1
      %v2299 = vsel %vm1830, %v2297, %v2298
      %v2300 = vrot.slane %v2226, 1
      %v2301 = vrot.slane %v2228, 1
      %v2302 = vsel %vm1830, %v2300, %v2301
      %v2303 = vrot.slane %v2229, 1
      %v2304 = vrot.slane %v2231, 1
      %v2305 = vsel %vm1830, %v2303, %v2304
      %v2306 = vrot.slane %v2230, 1
      %v2307 = vrot.slane %v2232, 1
      %v2308 = vsel %vm1830, %v2306, %v2307
      %v2309 = vrot.slane %v2233, 1
      %v2310 = vrot.slane %v2235, 1
      %v2311 = vsel %vm1830, %v2309, %v2310
      %v2312 = vrot.slane %v2234, 1
      %v2313 = vrot.slane %v2236, 1
      %v2314 = vsel %vm1830, %v2312, %v2313
      %v2315 = vrot.slane %v2237, 1
      %v2316 = vrot.slane %v2239, 1
      %v2317 = vsel %vm1830, %v2315, %v2316
      %v2318 = vrot.slane %v2238, 1
      %v2319 = vrot.slane %v2240, 1
      %v2320 = vsel %vm1830, %v2318, %v2319
      %v2353 = vadd.f32 %v2132, %v2275
      %v2354 = vadd.f32 %v2133, %v2278
      %v2355 = vadd.f32 %v2134, %v2274
      %v2356 = vadd.f32 %v2135, %v2277
      %v2357 = vadd.f32 %v2136, %v2281
      %v2358 = vadd.f32 %v2137, %v2284
      %v2359 = vadd.f32 %v2138, %v2280
      %v2360 = vadd.f32 %v2139, %v2283
      %v2361 = vadd.f32 %v2140, %v2287
      %v2362 = vadd.f32 %v2141, %v2290
      %v2363 = vadd.f32 %v2142, %v2286
      %v2364 = vadd.f32 %v2143, %v2289
      %v2365 = vadd.f32 %v2144, %v2293
      %v2366 = vadd.f32 %v2145, %v2296
      %v2367 = vadd.f32 %v2146, %v2292
      %v2368 = vadd.f32 %v2147, %v2295
      %v2369 = vadd.f32 %v2148, %v2299
      %v2370 = vadd.f32 %v2149, %v2302
      %v2371 = vadd.f32 %v2150, %v2298
      %v2372 = vadd.f32 %v2151, %v2301
      %v2373 = vadd.f32 %v2152, %v2305
      %v2374 = vadd.f32 %v2153, %v2308
      %v2375 = vadd.f32 %v2154, %v2304
      %v2376 = vadd.f32 %v2155, %v2307
      %v2377 = vadd.f32 %v2156, %v2311
      %v2378 = vadd.f32 %v2157, %v2314
      %v2379 = vadd.f32 %v2158, %v2310
      %v2380 = vadd.f32 %v2159, %v2313
      %v2381 = vadd.f32 %v2160, %v2317
      %v2382 = vadd.f32 %v2161, %v2320
      %v2383 = vadd.f32 %v2162, %v2316
      %v2384 = vadd.f32 %v2163, %v2319
      %v2385 = vld [vmem:[%s1392] sm:$0xf8]
      %v2386 = vld [vmem:[%s1392 + $0x8] sm:$0xf8]
      %v2387 = vld [vmem:[%s1392 + $0x10] sm:$0x7]
      %v2388 = vld [vmem:[%s1392 + $0x18] sm:$0x7]
      %v2389 = vld [vmem:[%s1392 + $0x20] sm:$0xf8]
      %v2390 = vld [vmem:[%s1392 + $0x28] sm:$0xf8]
      %v2391 = vld [vmem:[%s1392 + $0x30] sm:$0x7]
      %v2392 = vld [vmem:[%s1392 + $0x38] sm:$0x7]
      %v2393 = vld [vmem:[%s1392 + $0x40] sm:$0xf8]
      %v2394 = vld [vmem:[%s1392 + $0x48] sm:$0xf8]
      %v2395 = vld [vmem:[%s1392 + $0x50] sm:$0x7]
      %v2396 = vld [vmem:[%s1392 + $0x58] sm:$0x7]
      %v2397 = vld [vmem:[%s1392 + $0x60] sm:$0xf8]
      %v2398 = vld [vmem:[%s1392 + $0x68] sm:$0xf8]
      %v2399 = vld [vmem:[%s1392 + $0x70] sm:$0x7]
      %v2400 = vld [vmem:[%s1392 + $0x78] sm:$0x7]
      %v2401 = vld [vmem:[%s1392 + $0x80] sm:$0xf8]
      %v2402 = vld [vmem:[%s1392 + $0x88] sm:$0xf8]
      %v2403 = vld [vmem:[%s1392 + $0x90] sm:$0x7]
      %v2404 = vld [vmem:[%s1392 + $0x98] sm:$0x7]
      %v2405 = vld [vmem:[%s1392 + $0xa0] sm:$0xf8]
      %v2406 = vld [vmem:[%s1392 + $0xa8] sm:$0xf8]
      %v2407 = vld [vmem:[%s1392 + $0xb0] sm:$0x7]
      %v2408 = vld [vmem:[%s1392 + $0xb8] sm:$0x7]
      %v2409 = vld [vmem:[%s1392 + $0xc0] sm:$0xf8]
      %v2410 = vld [vmem:[%s1392 + $0xc8] sm:$0xf8]
      %v2411 = vld [vmem:[%s1392 + $0xd0] sm:$0x7]
      %v2412 = vld [vmem:[%s1392 + $0xd8] sm:$0x7]
      %v2413 = vld [vmem:[%s1392 + $0xe0] sm:$0xf8]
      %v2414 = vld [vmem:[%s1392 + $0xe8] sm:$0xf8]
      %v2415 = vld [vmem:[%s1392 + $0xf0] sm:$0x7]
      %v2416 = vld [vmem:[%s1392 + $0xf8] sm:$0x7]
      %s2417 = scalar_lea.vmem %s1, 6
      %v2418 = vld [vmem:[%s2417] ss:$8 sm:$0x3]
      %v2420 = vlaneseq
      %v2421 = vshrl.u32 %v2420, 7
      %v2422 = vsub.s32 0, %v2421
      %v2423 = vrot.slane %v2418, %v2422
      %v2424 = vlaneseq
      %v2425 = vshrl.u32 %v2424, 7
      %v2426 = vsub.s32 1, %v2425
      %v2427 = vrot.slane %v2418, %v2426
      %v2430 = vmul.f32 %v2385, %v2423
      %v2431 = vmul.f32 %v2386, %v2427
      %v2432 = vmul.f32 %v2387, %v2423
      %v2433 = vmul.f32 %v2388, %v2427
      %v2434 = vmul.f32 %v2389, %v2423
      %v2435 = vmul.f32 %v2390, %v2427
      %v2436 = vmul.f32 %v2391, %v2423
      %v2437 = vmul.f32 %v2392, %v2427
      %v2438 = vmul.f32 %v2393, %v2423
      %v2439 = vmul.f32 %v2394, %v2427
      %v2440 = vmul.f32 %v2395, %v2423
      %v2441 = vmul.f32 %v2396, %v2427
      %v2442 = vmul.f32 %v2397, %v2423
      %v2443 = vmul.f32 %v2398, %v2427
      %v2444 = vmul.f32 %v2399, %v2423
      %v2445 = vmul.f32 %v2400, %v2427
      %v2446 = vmul.f32 %v2401, %v2423
      %v2447 = vmul.f32 %v2402, %v2427
      %v2448 = vmul.f32 %v2403, %v2423
      %v2449 = vmul.f32 %v2404, %v2427
      %v2450 = vmul.f32 %v2405, %v2423
      %v2451 = vmul.f32 %v2406, %v2427
      %v2452 = vmul.f32 %v2407, %v2423
      %v2453 = vmul.f32 %v2408, %v2427
      %v2454 = vmul.f32 %v2409, %v2423
      %v2455 = vmul.f32 %v2410, %v2427
      %v2456 = vmul.f32 %v2411, %v2423
      %v2457 = vmul.f32 %v2412, %v2427
      %v2458 = vmul.f32 %v2413, %v2423
      %v2459 = vmul.f32 %v2414, %v2427
      %v2460 = vmul.f32 %v2415, %v2423
      %v2461 = vmul.f32 %v2416, %v2427
      %vm2494 = vcmask 1045504
      %v2495 = vrot.slane %v2430, 2
      %v2496 = vrot.slane %v2432, 2
      %v2497 = vsel %vm2494, %v2495, %v2496
      %v2498 = vrot.slane %v2431, 2
      %v2499 = vrot.slane %v2433, 2
      %v2500 = vsel %vm2494, %v2498, %v2499
      %v2501 = vrot.slane %v2434, 2
      %v2502 = vrot.slane %v2436, 2
      %v2503 = vsel %vm2494, %v2501, %v2502
      %v2504 = vrot.slane %v2435, 2
      %v2505 = vrot.slane %v2437, 2
      %v2506 = vsel %vm2494, %v2504, %v2505
      %v2507 = vrot.slane %v2438, 2
      %v2508 = vrot.slane %v2440, 2
      %v2509 = vsel %vm2494, %v2507, %v2508
      %v2510 = vrot.slane %v2439, 2
      %v2511 = vrot.slane %v2441, 2
      %v2512 = vsel %vm2494, %v2510, %v2511
      %v2513 = vrot.slane %v2442, 2
      %v2514 = vrot.slane %v2444, 2
      %v2515 = vsel %vm2494, %v2513, %v2514
      %v2516 = vrot.slane %v2443, 2
      %v2517 = vrot.slane %v2445, 2
      %v2518 = vsel %vm2494, %v2516, %v2517
      %v2519 = vrot.slane %v2446, 2
      %v2520 = vrot.slane %v2448, 2
      %v2521 = vsel %vm2494, %v2519, %v2520
      %v2522 = vrot.slane %v2447, 2
      %v2523 = vrot.slane %v2449, 2
      %v2524 = vsel %vm2494, %v2522, %v2523
      %v2525 = vrot.slane %v2450, 2
      %v2526 = vrot.slane %v2452, 2
      %v2527 = vsel %vm2494, %v2525, %v2526
      %v2528 = vrot.slane %v2451, 2
      %v2529 = vrot.slane %v2453, 2
      %v2530 = vsel %vm2494, %v2528, %v2529
      %v2531 = vrot.slane %v2454, 2
      %v2532 = vrot.slane %v2456, 2
      %v2533 = vsel %vm2494, %v2531, %v2532
      %v2534 = vrot.slane %v2455, 2
      %v2535 = vrot.slane %v2457, 2
      %v2536 = vsel %vm2494, %v2534, %v2535
      %v2537 = vrot.slane %v2458, 2
      %v2538 = vrot.slane %v2460, 2
      %v2539 = vsel %vm2494, %v2537, %v2538
      %v2540 = vrot.slane %v2459, 2
      %v2541 = vrot.slane %v2461, 2
      %v2542 = vsel %vm2494, %v2540, %v2541
      %v2575 = vadd.f32 %v2353, %v2497
      %v2576 = vadd.f32 %v2354, %v2500
      %v2577 = vadd.f32 %v2355, %v2496
      %v2578 = vadd.f32 %v2356, %v2499
      %v2579 = vadd.f32 %v2357, %v2503
      %v2580 = vadd.f32 %v2358, %v2506
      %v2581 = vadd.f32 %v2359, %v2502
      %v2582 = vadd.f32 %v2360, %v2505
      %v2583 = vadd.f32 %v2361, %v2509
      %v2584 = vadd.f32 %v2362, %v2512
      %v2585 = vadd.f32 %v2363, %v2508
      %v2586 = vadd.f32 %v2364, %v2511
      %v2587 = vadd.f32 %v2365, %v2515
      %v2588 = vadd.f32 %v2366, %v2518
      %v2589 = vadd.f32 %v2367, %v2514
      %v2590 = vadd.f32 %v2368, %v2517
      %v2591 = vadd.f32 %v2369, %v2521
      %v2592 = vadd.f32 %v2370, %v2524
      %v2593 = vadd.f32 %v2371, %v2520
      %v2594 = vadd.f32 %v2372, %v2523
      %v2595 = vadd.f32 %v2373, %v2527
      %v2596 = vadd.f32 %v2374, %v2530
      %v2597 = vadd.f32 %v2375, %v2526
      %v2598 = vadd.f32 %v2376, %v2529
      %v2599 = vadd.f32 %v2377, %v2533
      %v2600 = vadd.f32 %v2378, %v2536
      %v2601 = vadd.f32 %v2379, %v2532
      %v2602 = vadd.f32 %v2380, %v2535
      %v2603 = vadd.f32 %v2381, %v2539
      %v2604 = vadd.f32 %v2382, %v2542
      %v2605 = vadd.f32 %v2383, %v2538
      %v2606 = vadd.f32 %v2384, %v2541
      %v2607 = vld [vmem:[%s1501] sm:$0xf8]
      %v2608 = vld [vmem:[%s1501 + $0x8] sm:$0xf8]
      %v2609 = vld [vmem:[%s1501 + $0x10] sm:$0x7]
      %v2610 = vld [vmem:[%s1501 + $0x18] sm:$0x7]
      %v2611 = vld [vmem:[%s1501 + $0x20] sm:$0xf8]
      %v2612 = vld [vmem:[%s1501 + $0x28] sm:$0xf8]
      %v2613 = vld [vmem:[%s1501 + $0x30] sm:$0x7]
      %v2614 = vld [vmem:[%s1501 + $0x38] sm:$0x7]
      %v2615 = vld [vmem:[%s1501 + $0x40] sm:$0xf8]
      %v2616 = vld [vmem:[%s1501 + $0x48] sm:$0xf8]
      %v2617 = vld [vmem:[%s1501 + $0x50] sm:$0x7]
      %v2618 = vld [vmem:[%s1501 + $0x58] sm:$0x7]
      %v2619 = vld [vmem:[%s1501 + $0x60] sm:$0xf8]
      %v2620 = vld [vmem:[%s1501 + $0x68] sm:$0xf8]
      %v2621 = vld [vmem:[%s1501 + $0x70] sm:$0x7]
      %v2622 = vld [vmem:[%s1501 + $0x78] sm:$0x7]
      %v2623 = vld [vmem:[%s1501 + $0x80] sm:$0xf8]
      %v2624 = vld [vmem:[%s1501 + $0x88] sm:$0xf8]
      %v2625 = vld [vmem:[%s1501 + $0x90] sm:$0x7]
      %v2626 = vld [vmem:[%s1501 + $0x98] sm:$0x7]
      %v2627 = vld [vmem:[%s1501 + $0xa0] sm:$0xf8]
      %v2628 = vld [vmem:[%s1501 + $0xa8] sm:$0xf8]
      %v2629 = vld [vmem:[%s1501 + $0xb0] sm:$0x7]
      %v2630 = vld [vmem:[%s1501 + $0xb8] sm:$0x7]
      %v2631 = vld [vmem:[%s1501 + $0xc0] sm:$0xf8]
      %v2632 = vld [vmem:[%s1501 + $0xc8] sm:$0xf8]
      %v2633 = vld [vmem:[%s1501 + $0xd0] sm:$0x7]
      %v2634 = vld [vmem:[%s1501 + $0xd8] sm:$0x7]
      %v2635 = vld [vmem:[%s1501 + $0xe0] sm:$0xf8]
      %v2636 = vld [vmem:[%s1501 + $0xe8] sm:$0xf8]
      %v2637 = vld [vmem:[%s1501 + $0xf0] sm:$0x7]
      %v2638 = vld [vmem:[%s1501 + $0xf8] sm:$0x7]
      %s2639 = scalar_lea.vmem %s1, 7
      %v2640 = vld [vmem:[%s2639] ss:$8 sm:$0x3]
      %v2642 = vlaneseq
      %v2643 = vshrl.u32 %v2642, 7
      %v2644 = vsub.s32 0, %v2643
      %v2645 = vrot.slane %v2640, %v2644
      %v2646 = vlaneseq
      %v2647 = vshrl.u32 %v2646, 7
      %v2648 = vsub.s32 1, %v2647
      %v2649 = vrot.slane %v2640, %v2648
      %v2652 = vmul.f32 %v2607, %v2645
      %v2653 = vmul.f32 %v2608, %v2649
      %v2654 = vmul.f32 %v2609, %v2645
      %v2655 = vmul.f32 %v2610, %v2649
      %v2656 = vmul.f32 %v2611, %v2645
      %v2657 = vmul.f32 %v2612, %v2649
      %v2658 = vmul.f32 %v2613, %v2645
      %v2659 = vmul.f32 %v2614, %v2649
      %v2660 = vmul.f32 %v2615, %v2645
      %v2661 = vmul.f32 %v2616, %v2649
      %v2662 = vmul.f32 %v2617, %v2645
      %v2663 = vmul.f32 %v2618, %v2649
      %v2664 = vmul.f32 %v2619, %v2645
      %v2665 = vmul.f32 %v2620, %v2649
      %v2666 = vmul.f32 %v2621, %v2645
      %v2667 = vmul.f32 %v2622, %v2649
      %v2668 = vmul.f32 %v2623, %v2645
      %v2669 = vmul.f32 %v2624, %v2649
      %v2670 = vmul.f32 %v2625, %v2645
      %v2671 = vmul.f32 %v2626, %v2649
      %v2672 = vmul.f32 %v2627, %v2645
      %v2673 = vmul.f32 %v2628, %v2649
      %v2674 = vmul.f32 %v2629, %v2645
      %v2675 = vmul.f32 %v2630, %v2649
      %v2676 = vmul.f32 %v2631, %v2645
      %v2677 = vmul.f32 %v2632, %v2649
      %v2678 = vmul.f32 %v2633, %v2645
      %v2679 = vmul.f32 %v2634, %v2649
      %v2680 = vmul.f32 %v2635, %v2645
      %v2681 = vmul.f32 %v2636, %v2649
      %v2682 = vmul.f32 %v2637, %v2645
      %v2683 = vmul.f32 %v2638, %v2649
      %v2716 = vrot.slane %v2652, 2
      %v2717 = vrot.slane %v2654, 2
      %v2718 = vsel %vm2494, %v2716, %v2717
      %v2719 = vrot.slane %v2653, 2
      %v2720 = vrot.slane %v2655, 2
      %v2721 = vsel %vm2494, %v2719, %v2720
      %v2722 = vrot.slane %v2656, 2
      %v2723 = vrot.slane %v2658, 2
      %v2724 = vsel %vm2494, %v2722, %v2723
      %v2725 = vrot.slane %v2657, 2
      %v2726 = vrot.slane %v2659, 2
      %v2727 = vsel %vm2494, %v2725, %v2726
      %v2728 = vrot.slane %v2660, 2
      %v2729 = vrot.slane %v2662, 2
      %v2730 = vsel %vm2494, %v2728, %v2729
      %v2731 = vrot.slane %v2661, 2
      %v2732 = vrot.slane %v2663, 2
      %v2733 = vsel %vm2494, %v2731, %v2732
      %v2734 = vrot.slane %v2664, 2
      %v2735 = vrot.slane %v2666, 2
      %v2736 = vsel %vm2494, %v2734, %v2735
      %v2737 = vrot.slane %v2665, 2
      %v2738 = vrot.slane %v2667, 2
      %v2739 = vsel %vm2494, %v2737, %v2738
      %v2740 = vrot.slane %v2668, 2
      %v2741 = vrot.slane %v2670, 2
      %v2742 = vsel %vm2494, %v2740, %v2741
      %v2743 = vrot.slane %v2669, 2
      %v2744 = vrot.slane %v2671, 2
      %v2745 = vsel %vm2494, %v2743, %v2744
      %v2746 = vrot.slane %v2672, 2
      %v2747 = vrot.slane %v2674, 2
      %v2748 = vsel %vm2494, %v2746, %v2747
      %v2749 = vrot.slane %v2673, 2
      %v2750 = vrot.slane %v2675, 2
      %v2751 = vsel %vm2494, %v2749, %v2750
      %v2752 = vrot.slane %v2676, 2
      %v2753 = vrot.slane %v2678, 2
      %v2754 = vsel %vm2494, %v2752, %v2753
      %v2755 = vrot.slane %v2677, 2
      %v2756 = vrot.slane %v2679, 2
      %v2757 = vsel %vm2494, %v2755, %v2756
      %v2758 = vrot.slane %v2680, 2
      %v2759 = vrot.slane %v2682, 2
      %v2760 = vsel %vm2494, %v2758, %v2759
      %v2761 = vrot.slane %v2681, 2
      %v2762 = vrot.slane %v2683, 2
      %v2763 = vsel %vm2494, %v2761, %v2762
      %v2796 = vadd.f32 %v2575, %v2718
      %v2797 = vadd.f32 %v2576, %v2721
      %v2798 = vadd.f32 %v2577, %v2717
      %v2799 = vadd.f32 %v2578, %v2720
      %v2800 = vadd.f32 %v2579, %v2724
      %v2801 = vadd.f32 %v2580, %v2727
      %v2802 = vadd.f32 %v2581, %v2723
      %v2803 = vadd.f32 %v2582, %v2726
      %v2804 = vadd.f32 %v2583, %v2730
      %v2805 = vadd.f32 %v2584, %v2733
      %v2806 = vadd.f32 %v2585, %v2729
      %v2807 = vadd.f32 %v2586, %v2732
      %v2808 = vadd.f32 %v2587, %v2736
      %v2809 = vadd.f32 %v2588, %v2739
      %v2810 = vadd.f32 %v2589, %v2735
      %v2811 = vadd.f32 %v2590, %v2738
      %v2812 = vadd.f32 %v2591, %v2742
      %v2813 = vadd.f32 %v2592, %v2745
      %v2814 = vadd.f32 %v2593, %v2741
      %v2815 = vadd.f32 %v2594, %v2744
      %v2816 = vadd.f32 %v2595, %v2748
      %v2817 = vadd.f32 %v2596, %v2751
      %v2818 = vadd.f32 %v2597, %v2747
      %v2819 = vadd.f32 %v2598, %v2750
      %v2820 = vadd.f32 %v2599, %v2754
      %v2821 = vadd.f32 %v2600, %v2757
      %v2822 = vadd.f32 %v2601, %v2753
      %v2823 = vadd.f32 %v2602, %v2756
      %v2824 = vadd.f32 %v2603, %v2760
      %v2825 = vadd.f32 %v2604, %v2763
      %v2826 = vadd.f32 %v2605, %v2759
      %v2827 = vadd.f32 %v2606, %v2762
      %v2828 = vld [vmem:[%s1611] sm:$0xf8]
      %v2829 = vld [vmem:[%s1611 + $0x8] sm:$0xf8]
      %v2830 = vld [vmem:[%s1611 + $0x10] sm:$0x7]
      %v2831 = vld [vmem:[%s1611 + $0x18] sm:$0x7]
      %v2832 = vld [vmem:[%s1611 + $0x20] sm:$0xf8]
      %v2833 = vld [vmem:[%s1611 + $0x28] sm:$0xf8]
      %v2834 = vld [vmem:[%s1611 + $0x30] sm:$0x7]
      %v2835 = vld [vmem:[%s1611 + $0x38] sm:$0x7]
      %v2836 = vld [vmem:[%s1611 + $0x40] sm:$0xf8]
      %v2837 = vld [vmem:[%s1611 + $0x48] sm:$0xf8]
      %v2838 = vld [vmem:[%s1611 + $0x50] sm:$0x7]
      %v2839 = vld [vmem:[%s1611 + $0x58] sm:$0x7]
      %v2840 = vld [vmem:[%s1611 + $0x60] sm:$0xf8]
      %v2841 = vld [vmem:[%s1611 + $0x68] sm:$0xf8]
      %v2842 = vld [vmem:[%s1611 + $0x70] sm:$0x7]
      %v2843 = vld [vmem:[%s1611 + $0x78] sm:$0x7]
      %v2844 = vld [vmem:[%s1611 + $0x80] sm:$0xf8]
      %v2845 = vld [vmem:[%s1611 + $0x88] sm:$0xf8]
      %v2846 = vld [vmem:[%s1611 + $0x90] sm:$0x7]
      %v2847 = vld [vmem:[%s1611 + $0x98] sm:$0x7]
      %v2848 = vld [vmem:[%s1611 + $0xa0] sm:$0xf8]
      %v2849 = vld [vmem:[%s1611 + $0xa8] sm:$0xf8]
      %v2850 = vld [vmem:[%s1611 + $0xb0] sm:$0x7]
      %v2851 = vld [vmem:[%s1611 + $0xb8] sm:$0x7]
      %v2852 = vld [vmem:[%s1611 + $0xc0] sm:$0xf8]
      %v2853 = vld [vmem:[%s1611 + $0xc8] sm:$0xf8]
      %v2854 = vld [vmem:[%s1611 + $0xd0] sm:$0x7]
      %v2855 = vld [vmem:[%s1611 + $0xd8] sm:$0x7]
      %v2856 = vld [vmem:[%s1611 + $0xe0] sm:$0xf8]
      %v2857 = vld [vmem:[%s1611 + $0xe8] sm:$0xf8]
      %v2858 = vld [vmem:[%s1611 + $0xf0] sm:$0x7]
      %v2859 = vld [vmem:[%s1611 + $0xf8] sm:$0x7]
      %s2860 = scalar_lea.vmem %s1, 16
      %v2861 = vld [vmem:[%s2860] ss:$8 sm:$0x3]
      %v2863 = vlaneseq
      %v2864 = vshrl.u32 %v2863, 7
      %v2865 = vsub.s32 0, %v2864
      %v2866 = vrot.slane %v2861, %v2865
      %v2867 = vlaneseq
      %v2868 = vshrl.u32 %v2867, 7
      %v2869 = vsub.s32 1, %v2868
      %v2870 = vrot.slane %v2861, %v2869
      %v2873 = vmul.f32 %v2828, %v2866
      %v2874 = vmul.f32 %v2829, %v2870
      %v2875 = vmul.f32 %v2830, %v2866
      %v2876 = vmul.f32 %v2831, %v2870
      %v2877 = vmul.f32 %v2832, %v2866
      %v2878 = vmul.f32 %v2833, %v2870
      %v2879 = vmul.f32 %v2834, %v2866
      %v2880 = vmul.f32 %v2835, %v2870
      %v2881 = vmul.f32 %v2836, %v2866
      %v2882 = vmul.f32 %v2837, %v2870
      %v2883 = vmul.f32 %v2838, %v2866
      %v2884 = vmul.f32 %v2839, %v2870
      %v2885 = vmul.f32 %v2840, %v2866
      %v2886 = vmul.f32 %v2841, %v2870
      %v2887 = vmul.f32 %v2842, %v2866
      %v2888 = vmul.f32 %v2843, %v2870
      %v2889 = vmul.f32 %v2844, %v2866
      %v2890 = vmul.f32 %v2845, %v2870
      %v2891 = vmul.f32 %v2846, %v2866
      %v2892 = vmul.f32 %v2847, %v2870
      %v2893 = vmul.f32 %v2848, %v2866
      %v2894 = vmul.f32 %v2849, %v2870
      %v2895 = vmul.f32 %v2850, %v2866
      %v2896 = vmul.f32 %v2851, %v2870
      %v2897 = vmul.f32 %v2852, %v2866
      %v2898 = vmul.f32 %v2853, %v2870
      %v2899 = vmul.f32 %v2854, %v2866
      %v2900 = vmul.f32 %v2855, %v2870
      %v2901 = vmul.f32 %v2856, %v2866
      %v2902 = vmul.f32 %v2857, %v2870
      %v2903 = vmul.f32 %v2858, %v2866
      %v2904 = vmul.f32 %v2859, %v2870
      %v2937 = vrot.slane %v2873, 2
      %v2938 = vrot.slane %v2875, 2
      %v2939 = vsel %vm2494, %v2937, %v2938
      %v2940 = vrot.slane %v2874, 2
      %v2941 = vrot.slane %v2876, 2
      %v2942 = vsel %vm2494, %v2940, %v2941
      %v2943 = vrot.slane %v2877, 2
      %v2944 = vrot.slane %v2879, 2
      %v2945 = vsel %vm2494, %v2943, %v2944
      %v2946 = vrot.slane %v2878, 2
      %v2947 = vrot.slane %v2880, 2
      %v2948 = vsel %vm2494, %v2946, %v2947
      %v2949 = vrot.slane %v2881, 2
      %v2950 = vrot.slane %v2883, 2
      %v2951 = vsel %vm2494, %v2949, %v2950
      %v2952 = vrot.slane %v2882, 2
      %v2953 = vrot.slane %v2884, 2
      %v2954 = vsel %vm2494, %v2952, %v2953
      %v2955 = vrot.slane %v2885, 2
      %v2956 = vrot.slane %v2887, 2
      %v2957 = vsel %vm2494, %v2955, %v2956
      %v2958 = vrot.slane %v2886, 2
      %v2959 = vrot.slane %v2888, 2
      %v2960 = vsel %vm2494, %v2958, %v2959
      %v2961 = vrot.slane %v2889, 2
      %v2962 = vrot.slane %v2891, 2
      %v2963 = vsel %vm2494, %v2961, %v2962
      %v2964 = vrot.slane %v2890, 2
      %v2965 = vrot.slane %v2892, 2
      %v2966 = vsel %vm2494, %v2964, %v2965
      %v2967 = vrot.slane %v2893, 2
      %v2968 = vrot.slane %v2895, 2
      %v2969 = vsel %vm2494, %v2967, %v2968
      %v2970 = vrot.slane %v2894, 2
      %v2971 = vrot.slane %v2896, 2
      %v2972 = vsel %vm2494, %v2970, %v2971
      %v2973 = vrot.slane %v2897, 2
      %v2974 = vrot.slane %v2899, 2
      %v2975 = vsel %vm2494, %v2973, %v2974
      %v2976 = vrot.slane %v2898, 2
      %v2977 = vrot.slane %v2900, 2
      %v2978 = vsel %vm2494, %v2976, %v2977
      %v2979 = vrot.slane %v2901, 2
      %v2980 = vrot.slane %v2903, 2
      %v2981 = vsel %vm2494, %v2979, %v2980
      %v2982 = vrot.slane %v2902, 2
      %v2983 = vrot.slane %v2904, 2
      %v2984 = vsel %vm2494, %v2982, %v2983
      %v3017 = vadd.f32 %v2796, %v2939
      %v3018 = vadd.f32 %v2797, %v2942
      %v3019 = vadd.f32 %v2798, %v2938
      %v3020 = vadd.f32 %v2799, %v2941
      %v3021 = vadd.f32 %v2800, %v2945
      %v3022 = vadd.f32 %v2801, %v2948
      %v3023 = vadd.f32 %v2802, %v2944
      %v3024 = vadd.f32 %v2803, %v2947
      %v3025 = vadd.f32 %v2804, %v2951
      %v3026 = vadd.f32 %v2805, %v2954
      %v3027 = vadd.f32 %v2806, %v2950
      %v3028 = vadd.f32 %v2807, %v2953
      %v3029 = vadd.f32 %v2808, %v2957
      %v3030 = vadd.f32 %v2809, %v2960
      %v3031 = vadd.f32 %v2810, %v2956
      %v3032 = vadd.f32 %v2811, %v2959
      %v3033 = vadd.f32 %v2812, %v2963
      %v3034 = vadd.f32 %v2813, %v2966
      %v3035 = vadd.f32 %v2814, %v2962
      %v3036 = vadd.f32 %v2815, %v2965
      %v3037 = vadd.f32 %v2816, %v2969
      %v3038 = vadd.f32 %v2817, %v2972
      %v3039 = vadd.f32 %v2818, %v2968
      %v3040 = vadd.f32 %v2819, %v2971
      %v3041 = vadd.f32 %v2820, %v2975
      %v3042 = vadd.f32 %v2821, %v2978
      %v3043 = vadd.f32 %v2822, %v2974
      %v3044 = vadd.f32 %v2823, %v2977
      %v3045 = vadd.f32 %v2824, %v2981
      %v3046 = vadd.f32 %v2825, %v2984
      %v3047 = vadd.f32 %v2826, %v2980
      %v3048 = vadd.f32 %v2827, %v2983
      %v3049 = vld [vmem:[%s1023] sm:$0xfe]
      %v3050 = vld [vmem:[%s1023 + $0x8] sm:$0xfe]
      %v3051 = vld [vmem:[%s1023 + $0x10] sm:$0x1]
      %v3052 = vld [vmem:[%s1023 + $0x18] sm:$0x1]
      %v3053 = vld [vmem:[%s1023 + $0x20] sm:$0xfe]
      %v3054 = vld [vmem:[%s1023 + $0x28] sm:$0xfe]
      %v3055 = vld [vmem:[%s1023 + $0x30] sm:$0x1]
      %v3056 = vld [vmem:[%s1023 + $0x38] sm:$0x1]
      %v3057 = vld [vmem:[%s1023 + $0x40] sm:$0xfe]
      %v3058 = vld [vmem:[%s1023 + $0x48] sm:$0xfe]
      %v3059 = vld [vmem:[%s1023 + $0x50] sm:$0x1]
      %v3060 = vld [vmem:[%s1023 + $0x58] sm:$0x1]
      %v3061 = vld [vmem:[%s1023 + $0x60] sm:$0xfe]
      %v3062 = vld [vmem:[%s1023 + $0x68] sm:$0xfe]
      %v3063 = vld [vmem:[%s1023 + $0x70] sm:$0x1]
      %v3064 = vld [vmem:[%s1023 + $0x78] sm:$0x1]
      %v3065 = vld [vmem:[%s1023 + $0x80] sm:$0xfe]
      %v3066 = vld [vmem:[%s1023 + $0x88] sm:$0xfe]
      %v3067 = vld [vmem:[%s1023 + $0x90] sm:$0x1]
      %v3068 = vld [vmem:[%s1023 + $0x98] sm:$0x1]
      %v3069 = vld [vmem:[%s1023 + $0xa0] sm:$0xfe]
      %v3070 = vld [vmem:[%s1023 + $0xa8] sm:$0xfe]
      %v3071 = vld [vmem:[%s1023 + $0xb0] sm:$0x1]
      %v3072 = vld [vmem:[%s1023 + $0xb8] sm:$0x1]
      %v3073 = vld [vmem:[%s1023 + $0xc0] sm:$0xfe]
      %v3074 = vld [vmem:[%s1023 + $0xc8] sm:$0xfe]
      %v3075 = vld [vmem:[%s1023 + $0xd0] sm:$0x1]
      %v3076 = vld [vmem:[%s1023 + $0xd8] sm:$0x1]
      %v3077 = vld [vmem:[%s1023 + $0xe0] sm:$0xfe]
      %v3078 = vld [vmem:[%s1023 + $0xe8] sm:$0xfe]
      %v3079 = vld [vmem:[%s1023 + $0xf0] sm:$0x1]
      %v3080 = vld [vmem:[%s1023 + $0xf8] sm:$0x1]
      %s3081 = scalar_lea.vmem %s1, 17
      %v3082 = vld [vmem:[%s3081] ss:$8 sm:$0x3]
      %v3084 = vlaneseq
      %v3085 = vshrl.u32 %v3084, 7
      %v3086 = vsub.s32 0, %v3085
      %v3087 = vrot.slane %v3082, %v3086
      %v3088 = vlaneseq
      %v3089 = vshrl.u32 %v3088, 7
      %v3090 = vsub.s32 1, %v3089
      %v3091 = vrot.slane %v3082, %v3090
      %v3094 = vmul.f32 %v3049, %v3087
      %v3095 = vmul.f32 %v3050, %v3091
      %v3096 = vmul.f32 %v3051, %v3087
      %v3097 = vmul.f32 %v3052, %v3091
      %v3098 = vmul.f32 %v3053, %v3087
      %v3099 = vmul.f32 %v3054, %v3091
      %v3100 = vmul.f32 %v3055, %v3087
      %v3101 = vmul.f32 %v3056, %v3091
      %v3102 = vmul.f32 %v3057, %v3087
      %v3103 = vmul.f32 %v3058, %v3091
      %v3104 = vmul.f32 %v3059, %v3087
      %v3105 = vmul.f32 %v3060, %v3091
      %v3106 = vmul.f32 %v3061, %v3087
      %v3107 = vmul.f32 %v3062, %v3091
      %v3108 = vmul.f32 %v3063, %v3087
      %v3109 = vmul.f32 %v3064, %v3091
      %v3110 = vmul.f32 %v3065, %v3087
      %v3111 = vmul.f32 %v3066, %v3091
      %v3112 = vmul.f32 %v3067, %v3087
      %v3113 = vmul.f32 %v3068, %v3091
      %v3114 = vmul.f32 %v3069, %v3087
      %v3115 = vmul.f32 %v3070, %v3091
      %v3116 = vmul.f32 %v3071, %v3087
      %v3117 = vmul.f32 %v3072, %v3091
      %v3118 = vmul.f32 %v3073, %v3087
      %v3119 = vmul.f32 %v3074, %v3091
      %v3120 = vmul.f32 %v3075, %v3087
      %v3121 = vmul.f32 %v3076, %v3091
      %v3122 = vmul.f32 %v3077, %v3087
      %v3123 = vmul.f32 %v3078, %v3091
      %v3124 = vmul.f32 %v3079, %v3087
      %v3125 = vmul.f32 %v3080, %v3091
      %v3126 = vadd.f32 %v3017, %v3094
      %v3127 = vadd.f32 %v3018, %v3095
      %v3128 = vadd.f32 %v3019, %v3096
      %v3129 = vadd.f32 %v3020, %v3097
      %v3130 = vadd.f32 %v3021, %v3098
      %v3131 = vadd.f32 %v3022, %v3099
      %v3132 = vadd.f32 %v3023, %v3100
      %v3133 = vadd.f32 %v3024, %v3101
      %v3134 = vadd.f32 %v3025, %v3102
      %v3135 = vadd.f32 %v3026, %v3103
      %v3136 = vadd.f32 %v3027, %v3104
      %v3137 = vadd.f32 %v3028, %v3105
      %v3138 = vadd.f32 %v3029, %v3106
      %v3139 = vadd.f32 %v3030, %v3107
      %v3140 = vadd.f32 %v3031, %v3108
      %v3141 = vadd.f32 %v3032, %v3109
      %v3142 = vadd.f32 %v3033, %v3110
      %v3143 = vadd.f32 %v3034, %v3111
      %v3144 = vadd.f32 %v3035, %v3112
      %v3145 = vadd.f32 %v3036, %v3113
      %v3146 = vadd.f32 %v3037, %v3114
      %v3147 = vadd.f32 %v3038, %v3115
      %v3148 = vadd.f32 %v3039, %v3116
      %v3149 = vadd.f32 %v3040, %v3117
      %v3150 = vadd.f32 %v3041, %v3118
      %v3151 = vadd.f32 %v3042, %v3119
      %v3152 = vadd.f32 %v3043, %v3120
      %v3153 = vadd.f32 %v3044, %v3121
      %v3154 = vadd.f32 %v3045, %v3122
      %v3155 = vadd.f32 %v3046, %v3123
      %v3156 = vadd.f32 %v3047, %v3124
      %v3157 = vadd.f32 %v3048, %v3125
      %v3158 = vld [vmem:[%s1104] sm:$0xfe]
      %v3159 = vld [vmem:[%s1104 + $0x8] sm:$0xfe]
      %v3160 = vld [vmem:[%s1104 + $0x10] sm:$0x1]
      %v3161 = vld [vmem:[%s1104 + $0x18] sm:$0x1]
      %v3162 = vld [vmem:[%s1104 + $0x20] sm:$0xfe]
      %v3163 = vld [vmem:[%s1104 + $0x28] sm:$0xfe]
      %v3164 = vld [vmem:[%s1104 + $0x30] sm:$0x1]
      %v3165 = vld [vmem:[%s1104 + $0x38] sm:$0x1]
      %v3166 = vld [vmem:[%s1104 + $0x40] sm:$0xfe]
      %v3167 = vld [vmem:[%s1104 + $0x48] sm:$0xfe]
      %v3168 = vld [vmem:[%s1104 + $0x50] sm:$0x1]
      %v3169 = vld [vmem:[%s1104 + $0x58] sm:$0x1]
      %v3170 = vld [vmem:[%s1104 + $0x60] sm:$0xfe]
      %v3171 = vld [vmem:[%s1104 + $0x68] sm:$0xfe]
      %v3172 = vld [vmem:[%s1104 + $0x70] sm:$0x1]
      %v3173 = vld [vmem:[%s1104 + $0x78] sm:$0x1]
      %v3174 = vld [vmem:[%s1104 + $0x80] sm:$0xfe]
      %v3175 = vld [vmem:[%s1104 + $0x88] sm:$0xfe]
      %v3176 = vld [vmem:[%s1104 + $0x90] sm:$0x1]
      %v3177 = vld [vmem:[%s1104 + $0x98] sm:$0x1]
      %v3178 = vld [vmem:[%s1104 + $0xa0] sm:$0xfe]
      %v3179 = vld [vmem:[%s1104 + $0xa8] sm:$0xfe]
      %v3180 = vld [vmem:[%s1104 + $0xb0] sm:$0x1]
      %v3181 = vld [vmem:[%s1104 + $0xb8] sm:$0x1]
      %v3182 = vld [vmem:[%s1104 + $0xc0] sm:$0xfe]
      %v3183 = vld [vmem:[%s1104 + $0xc8] sm:$0xfe]
      %v3184 = vld [vmem:[%s1104 + $0xd0] sm:$0x1]
      %v3185 = vld [vmem:[%s1104 + $0xd8] sm:$0x1]
      %v3186 = vld [vmem:[%s1104 + $0xe0] sm:$0xfe]
      %v3187 = vld [vmem:[%s1104 + $0xe8] sm:$0xfe]
      %v3188 = vld [vmem:[%s1104 + $0xf0] sm:$0x1]
      %v3189 = vld [vmem:[%s1104 + $0xf8] sm:$0x1]
      %s3190 = scalar_lea.vmem %s1, 18
      %v3191 = vld [vmem:[%s3190] ss:$8 sm:$0x3]
      %v3193 = vlaneseq
      %v3194 = vshrl.u32 %v3193, 7
      %v3195 = vsub.s32 0, %v3194
      %v3196 = vrot.slane %v3191, %v3195
      %v3197 = vlaneseq
      %v3198 = vshrl.u32 %v3197, 7
      %v3199 = vsub.s32 1, %v3198
      %v3200 = vrot.slane %v3191, %v3199
      %v3203 = vmul.f32 %v3158, %v3196
      %v3204 = vmul.f32 %v3159, %v3200
      %v3205 = vmul.f32 %v3160, %v3196
      %v3206 = vmul.f32 %v3161, %v3200
      %v3207 = vmul.f32 %v3162, %v3196
      %v3208 = vmul.f32 %v3163, %v3200
      %v3209 = vmul.f32 %v3164, %v3196
      %v3210 = vmul.f32 %v3165, %v3200
      %v3211 = vmul.f32 %v3166, %v3196
      %v3212 = vmul.f32 %v3167, %v3200
      %v3213 = vmul.f32 %v3168, %v3196
      %v3214 = vmul.f32 %v3169, %v3200
      %v3215 = vmul.f32 %v3170, %v3196
      %v3216 = vmul.f32 %v3171, %v3200
      %v3217 = vmul.f32 %v3172, %v3196
      %v3218 = vmul.f32 %v3173, %v3200
      %v3219 = vmul.f32 %v3174, %v3196
      %v3220 = vmul.f32 %v3175, %v3200
      %v3221 = vmul.f32 %v3176, %v3196
      %v3222 = vmul.f32 %v3177, %v3200
      %v3223 = vmul.f32 %v3178, %v3196
      %v3224 = vmul.f32 %v3179, %v3200
      %v3225 = vmul.f32 %v3180, %v3196
      %v3226 = vmul.f32 %v3181, %v3200
      %v3227 = vmul.f32 %v3182, %v3196
      %v3228 = vmul.f32 %v3183, %v3200
      %v3229 = vmul.f32 %v3184, %v3196
      %v3230 = vmul.f32 %v3185, %v3200
      %v3231 = vmul.f32 %v3186, %v3196
      %v3232 = vmul.f32 %v3187, %v3200
      %v3233 = vmul.f32 %v3188, %v3196
      %v3234 = vmul.f32 %v3189, %v3200
      %v3235 = vadd.f32 %v3126, %v3203
      %v3236 = vadd.f32 %v3127, %v3204
      %v3237 = vadd.f32 %v3128, %v3205
      %v3238 = vadd.f32 %v3129, %v3206
      %v3239 = vadd.f32 %v3130, %v3207
      %v3240 = vadd.f32 %v3131, %v3208
      %v3241 = vadd.f32 %v3132, %v3209
      %v3242 = vadd.f32 %v3133, %v3210
      %v3243 = vadd.f32 %v3134, %v3211
      %v3244 = vadd.f32 %v3135, %v3212
      %v3245 = vadd.f32 %v3136, %v3213
      %v3246 = vadd.f32 %v3137, %v3214
      %v3247 = vadd.f32 %v3138, %v3215
      %v3248 = vadd.f32 %v3139, %v3216
      %v3249 = vadd.f32 %v3140, %v3217
      %v3250 = vadd.f32 %v3141, %v3218
      %v3251 = vadd.f32 %v3142, %v3219
      %v3252 = vadd.f32 %v3143, %v3220
      %v3253 = vadd.f32 %v3144, %v3221
      %v3254 = vadd.f32 %v3145, %v3222
      %v3255 = vadd.f32 %v3146, %v3223
      %v3256 = vadd.f32 %v3147, %v3224
      %v3257 = vadd.f32 %v3148, %v3225
      %v3258 = vadd.f32 %v3149, %v3226
      %v3259 = vadd.f32 %v3150, %v3227
      %v3260 = vadd.f32 %v3151, %v3228
      %v3261 = vadd.f32 %v3152, %v3229
      %v3262 = vadd.f32 %v3153, %v3230
      %v3263 = vadd.f32 %v3154, %v3231
      %v3264 = vadd.f32 %v3155, %v3232
      %v3265 = vadd.f32 %v3156, %v3233
      %v3266 = vadd.f32 %v3157, %v3234
      %v3267 = vld [vmem:[%s1256] sm:$0xfe]
      %v3268 = vld [vmem:[%s1256 + $0x8] sm:$0xfe]
      %v3269 = vld [vmem:[%s1256 + $0x10] sm:$0x1]
      %v3270 = vld [vmem:[%s1256 + $0x18] sm:$0x1]
      %v3271 = vld [vmem:[%s1256 + $0x20] sm:$0xfe]
      %v3272 = vld [vmem:[%s1256 + $0x28] sm:$0xfe]
      %v3273 = vld [vmem:[%s1256 + $0x30] sm:$0x1]
      %v3274 = vld [vmem:[%s1256 + $0x38] sm:$0x1]
      %v3275 = vld [vmem:[%s1256 + $0x40] sm:$0xfe]
      %v3276 = vld [vmem:[%s1256 + $0x48] sm:$0xfe]
      %v3277 = vld [vmem:[%s1256 + $0x50] sm:$0x1]
      %v3278 = vld [vmem:[%s1256 + $0x58] sm:$0x1]
      %v3279 = vld [vmem:[%s1256 + $0x60] sm:$0xfe]
      %v3280 = vld [vmem:[%s1256 + $0x68] sm:$0xfe]
      %v3281 = vld [vmem:[%s1256 + $0x70] sm:$0x1]
      %v3282 = vld [vmem:[%s1256 + $0x78] sm:$0x1]
      %v3283 = vld [vmem:[%s1256 + $0x80] sm:$0xfe]
      %v3284 = vld [vmem:[%s1256 + $0x88] sm:$0xfe]
      %v3285 = vld [vmem:[%s1256 + $0x90] sm:$0x1]
      %v3286 = vld [vmem:[%s1256 + $0x98] sm:$0x1]
      %v3287 = vld [vmem:[%s1256 + $0xa0] sm:$0xfe]
      %v3288 = vld [vmem:[%s1256 + $0xa8] sm:$0xfe]
      %v3289 = vld [vmem:[%s1256 + $0xb0] sm:$0x1]
      %v3290 = vld [vmem:[%s1256 + $0xb8] sm:$0x1]
      %v3291 = vld [vmem:[%s1256 + $0xc0] sm:$0xfe]
      %v3292 = vld [vmem:[%s1256 + $0xc8] sm:$0xfe]
      %v3293 = vld [vmem:[%s1256 + $0xd0] sm:$0x1]
      %v3294 = vld [vmem:[%s1256 + $0xd8] sm:$0x1]
      %v3295 = vld [vmem:[%s1256 + $0xe0] sm:$0xfe]
      %v3296 = vld [vmem:[%s1256 + $0xe8] sm:$0xfe]
      %v3297 = vld [vmem:[%s1256 + $0xf0] sm:$0x1]
      %v3298 = vld [vmem:[%s1256 + $0xf8] sm:$0x1]
      %s3299 = scalar_lea.vmem %s1, 19
      %v3300 = vld [vmem:[%s3299] ss:$8 sm:$0x3]
      %v3302 = vlaneseq
      %v3303 = vshrl.u32 %v3302, 7
      %v3304 = vsub.s32 0, %v3303
      %v3305 = vrot.slane %v3300, %v3304
      %v3306 = vlaneseq
      %v3307 = vshrl.u32 %v3306, 7
      %v3308 = vsub.s32 1, %v3307
      %v3309 = vrot.slane %v3300, %v3308
      %v3312 = vmul.f32 %v3267, %v3305
      %v3313 = vmul.f32 %v3268, %v3309
      %v3314 = vmul.f32 %v3269, %v3305
      %v3315 = vmul.f32 %v3270, %v3309
      %v3316 = vmul.f32 %v3271, %v3305
      %v3317 = vmul.f32 %v3272, %v3309
      %v3318 = vmul.f32 %v3273, %v3305
      %v3319 = vmul.f32 %v3274, %v3309
      %v3320 = vmul.f32 %v3275, %v3305
      %v3321 = vmul.f32 %v3276, %v3309
      %v3322 = vmul.f32 %v3277, %v3305
      %v3323 = vmul.f32 %v3278, %v3309
      %v3324 = vmul.f32 %v3279, %v3305
      %v3325 = vmul.f32 %v3280, %v3309
      %v3326 = vmul.f32 %v3281, %v3305
      %v3327 = vmul.f32 %v3282, %v3309
      %v3328 = vmul.f32 %v3283, %v3305
      %v3329 = vmul.f32 %v3284, %v3309
      %v3330 = vmul.f32 %v3285, %v3305
      %v3331 = vmul.f32 %v3286, %v3309
      %v3332 = vmul.f32 %v3287, %v3305
      %v3333 = vmul.f32 %v3288, %v3309
      %v3334 = vmul.f32 %v3289, %v3305
      %v3335 = vmul.f32 %v3290, %v3309
      %v3336 = vmul.f32 %v3291, %v3305
      %v3337 = vmul.f32 %v3292, %v3309
      %v3338 = vmul.f32 %v3293, %v3305
      %v3339 = vmul.f32 %v3294, %v3309
      %v3340 = vmul.f32 %v3295, %v3305
      %v3341 = vmul.f32 %v3296, %v3309
      %v3342 = vmul.f32 %v3297, %v3305
      %v3343 = vmul.f32 %v3298, %v3309
      %v3344 = vadd.f32 %v3235, %v3312
      %v3345 = vadd.f32 %v3236, %v3313
      %v3346 = vadd.f32 %v3237, %v3314
      %v3347 = vadd.f32 %v3238, %v3315
      %v3348 = vadd.f32 %v3239, %v3316
      %v3349 = vadd.f32 %v3240, %v3317
      %v3350 = vadd.f32 %v3241, %v3318
      %v3351 = vadd.f32 %v3242, %v3319
      %v3352 = vadd.f32 %v3243, %v3320
      %v3353 = vadd.f32 %v3244, %v3321
      %v3354 = vadd.f32 %v3245, %v3322
      %v3355 = vadd.f32 %v3246, %v3323
      %v3356 = vadd.f32 %v3247, %v3324
      %v3357 = vadd.f32 %v3248, %v3325
      %v3358 = vadd.f32 %v3249, %v3326
      %v3359 = vadd.f32 %v3250, %v3327
      %v3360 = vadd.f32 %v3251, %v3328
      %v3361 = vadd.f32 %v3252, %v3329
      %v3362 = vadd.f32 %v3253, %v3330
      %v3363 = vadd.f32 %v3254, %v3331
      %v3364 = vadd.f32 %v3255, %v3332
      %v3365 = vadd.f32 %v3256, %v3333
      %v3366 = vadd.f32 %v3257, %v3334
      %v3367 = vadd.f32 %v3258, %v3335
      %v3368 = vadd.f32 %v3259, %v3336
      %v3369 = vadd.f32 %v3260, %v3337
      %v3370 = vadd.f32 %v3261, %v3338
      %v3371 = vadd.f32 %v3262, %v3339
      %v3372 = vadd.f32 %v3263, %v3340
      %v3373 = vadd.f32 %v3264, %v3341
      %v3374 = vadd.f32 %v3265, %v3342
      %v3375 = vadd.f32 %v3266, %v3343
      %v3376 = vld [vmem:[%s1023] sm:$0xfc]
      %v3377 = vld [vmem:[%s1023 + $0x8] sm:$0xfc]
      %v3378 = vld [vmem:[%s1023 + $0x10] sm:$0x3]
      %v3379 = vld [vmem:[%s1023 + $0x18] sm:$0x3]
      %v3380 = vld [vmem:[%s1023 + $0x20] sm:$0xfc]
      %v3381 = vld [vmem:[%s1023 + $0x28] sm:$0xfc]
      %v3382 = vld [vmem:[%s1023 + $0x30] sm:$0x3]
      %v3383 = vld [vmem:[%s1023 + $0x38] sm:$0x3]
      %v3384 = vld [vmem:[%s1023 + $0x40] sm:$0xfc]
      %v3385 = vld [vmem:[%s1023 + $0x48] sm:$0xfc]
      %v3386 = vld [vmem:[%s1023 + $0x50] sm:$0x3]
      %v3387 = vld [vmem:[%s1023 + $0x58] sm:$0x3]
      %v3388 = vld [vmem:[%s1023 + $0x60] sm:$0xfc]
      %v3389 = vld [vmem:[%s1023 + $0x68] sm:$0xfc]
      %v3390 = vld [vmem:[%s1023 + $0x70] sm:$0x3]
      %v3391 = vld [vmem:[%s1023 + $0x78] sm:$0x3]
      %v3392 = vld [vmem:[%s1023 + $0x80] sm:$0xfc]
      %v3393 = vld [vmem:[%s1023 + $0x88] sm:$0xfc]
      %v3394 = vld [vmem:[%s1023 + $0x90] sm:$0x3]
      %v3395 = vld [vmem:[%s1023 + $0x98] sm:$0x3]
      %v3396 = vld [vmem:[%s1023 + $0xa0] sm:$0xfc]
      %v3397 = vld [vmem:[%s1023 + $0xa8] sm:$0xfc]
      %v3398 = vld [vmem:[%s1023 + $0xb0] sm:$0x3]
      %v3399 = vld [vmem:[%s1023 + $0xb8] sm:$0x3]
      %v3400 = vld [vmem:[%s1023 + $0xc0] sm:$0xfc]
      %v3401 = vld [vmem:[%s1023 + $0xc8] sm:$0xfc]
      %v3402 = vld [vmem:[%s1023 + $0xd0] sm:$0x3]
      %v3403 = vld [vmem:[%s1023 + $0xd8] sm:$0x3]
      %v3404 = vld [vmem:[%s1023 + $0xe0] sm:$0xfc]
      %v3405 = vld [vmem:[%s1023 + $0xe8] sm:$0xfc]
      %v3406 = vld [vmem:[%s1023 + $0xf0] sm:$0x3]
      %v3407 = vld [vmem:[%s1023 + $0xf8] sm:$0x3]
      %s3408 = scalar_lea.vmem %s1, 20
      %v3409 = vld [vmem:[%s3408] ss:$8 sm:$0x3]
      %v3411 = vlaneseq
      %v3412 = vshrl.u32 %v3411, 7
      %v3413 = vsub.s32 0, %v3412
      %v3414 = vrot.slane %v3409, %v3413
      %v3415 = vlaneseq
      %v3416 = vshrl.u32 %v3415, 7
      %v3417 = vsub.s32 1, %v3416
      %v3418 = vrot.slane %v3409, %v3417
      %v3421 = vmul.f32 %v3376, %v3414
      %v3422 = vmul.f32 %v3377, %v3418
      %v3423 = vmul.f32 %v3378, %v3414
      %v3424 = vmul.f32 %v3379, %v3418
      %v3425 = vmul.f32 %v3380, %v3414
      %v3426 = vmul.f32 %v3381, %v3418
      %v3427 = vmul.f32 %v3382, %v3414
      %v3428 = vmul.f32 %v3383, %v3418
      %v3429 = vmul.f32 %v3384, %v3414
      %v3430 = vmul.f32 %v3385, %v3418
      %v3431 = vmul.f32 %v3386, %v3414
      %v3432 = vmul.f32 %v3387, %v3418
      %v3433 = vmul.f32 %v3388, %v3414
      %v3434 = vmul.f32 %v3389, %v3418
      %v3435 = vmul.f32 %v3390, %v3414
      %v3436 = vmul.f32 %v3391, %v3418
      %v3437 = vmul.f32 %v3392, %v3414
      %v3438 = vmul.f32 %v3393, %v3418
      %v3439 = vmul.f32 %v3394, %v3414
      %v3440 = vmul.f32 %v3395, %v3418
      %v3441 = vmul.f32 %v3396, %v3414
      %v3442 = vmul.f32 %v3397, %v3418
      %v3443 = vmul.f32 %v3398, %v3414
      %v3444 = vmul.f32 %v3399, %v3418
      %v3445 = vmul.f32 %v3400, %v3414
      %v3446 = vmul.f32 %v3401, %v3418
      %v3447 = vmul.f32 %v3402, %v3414
      %v3448 = vmul.f32 %v3403, %v3418
      %v3449 = vmul.f32 %v3404, %v3414
      %v3450 = vmul.f32 %v3405, %v3418
      %v3451 = vmul.f32 %v3406, %v3414
      %v3452 = vmul.f32 %v3407, %v3418
      %v3485 = vrot.slane %v3421, 1
      %v3486 = vrot.slane %v3423, 1
      %v3487 = vsel %vm1830, %v3485, %v3486
      %v3488 = vrot.slane %v3422, 1
      %v3489 = vrot.slane %v3424, 1
      %v3490 = vsel %vm1830, %v3488, %v3489
      %v3491 = vrot.slane %v3425, 1
      %v3492 = vrot.slane %v3427, 1
      %v3493 = vsel %vm1830, %v3491, %v3492
      %v3494 = vrot.slane %v3426, 1
      %v3495 = vrot.slane %v3428, 1
      %v3496 = vsel %vm1830, %v3494, %v3495
      %v3497 = vrot.slane %v3429, 1
      %v3498 = vrot.slane %v3431, 1
      %v3499 = vsel %vm1830, %v3497, %v3498
      %v3500 = vrot.slane %v3430, 1
      %v3501 = vrot.slane %v3432, 1
      %v3502 = vsel %vm1830, %v3500, %v3501
      %v3503 = vrot.slane %v3433, 1
      %v3504 = vrot.slane %v3435, 1
      %v3505 = vsel %vm1830, %v3503, %v3504
      %v3506 = vrot.slane %v3434, 1
      %v3507 = vrot.slane %v3436, 1
      %v3508 = vsel %vm1830, %v3506, %v3507
      %v3509 = vrot.slane %v3437, 1
      %v3510 = vrot.slane %v3439, 1
      %v3511 = vsel %vm1830, %v3509, %v3510
      %v3512 = vrot.slane %v3438, 1
      %v3513 = vrot.slane %v3440, 1
      %v3514 = vsel %vm1830, %v3512, %v3513
      %v3515 = vrot.slane %v3441, 1
      %v3516 = vrot.slane %v3443, 1
      %v3517 = vsel %vm1830, %v3515, %v3516
      %v3518 = vrot.slane %v3442, 1
      %v3519 = vrot.slane %v3444, 1
      %v3520 = vsel %vm1830, %v3518, %v3519
      %v3521 = vrot.slane %v3445, 1
      %v3522 = vrot.slane %v3447, 1
      %v3523 = vsel %vm1830, %v3521, %v3522
      %v3524 = vrot.slane %v3446, 1
      %v3525 = vrot.slane %v3448, 1
      %v3526 = vsel %vm1830, %v3524, %v3525
      %v3527 = vrot.slane %v3449, 1
      %v3528 = vrot.slane %v3451, 1
      %v3529 = vsel %vm1830, %v3527, %v3528
      %v3530 = vrot.slane %v3450, 1
      %v3531 = vrot.slane %v3452, 1
      %v3532 = vsel %vm1830, %v3530, %v3531
      %v3565 = vadd.f32 %v3344, %v3487
      %v3566 = vadd.f32 %v3345, %v3490
      %v3567 = vadd.f32 %v3346, %v3486
      %v3568 = vadd.f32 %v3347, %v3489
      %v3569 = vadd.f32 %v3348, %v3493
      %v3570 = vadd.f32 %v3349, %v3496
      %v3571 = vadd.f32 %v3350, %v3492
      %v3572 = vadd.f32 %v3351, %v3495
      %v3573 = vadd.f32 %v3352, %v3499
      %v3574 = vadd.f32 %v3353, %v3502
      %v3575 = vadd.f32 %v3354, %v3498
      %v3576 = vadd.f32 %v3355, %v3501
      %v3577 = vadd.f32 %v3356, %v3505
      %v3578 = vadd.f32 %v3357, %v3508
      %v3579 = vadd.f32 %v3358, %v3504
      %v3580 = vadd.f32 %v3359, %v3507
      %v3581 = vadd.f32 %v3360, %v3511
      %v3582 = vadd.f32 %v3361, %v3514
      %v3583 = vadd.f32 %v3362, %v3510
      %v3584 = vadd.f32 %v3363, %v3513
      %v3585 = vadd.f32 %v3364, %v3517
      %v3586 = vadd.f32 %v3365, %v3520
      %v3587 = vadd.f32 %v3366, %v3516
      %v3588 = vadd.f32 %v3367, %v3519
      %v3589 = vadd.f32 %v3368, %v3523
      %v3590 = vadd.f32 %v3369, %v3526
      %v3591 = vadd.f32 %v3370, %v3522
      %v3592 = vadd.f32 %v3371, %v3525
      %v3593 = vadd.f32 %v3372, %v3529
      %v3594 = vadd.f32 %v3373, %v3532
      %v3595 = vadd.f32 %v3374, %v3528
      %v3596 = vadd.f32 %v3375, %v3531
      %v3597 = vld [vmem:[%s1104] sm:$0xfc]
      %v3598 = vld [vmem:[%s1104 + $0x8] sm:$0xfc]
      %v3599 = vld [vmem:[%s1104 + $0x10] sm:$0x3]
      %v3600 = vld [vmem:[%s1104 + $0x18] sm:$0x3]
      %v3601 = vld [vmem:[%s1104 + $0x20] sm:$0xfc]
      %v3602 = vld [vmem:[%s1104 + $0x28] sm:$0xfc]
      %v3603 = vld [vmem:[%s1104 + $0x30] sm:$0x3]
      %v3604 = vld [vmem:[%s1104 + $0x38] sm:$0x3]
      %v3605 = vld [vmem:[%s1104 + $0x40] sm:$0xfc]
      %v3606 = vld [vmem:[%s1104 + $0x48] sm:$0xfc]
      %v3607 = vld [vmem:[%s1104 + $0x50] sm:$0x3]
      %v3608 = vld [vmem:[%s1104 + $0x58] sm:$0x3]
      %v3609 = vld [vmem:[%s1104 + $0x60] sm:$0xfc]
      %v3610 = vld [vmem:[%s1104 + $0x68] sm:$0xfc]
      %v3611 = vld [vmem:[%s1104 + $0x70] sm:$0x3]
      %v3612 = vld [vmem:[%s1104 + $0x78] sm:$0x3]
      %v3613 = vld [vmem:[%s1104 + $0x80] sm:$0xfc]
      %v3614 = vld [vmem:[%s1104 + $0x88] sm:$0xfc]
      %v3615 = vld [vmem:[%s1104 + $0x90] sm:$0x3]
      %v3616 = vld [vmem:[%s1104 + $0x98] sm:$0x3]
      %v3617 = vld [vmem:[%s1104 + $0xa0] sm:$0xfc]
      %v3618 = vld [vmem:[%s1104 + $0xa8] sm:$0xfc]
      %v3619 = vld [vmem:[%s1104 + $0xb0] sm:$0x3]
      %v3620 = vld [vmem:[%s1104 + $0xb8] sm:$0x3]
      %v3621 = vld [vmem:[%s1104 + $0xc0] sm:$0xfc]
      %v3622 = vld [vmem:[%s1104 + $0xc8] sm:$0xfc]
      %v3623 = vld [vmem:[%s1104 + $0xd0] sm:$0x3]
      %v3624 = vld [vmem:[%s1104 + $0xd8] sm:$0x3]
      %v3625 = vld [vmem:[%s1104 + $0xe0] sm:$0xfc]
      %v3626 = vld [vmem:[%s1104 + $0xe8] sm:$0xfc]
      %v3627 = vld [vmem:[%s1104 + $0xf0] sm:$0x3]
      %v3628 = vld [vmem:[%s1104 + $0xf8] sm:$0x3]
      %s3629 = scalar_lea.vmem %s1, 21
      %v3630 = vld [vmem:[%s3629] ss:$8 sm:$0x3]
      %v3632 = vlaneseq
      %v3633 = vshrl.u32 %v3632, 7
      %v3634 = vsub.s32 0, %v3633
      %v3635 = vrot.slane %v3630, %v3634
      %v3636 = vlaneseq
      %v3637 = vshrl.u32 %v3636, 7
      %v3638 = vsub.s32 1, %v3637
      %v3639 = vrot.slane %v3630, %v3638
      %v3642 = vmul.f32 %v3597, %v3635
      %v3643 = vmul.f32 %v3598, %v3639
      %v3644 = vmul.f32 %v3599, %v3635
      %v3645 = vmul.f32 %v3600, %v3639
      %v3646 = vmul.f32 %v3601, %v3635
      %v3647 = vmul.f32 %v3602, %v3639
      %v3648 = vmul.f32 %v3603, %v3635
      %v3649 = vmul.f32 %v3604, %v3639
      %v3650 = vmul.f32 %v3605, %v3635
      %v3651 = vmul.f32 %v3606, %v3639
      %v3652 = vmul.f32 %v3607, %v3635
      %v3653 = vmul.f32 %v3608, %v3639
      %v3654 = vmul.f32 %v3609, %v3635
      %v3655 = vmul.f32 %v3610, %v3639
      %v3656 = vmul.f32 %v3611, %v3635
      %v3657 = vmul.f32 %v3612, %v3639
      %v3658 = vmul.f32 %v3613, %v3635
      %v3659 = vmul.f32 %v3614, %v3639
      %v3660 = vmul.f32 %v3615, %v3635
      %v3661 = vmul.f32 %v3616, %v3639
      %v3662 = vmul.f32 %v3617, %v3635
      %v3663 = vmul.f32 %v3618, %v3639
      %v3664 = vmul.f32 %v3619, %v3635
      %v3665 = vmul.f32 %v3620, %v3639
      %v3666 = vmul.f32 %v3621, %v3635
      %v3667 = vmul.f32 %v3622, %v3639
      %v3668 = vmul.f32 %v3623, %v3635
      %v3669 = vmul.f32 %v3624, %v3639
      %v3670 = vmul.f32 %v3625, %v3635
      %v3671 = vmul.f32 %v3626, %v3639
      %v3672 = vmul.f32 %v3627, %v3635
      %v3673 = vmul.f32 %v3628, %v3639
      %v3706 = vrot.slane %v3642, 1
      %v3707 = vrot.slane %v3644, 1
      %v3708 = vsel %vm1830, %v3706, %v3707
      %v3709 = vrot.slane %v3643, 1
      %v3710 = vrot.slane %v3645, 1
      %v3711 = vsel %vm1830, %v3709, %v3710
      %v3712 = vrot.slane %v3646, 1
      %v3713 = vrot.slane %v3648, 1
      %v3714 = vsel %vm1830, %v3712, %v3713
      %v3715 = vrot.slane %v3647, 1
      %v3716 = vrot.slane %v3649, 1
      %v3717 = vsel %vm1830, %v3715, %v3716
      %v3718 = vrot.slane %v3650, 1
      %v3719 = vrot.slane %v3652, 1
      %v3720 = vsel %vm1830, %v3718, %v3719
      %v3721 = vrot.slane %v3651, 1
      %v3722 = vrot.slane %v3653, 1
      %v3723 = vsel %vm1830, %v3721, %v3722
      %v3724 = vrot.slane %v3654, 1
      %v3725 = vrot.slane %v3656, 1
      %v3726 = vsel %vm1830, %v3724, %v3725
      %v3727 = vrot.slane %v3655, 1
      %v3728 = vrot.slane %v3657, 1
      %v3729 = vsel %vm1830, %v3727, %v3728
      %v3730 = vrot.slane %v3658, 1
      %v3731 = vrot.slane %v3660, 1
      %v3732 = vsel %vm1830, %v3730, %v3731
      %v3733 = vrot.slane %v3659, 1
      %v3734 = vrot.slane %v3661, 1
      %v3735 = vsel %vm1830, %v3733, %v3734
      %v3736 = vrot.slane %v3662, 1
      %v3737 = vrot.slane %v3664, 1
      %v3738 = vsel %vm1830, %v3736, %v3737
      %v3739 = vrot.slane %v3663, 1
      %v3740 = vrot.slane %v3665, 1
      %v3741 = vsel %vm1830, %v3739, %v3740
      %v3742 = vrot.slane %v3666, 1
      %v3743 = vrot.slane %v3668, 1
      %v3744 = vsel %vm1830, %v3742, %v3743
      %v3745 = vrot.slane %v3667, 1
      %v3746 = vrot.slane %v3669, 1
      %v3747 = vsel %vm1830, %v3745, %v3746
      %v3748 = vrot.slane %v3670, 1
      %v3749 = vrot.slane %v3672, 1
      %v3750 = vsel %vm1830, %v3748, %v3749
      %v3751 = vrot.slane %v3671, 1
      %v3752 = vrot.slane %v3673, 1
      %v3753 = vsel %vm1830, %v3751, %v3752
      %v3786 = vadd.f32 %v3565, %v3708
      %v3787 = vadd.f32 %v3566, %v3711
      %v3788 = vadd.f32 %v3567, %v3707
      %v3789 = vadd.f32 %v3568, %v3710
      %v3790 = vadd.f32 %v3569, %v3714
      %v3791 = vadd.f32 %v3570, %v3717
      %v3792 = vadd.f32 %v3571, %v3713
      %v3793 = vadd.f32 %v3572, %v3716
      %v3794 = vadd.f32 %v3573, %v3720
      %v3795 = vadd.f32 %v3574, %v3723
      %v3796 = vadd.f32 %v3575, %v3719
      %v3797 = vadd.f32 %v3576, %v3722
      %v3798 = vadd.f32 %v3577, %v3726
      %v3799 = vadd.f32 %v3578, %v3729
      %v3800 = vadd.f32 %v3579, %v3725
      %v3801 = vadd.f32 %v3580, %v3728
      %v3802 = vadd.f32 %v3581, %v3732
      %v3803 = vadd.f32 %v3582, %v3735
      %v3804 = vadd.f32 %v3583, %v3731
      %v3805 = vadd.f32 %v3584, %v3734
      %v3806 = vadd.f32 %v3585, %v3738
      %v3807 = vadd.f32 %v3586, %v3741
      %v3808 = vadd.f32 %v3587, %v3737
      %v3809 = vadd.f32 %v3588, %v3740
      %v3810 = vadd.f32 %v3589, %v3744
      %v3811 = vadd.f32 %v3590, %v3747
      %v3812 = vadd.f32 %v3591, %v3743
      %v3813 = vadd.f32 %v3592, %v3746
      %v3814 = vadd.f32 %v3593, %v3750
      %v3815 = vadd.f32 %v3594, %v3753
      %v3816 = vadd.f32 %v3595, %v3749
      %v3817 = vadd.f32 %v3596, %v3752
      %v3818 = vld [vmem:[%s1256] sm:$0xfc]
      %v3819 = vld [vmem:[%s1256 + $0x8] sm:$0xfc]
      %v3820 = vld [vmem:[%s1256 + $0x10] sm:$0x3]
      %v3821 = vld [vmem:[%s1256 + $0x18] sm:$0x3]
      %v3822 = vld [vmem:[%s1256 + $0x20] sm:$0xfc]
      %v3823 = vld [vmem:[%s1256 + $0x28] sm:$0xfc]
      %v3824 = vld [vmem:[%s1256 + $0x30] sm:$0x3]
      %v3825 = vld [vmem:[%s1256 + $0x38] sm:$0x3]
      %v3826 = vld [vmem:[%s1256 + $0x40] sm:$0xfc]
      %v3827 = vld [vmem:[%s1256 + $0x48] sm:$0xfc]
      %v3828 = vld [vmem:[%s1256 + $0x50] sm:$0x3]
      %v3829 = vld [vmem:[%s1256 + $0x58] sm:$0x3]
      %v3830 = vld [vmem:[%s1256 + $0x60] sm:$0xfc]
      %v3831 = vld [vmem:[%s1256 + $0x68] sm:$0xfc]
      %v3832 = vld [vmem:[%s1256 + $0x70] sm:$0x3]
      %v3833 = vld [vmem:[%s1256 + $0x78] sm:$0x3]
      %v3834 = vld [vmem:[%s1256 + $0x80] sm:$0xfc]
      %v3835 = vld [vmem:[%s1256 + $0x88] sm:$0xfc]
      %v3836 = vld [vmem:[%s1256 + $0x90] sm:$0x3]
      %v3837 = vld [vmem:[%s1256 + $0x98] sm:$0x3]
      %v3838 = vld [vmem:[%s1256 + $0xa0] sm:$0xfc]
      %v3839 = vld [vmem:[%s1256 + $0xa8] sm:$0xfc]
      %v3840 = vld [vmem:[%s1256 + $0xb0] sm:$0x3]
      %v3841 = vld [vmem:[%s1256 + $0xb8] sm:$0x3]
      %v3842 = vld [vmem:[%s1256 + $0xc0] sm:$0xfc]
      %v3843 = vld [vmem:[%s1256 + $0xc8] sm:$0xfc]
      %v3844 = vld [vmem:[%s1256 + $0xd0] sm:$0x3]
      %v3845 = vld [vmem:[%s1256 + $0xd8] sm:$0x3]
      %v3846 = vld [vmem:[%s1256 + $0xe0] sm:$0xfc]
      %v3847 = vld [vmem:[%s1256 + $0xe8] sm:$0xfc]
      %v3848 = vld [vmem:[%s1256 + $0xf0] sm:$0x3]
      %v3849 = vld [vmem:[%s1256 + $0xf8] sm:$0x3]
      %s3850 = scalar_lea.vmem %s1, 22
      %v3851 = vld [vmem:[%s3850] ss:$8 sm:$0x3]
      %v3853 = vlaneseq
      %v3854 = vshrl.u32 %v3853, 7
      %v3855 = vsub.s32 0, %v3854
      %v3856 = vrot.slane %v3851, %v3855
      %v3857 = vlaneseq
      %v3858 = vshrl.u32 %v3857, 7
      %v3859 = vsub.s32 1, %v3858
      %v3860 = vrot.slane %v3851, %v3859
      %v3863 = vmul.f32 %v3818, %v3856
      %v3864 = vmul.f32 %v3819, %v3860
      %v3865 = vmul.f32 %v3820, %v3856
      %v3866 = vmul.f32 %v3821, %v3860
      %v3867 = vmul.f32 %v3822, %v3856
      %v3868 = vmul.f32 %v3823, %v3860
      %v3869 = vmul.f32 %v3824, %v3856
      %v3870 = vmul.f32 %v3825, %v3860
      %v3871 = vmul.f32 %v3826, %v3856
      %v3872 = vmul.f32 %v3827, %v3860
      %v3873 = vmul.f32 %v3828, %v3856
      %v3874 = vmul.f32 %v3829, %v3860
      %v3875 = vmul.f32 %v3830, %v3856
      %v3876 = vmul.f32 %v3831, %v3860
      %v3877 = vmul.f32 %v3832, %v3856
      %v3878 = vmul.f32 %v3833, %v3860
      %v3879 = vmul.f32 %v3834, %v3856
      %v3880 = vmul.f32 %v3835, %v3860
      %v3881 = vmul.f32 %v3836, %v3856
      %v3882 = vmul.f32 %v3837, %v3860
      %v3883 = vmul.f32 %v3838, %v3856
      %v3884 = vmul.f32 %v3839, %v3860
      %v3885 = vmul.f32 %v3840, %v3856
      %v3886 = vmul.f32 %v3841, %v3860
      %v3887 = vmul.f32 %v3842, %v3856
      %v3888 = vmul.f32 %v3843, %v3860
      %v3889 = vmul.f32 %v3844, %v3856
      %v3890 = vmul.f32 %v3845, %v3860
      %v3891 = vmul.f32 %v3846, %v3856
      %v3892 = vmul.f32 %v3847, %v3860
      %v3893 = vmul.f32 %v3848, %v3856
      %v3894 = vmul.f32 %v3849, %v3860
      %v3927 = vrot.slane %v3863, 1
      %v3928 = vrot.slane %v3865, 1
      %v3929 = vsel %vm1830, %v3927, %v3928
      %v3930 = vrot.slane %v3864, 1
      %v3931 = vrot.slane %v3866, 1
      %v3932 = vsel %vm1830, %v3930, %v3931
      %v3933 = vrot.slane %v3867, 1
      %v3934 = vrot.slane %v3869, 1
      %v3935 = vsel %vm1830, %v3933, %v3934
      %v3936 = vrot.slane %v3868, 1
      %v3937 = vrot.slane %v3870, 1
      %v3938 = vsel %vm1830, %v3936, %v3937
      %v3939 = vrot.slane %v3871, 1
      %v3940 = vrot.slane %v3873, 1
      %v3941 = vsel %vm1830, %v3939, %v3940
      %v3942 = vrot.slane %v3872, 1
      %v3943 = vrot.slane %v3874, 1
      %v3944 = vsel %vm1830, %v3942, %v3943
      %v3945 = vrot.slane %v3875, 1
      %v3946 = vrot.slane %v3877, 1
      %v3947 = vsel %vm1830, %v3945, %v3946
      %v3948 = vrot.slane %v3876, 1
      %v3949 = vrot.slane %v3878, 1
      %v3950 = vsel %vm1830, %v3948, %v3949
      %v3951 = vrot.slane %v3879, 1
      %v3952 = vrot.slane %v3881, 1
      %v3953 = vsel %vm1830, %v3951, %v3952
      %v3954 = vrot.slane %v3880, 1
      %v3955 = vrot.slane %v3882, 1
      %v3956 = vsel %vm1830, %v3954, %v3955
      %v3957 = vrot.slane %v3883, 1
      %v3958 = vrot.slane %v3885, 1
      %v3959 = vsel %vm1830, %v3957, %v3958
      %v3960 = vrot.slane %v3884, 1
      %v3961 = vrot.slane %v3886, 1
      %v3962 = vsel %vm1830, %v3960, %v3961
      %v3963 = vrot.slane %v3887, 1
      %v3964 = vrot.slane %v3889, 1
      %v3965 = vsel %vm1830, %v3963, %v3964
      %v3966 = vrot.slane %v3888, 1
      %v3967 = vrot.slane %v3890, 1
      %v3968 = vsel %vm1830, %v3966, %v3967
      %v3969 = vrot.slane %v3891, 1
      %v3970 = vrot.slane %v3893, 1
      %v3971 = vsel %vm1830, %v3969, %v3970
      %v3972 = vrot.slane %v3892, 1
      %v3973 = vrot.slane %v3894, 1
      %v3974 = vsel %vm1830, %v3972, %v3973
      %v4007 = vadd.f32 %v3786, %v3929
      %v4008 = vadd.f32 %v3787, %v3932
      %v4009 = vadd.f32 %v3788, %v3928
      %v4010 = vadd.f32 %v3789, %v3931
      %v4011 = vadd.f32 %v3790, %v3935
      %v4012 = vadd.f32 %v3791, %v3938
      %v4013 = vadd.f32 %v3792, %v3934
      %v4014 = vadd.f32 %v3793, %v3937
      %v4015 = vadd.f32 %v3794, %v3941
      %v4016 = vadd.f32 %v3795, %v3944
      %v4017 = vadd.f32 %v3796, %v3940
      %v4018 = vadd.f32 %v3797, %v3943
      %v4019 = vadd.f32 %v3798, %v3947
      %v4020 = vadd.f32 %v3799, %v3950
      %v4021 = vadd.f32 %v3800, %v3946
      %v4022 = vadd.f32 %v3801, %v3949
      %v4023 = vadd.f32 %v3802, %v3953
      %v4024 = vadd.f32 %v3803, %v3956
      %v4025 = vadd.f32 %v3804, %v3952
      %v4026 = vadd.f32 %v3805, %v3955
      %v4027 = vadd.f32 %v3806, %v3959
      %v4028 = vadd.f32 %v3807, %v3962
      %v4029 = vadd.f32 %v3808, %v3958
      %v4030 = vadd.f32 %v3809, %v3961
      %v4031 = vadd.f32 %v3810, %v3965
      %v4032 = vadd.f32 %v3811, %v3968
      %v4033 = vadd.f32 %v3812, %v3964
      %v4034 = vadd.f32 %v3813, %v3967
      %v4035 = vadd.f32 %v3814, %v3971
      %v4036 = vadd.f32 %v3815, %v3974
      %v4037 = vadd.f32 %v3816, %v3970
      %v4038 = vadd.f32 %v3817, %v3973
      %v4039 = vld [vmem:[%s1023] sm:$0xf8]
      %v4040 = vld [vmem:[%s1023 + $0x8] sm:$0xf8]
      %v4041 = vld [vmem:[%s1023 + $0x10] sm:$0x7]
      %v4042 = vld [vmem:[%s1023 + $0x18] sm:$0x7]
      %v4043 = vld [vmem:[%s1023 + $0x20] sm:$0xf8]
      %v4044 = vld [vmem:[%s1023 + $0x28] sm:$0xf8]
      %v4045 = vld [vmem:[%s1023 + $0x30] sm:$0x7]
      %v4046 = vld [vmem:[%s1023 + $0x38] sm:$0x7]
      %v4047 = vld [vmem:[%s1023 + $0x40] sm:$0xf8]
      %v4048 = vld [vmem:[%s1023 + $0x48] sm:$0xf8]
      %v4049 = vld [vmem:[%s1023 + $0x50] sm:$0x7]
      %v4050 = vld [vmem:[%s1023 + $0x58] sm:$0x7]
      %v4051 = vld [vmem:[%s1023 + $0x60] sm:$0xf8]
      %v4052 = vld [vmem:[%s1023 + $0x68] sm:$0xf8]
      %v4053 = vld [vmem:[%s1023 + $0x70] sm:$0x7]
      %v4054 = vld [vmem:[%s1023 + $0x78] sm:$0x7]
      %v4055 = vld [vmem:[%s1023 + $0x80] sm:$0xf8]
      %v4056 = vld [vmem:[%s1023 + $0x88] sm:$0xf8]
      %v4057 = vld [vmem:[%s1023 + $0x90] sm:$0x7]
      %v4058 = vld [vmem:[%s1023 + $0x98] sm:$0x7]
      %v4059 = vld [vmem:[%s1023 + $0xa0] sm:$0xf8]
      %v4060 = vld [vmem:[%s1023 + $0xa8] sm:$0xf8]
      %v4061 = vld [vmem:[%s1023 + $0xb0] sm:$0x7]
      %v4062 = vld [vmem:[%s1023 + $0xb8] sm:$0x7]
      %v4063 = vld [vmem:[%s1023 + $0xc0] sm:$0xf8]
      %v4064 = vld [vmem:[%s1023 + $0xc8] sm:$0xf8]
      %v4065 = vld [vmem:[%s1023 + $0xd0] sm:$0x7]
      %v4066 = vld [vmem:[%s1023 + $0xd8] sm:$0x7]
      %v4067 = vld [vmem:[%s1023 + $0xe0] sm:$0xf8]
      %v4068 = vld [vmem:[%s1023 + $0xe8] sm:$0xf8]
      %v4069 = vld [vmem:[%s1023 + $0xf0] sm:$0x7]
      %v4070 = vld [vmem:[%s1023 + $0xf8] sm:$0x7]
      %s4071 = scalar_lea.vmem %s1, 23
      %v4072 = vld [vmem:[%s4071] ss:$8 sm:$0x3]
      %v4074 = vlaneseq
      %v4075 = vshrl.u32 %v4074, 7
      %v4076 = vsub.s32 0, %v4075
      %v4077 = vrot.slane %v4072, %v4076
      %v4078 = vlaneseq
      %v4079 = vshrl.u32 %v4078, 7
      %v4080 = vsub.s32 1, %v4079
      %v4081 = vrot.slane %v4072, %v4080
      %v4084 = vmul.f32 %v4039, %v4077
      %v4085 = vmul.f32 %v4040, %v4081
      %v4086 = vmul.f32 %v4041, %v4077
      %v4087 = vmul.f32 %v4042, %v4081
      %v4088 = vmul.f32 %v4043, %v4077
      %v4089 = vmul.f32 %v4044, %v4081
      %v4090 = vmul.f32 %v4045, %v4077
      %v4091 = vmul.f32 %v4046, %v4081
      %v4092 = vmul.f32 %v4047, %v4077
      %v4093 = vmul.f32 %v4048, %v4081
      %v4094 = vmul.f32 %v4049, %v4077
      %v4095 = vmul.f32 %v4050, %v4081
      %v4096 = vmul.f32 %v4051, %v4077
      %v4097 = vmul.f32 %v4052, %v4081
      %v4098 = vmul.f32 %v4053, %v4077
      %v4099 = vmul.f32 %v4054, %v4081
      %v4100 = vmul.f32 %v4055, %v4077
      %v4101 = vmul.f32 %v4056, %v4081
      %v4102 = vmul.f32 %v4057, %v4077
      %v4103 = vmul.f32 %v4058, %v4081
      %v4104 = vmul.f32 %v4059, %v4077
      %v4105 = vmul.f32 %v4060, %v4081
      %v4106 = vmul.f32 %v4061, %v4077
      %v4107 = vmul.f32 %v4062, %v4081
      %v4108 = vmul.f32 %v4063, %v4077
      %v4109 = vmul.f32 %v4064, %v4081
      %v4110 = vmul.f32 %v4065, %v4077
      %v4111 = vmul.f32 %v4066, %v4081
      %v4112 = vmul.f32 %v4067, %v4077
      %v4113 = vmul.f32 %v4068, %v4081
      %v4114 = vmul.f32 %v4069, %v4077
      %v4115 = vmul.f32 %v4070, %v4081
      %v4148 = vrot.slane %v4084, 2
      %v4149 = vrot.slane %v4086, 2
      %v4150 = vsel %vm2494, %v4148, %v4149
      %v4151 = vrot.slane %v4085, 2
      %v4152 = vrot.slane %v4087, 2
      %v4153 = vsel %vm2494, %v4151, %v4152
      %v4154 = vrot.slane %v4088, 2
      %v4155 = vrot.slane %v4090, 2
      %v4156 = vsel %vm2494, %v4154, %v4155
      %v4157 = vrot.slane %v4089, 2
      %v4158 = vrot.slane %v4091, 2
      %v4159 = vsel %vm2494, %v4157, %v4158
      %v4160 = vrot.slane %v4092, 2
      %v4161 = vrot.slane %v4094, 2
      %v4162 = vsel %vm2494, %v4160, %v4161
      %v4163 = vrot.slane %v4093, 2
      %v4164 = vrot.slane %v4095, 2
      %v4165 = vsel %vm2494, %v4163, %v4164
      %v4166 = vrot.slane %v4096, 2
      %v4167 = vrot.slane %v4098, 2
      %v4168 = vsel %vm2494, %v4166, %v4167
      %v4169 = vrot.slane %v4097, 2
      %v4170 = vrot.slane %v4099, 2
      %v4171 = vsel %vm2494, %v4169, %v4170
      %v4172 = vrot.slane %v4100, 2
      %v4173 = vrot.slane %v4102, 2
      %v4174 = vsel %vm2494, %v4172, %v4173
      %v4175 = vrot.slane %v4101, 2
      %v4176 = vrot.slane %v4103, 2
      %v4177 = vsel %vm2494, %v4175, %v4176
      %v4178 = vrot.slane %v4104, 2
      %v4179 = vrot.slane %v4106, 2
      %v4180 = vsel %vm2494, %v4178, %v4179
      %v4181 = vrot.slane %v4105, 2
      %v4182 = vrot.slane %v4107, 2
      %v4183 = vsel %vm2494, %v4181, %v4182
      %v4184 = vrot.slane %v4108, 2
      %v4185 = vrot.slane %v4110, 2
      %v4186 = vsel %vm2494, %v4184, %v4185
      %v4187 = vrot.slane %v4109, 2
      %v4188 = vrot.slane %v4111, 2
      %v4189 = vsel %vm2494, %v4187, %v4188
      %v4190 = vrot.slane %v4112, 2
      %v4191 = vrot.slane %v4114, 2
      %v4192 = vsel %vm2494, %v4190, %v4191
      %v4193 = vrot.slane %v4113, 2
      %v4194 = vrot.slane %v4115, 2
      %v4195 = vsel %vm2494, %v4193, %v4194
      %v4228 = vadd.f32 %v4007, %v4150
      %v4229 = vadd.f32 %v4008, %v4153
      %v4230 = vadd.f32 %v4009, %v4149
      %v4231 = vadd.f32 %v4010, %v4152
      %v4232 = vadd.f32 %v4011, %v4156
      %v4233 = vadd.f32 %v4012, %v4159
      %v4234 = vadd.f32 %v4013, %v4155
      %v4235 = vadd.f32 %v4014, %v4158
      %v4236 = vadd.f32 %v4015, %v4162
      %v4237 = vadd.f32 %v4016, %v4165
      %v4238 = vadd.f32 %v4017, %v4161
      %v4239 = vadd.f32 %v4018, %v4164
      %v4240 = vadd.f32 %v4019, %v4168
      %v4241 = vadd.f32 %v4020, %v4171
      %v4242 = vadd.f32 %v4021, %v4167
      %v4243 = vadd.f32 %v4022, %v4170
      %v4244 = vadd.f32 %v4023, %v4174
      %v4245 = vadd.f32 %v4024, %v4177
      %v4246 = vadd.f32 %v4025, %v4173
      %v4247 = vadd.f32 %v4026, %v4176
      %v4248 = vadd.f32 %v4027, %v4180
      %v4249 = vadd.f32 %v4028, %v4183
      %v4250 = vadd.f32 %v4029, %v4179
      %v4251 = vadd.f32 %v4030, %v4182
      %v4252 = vadd.f32 %v4031, %v4186
      %v4253 = vadd.f32 %v4032, %v4189
      %v4254 = vadd.f32 %v4033, %v4185
      %v4255 = vadd.f32 %v4034, %v4188
      %v4256 = vadd.f32 %v4035, %v4192
      %v4257 = vadd.f32 %v4036, %v4195
      %v4258 = vadd.f32 %v4037, %v4191
      %v4259 = vadd.f32 %v4038, %v4194
      %v4260 = vld [vmem:[%s1104] sm:$0xf8]
      %v4261 = vld [vmem:[%s1104 + $0x8] sm:$0xf8]
      %v4262 = vld [vmem:[%s1104 + $0x10] sm:$0x7]
      %v4263 = vld [vmem:[%s1104 + $0x18] sm:$0x7]
      %v4264 = vld [vmem:[%s1104 + $0x20] sm:$0xf8]
      %v4265 = vld [vmem:[%s1104 + $0x28] sm:$0xf8]
      %v4266 = vld [vmem:[%s1104 + $0x30] sm:$0x7]
      %v4267 = vld [vmem:[%s1104 + $0x38] sm:$0x7]
      %v4268 = vld [vmem:[%s1104 + $0x40] sm:$0xf8]
      %v4269 = vld [vmem:[%s1104 + $0x48] sm:$0xf8]
      %v4270 = vld [vmem:[%s1104 + $0x50] sm:$0x7]
      %v4271 = vld [vmem:[%s1104 + $0x58] sm:$0x7]
      %v4272 = vld [vmem:[%s1104 + $0x60] sm:$0xf8]
      %v4273 = vld [vmem:[%s1104 + $0x68] sm:$0xf8]
      %v4274 = vld [vmem:[%s1104 + $0x70] sm:$0x7]
      %v4275 = vld [vmem:[%s1104 + $0x78] sm:$0x7]
      %v4276 = vld [vmem:[%s1104 + $0x80] sm:$0xf8]
      %v4277 = vld [vmem:[%s1104 + $0x88] sm:$0xf8]
      %v4278 = vld [vmem:[%s1104 + $0x90] sm:$0x7]
      %v4279 = vld [vmem:[%s1104 + $0x98] sm:$0x7]
      %v4280 = vld [vmem:[%s1104 + $0xa0] sm:$0xf8]
      %v4281 = vld [vmem:[%s1104 + $0xa8] sm:$0xf8]
      %v4282 = vld [vmem:[%s1104 + $0xb0] sm:$0x7]
      %v4283 = vld [vmem:[%s1104 + $0xb8] sm:$0x7]
      %v4284 = vld [vmem:[%s1104 + $0xc0] sm:$0xf8]
      %v4285 = vld [vmem:[%s1104 + $0xc8] sm:$0xf8]
      %v4286 = vld [vmem:[%s1104 + $0xd0] sm:$0x7]
      %v4287 = vld [vmem:[%s1104 + $0xd8] sm:$0x7]
      %v4288 = vld [vmem:[%s1104 + $0xe0] sm:$0xf8]
      %v4289 = vld [vmem:[%s1104 + $0xe8] sm:$0xf8]
      %v4290 = vld [vmem:[%s1104 + $0xf0] sm:$0x7]
      %v4291 = vld [vmem:[%s1104 + $0xf8] sm:$0x7]
      %s4292 = scalar_lea.vmem %s1, 32
      %v4293 = vld [vmem:[%s4292] ss:$8 sm:$0x3]
      %v4295 = vlaneseq
      %v4296 = vshrl.u32 %v4295, 7
      %v4297 = vsub.s32 0, %v4296
      %v4298 = vrot.slane %v4293, %v4297
      %v4299 = vlaneseq
      %v4300 = vshrl.u32 %v4299, 7
      %v4301 = vsub.s32 1, %v4300
      %v4302 = vrot.slane %v4293, %v4301
      %v4305 = vmul.f32 %v4260, %v4298
      %v4306 = vmul.f32 %v4261, %v4302
      %v4307 = vmul.f32 %v4262, %v4298
      %v4308 = vmul.f32 %v4263, %v4302
      %v4309 = vmul.f32 %v4264, %v4298
      %v4310 = vmul.f32 %v4265, %v4302
      %v4311 = vmul.f32 %v4266, %v4298
      %v4312 = vmul.f32 %v4267, %v4302
      %v4313 = vmul.f32 %v4268, %v4298
      %v4314 = vmul.f32 %v4269, %v4302
      %v4315 = vmul.f32 %v4270, %v4298
      %v4316 = vmul.f32 %v4271, %v4302
      %v4317 = vmul.f32 %v4272, %v4298
      %v4318 = vmul.f32 %v4273, %v4302
      %v4319 = vmul.f32 %v4274, %v4298
      %v4320 = vmul.f32 %v4275, %v4302
      %v4321 = vmul.f32 %v4276, %v4298
      %v4322 = vmul.f32 %v4277, %v4302
      %v4323 = vmul.f32 %v4278, %v4298
      %v4324 = vmul.f32 %v4279, %v4302
      %v4325 = vmul.f32 %v4280, %v4298
      %v4326 = vmul.f32 %v4281, %v4302
      %v4327 = vmul.f32 %v4282, %v4298
      %v4328 = vmul.f32 %v4283, %v4302
      %v4329 = vmul.f32 %v4284, %v4298
      %v4330 = vmul.f32 %v4285, %v4302
      %v4331 = vmul.f32 %v4286, %v4298
      %v4332 = vmul.f32 %v4287, %v4302
      %v4333 = vmul.f32 %v4288, %v4298
      %v4334 = vmul.f32 %v4289, %v4302
      %v4335 = vmul.f32 %v4290, %v4298
      %v4336 = vmul.f32 %v4291, %v4302
      %v4369 = vrot.slane %v4305, 2
      %v4370 = vrot.slane %v4307, 2
      %v4371 = vsel %vm2494, %v4369, %v4370
      %v4372 = vrot.slane %v4306, 2
      %v4373 = vrot.slane %v4308, 2
      %v4374 = vsel %vm2494, %v4372, %v4373
      %v4375 = vrot.slane %v4309, 2
      %v4376 = vrot.slane %v4311, 2
      %v4377 = vsel %vm2494, %v4375, %v4376
      %v4378 = vrot.slane %v4310, 2
      %v4379 = vrot.slane %v4312, 2
      %v4380 = vsel %vm2494, %v4378, %v4379
      %v4381 = vrot.slane %v4313, 2
      %v4382 = vrot.slane %v4315, 2
      %v4383 = vsel %vm2494, %v4381, %v4382
      %v4384 = vrot.slane %v4314, 2
      %v4385 = vrot.slane %v4316, 2
      %v4386 = vsel %vm2494, %v4384, %v4385
      %v4387 = vrot.slane %v4317, 2
      %v4388 = vrot.slane %v4319, 2
      %v4389 = vsel %vm2494, %v4387, %v4388
      %v4390 = vrot.slane %v4318, 2
      %v4391 = vrot.slane %v4320, 2
      %v4392 = vsel %vm2494, %v4390, %v4391
      %v4393 = vrot.slane %v4321, 2
      %v4394 = vrot.slane %v4323, 2
      %v4395 = vsel %vm2494, %v4393, %v4394
      %v4396 = vrot.slane %v4322, 2
      %v4397 = vrot.slane %v4324, 2
      %v4398 = vsel %vm2494, %v4396, %v4397
      %v4399 = vrot.slane %v4325, 2
      %v4400 = vrot.slane %v4327, 2
      %v4401 = vsel %vm2494, %v4399, %v4400
      %v4402 = vrot.slane %v4326, 2
      %v4403 = vrot.slane %v4328, 2
      %v4404 = vsel %vm2494, %v4402, %v4403
      %v4405 = vrot.slane %v4329, 2
      %v4406 = vrot.slane %v4331, 2
      %v4407 = vsel %vm2494, %v4405, %v4406
      %v4408 = vrot.slane %v4330, 2
      %v4409 = vrot.slane %v4332, 2
      %v4410 = vsel %vm2494, %v4408, %v4409
      %v4411 = vrot.slane %v4333, 2
      %v4412 = vrot.slane %v4335, 2
      %v4413 = vsel %vm2494, %v4411, %v4412
      %v4414 = vrot.slane %v4334, 2
      %v4415 = vrot.slane %v4336, 2
      %v4416 = vsel %vm2494, %v4414, %v4415
      %v4449 = vadd.f32 %v4228, %v4371
      %v4450 = vadd.f32 %v4229, %v4374
      %v4451 = vadd.f32 %v4230, %v4370
      %v4452 = vadd.f32 %v4231, %v4373
      %v4453 = vadd.f32 %v4232, %v4377
      %v4454 = vadd.f32 %v4233, %v4380
      %v4455 = vadd.f32 %v4234, %v4376
      %v4456 = vadd.f32 %v4235, %v4379
      %v4457 = vadd.f32 %v4236, %v4383
      %v4458 = vadd.f32 %v4237, %v4386
      %v4459 = vadd.f32 %v4238, %v4382
      %v4460 = vadd.f32 %v4239, %v4385
      %v4461 = vadd.f32 %v4240, %v4389
      %v4462 = vadd.f32 %v4241, %v4392
      %v4463 = vadd.f32 %v4242, %v4388
      %v4464 = vadd.f32 %v4243, %v4391
      %v4465 = vadd.f32 %v4244, %v4395
      %v4466 = vadd.f32 %v4245, %v4398
      %v4467 = vadd.f32 %v4246, %v4394
      %v4468 = vadd.f32 %v4247, %v4397
      %v4469 = vadd.f32 %v4248, %v4401
      %v4470 = vadd.f32 %v4249, %v4404
      %v4471 = vadd.f32 %v4250, %v4400
      %v4472 = vadd.f32 %v4251, %v4403
      %v4473 = vadd.f32 %v4252, %v4407
      %v4474 = vadd.f32 %v4253, %v4410
      %v4475 = vadd.f32 %v4254, %v4406
      %v4476 = vadd.f32 %v4255, %v4409
      %v4477 = vadd.f32 %v4256, %v4413
      %v4478 = vadd.f32 %v4257, %v4416
      %v4479 = vadd.f32 %v4258, %v4412
      %v4480 = vadd.f32 %v4259, %v4415
      %v4481 = vld [vmem:[%s1256] sm:$0xf8]
      %v4482 = vld [vmem:[%s1256 + $0x8] sm:$0xf8]
      %v4483 = vld [vmem:[%s1256 + $0x10] sm:$0x7]
      %v4484 = vld [vmem:[%s1256 + $0x18] sm:$0x7]
      %v4485 = vld [vmem:[%s1256 + $0x20] sm:$0xf8]
      %v4486 = vld [vmem:[%s1256 + $0x28] sm:$0xf8]
      %v4487 = vld [vmem:[%s1256 + $0x30] sm:$0x7]
      %v4488 = vld [vmem:[%s1256 + $0x38] sm:$0x7]
      %v4489 = vld [vmem:[%s1256 + $0x40] sm:$0xf8]
      %v4490 = vld [vmem:[%s1256 + $0x48] sm:$0xf8]
      %v4491 = vld [vmem:[%s1256 + $0x50] sm:$0x7]
      %v4492 = vld [vmem:[%s1256 + $0x58] sm:$0x7]
      %v4493 = vld [vmem:[%s1256 + $0x60] sm:$0xf8]
      %v4494 = vld [vmem:[%s1256 + $0x68] sm:$0xf8]
      %v4495 = vld [vmem:[%s1256 + $0x70] sm:$0x7]
      %v4496 = vld [vmem:[%s1256 + $0x78] sm:$0x7]
      %v4497 = vld [vmem:[%s1256 + $0x80] sm:$0xf8]
      %v4498 = vld [vmem:[%s1256 + $0x88] sm:$0xf8]
      %v4499 = vld [vmem:[%s1256 + $0x90] sm:$0x7]
      %v4500 = vld [vmem:[%s1256 + $0x98] sm:$0x7]
      %v4501 = vld [vmem:[%s1256 + $0xa0] sm:$0xf8]
      %v4502 = vld [vmem:[%s1256 + $0xa8] sm:$0xf8]
      %v4503 = vld [vmem:[%s1256 + $0xb0] sm:$0x7]
      %v4504 = vld [vmem:[%s1256 + $0xb8] sm:$0x7]
      %v4505 = vld [vmem:[%s1256 + $0xc0] sm:$0xf8]
      %v4506 = vld [vmem:[%s1256 + $0xc8] sm:$0xf8]
      %v4507 = vld [vmem:[%s1256 + $0xd0] sm:$0x7]
      %v4508 = vld [vmem:[%s1256 + $0xd8] sm:$0x7]
      %v4509 = vld [vmem:[%s1256 + $0xe0] sm:$0xf8]
      %v4510 = vld [vmem:[%s1256 + $0xe8] sm:$0xf8]
      %v4511 = vld [vmem:[%s1256 + $0xf0] sm:$0x7]
      %v4512 = vld [vmem:[%s1256 + $0xf8] sm:$0x7]
      %s4513 = scalar_lea.vmem %s1, 33
      %v4514 = vld [vmem:[%s4513] ss:$8 sm:$0x3]
      %v4516 = vlaneseq
      %v4517 = vshrl.u32 %v4516, 7
      %v4518 = vsub.s32 0, %v4517
      %v4519 = vrot.slane %v4514, %v4518
      %v4520 = vlaneseq
      %v4521 = vshrl.u32 %v4520, 7
      %v4522 = vsub.s32 1, %v4521
      %v4523 = vrot.slane %v4514, %v4522
      %v4526 = vmul.f32 %v4481, %v4519
      %v4527 = vmul.f32 %v4482, %v4523
      %v4528 = vmul.f32 %v4483, %v4519
      %v4529 = vmul.f32 %v4484, %v4523
      %v4530 = vmul.f32 %v4485, %v4519
      %v4531 = vmul.f32 %v4486, %v4523
      %v4532 = vmul.f32 %v4487, %v4519
      %v4533 = vmul.f32 %v4488, %v4523
      %v4534 = vmul.f32 %v4489, %v4519
      %v4535 = vmul.f32 %v4490, %v4523
      %v4536 = vmul.f32 %v4491, %v4519
      %v4537 = vmul.f32 %v4492, %v4523
      %v4538 = vmul.f32 %v4493, %v4519
      %v4539 = vmul.f32 %v4494, %v4523
      %v4540 = vmul.f32 %v4495, %v4519
      %v4541 = vmul.f32 %v4496, %v4523
      %v4542 = vmul.f32 %v4497, %v4519
      %v4543 = vmul.f32 %v4498, %v4523
      %v4544 = vmul.f32 %v4499, %v4519
      %v4545 = vmul.f32 %v4500, %v4523
      %v4546 = vmul.f32 %v4501, %v4519
      %v4547 = vmul.f32 %v4502, %v4523
      %v4548 = vmul.f32 %v4503, %v4519
      %v4549 = vmul.f32 %v4504, %v4523
      %v4550 = vmul.f32 %v4505, %v4519
      %v4551 = vmul.f32 %v4506, %v4523
      %v4552 = vmul.f32 %v4507, %v4519
      %v4553 = vmul.f32 %v4508, %v4523
      %v4554 = vmul.f32 %v4509, %v4519
      %v4555 = vmul.f32 %v4510, %v4523
      %v4556 = vmul.f32 %v4511, %v4519
      %v4557 = vmul.f32 %v4512, %v4523
      %v4590 = vrot.slane %v4526, 2
      %v4591 = vrot.slane %v4528, 2
      %v4592 = vsel %vm2494, %v4590, %v4591
      %v4593 = vrot.slane %v4527, 2
      %v4594 = vrot.slane %v4529, 2
      %v4595 = vsel %vm2494, %v4593, %v4594
      %v4596 = vrot.slane %v4530, 2
      %v4597 = vrot.slane %v4532, 2
      %v4598 = vsel %vm2494, %v4596, %v4597
      %v4599 = vrot.slane %v4531, 2
      %v4600 = vrot.slane %v4533, 2
      %v4601 = vsel %vm2494, %v4599, %v4600
      %v4602 = vrot.slane %v4534, 2
      %v4603 = vrot.slane %v4536, 2
      %v4604 = vsel %vm2494, %v4602, %v4603
      %v4605 = vrot.slane %v4535, 2
      %v4606 = vrot.slane %v4537, 2
      %v4607 = vsel %vm2494, %v4605, %v4606
      %v4608 = vrot.slane %v4538, 2
      %v4609 = vrot.slane %v4540, 2
      %v4610 = vsel %vm2494, %v4608, %v4609
      %v4611 = vrot.slane %v4539, 2
      %v4612 = vrot.slane %v4541, 2
      %v4613 = vsel %vm2494, %v4611, %v4612
      %v4614 = vrot.slane %v4542, 2
      %v4615 = vrot.slane %v4544, 2
      %v4616 = vsel %vm2494, %v4614, %v4615
      %v4617 = vrot.slane %v4543, 2
      %v4618 = vrot.slane %v4545, 2
      %v4619 = vsel %vm2494, %v4617, %v4618
      %v4620 = vrot.slane %v4546, 2
      %v4621 = vrot.slane %v4548, 2
      %v4622 = vsel %vm2494, %v4620, %v4621
      %v4623 = vrot.slane %v4547, 2
      %v4624 = vrot.slane %v4549, 2
      %v4625 = vsel %vm2494, %v4623, %v4624
      %v4626 = vrot.slane %v4550, 2
      %v4627 = vrot.slane %v4552, 2
      %v4628 = vsel %vm2494, %v4626, %v4627
      %v4629 = vrot.slane %v4551, 2
      %v4630 = vrot.slane %v4553, 2
      %v4631 = vsel %vm2494, %v4629, %v4630
      %v4632 = vrot.slane %v4554, 2
      %v4633 = vrot.slane %v4556, 2
      %v4634 = vsel %vm2494, %v4632, %v4633
      %v4635 = vrot.slane %v4555, 2
      %v4636 = vrot.slane %v4557, 2
      %v4637 = vsel %vm2494, %v4635, %v4636
      %v4670 = vadd.f32 %v4449, %v4592
      %v4671 = vadd.f32 %v4450, %v4595
      %v4672 = vadd.f32 %v4451, %v4591
      %v4673 = vadd.f32 %v4452, %v4594
      %v4674 = vadd.f32 %v4453, %v4598
      %v4675 = vadd.f32 %v4454, %v4601
      %v4676 = vadd.f32 %v4455, %v4597
      %v4677 = vadd.f32 %v4456, %v4600
      %v4678 = vadd.f32 %v4457, %v4604
      %v4679 = vadd.f32 %v4458, %v4607
      %v4680 = vadd.f32 %v4459, %v4603
      %v4681 = vadd.f32 %v4460, %v4606
      %v4682 = vadd.f32 %v4461, %v4610
      %v4683 = vadd.f32 %v4462, %v4613
      %v4684 = vadd.f32 %v4463, %v4609
      %v4685 = vadd.f32 %v4464, %v4612
      %v4686 = vadd.f32 %v4465, %v4616
      %v4687 = vadd.f32 %v4466, %v4619
      %v4688 = vadd.f32 %v4467, %v4615
      %v4689 = vadd.f32 %v4468, %v4618
      %v4690 = vadd.f32 %v4469, %v4622
      %v4691 = vadd.f32 %v4470, %v4625
      %v4692 = vadd.f32 %v4471, %v4621
      %v4693 = vadd.f32 %v4472, %v4624
      %v4694 = vadd.f32 %v4473, %v4628
      %v4695 = vadd.f32 %v4474, %v4631
      %v4696 = vadd.f32 %v4475, %v4627
      %v4697 = vadd.f32 %v4476, %v4630
      %v4698 = vadd.f32 %v4477, %v4634
      %v4699 = vadd.f32 %v4478, %v4637
      %v4700 = vadd.f32 %v4479, %v4633
      %v4701 = vadd.f32 %v4480, %v4636
      %s4702 = scalar_lea.vmem [#allocation2], 480
      %v4703 = vld [vmem:[%s4702] sm:$0xfe]
      %v4704 = vld [vmem:[%s4702 + $0x8] sm:$0xfe]
      %v4705 = vld [vmem:[%s4702 + $0x10] sm:$0x1]
      %v4706 = vld [vmem:[%s4702 + $0x18] sm:$0x1]
      %v4707 = vld [vmem:[%s4702 + $0x20] sm:$0xfe]
      %v4708 = vld [vmem:[%s4702 + $0x28] sm:$0xfe]
      %v4709 = vld [vmem:[%s4702 + $0x30] sm:$0x1]
      %v4710 = vld [vmem:[%s4702 + $0x38] sm:$0x1]
      %v4711 = vld [vmem:[%s4702 + $0x40] sm:$0xfe]
      %v4712 = vld [vmem:[%s4702 + $0x48] sm:$0xfe]
      %v4713 = vld [vmem:[%s4702 + $0x50] sm:$0x1]
      %v4714 = vld [vmem:[%s4702 + $0x58] sm:$0x1]
      %v4715 = vld [vmem:[%s4702 + $0x60] sm:$0xfe]
      %v4716 = vld [vmem:[%s4702 + $0x68] sm:$0xfe]
      %v4717 = vld [vmem:[%s4702 + $0x70] sm:$0x1]
      %v4718 = vld [vmem:[%s4702 + $0x78] sm:$0x1]
      %v4719 = vld [vmem:[%s4702 + $0x80] sm:$0xfe]
      %v4720 = vld [vmem:[%s4702 + $0x88] sm:$0xfe]
      %v4721 = vld [vmem:[%s4702 + $0x90] sm:$0x1]
      %v4722 = vld [vmem:[%s4702 + $0x98] sm:$0x1]
      %v4723 = vld [vmem:[%s4702 + $0xa0] sm:$0xfe]
      %v4724 = vld [vmem:[%s4702 + $0xa8] sm:$0xfe]
      %v4725 = vld [vmem:[%s4702 + $0xb0] sm:$0x1]
      %v4726 = vld [vmem:[%s4702 + $0xb8] sm:$0x1]
      %v4727 = vld [vmem:[%s4702 + $0xc0] sm:$0xfe]
      %v4728 = vld [vmem:[%s4702 + $0xc8] sm:$0xfe]
      %v4729 = vld [vmem:[%s4702 + $0xd0] sm:$0x1]
      %v4730 = vld [vmem:[%s4702 + $0xd8] sm:$0x1]
      %v4731 = vld [vmem:[%s4702 + $0xe0] sm:$0xfe]
      %v4732 = vld [vmem:[%s4702 + $0xe8] sm:$0xfe]
      %v4733 = vld [vmem:[%s4702 + $0xf0] sm:$0x1]
      %v4734 = vld [vmem:[%s4702 + $0xf8] sm:$0x1]
      %s4735 = scalar_lea.vmem %s1, 34
      %v4736 = vld [vmem:[%s4735] ss:$8 sm:$0x3]
      %v4738 = vlaneseq
      %v4739 = vshrl.u32 %v4738, 7
      %v4740 = vsub.s32 0, %v4739
      %v4741 = vrot.slane %v4736, %v4740
      %v4742 = vlaneseq
      %v4743 = vshrl.u32 %v4742, 7
      %v4744 = vsub.s32 1, %v4743
      %v4745 = vrot.slane %v4736, %v4744
      %v4748 = vmul.f32 %v4703, %v4741
      %v4749 = vmul.f32 %v4704, %v4745
      %v4750 = vmul.f32 %v4705, %v4741
      %v4751 = vmul.f32 %v4706, %v4745
      %v4752 = vmul.f32 %v4707, %v4741
      %v4753 = vmul.f32 %v4708, %v4745
      %v4754 = vmul.f32 %v4709, %v4741
      %v4755 = vmul.f32 %v4710, %v4745
      %v4756 = vmul.f32 %v4711, %v4741
      %v4757 = vmul.f32 %v4712, %v4745
      %v4758 = vmul.f32 %v4713, %v4741
      %v4759 = vmul.f32 %v4714, %v4745
      %v4760 = vmul.f32 %v4715, %v4741
      %v4761 = vmul.f32 %v4716, %v4745
      %v4762 = vmul.f32 %v4717, %v4741
      %v4763 = vmul.f32 %v4718, %v4745
      %v4764 = vmul.f32 %v4719, %v4741
      %v4765 = vmul.f32 %v4720, %v4745
      %v4766 = vmul.f32 %v4721, %v4741
      %v4767 = vmul.f32 %v4722, %v4745
      %v4768 = vmul.f32 %v4723, %v4741
      %v4769 = vmul.f32 %v4724, %v4745
      %v4770 = vmul.f32 %v4725, %v4741
      %v4771 = vmul.f32 %v4726, %v4745
      %v4772 = vmul.f32 %v4727, %v4741
      %v4773 = vmul.f32 %v4728, %v4745
      %v4774 = vmul.f32 %v4729, %v4741
      %v4775 = vmul.f32 %v4730, %v4745
      %v4776 = vmul.f32 %v4731, %v4741
      %v4777 = vmul.f32 %v4732, %v4745
      %v4778 = vmul.f32 %v4733, %v4741
      %v4779 = vmul.f32 %v4734, %v4745
      %v4780 = vadd.f32 %v4670, %v4748
      %v4781 = vadd.f32 %v4671, %v4749
      %v4782 = vadd.f32 %v4672, %v4750
      %v4783 = vadd.f32 %v4673, %v4751
      %v4784 = vadd.f32 %v4674, %v4752
      %v4785 = vadd.f32 %v4675, %v4753
      %v4786 = vadd.f32 %v4676, %v4754
      %v4787 = vadd.f32 %v4677, %v4755
      %v4788 = vadd.f32 %v4678, %v4756
      %v4789 = vadd.f32 %v4679, %v4757
      %v4790 = vadd.f32 %v4680, %v4758
      %v4791 = vadd.f32 %v4681, %v4759
      %v4792 = vadd.f32 %v4682, %v4760
      %v4793 = vadd.f32 %v4683, %v4761
      %v4794 = vadd.f32 %v4684, %v4762
      %v4795 = vadd.f32 %v4685, %v4763
      %v4796 = vadd.f32 %v4686, %v4764
      %v4797 = vadd.f32 %v4687, %v4765
      %v4798 = vadd.f32 %v4688, %v4766
      %v4799 = vadd.f32 %v4689, %v4767
      %v4800 = vadd.f32 %v4690, %v4768
      %v4801 = vadd.f32 %v4691, %v4769
      %v4802 = vadd.f32 %v4692, %v4770
      %v4803 = vadd.f32 %v4693, %v4771
      %v4804 = vadd.f32 %v4694, %v4772
      %v4805 = vadd.f32 %v4695, %v4773
      %v4806 = vadd.f32 %v4696, %v4774
      %v4807 = vadd.f32 %v4697, %v4775
      %v4808 = vadd.f32 %v4698, %v4776
      %v4809 = vadd.f32 %v4699, %v4777
      %v4810 = vadd.f32 %v4700, %v4778
      %v4811 = vadd.f32 %v4701, %v4779
      %s4812 = scalar_lea.vmem [#allocation2], 864
      %v4813 = vld [vmem:[%s4812] sm:$0xfe]
      %v4814 = vld [vmem:[%s4812 + $0x8] sm:$0xfe]
      %v4815 = vld [vmem:[%s4812 + $0x10] sm:$0x1]
      %v4816 = vld [vmem:[%s4812 + $0x18] sm:$0x1]
      %v4817 = vld [vmem:[%s4812 + $0x20] sm:$0xfe]
      %v4818 = vld [vmem:[%s4812 + $0x28] sm:$0xfe]
      %v4819 = vld [vmem:[%s4812 + $0x30] sm:$0x1]
      %v4820 = vld [vmem:[%s4812 + $0x38] sm:$0x1]
      %v4821 = vld [vmem:[%s4812 + $0x40] sm:$0xfe]
      %v4822 = vld [vmem:[%s4812 + $0x48] sm:$0xfe]
      %v4823 = vld [vmem:[%s4812 + $0x50] sm:$0x1]
      %v4824 = vld [vmem:[%s4812 + $0x58] sm:$0x1]
      %v4825 = vld [vmem:[%s4812 + $0x60] sm:$0xfe]
      %v4826 = vld [vmem:[%s4812 + $0x68] sm:$0xfe]
      %v4827 = vld [vmem:[%s4812 + $0x70] sm:$0x1]
      %v4828 = vld [vmem:[%s4812 + $0x78] sm:$0x1]
      %v4829 = vld [vmem:[%s4812 + $0x80] sm:$0xfe]
      %v4830 = vld [vmem:[%s4812 + $0x88] sm:$0xfe]
      %v4831 = vld [vmem:[%s4812 + $0x90] sm:$0x1]
      %v4832 = vld [vmem:[%s4812 + $0x98] sm:$0x1]
      %v4833 = vld [vmem:[%s4812 + $0xa0] sm:$0xfe]
      %v4834 = vld [vmem:[%s4812 + $0xa8] sm:$0xfe]
      %v4835 = vld [vmem:[%s4812 + $0xb0] sm:$0x1]
      %v4836 = vld [vmem:[%s4812 + $0xb8] sm:$0x1]
      %v4837 = vld [vmem:[%s4812 + $0xc0] sm:$0xfe]
      %v4838 = vld [vmem:[%s4812 + $0xc8] sm:$0xfe]
      %v4839 = vld [vmem:[%s4812 + $0xd0] sm:$0x1]
      %v4840 = vld [vmem:[%s4812 + $0xd8] sm:$0x1]
      %v4841 = vld [vmem:[%s4812 + $0xe0] sm:$0xfe]
      %v4842 = vld [vmem:[%s4812 + $0xe8] sm:$0xfe]
      %v4843 = vld [vmem:[%s4812 + $0xf0] sm:$0x1]
      %v4844 = vld [vmem:[%s4812 + $0xf8] sm:$0x1]
      %s4845 = scalar_lea.vmem %s1, 35
      %v4846 = vld [vmem:[%s4845] ss:$8 sm:$0x3]
      %v4848 = vlaneseq
      %v4849 = vshrl.u32 %v4848, 7
      %v4850 = vsub.s32 0, %v4849
      %v4851 = vrot.slane %v4846, %v4850
      %v4852 = vlaneseq
      %v4853 = vshrl.u32 %v4852, 7
      %v4854 = vsub.s32 1, %v4853
      %v4855 = vrot.slane %v4846, %v4854
      %v4858 = vmul.f32 %v4813, %v4851
      %v4859 = vmul.f32 %v4814, %v4855
      %v4860 = vmul.f32 %v4815, %v4851
      %v4861 = vmul.f32 %v4816, %v4855
      %v4862 = vmul.f32 %v4817, %v4851
      %v4863 = vmul.f32 %v4818, %v4855
      %v4864 = vmul.f32 %v4819, %v4851
      %v4865 = vmul.f32 %v4820, %v4855
      %v4866 = vmul.f32 %v4821, %v4851
      %v4867 = vmul.f32 %v4822, %v4855
      %v4868 = vmul.f32 %v4823, %v4851
      %v4869 = vmul.f32 %v4824, %v4855
      %v4870 = vmul.f32 %v4825, %v4851
      %v4871 = vmul.f32 %v4826, %v4855
      %v4872 = vmul.f32 %v4827, %v4851
      %v4873 = vmul.f32 %v4828, %v4855
      %v4874 = vmul.f32 %v4829, %v4851
      %v4875 = vmul.f32 %v4830, %v4855
      %v4876 = vmul.f32 %v4831, %v4851
      %v4877 = vmul.f32 %v4832, %v4855
      %v4878 = vmul.f32 %v4833, %v4851
      %v4879 = vmul.f32 %v4834, %v4855
      %v4880 = vmul.f32 %v4835, %v4851
      %v4881 = vmul.f32 %v4836, %v4855
      %v4882 = vmul.f32 %v4837, %v4851
      %v4883 = vmul.f32 %v4838, %v4855
      %v4884 = vmul.f32 %v4839, %v4851
      %v4885 = vmul.f32 %v4840, %v4855
      %v4886 = vmul.f32 %v4841, %v4851
      %v4887 = vmul.f32 %v4842, %v4855
      %v4888 = vmul.f32 %v4843, %v4851
      %v4889 = vmul.f32 %v4844, %v4855
      %v4890 = vadd.f32 %v4780, %v4858
      %v4891 = vadd.f32 %v4781, %v4859
      %v4892 = vadd.f32 %v4782, %v4860
      %v4893 = vadd.f32 %v4783, %v4861
      %v4894 = vadd.f32 %v4784, %v4862
      %v4895 = vadd.f32 %v4785, %v4863
      %v4896 = vadd.f32 %v4786, %v4864
      %v4897 = vadd.f32 %v4787, %v4865
      %v4898 = vadd.f32 %v4788, %v4866
      %v4899 = vadd.f32 %v4789, %v4867
      %v4900 = vadd.f32 %v4790, %v4868
      %v4901 = vadd.f32 %v4791, %v4869
      %v4902 = vadd.f32 %v4792, %v4870
      %v4903 = vadd.f32 %v4793, %v4871
      %v4904 = vadd.f32 %v4794, %v4872
      %v4905 = vadd.f32 %v4795, %v4873
      %v4906 = vadd.f32 %v4796, %v4874
      %v4907 = vadd.f32 %v4797, %v4875
      %v4908 = vadd.f32 %v4798, %v4876
      %v4909 = vadd.f32 %v4799, %v4877
      %v4910 = vadd.f32 %v4800, %v4878
      %v4911 = vadd.f32 %v4801, %v4879
      %v4912 = vadd.f32 %v4802, %v4880
      %v4913 = vadd.f32 %v4803, %v4881
      %v4914 = vadd.f32 %v4804, %v4882
      %v4915 = vadd.f32 %v4805, %v4883
      %v4916 = vadd.f32 %v4806, %v4884
      %v4917 = vadd.f32 %v4807, %v4885
      %v4918 = vadd.f32 %v4808, %v4886
      %v4919 = vadd.f32 %v4809, %v4887
      %v4920 = vadd.f32 %v4810, %v4888
      %v4921 = vadd.f32 %v4811, %v4889
      %s4922 = scalar_lea.vmem [#allocation2], 1248
      %v4923 = vld [vmem:[%s4922] sm:$0xfe]
      %v4924 = vld [vmem:[%s4922 + $0x8] sm:$0xfe]
      %v4925 = vld [vmem:[%s4922 + $0x10] sm:$0x1]
      %v4926 = vld [vmem:[%s4922 + $0x18] sm:$0x1]
      %v4927 = vld [vmem:[%s4922 + $0x20] sm:$0xfe]
      %v4928 = vld [vmem:[%s4922 + $0x28] sm:$0xfe]
      %v4929 = vld [vmem:[%s4922 + $0x30] sm:$0x1]
      %v4930 = vld [vmem:[%s4922 + $0x38] sm:$0x1]
      %v4931 = vld [vmem:[%s4922 + $0x40] sm:$0xfe]
      %v4932 = vld [vmem:[%s4922 + $0x48] sm:$0xfe]
      %v4933 = vld [vmem:[%s4922 + $0x50] sm:$0x1]
      %v4934 = vld [vmem:[%s4922 + $0x58] sm:$0x1]
      %v4935 = vld [vmem:[%s4922 + $0x60] sm:$0xfe]
      %v4936 = vld [vmem:[%s4922 + $0x68] sm:$0xfe]
      %v4937 = vld [vmem:[%s4922 + $0x70] sm:$0x1]
      %v4938 = vld [vmem:[%s4922 + $0x78] sm:$0x1]
      %v4939 = vld [vmem:[%s4922 + $0x80] sm:$0xfe]
      %v4940 = vld [vmem:[%s4922 + $0x88] sm:$0xfe]
      %v4941 = vld [vmem:[%s4922 + $0x90] sm:$0x1]
      %v4942 = vld [vmem:[%s4922 + $0x98] sm:$0x1]
      %v4943 = vld [vmem:[%s4922 + $0xa0] sm:$0xfe]
      %v4944 = vld [vmem:[%s4922 + $0xa8] sm:$0xfe]
      %v4945 = vld [vmem:[%s4922 + $0xb0] sm:$0x1]
      %v4946 = vld [vmem:[%s4922 + $0xb8] sm:$0x1]
      %v4947 = vld [vmem:[%s4922 + $0xc0] sm:$0xfe]
      %v4948 = vld [vmem:[%s4922 + $0xc8] sm:$0xfe]
      %v4949 = vld [vmem:[%s4922 + $0xd0] sm:$0x1]
      %v4950 = vld [vmem:[%s4922 + $0xd8] sm:$0x1]
      %v4951 = vld [vmem:[%s4922 + $0xe0] sm:$0xfe]
      %v4952 = vld [vmem:[%s4922 + $0xe8] sm:$0xfe]
      %v4953 = vld [vmem:[%s4922 + $0xf0] sm:$0x1]
      %v4954 = vld [vmem:[%s4922 + $0xf8] sm:$0x1]
      %s4955 = scalar_lea.vmem %s1, 36
      %v4956 = vld [vmem:[%s4955] ss:$8 sm:$0x3]
      %v4958 = vlaneseq
      %v4959 = vshrl.u32 %v4958, 7
      %v4960 = vsub.s32 0, %v4959
      %v4961 = vrot.slane %v4956, %v4960
      %v4962 = vlaneseq
      %v4963 = vshrl.u32 %v4962, 7
      %v4964 = vsub.s32 1, %v4963
      %v4965 = vrot.slane %v4956, %v4964
      %v4968 = vmul.f32 %v4923, %v4961
      %v4969 = vmul.f32 %v4924, %v4965
      %v4970 = vmul.f32 %v4925, %v4961
      %v4971 = vmul.f32 %v4926, %v4965
      %v4972 = vmul.f32 %v4927, %v4961
      %v4973 = vmul.f32 %v4928, %v4965
      %v4974 = vmul.f32 %v4929, %v4961
      %v4975 = vmul.f32 %v4930, %v4965
      %v4976 = vmul.f32 %v4931, %v4961
      %v4977 = vmul.f32 %v4932, %v4965
      %v4978 = vmul.f32 %v4933, %v4961
      %v4979 = vmul.f32 %v4934, %v4965
      %v4980 = vmul.f32 %v4935, %v4961
      %v4981 = vmul.f32 %v4936, %v4965
      %v4982 = vmul.f32 %v4937, %v4961
      %v4983 = vmul.f32 %v4938, %v4965
      %v4984 = vmul.f32 %v4939, %v4961
      %v4985 = vmul.f32 %v4940, %v4965
      %v4986 = vmul.f32 %v4941, %v4961
      %v4987 = vmul.f32 %v4942, %v4965
      %v4988 = vmul.f32 %v4943, %v4961
      %v4989 = vmul.f32 %v4944, %v4965
      %v4990 = vmul.f32 %v4945, %v4961
      %v4991 = vmul.f32 %v4946, %v4965
      %v4992 = vmul.f32 %v4947, %v4961
      %v4993 = vmul.f32 %v4948, %v4965
      %v4994 = vmul.f32 %v4949, %v4961
      %v4995 = vmul.f32 %v4950, %v4965
      %v4996 = vmul.f32 %v4951, %v4961
      %v4997 = vmul.f32 %v4952, %v4965
      %v4998 = vmul.f32 %v4953, %v4961
      %v4999 = vmul.f32 %v4954, %v4965
      %v5000 = vadd.f32 %v4890, %v4968
      %v5001 = vadd.f32 %v4891, %v4969
      %v5002 = vadd.f32 %v4892, %v4970
      %v5003 = vadd.f32 %v4893, %v4971
      %v5004 = vadd.f32 %v4894, %v4972
      %v5005 = vadd.f32 %v4895, %v4973
      %v5006 = vadd.f32 %v4896, %v4974
      %v5007 = vadd.f32 %v4897, %v4975
      %v5008 = vadd.f32 %v4898, %v4976
      %v5009 = vadd.f32 %v4899, %v4977
      %v5010 = vadd.f32 %v4900, %v4978
      %v5011 = vadd.f32 %v4901, %v4979
      %v5012 = vadd.f32 %v4902, %v4980
      %v5013 = vadd.f32 %v4903, %v4981
      %v5014 = vadd.f32 %v4904, %v4982
      %v5015 = vadd.f32 %v4905, %v4983
      %v5016 = vadd.f32 %v4906, %v4984
      %v5017 = vadd.f32 %v4907, %v4985
      %v5018 = vadd.f32 %v4908, %v4986
      %v5019 = vadd.f32 %v4909, %v4987
      %v5020 = vadd.f32 %v4910, %v4988
      %v5021 = vadd.f32 %v4911, %v4989
      %v5022 = vadd.f32 %v4912, %v4990
      %v5023 = vadd.f32 %v4913, %v4991
      %v5024 = vadd.f32 %v4914, %v4992
      %v5025 = vadd.f32 %v4915, %v4993
      %v5026 = vadd.f32 %v4916, %v4994
      %v5027 = vadd.f32 %v4917, %v4995
      %v5028 = vadd.f32 %v4918, %v4996
      %v5029 = vadd.f32 %v4919, %v4997
      %v5030 = vadd.f32 %v4920, %v4998
      %v5031 = vadd.f32 %v4921, %v4999
      %v5032 = vld [vmem:[%s4702] sm:$0xfc]
      %v5033 = vld [vmem:[%s4702 + $0x8] sm:$0xfc]
      %v5034 = vld [vmem:[%s4702 + $0x10] sm:$0x3]
      %v5035 = vld [vmem:[%s4702 + $0x18] sm:$0x3]
      %v5036 = vld [vmem:[%s4702 + $0x20] sm:$0xfc]
      %v5037 = vld [vmem:[%s4702 + $0x28] sm:$0xfc]
      %v5038 = vld [vmem:[%s4702 + $0x30] sm:$0x3]
      %v5039 = vld [vmem:[%s4702 + $0x38] sm:$0x3]
      %v5040 = vld [vmem:[%s4702 + $0x40] sm:$0xfc]
      %v5041 = vld [vmem:[%s4702 + $0x48] sm:$0xfc]
      %v5042 = vld [vmem:[%s4702 + $0x50] sm:$0x3]
      %v5043 = vld [vmem:[%s4702 + $0x58] sm:$0x3]
      %v5044 = vld [vmem:[%s4702 + $0x60] sm:$0xfc]
      %v5045 = vld [vmem:[%s4702 + $0x68] sm:$0xfc]
      %v5046 = vld [vmem:[%s4702 + $0x70] sm:$0x3]
      %v5047 = vld [vmem:[%s4702 + $0x78] sm:$0x3]
      %v5048 = vld [vmem:[%s4702 + $0x80] sm:$0xfc]
      %v5049 = vld [vmem:[%s4702 + $0x88] sm:$0xfc]
      %v5050 = vld [vmem:[%s4702 + $0x90] sm:$0x3]
      %v5051 = vld [vmem:[%s4702 + $0x98] sm:$0x3]
      %v5052 = vld [vmem:[%s4702 + $0xa0] sm:$0xfc]
      %v5053 = vld [vmem:[%s4702 + $0xa8] sm:$0xfc]
      %v5054 = vld [vmem:[%s4702 + $0xb0] sm:$0x3]
      %v5055 = vld [vmem:[%s4702 + $0xb8] sm:$0x3]
      %v5056 = vld [vmem:[%s4702 + $0xc0] sm:$0xfc]
      %v5057 = vld [vmem:[%s4702 + $0xc8] sm:$0xfc]
      %v5058 = vld [vmem:[%s4702 + $0xd0] sm:$0x3]
      %v5059 = vld [vmem:[%s4702 + $0xd8] sm:$0x3]
      %v5060 = vld [vmem:[%s4702 + $0xe0] sm:$0xfc]
      %v5061 = vld [vmem:[%s4702 + $0xe8] sm:$0xfc]
      %v5062 = vld [vmem:[%s4702 + $0xf0] sm:$0x3]
      %v5063 = vld [vmem:[%s4702 + $0xf8] sm:$0x3]
      %s5064 = scalar_lea.vmem %s1, 37
      %v5065 = vld [vmem:[%s5064] ss:$8 sm:$0x3]
      %v5067 = vlaneseq
      %v5068 = vshrl.u32 %v5067, 7
      %v5069 = vsub.s32 0, %v5068
      %v5070 = vrot.slane %v5065, %v5069
      %v5071 = vlaneseq
      %v5072 = vshrl.u32 %v5071, 7
      %v5073 = vsub.s32 1, %v5072
      %v5074 = vrot.slane %v5065, %v5073
      %v5077 = vmul.f32 %v5032, %v5070
      %v5078 = vmul.f32 %v5033, %v5074
      %v5079 = vmul.f32 %v5034, %v5070
      %v5080 = vmul.f32 %v5035, %v5074
      %v5081 = vmul.f32 %v5036, %v5070
      %v5082 = vmul.f32 %v5037, %v5074
      %v5083 = vmul.f32 %v5038, %v5070
      %v5084 = vmul.f32 %v5039, %v5074
      %v5085 = vmul.f32 %v5040, %v5070
      %v5086 = vmul.f32 %v5041, %v5074
      %v5087 = vmul.f32 %v5042, %v5070
      %v5088 = vmul.f32 %v5043, %v5074
      %v5089 = vmul.f32 %v5044, %v5070
      %v5090 = vmul.f32 %v5045, %v5074
      %v5091 = vmul.f32 %v5046, %v5070
      %v5092 = vmul.f32 %v5047, %v5074
      %v5093 = vmul.f32 %v5048, %v5070
      %v5094 = vmul.f32 %v5049, %v5074
      %v5095 = vmul.f32 %v5050, %v5070
      %v5096 = vmul.f32 %v5051, %v5074
      %v5097 = vmul.f32 %v5052, %v5070
      %v5098 = vmul.f32 %v5053, %v5074
      %v5099 = vmul.f32 %v5054, %v5070
      %v5100 = vmul.f32 %v5055, %v5074
      %v5101 = vmul.f32 %v5056, %v5070
      %v5102 = vmul.f32 %v5057, %v5074
      %v5103 = vmul.f32 %v5058, %v5070
      %v5104 = vmul.f32 %v5059, %v5074
      %v5105 = vmul.f32 %v5060, %v5070
      %v5106 = vmul.f32 %v5061, %v5074
      %v5107 = vmul.f32 %v5062, %v5070
      %v5108 = vmul.f32 %v5063, %v5074
      %v5141 = vrot.slane %v5077, 1
      %v5142 = vrot.slane %v5079, 1
      %v5143 = vsel %vm1830, %v5141, %v5142
      %v5144 = vrot.slane %v5078, 1
      %v5145 = vrot.slane %v5080, 1
      %v5146 = vsel %vm1830, %v5144, %v5145
      %v5147 = vrot.slane %v5081, 1
      %v5148 = vrot.slane %v5083, 1
      %v5149 = vsel %vm1830, %v5147, %v5148
      %v5150 = vrot.slane %v5082, 1
      %v5151 = vrot.slane %v5084, 1
      %v5152 = vsel %vm1830, %v5150, %v5151
      %v5153 = vrot.slane %v5085, 1
      %v5154 = vrot.slane %v5087, 1
      %v5155 = vsel %vm1830, %v5153, %v5154
      %v5156 = vrot.slane %v5086, 1
      %v5157 = vrot.slane %v5088, 1
      %v5158 = vsel %vm1830, %v5156, %v5157
      %v5159 = vrot.slane %v5089, 1
      %v5160 = vrot.slane %v5091, 1
      %v5161 = vsel %vm1830, %v5159, %v5160
      %v5162 = vrot.slane %v5090, 1
      %v5163 = vrot.slane %v5092, 1
      %v5164 = vsel %vm1830, %v5162, %v5163
      %v5165 = vrot.slane %v5093, 1
      %v5166 = vrot.slane %v5095, 1
      %v5167 = vsel %vm1830, %v5165, %v5166
      %v5168 = vrot.slane %v5094, 1
      %v5169 = vrot.slane %v5096, 1
      %v5170 = vsel %vm1830, %v5168, %v5169
      %v5171 = vrot.slane %v5097, 1
      %v5172 = vrot.slane %v5099, 1
      %v5173 = vsel %vm1830, %v5171, %v5172
      %v5174 = vrot.slane %v5098, 1
      %v5175 = vrot.slane %v5100, 1
      %v5176 = vsel %vm1830, %v5174, %v5175
      %v5177 = vrot.slane %v5101, 1
      %v5178 = vrot.slane %v5103, 1
      %v5179 = vsel %vm1830, %v5177, %v5178
      %v5180 = vrot.slane %v5102, 1
      %v5181 = vrot.slane %v5104, 1
      %v5182 = vsel %vm1830, %v5180, %v5181
      %v5183 = vrot.slane %v5105, 1
      %v5184 = vrot.slane %v5107, 1
      %v5185 = vsel %vm1830, %v5183, %v5184
      %v5186 = vrot.slane %v5106, 1
      %v5187 = vrot.slane %v5108, 1
      %v5188 = vsel %vm1830, %v5186, %v5187
      %v5221 = vadd.f32 %v5000, %v5143
      %v5222 = vadd.f32 %v5001, %v5146
      %v5223 = vadd.f32 %v5002, %v5142
      %v5224 = vadd.f32 %v5003, %v5145
      %v5225 = vadd.f32 %v5004, %v5149
      %v5226 = vadd.f32 %v5005, %v5152
      %v5227 = vadd.f32 %v5006, %v5148
      %v5228 = vadd.f32 %v5007, %v5151
      %v5229 = vadd.f32 %v5008, %v5155
      %v5230 = vadd.f32 %v5009, %v5158
      %v5231 = vadd.f32 %v5010, %v5154
      %v5232 = vadd.f32 %v5011, %v5157
      %v5233 = vadd.f32 %v5012, %v5161
      %v5234 = vadd.f32 %v5013, %v5164
      %v5235 = vadd.f32 %v5014, %v5160
      %v5236 = vadd.f32 %v5015, %v5163
      %v5237 = vadd.f32 %v5016, %v5167
      %v5238 = vadd.f32 %v5017, %v5170
      %v5239 = vadd.f32 %v5018, %v5166
      %v5240 = vadd.f32 %v5019, %v5169
      %v5241 = vadd.f32 %v5020, %v5173
      %v5242 = vadd.f32 %v5021, %v5176
      %v5243 = vadd.f32 %v5022, %v5172
      %v5244 = vadd.f32 %v5023, %v5175
      %v5245 = vadd.f32 %v5024, %v5179
      %v5246 = vadd.f32 %v5025, %v5182
      %v5247 = vadd.f32 %v5026, %v5178
      %v5248 = vadd.f32 %v5027, %v5181
      %v5249 = vadd.f32 %v5028, %v5185
      %v5250 = vadd.f32 %v5029, %v5188
      %v5251 = vadd.f32 %v5030, %v5184
      %v5252 = vadd.f32 %v5031, %v5187
      %v5253 = vld [vmem:[%s4812] sm:$0xfc]
      %v5254 = vld [vmem:[%s4812 + $0x8] sm:$0xfc]
      %v5255 = vld [vmem:[%s4812 + $0x10] sm:$0x3]
      %v5256 = vld [vmem:[%s4812 + $0x18] sm:$0x3]
      %v5257 = vld [vmem:[%s4812 + $0x20] sm:$0xfc]
      %v5258 = vld [vmem:[%s4812 + $0x28] sm:$0xfc]
      %v5259 = vld [vmem:[%s4812 + $0x30] sm:$0x3]
      %v5260 = vld [vmem:[%s4812 + $0x38] sm:$0x3]
      %v5261 = vld [vmem:[%s4812 + $0x40] sm:$0xfc]
      %v5262 = vld [vmem:[%s4812 + $0x48] sm:$0xfc]
      %v5263 = vld [vmem:[%s4812 + $0x50] sm:$0x3]
      %v5264 = vld [vmem:[%s4812 + $0x58] sm:$0x3]
      %v5265 = vld [vmem:[%s4812 + $0x60] sm:$0xfc]
      %v5266 = vld [vmem:[%s4812 + $0x68] sm:$0xfc]
      %v5267 = vld [vmem:[%s4812 + $0x70] sm:$0x3]
      %v5268 = vld [vmem:[%s4812 + $0x78] sm:$0x3]
      %v5269 = vld [vmem:[%s4812 + $0x80] sm:$0xfc]
      %v5270 = vld [vmem:[%s4812 + $0x88] sm:$0xfc]
      %v5271 = vld [vmem:[%s4812 + $0x90] sm:$0x3]
      %v5272 = vld [vmem:[%s4812 + $0x98] sm:$0x3]
      %v5273 = vld [vmem:[%s4812 + $0xa0] sm:$0xfc]
      %v5274 = vld [vmem:[%s4812 + $0xa8] sm:$0xfc]
      %v5275 = vld [vmem:[%s4812 + $0xb0] sm:$0x3]
      %v5276 = vld [vmem:[%s4812 + $0xb8] sm:$0x3]
      %v5277 = vld [vmem:[%s4812 + $0xc0] sm:$0xfc]
      %v5278 = vld [vmem:[%s4812 + $0xc8] sm:$0xfc]
      %v5279 = vld [vmem:[%s4812 + $0xd0] sm:$0x3]
      %v5280 = vld [vmem:[%s4812 + $0xd8] sm:$0x3]
      %v5281 = vld [vmem:[%s4812 + $0xe0] sm:$0xfc]
      %v5282 = vld [vmem:[%s4812 + $0xe8] sm:$0xfc]
      %v5283 = vld [vmem:[%s4812 + $0xf0] sm:$0x3]
      %v5284 = vld [vmem:[%s4812 + $0xf8] sm:$0x3]
      %s5285 = scalar_lea.vmem %s1, 38
      %v5286 = vld [vmem:[%s5285] ss:$8 sm:$0x3]
      %v5288 = vlaneseq
      %v5289 = vshrl.u32 %v5288, 7
      %v5290 = vsub.s32 0, %v5289
      %v5291 = vrot.slane %v5286, %v5290
      %v5292 = vlaneseq
      %v5293 = vshrl.u32 %v5292, 7
      %v5294 = vsub.s32 1, %v5293
      %v5295 = vrot.slane %v5286, %v5294
      %v5298 = vmul.f32 %v5253, %v5291
      %v5299 = vmul.f32 %v5254, %v5295
      %v5300 = vmul.f32 %v5255, %v5291
      %v5301 = vmul.f32 %v5256, %v5295
      %v5302 = vmul.f32 %v5257, %v5291
      %v5303 = vmul.f32 %v5258, %v5295
      %v5304 = vmul.f32 %v5259, %v5291
      %v5305 = vmul.f32 %v5260, %v5295
      %v5306 = vmul.f32 %v5261, %v5291
      %v5307 = vmul.f32 %v5262, %v5295
      %v5308 = vmul.f32 %v5263, %v5291
      %v5309 = vmul.f32 %v5264, %v5295
      %v5310 = vmul.f32 %v5265, %v5291
      %v5311 = vmul.f32 %v5266, %v5295
      %v5312 = vmul.f32 %v5267, %v5291
      %v5313 = vmul.f32 %v5268, %v5295
      %v5314 = vmul.f32 %v5269, %v5291
      %v5315 = vmul.f32 %v5270, %v5295
      %v5316 = vmul.f32 %v5271, %v5291
      %v5317 = vmul.f32 %v5272, %v5295
      %v5318 = vmul.f32 %v5273, %v5291
      %v5319 = vmul.f32 %v5274, %v5295
      %v5320 = vmul.f32 %v5275, %v5291
      %v5321 = vmul.f32 %v5276, %v5295
      %v5322 = vmul.f32 %v5277, %v5291
      %v5323 = vmul.f32 %v5278, %v5295
      %v5324 = vmul.f32 %v5279, %v5291
      %v5325 = vmul.f32 %v5280, %v5295
      %v5326 = vmul.f32 %v5281, %v5291
      %v5327 = vmul.f32 %v5282, %v5295
      %v5328 = vmul.f32 %v5283, %v5291
      %v5329 = vmul.f32 %v5284, %v5295
      %v5362 = vrot.slane %v5298, 1
      %v5363 = vrot.slane %v5300, 1
      %v5364 = vsel %vm1830, %v5362, %v5363
      %v5365 = vrot.slane %v5299, 1
      %v5366 = vrot.slane %v5301, 1
      %v5367 = vsel %vm1830, %v5365, %v5366
      %v5368 = vrot.slane %v5302, 1
      %v5369 = vrot.slane %v5304, 1
      %v5370 = vsel %vm1830, %v5368, %v5369
      %v5371 = vrot.slane %v5303, 1
      %v5372 = vrot.slane %v5305, 1
      %v5373 = vsel %vm1830, %v5371, %v5372
      %v5374 = vrot.slane %v5306, 1
      %v5375 = vrot.slane %v5308, 1
      %v5376 = vsel %vm1830, %v5374, %v5375
      %v5377 = vrot.slane %v5307, 1
      %v5378 = vrot.slane %v5309, 1
      %v5379 = vsel %vm1830, %v5377, %v5378
      %v5380 = vrot.slane %v5310, 1
      %v5381 = vrot.slane %v5312, 1
      %v5382 = vsel %vm1830, %v5380, %v5381
      %v5383 = vrot.slane %v5311, 1
      %v5384 = vrot.slane %v5313, 1
      %v5385 = vsel %vm1830, %v5383, %v5384
      %v5386 = vrot.slane %v5314, 1
      %v5387 = vrot.slane %v5316, 1
      %v5388 = vsel %vm1830, %v5386, %v5387
      %v5389 = vrot.slane %v5315, 1
      %v5390 = vrot.slane %v5317, 1
      %v5391 = vsel %vm1830, %v5389, %v5390
      %v5392 = vrot.slane %v5318, 1
      %v5393 = vrot.slane %v5320, 1
      %v5394 = vsel %vm1830, %v5392, %v5393
      %v5395 = vrot.slane %v5319, 1
      %v5396 = vrot.slane %v5321, 1
      %v5397 = vsel %vm1830, %v5395, %v5396
      %v5398 = vrot.slane %v5322, 1
      %v5399 = vrot.slane %v5324, 1
      %v5400 = vsel %vm1830, %v5398, %v5399
      %v5401 = vrot.slane %v5323, 1
      %v5402 = vrot.slane %v5325, 1
      %v5403 = vsel %vm1830, %v5401, %v5402
      %v5404 = vrot.slane %v5326, 1
      %v5405 = vrot.slane %v5328, 1
      %v5406 = vsel %vm1830, %v5404, %v5405
      %v5407 = vrot.slane %v5327, 1
      %v5408 = vrot.slane %v5329, 1
      %v5409 = vsel %vm1830, %v5407, %v5408
      %v5442 = vadd.f32 %v5221, %v5364
      %v5443 = vadd.f32 %v5222, %v5367
      %v5444 = vadd.f32 %v5223, %v5363
      %v5445 = vadd.f32 %v5224, %v5366
      %v5446 = vadd.f32 %v5225, %v5370
      %v5447 = vadd.f32 %v5226, %v5373
      %v5448 = vadd.f32 %v5227, %v5369
      %v5449 = vadd.f32 %v5228, %v5372
      %v5450 = vadd.f32 %v5229, %v5376
      %v5451 = vadd.f32 %v5230, %v5379
      %v5452 = vadd.f32 %v5231, %v5375
      %v5453 = vadd.f32 %v5232, %v5378
      %v5454 = vadd.f32 %v5233, %v5382
      %v5455 = vadd.f32 %v5234, %v5385
      %v5456 = vadd.f32 %v5235, %v5381
      %v5457 = vadd.f32 %v5236, %v5384
      %v5458 = vadd.f32 %v5237, %v5388
      %v5459 = vadd.f32 %v5238, %v5391
      %v5460 = vadd.f32 %v5239, %v5387
      %v5461 = vadd.f32 %v5240, %v5390
      %v5462 = vadd.f32 %v5241, %v5394
      %v5463 = vadd.f32 %v5242, %v5397
      %v5464 = vadd.f32 %v5243, %v5393
      %v5465 = vadd.f32 %v5244, %v5396
      %v5466 = vadd.f32 %v5245, %v5400
      %v5467 = vadd.f32 %v5246, %v5403
      %v5468 = vadd.f32 %v5247, %v5399
      %v5469 = vadd.f32 %v5248, %v5402
      %v5470 = vadd.f32 %v5249, %v5406
      %v5471 = vadd.f32 %v5250, %v5409
      %v5472 = vadd.f32 %v5251, %v5405
      %v5473 = vadd.f32 %v5252, %v5408
      %v5474 = vld [vmem:[%s4922] sm:$0xfc]
      %v5475 = vld [vmem:[%s4922 + $0x8] sm:$0xfc]
      %v5476 = vld [vmem:[%s4922 + $0x10] sm:$0x3]
      %v5477 = vld [vmem:[%s4922 + $0x18] sm:$0x3]
      %v5478 = vld [vmem:[%s4922 + $0x20] sm:$0xfc]
      %v5479 = vld [vmem:[%s4922 + $0x28] sm:$0xfc]
      %v5480 = vld [vmem:[%s4922 + $0x30] sm:$0x3]
      %v5481 = vld [vmem:[%s4922 + $0x38] sm:$0x3]
      %v5482 = vld [vmem:[%s4922 + $0x40] sm:$0xfc]
      %v5483 = vld [vmem:[%s4922 + $0x48] sm:$0xfc]
      %v5484 = vld [vmem:[%s4922 + $0x50] sm:$0x3]
      %v5485 = vld [vmem:[%s4922 + $0x58] sm:$0x3]
      %v5486 = vld [vmem:[%s4922 + $0x60] sm:$0xfc]
      %v5487 = vld [vmem:[%s4922 + $0x68] sm:$0xfc]
      %v5488 = vld [vmem:[%s4922 + $0x70] sm:$0x3]
      %v5489 = vld [vmem:[%s4922 + $0x78] sm:$0x3]
      %v5490 = vld [vmem:[%s4922 + $0x80] sm:$0xfc]
      %v5491 = vld [vmem:[%s4922 + $0x88] sm:$0xfc]
      %v5492 = vld [vmem:[%s4922 + $0x90] sm:$0x3]
      %v5493 = vld [vmem:[%s4922 + $0x98] sm:$0x3]
      %v5494 = vld [vmem:[%s4922 + $0xa0] sm:$0xfc]
      %v5495 = vld [vmem:[%s4922 + $0xa8] sm:$0xfc]
      %v5496 = vld [vmem:[%s4922 + $0xb0] sm:$0x3]
      %v5497 = vld [vmem:[%s4922 + $0xb8] sm:$0x3]
      %v5498 = vld [vmem:[%s4922 + $0xc0] sm:$0xfc]
      %v5499 = vld [vmem:[%s4922 + $0xc8] sm:$0xfc]
      %v5500 = vld [vmem:[%s4922 + $0xd0] sm:$0x3]
      %v5501 = vld [vmem:[%s4922 + $0xd8] sm:$0x3]
      %v5502 = vld [vmem:[%s4922 + $0xe0] sm:$0xfc]
      %v5503 = vld [vmem:[%s4922 + $0xe8] sm:$0xfc]
      %v5504 = vld [vmem:[%s4922 + $0xf0] sm:$0x3]
      %v5505 = vld [vmem:[%s4922 + $0xf8] sm:$0x3]
      %s5506 = scalar_lea.vmem %s1, 39
      %v5507 = vld [vmem:[%s5506] ss:$8 sm:$0x3]
      %v5509 = vlaneseq
      %v5510 = vshrl.u32 %v5509, 7
      %v5511 = vsub.s32 0, %v5510
      %v5512 = vrot.slane %v5507, %v5511
      %v5513 = vlaneseq
      %v5514 = vshrl.u32 %v5513, 7
      %v5515 = vsub.s32 1, %v5514
      %v5516 = vrot.slane %v5507, %v5515
      %v5519 = vmul.f32 %v5474, %v5512
      %v5520 = vmul.f32 %v5475, %v5516
      %v5521 = vmul.f32 %v5476, %v5512
      %v5522 = vmul.f32 %v5477, %v5516
      %v5523 = vmul.f32 %v5478, %v5512
      %v5524 = vmul.f32 %v5479, %v5516
      %v5525 = vmul.f32 %v5480, %v5512
      %v5526 = vmul.f32 %v5481, %v5516
      %v5527 = vmul.f32 %v5482, %v5512
      %v5528 = vmul.f32 %v5483, %v5516
      %v5529 = vmul.f32 %v5484, %v5512
      %v5530 = vmul.f32 %v5485, %v5516
      %v5531 = vmul.f32 %v5486, %v5512
      %v5532 = vmul.f32 %v5487, %v5516
      %v5533 = vmul.f32 %v5488, %v5512
      %v5534 = vmul.f32 %v5489, %v5516
      %v5535 = vmul.f32 %v5490, %v5512
      %v5536 = vmul.f32 %v5491, %v5516
      %v5537 = vmul.f32 %v5492, %v5512
      %v5538 = vmul.f32 %v5493, %v5516
      %v5539 = vmul.f32 %v5494, %v5512
      %v5540 = vmul.f32 %v5495, %v5516
      %v5541 = vmul.f32 %v5496, %v5512
      %v5542 = vmul.f32 %v5497, %v5516
      %v5543 = vmul.f32 %v5498, %v5512
      %v5544 = vmul.f32 %v5499, %v5516
      %v5545 = vmul.f32 %v5500, %v5512
      %v5546 = vmul.f32 %v5501, %v5516
      %v5547 = vmul.f32 %v5502, %v5512
      %v5548 = vmul.f32 %v5503, %v5516
      %v5549 = vmul.f32 %v5504, %v5512
      %v5550 = vmul.f32 %v5505, %v5516
      %v5583 = vrot.slane %v5519, 1
      %v5584 = vrot.slane %v5521, 1
      %v5585 = vsel %vm1830, %v5583, %v5584
      %v5586 = vrot.slane %v5520, 1
      %v5587 = vrot.slane %v5522, 1
      %v5588 = vsel %vm1830, %v5586, %v5587
      %v5589 = vrot.slane %v5523, 1
      %v5590 = vrot.slane %v5525, 1
      %v5591 = vsel %vm1830, %v5589, %v5590
      %v5592 = vrot.slane %v5524, 1
      %v5593 = vrot.slane %v5526, 1
      %v5594 = vsel %vm1830, %v5592, %v5593
      %v5595 = vrot.slane %v5527, 1
      %v5596 = vrot.slane %v5529, 1
      %v5597 = vsel %vm1830, %v5595, %v5596
      %v5598 = vrot.slane %v5528, 1
      %v5599 = vrot.slane %v5530, 1
      %v5600 = vsel %vm1830, %v5598, %v5599
      %v5601 = vrot.slane %v5531, 1
      %v5602 = vrot.slane %v5533, 1
      %v5603 = vsel %vm1830, %v5601, %v5602
      %v5604 = vrot.slane %v5532, 1
      %v5605 = vrot.slane %v5534, 1
      %v5606 = vsel %vm1830, %v5604, %v5605
      %v5607 = vrot.slane %v5535, 1
      %v5608 = vrot.slane %v5537, 1
      %v5609 = vsel %vm1830, %v5607, %v5608
      %v5610 = vrot.slane %v5536, 1
      %v5611 = vrot.slane %v5538, 1
      %v5612 = vsel %vm1830, %v5610, %v5611
      %v5613 = vrot.slane %v5539, 1
      %v5614 = vrot.slane %v5541, 1
      %v5615 = vsel %vm1830, %v5613, %v5614
      %v5616 = vrot.slane %v5540, 1
      %v5617 = vrot.slane %v5542, 1
      %v5618 = vsel %vm1830, %v5616, %v5617
      %v5619 = vrot.slane %v5543, 1
      %v5620 = vrot.slane %v5545, 1
      %v5621 = vsel %vm1830, %v5619, %v5620
      %v5622 = vrot.slane %v5544, 1
      %v5623 = vrot.slane %v5546, 1
      %v5624 = vsel %vm1830, %v5622, %v5623
      %v5625 = vrot.slane %v5547, 1
      %v5626 = vrot.slane %v5549, 1
      %v5627 = vsel %vm1830, %v5625, %v5626
      %v5628 = vrot.slane %v5548, 1
      %v5629 = vrot.slane %v5550, 1
      %v5630 = vsel %vm1830, %v5628, %v5629
      %v5663 = vadd.f32 %v5442, %v5585
      %v5664 = vadd.f32 %v5443, %v5588
      %v5665 = vadd.f32 %v5444, %v5584
      %v5666 = vadd.f32 %v5445, %v5587
      %v5667 = vadd.f32 %v5446, %v5591
      %v5668 = vadd.f32 %v5447, %v5594
      %v5669 = vadd.f32 %v5448, %v5590
      %v5670 = vadd.f32 %v5449, %v5593
      %v5671 = vadd.f32 %v5450, %v5597
      %v5672 = vadd.f32 %v5451, %v5600
      %v5673 = vadd.f32 %v5452, %v5596
      %v5674 = vadd.f32 %v5453, %v5599
      %v5675 = vadd.f32 %v5454, %v5603
      %v5676 = vadd.f32 %v5455, %v5606
      %v5677 = vadd.f32 %v5456, %v5602
      %v5678 = vadd.f32 %v5457, %v5605
      %v5679 = vadd.f32 %v5458, %v5609
      %v5680 = vadd.f32 %v5459, %v5612
      %v5681 = vadd.f32 %v5460, %v5608
      %v5682 = vadd.f32 %v5461, %v5611
      %v5683 = vadd.f32 %v5462, %v5615
      %v5684 = vadd.f32 %v5463, %v5618
      %v5685 = vadd.f32 %v5464, %v5614
      %v5686 = vadd.f32 %v5465, %v5617
      %v5687 = vadd.f32 %v5466, %v5621
      %v5688 = vadd.f32 %v5467, %v5624
      %v5689 = vadd.f32 %v5468, %v5620
      %v5690 = vadd.f32 %v5469, %v5623
      %v5691 = vadd.f32 %v5470, %v5627
      %v5692 = vadd.f32 %v5471, %v5630
      %v5693 = vadd.f32 %v5472, %v5626
      %v5694 = vadd.f32 %v5473, %v5629
      %v5695 = vld [vmem:[%s4702] sm:$0xf8]
      %v5696 = vld [vmem:[%s4702 + $0x8] sm:$0xf8]
      %v5697 = vld [vmem:[%s4702 + $0x10] sm:$0x7]
      %v5698 = vld [vmem:[%s4702 + $0x18] sm:$0x7]
      %v5699 = vld [vmem:[%s4702 + $0x20] sm:$0xf8]
      %v5700 = vld [vmem:[%s4702 + $0x28] sm:$0xf8]
      %v5701 = vld [vmem:[%s4702 + $0x30] sm:$0x7]
      %v5702 = vld [vmem:[%s4702 + $0x38] sm:$0x7]
      %v5703 = vld [vmem:[%s4702 + $0x40] sm:$0xf8]
      %v5704 = vld [vmem:[%s4702 + $0x48] sm:$0xf8]
      %v5705 = vld [vmem:[%s4702 + $0x50] sm:$0x7]
      %v5706 = vld [vmem:[%s4702 + $0x58] sm:$0x7]
      %v5707 = vld [vmem:[%s4702 + $0x60] sm:$0xf8]
      %v5708 = vld [vmem:[%s4702 + $0x68] sm:$0xf8]
      %v5709 = vld [vmem:[%s4702 + $0x70] sm:$0x7]
      %v5710 = vld [vmem:[%s4702 + $0x78] sm:$0x7]
      %v5711 = vld [vmem:[%s4702 + $0x80] sm:$0xf8]
      %v5712 = vld [vmem:[%s4702 + $0x88] sm:$0xf8]
      %v5713 = vld [vmem:[%s4702 + $0x90] sm:$0x7]
      %v5714 = vld [vmem:[%s4702 + $0x98] sm:$0x7]
      %v5715 = vld [vmem:[%s4702 + $0xa0] sm:$0xf8]
      %v5716 = vld [vmem:[%s4702 + $0xa8] sm:$0xf8]
      %v5717 = vld [vmem:[%s4702 + $0xb0] sm:$0x7]
      %v5718 = vld [vmem:[%s4702 + $0xb8] sm:$0x7]
      %v5719 = vld [vmem:[%s4702 + $0xc0] sm:$0xf8]
      %v5720 = vld [vmem:[%s4702 + $0xc8] sm:$0xf8]
      %v5721 = vld [vmem:[%s4702 + $0xd0] sm:$0x7]
      %v5722 = vld [vmem:[%s4702 + $0xd8] sm:$0x7]
      %v5723 = vld [vmem:[%s4702 + $0xe0] sm:$0xf8]
      %v5724 = vld [vmem:[%s4702 + $0xe8] sm:$0xf8]
      %v5725 = vld [vmem:[%s4702 + $0xf0] sm:$0x7]
      %v5726 = vld [vmem:[%s4702 + $0xf8] sm:$0x7]
      %s5727 = scalar_lea.vmem %s1, 48
      %v5728 = vld [vmem:[%s5727] ss:$8 sm:$0x3]
      %v5730 = vlaneseq
      %v5731 = vshrl.u32 %v5730, 7
      %v5732 = vsub.s32 0, %v5731
      %v5733 = vrot.slane %v5728, %v5732
      %v5734 = vlaneseq
      %v5735 = vshrl.u32 %v5734, 7
      %v5736 = vsub.s32 1, %v5735
      %v5737 = vrot.slane %v5728, %v5736
      %v5740 = vmul.f32 %v5695, %v5733
      %v5741 = vmul.f32 %v5696, %v5737
      %v5742 = vmul.f32 %v5697, %v5733
      %v5743 = vmul.f32 %v5698, %v5737
      %v5744 = vmul.f32 %v5699, %v5733
      %v5745 = vmul.f32 %v5700, %v5737
      %v5746 = vmul.f32 %v5701, %v5733
      %v5747 = vmul.f32 %v5702, %v5737
      %v5748 = vmul.f32 %v5703, %v5733
      %v5749 = vmul.f32 %v5704, %v5737
      %v5750 = vmul.f32 %v5705, %v5733
      %v5751 = vmul.f32 %v5706, %v5737
      %v5752 = vmul.f32 %v5707, %v5733
      %v5753 = vmul.f32 %v5708, %v5737
      %v5754 = vmul.f32 %v5709, %v5733
      %v5755 = vmul.f32 %v5710, %v5737
      %v5756 = vmul.f32 %v5711, %v5733
      %v5757 = vmul.f32 %v5712, %v5737
      %v5758 = vmul.f32 %v5713, %v5733
      %v5759 = vmul.f32 %v5714, %v5737
      %v5760 = vmul.f32 %v5715, %v5733
      %v5761 = vmul.f32 %v5716, %v5737
      %v5762 = vmul.f32 %v5717, %v5733
      %v5763 = vmul.f32 %v5718, %v5737
      %v5764 = vmul.f32 %v5719, %v5733
      %v5765 = vmul.f32 %v5720, %v5737
      %v5766 = vmul.f32 %v5721, %v5733
      %v5767 = vmul.f32 %v5722, %v5737
      %v5768 = vmul.f32 %v5723, %v5733
      %v5769 = vmul.f32 %v5724, %v5737
      %v5770 = vmul.f32 %v5725, %v5733
      %v5771 = vmul.f32 %v5726, %v5737
      %v5804 = vrot.slane %v5740, 2
      %v5805 = vrot.slane %v5742, 2
      %v5806 = vsel %vm2494, %v5804, %v5805
      %v5807 = vrot.slane %v5741, 2
      %v5808 = vrot.slane %v5743, 2
      %v5809 = vsel %vm2494, %v5807, %v5808
      %v5810 = vrot.slane %v5744, 2
      %v5811 = vrot.slane %v5746, 2
      %v5812 = vsel %vm2494, %v5810, %v5811
      %v5813 = vrot.slane %v5745, 2
      %v5814 = vrot.slane %v5747, 2
      %v5815 = vsel %vm2494, %v5813, %v5814
      %v5816 = vrot.slane %v5748, 2
      %v5817 = vrot.slane %v5750, 2
      %v5818 = vsel %vm2494, %v5816, %v5817
      %v5819 = vrot.slane %v5749, 2
      %v5820 = vrot.slane %v5751, 2
      %v5821 = vsel %vm2494, %v5819, %v5820
      %v5822 = vrot.slane %v5752, 2
      %v5823 = vrot.slane %v5754, 2
      %v5824 = vsel %vm2494, %v5822, %v5823
      %v5825 = vrot.slane %v5753, 2
      %v5826 = vrot.slane %v5755, 2
      %v5827 = vsel %vm2494, %v5825, %v5826
      %v5828 = vrot.slane %v5756, 2
      %v5829 = vrot.slane %v5758, 2
      %v5830 = vsel %vm2494, %v5828, %v5829
      %v5831 = vrot.slane %v5757, 2
      %v5832 = vrot.slane %v5759, 2
      %v5833 = vsel %vm2494, %v5831, %v5832
      %v5834 = vrot.slane %v5760, 2
      %v5835 = vrot.slane %v5762, 2
      %v5836 = vsel %vm2494, %v5834, %v5835
      %v5837 = vrot.slane %v5761, 2
      %v5838 = vrot.slane %v5763, 2
      %v5839 = vsel %vm2494, %v5837, %v5838
      %v5840 = vrot.slane %v5764, 2
      %v5841 = vrot.slane %v5766, 2
      %v5842 = vsel %vm2494, %v5840, %v5841
      %v5843 = vrot.slane %v5765, 2
      %v5844 = vrot.slane %v5767, 2
      %v5845 = vsel %vm2494, %v5843, %v5844
      %v5846 = vrot.slane %v5768, 2
      %v5847 = vrot.slane %v5770, 2
      %v5848 = vsel %vm2494, %v5846, %v5847
      %v5849 = vrot.slane %v5769, 2
      %v5850 = vrot.slane %v5771, 2
      %v5851 = vsel %vm2494, %v5849, %v5850
      %v5884 = vadd.f32 %v5663, %v5806
      %v5885 = vadd.f32 %v5664, %v5809
      %v5886 = vadd.f32 %v5665, %v5805
      %v5887 = vadd.f32 %v5666, %v5808
      %v5888 = vadd.f32 %v5667, %v5812
      %v5889 = vadd.f32 %v5668, %v5815
      %v5890 = vadd.f32 %v5669, %v5811
      %v5891 = vadd.f32 %v5670, %v5814
      %v5892 = vadd.f32 %v5671, %v5818
      %v5893 = vadd.f32 %v5672, %v5821
      %v5894 = vadd.f32 %v5673, %v5817
      %v5895 = vadd.f32 %v5674, %v5820
      %v5896 = vadd.f32 %v5675, %v5824
      %v5897 = vadd.f32 %v5676, %v5827
      %v5898 = vadd.f32 %v5677, %v5823
      %v5899 = vadd.f32 %v5678, %v5826
      %v5900 = vadd.f32 %v5679, %v5830
      %v5901 = vadd.f32 %v5680, %v5833
      %v5902 = vadd.f32 %v5681, %v5829
      %v5903 = vadd.f32 %v5682, %v5832
      %v5904 = vadd.f32 %v5683, %v5836
      %v5905 = vadd.f32 %v5684, %v5839
      %v5906 = vadd.f32 %v5685, %v5835
      %v5907 = vadd.f32 %v5686, %v5838
      %v5908 = vadd.f32 %v5687, %v5842
      %v5909 = vadd.f32 %v5688, %v5845
      %v5910 = vadd.f32 %v5689, %v5841
      %v5911 = vadd.f32 %v5690, %v5844
      %v5912 = vadd.f32 %v5691, %v5848
      %v5913 = vadd.f32 %v5692, %v5851
      %v5914 = vadd.f32 %v5693, %v5847
      %v5915 = vadd.f32 %v5694, %v5850
      %v5916 = vld [vmem:[%s4812] sm:$0xf8]
      %v5917 = vld [vmem:[%s4812 + $0x8] sm:$0xf8]
      %v5918 = vld [vmem:[%s4812 + $0x10] sm:$0x7]
      %v5919 = vld [vmem:[%s4812 + $0x18] sm:$0x7]
      %v5920 = vld [vmem:[%s4812 + $0x20] sm:$0xf8]
      %v5921 = vld [vmem:[%s4812 + $0x28] sm:$0xf8]
      %v5922 = vld [vmem:[%s4812 + $0x30] sm:$0x7]
      %v5923 = vld [vmem:[%s4812 + $0x38] sm:$0x7]
      %v5924 = vld [vmem:[%s4812 + $0x40] sm:$0xf8]
      %v5925 = vld [vmem:[%s4812 + $0x48] sm:$0xf8]
      %v5926 = vld [vmem:[%s4812 + $0x50] sm:$0x7]
      %v5927 = vld [vmem:[%s4812 + $0x58] sm:$0x7]
      %v5928 = vld [vmem:[%s4812 + $0x60] sm:$0xf8]
      %v5929 = vld [vmem:[%s4812 + $0x68] sm:$0xf8]
      %v5930 = vld [vmem:[%s4812 + $0x70] sm:$0x7]
      %v5931 = vld [vmem:[%s4812 + $0x78] sm:$0x7]
      %v5932 = vld [vmem:[%s4812 + $0x80] sm:$0xf8]
      %v5933 = vld [vmem:[%s4812 + $0x88] sm:$0xf8]
      %v5934 = vld [vmem:[%s4812 + $0x90] sm:$0x7]
      %v5935 = vld [vmem:[%s4812 + $0x98] sm:$0x7]
      %v5936 = vld [vmem:[%s4812 + $0xa0] sm:$0xf8]
      %v5937 = vld [vmem:[%s4812 + $0xa8] sm:$0xf8]
      %v5938 = vld [vmem:[%s4812 + $0xb0] sm:$0x7]
      %v5939 = vld [vmem:[%s4812 + $0xb8] sm:$0x7]
      %v5940 = vld [vmem:[%s4812 + $0xc0] sm:$0xf8]
      %v5941 = vld [vmem:[%s4812 + $0xc8] sm:$0xf8]
      %v5942 = vld [vmem:[%s4812 + $0xd0] sm:$0x7]
      %v5943 = vld [vmem:[%s4812 + $0xd8] sm:$0x7]
      %v5944 = vld [vmem:[%s4812 + $0xe0] sm:$0xf8]
      %v5945 = vld [vmem:[%s4812 + $0xe8] sm:$0xf8]
      %v5946 = vld [vmem:[%s4812 + $0xf0] sm:$0x7]
      %v5947 = vld [vmem:[%s4812 + $0xf8] sm:$0x7]
      %s5948 = scalar_lea.vmem %s1, 49
      %v5949 = vld [vmem:[%s5948] ss:$8 sm:$0x3]
      %v5951 = vlaneseq
      %v5952 = vshrl.u32 %v5951, 7
      %v5953 = vsub.s32 0, %v5952
      %v5954 = vrot.slane %v5949, %v5953
      %v5955 = vlaneseq
      %v5956 = vshrl.u32 %v5955, 7
      %v5957 = vsub.s32 1, %v5956
      %v5958 = vrot.slane %v5949, %v5957
      %v5961 = vmul.f32 %v5916, %v5954
      %v5962 = vmul.f32 %v5917, %v5958
      %v5963 = vmul.f32 %v5918, %v5954
      %v5964 = vmul.f32 %v5919, %v5958
      %v5965 = vmul.f32 %v5920, %v5954
      %v5966 = vmul.f32 %v5921, %v5958
      %v5967 = vmul.f32 %v5922, %v5954
      %v5968 = vmul.f32 %v5923, %v5958
      %v5969 = vmul.f32 %v5924, %v5954
      %v5970 = vmul.f32 %v5925, %v5958
      %v5971 = vmul.f32 %v5926, %v5954
      %v5972 = vmul.f32 %v5927, %v5958
      %v5973 = vmul.f32 %v5928, %v5954
      %v5974 = vmul.f32 %v5929, %v5958
      %v5975 = vmul.f32 %v5930, %v5954
      %v5976 = vmul.f32 %v5931, %v5958
      %v5977 = vmul.f32 %v5932, %v5954
      %v5978 = vmul.f32 %v5933, %v5958
      %v5979 = vmul.f32 %v5934, %v5954
      %v5980 = vmul.f32 %v5935, %v5958
      %v5981 = vmul.f32 %v5936, %v5954
      %v5982 = vmul.f32 %v5937, %v5958
      %v5983 = vmul.f32 %v5938, %v5954
      %v5984 = vmul.f32 %v5939, %v5958
      %v5985 = vmul.f32 %v5940, %v5954
      %v5986 = vmul.f32 %v5941, %v5958
      %v5987 = vmul.f32 %v5942, %v5954
      %v5988 = vmul.f32 %v5943, %v5958
      %v5989 = vmul.f32 %v5944, %v5954
      %v5990 = vmul.f32 %v5945, %v5958
      %v5991 = vmul.f32 %v5946, %v5954
      %v5992 = vmul.f32 %v5947, %v5958
      %v6025 = vrot.slane %v5961, 2
      %v6026 = vrot.slane %v5963, 2
      %v6027 = vsel %vm2494, %v6025, %v6026
      %v6028 = vrot.slane %v5962, 2
      %v6029 = vrot.slane %v5964, 2
      %v6030 = vsel %vm2494, %v6028, %v6029
      %v6031 = vrot.slane %v5965, 2
      %v6032 = vrot.slane %v5967, 2
      %v6033 = vsel %vm2494, %v6031, %v6032
      %v6034 = vrot.slane %v5966, 2
      %v6035 = vrot.slane %v5968, 2
      %v6036 = vsel %vm2494, %v6034, %v6035
      %v6037 = vrot.slane %v5969, 2
      %v6038 = vrot.slane %v5971, 2
      %v6039 = vsel %vm2494, %v6037, %v6038
      %v6040 = vrot.slane %v5970, 2
      %v6041 = vrot.slane %v5972, 2
      %v6042 = vsel %vm2494, %v6040, %v6041
      %v6043 = vrot.slane %v5973, 2
      %v6044 = vrot.slane %v5975, 2
      %v6045 = vsel %vm2494, %v6043, %v6044
      %v6046 = vrot.slane %v5974, 2
      %v6047 = vrot.slane %v5976, 2
      %v6048 = vsel %vm2494, %v6046, %v6047
      %v6049 = vrot.slane %v5977, 2
      %v6050 = vrot.slane %v5979, 2
      %v6051 = vsel %vm2494, %v6049, %v6050
      %v6052 = vrot.slane %v5978, 2
      %v6053 = vrot.slane %v5980, 2
      %v6054 = vsel %vm2494, %v6052, %v6053
      %v6055 = vrot.slane %v5981, 2
      %v6056 = vrot.slane %v5983, 2
      %v6057 = vsel %vm2494, %v6055, %v6056
      %v6058 = vrot.slane %v5982, 2
      %v6059 = vrot.slane %v5984, 2
      %v6060 = vsel %vm2494, %v6058, %v6059
      %v6061 = vrot.slane %v5985, 2
      %v6062 = vrot.slane %v5987, 2
      %v6063 = vsel %vm2494, %v6061, %v6062
      %v6064 = vrot.slane %v5986, 2
      %v6065 = vrot.slane %v5988, 2
      %v6066 = vsel %vm2494, %v6064, %v6065
      %v6067 = vrot.slane %v5989, 2
      %v6068 = vrot.slane %v5991, 2
      %v6069 = vsel %vm2494, %v6067, %v6068
      %v6070 = vrot.slane %v5990, 2
      %v6071 = vrot.slane %v5992, 2
      %v6072 = vsel %vm2494, %v6070, %v6071
      %v6105 = vadd.f32 %v5884, %v6027
      %v6106 = vadd.f32 %v5885, %v6030
      %v6107 = vadd.f32 %v5886, %v6026
      %v6108 = vadd.f32 %v5887, %v6029
      %v6109 = vadd.f32 %v5888, %v6033
      %v6110 = vadd.f32 %v5889, %v6036
      %v6111 = vadd.f32 %v5890, %v6032
      %v6112 = vadd.f32 %v5891, %v6035
      %v6113 = vadd.f32 %v5892, %v6039
      %v6114 = vadd.f32 %v5893, %v6042
      %v6115 = vadd.f32 %v5894, %v6038
      %v6116 = vadd.f32 %v5895, %v6041
      %v6117 = vadd.f32 %v5896, %v6045
      %v6118 = vadd.f32 %v5897, %v6048
      %v6119 = vadd.f32 %v5898, %v6044
      %v6120 = vadd.f32 %v5899, %v6047
      %v6121 = vadd.f32 %v5900, %v6051
      %v6122 = vadd.f32 %v5901, %v6054
      %v6123 = vadd.f32 %v5902, %v6050
      %v6124 = vadd.f32 %v5903, %v6053
      %v6125 = vadd.f32 %v5904, %v6057
      %v6126 = vadd.f32 %v5905, %v6060
      %v6127 = vadd.f32 %v5906, %v6056
      %v6128 = vadd.f32 %v5907, %v6059
      %v6129 = vadd.f32 %v5908, %v6063
      %v6130 = vadd.f32 %v5909, %v6066
      %v6131 = vadd.f32 %v5910, %v6062
      %v6132 = vadd.f32 %v5911, %v6065
      %v6133 = vadd.f32 %v5912, %v6069
      %v6134 = vadd.f32 %v5913, %v6072
      %v6135 = vadd.f32 %v5914, %v6068
      %v6136 = vadd.f32 %v5915, %v6071
      %v6137 = vld [vmem:[%s4922] sm:$0xf8]
      %v6138 = vld [vmem:[%s4922 + $0x8] sm:$0xf8]
      %v6139 = vld [vmem:[%s4922 + $0x10] sm:$0x7]
      %v6140 = vld [vmem:[%s4922 + $0x18] sm:$0x7]
      %v6141 = vld [vmem:[%s4922 + $0x20] sm:$0xf8]
      %v6142 = vld [vmem:[%s4922 + $0x28] sm:$0xf8]
      %v6143 = vld [vmem:[%s4922 + $0x30] sm:$0x7]
      %v6144 = vld [vmem:[%s4922 + $0x38] sm:$0x7]
      %v6145 = vld [vmem:[%s4922 + $0x40] sm:$0xf8]
      %v6146 = vld [vmem:[%s4922 + $0x48] sm:$0xf8]
      %v6147 = vld [vmem:[%s4922 + $0x50] sm:$0x7]
      %v6148 = vld [vmem:[%s4922 + $0x58] sm:$0x7]
      %v6149 = vld [vmem:[%s4922 + $0x60] sm:$0xf8]
      %v6150 = vld [vmem:[%s4922 + $0x68] sm:$0xf8]
      %v6151 = vld [vmem:[%s4922 + $0x70] sm:$0x7]
      %v6152 = vld [vmem:[%s4922 + $0x78] sm:$0x7]
      %v6153 = vld [vmem:[%s4922 + $0x80] sm:$0xf8]
      %v6154 = vld [vmem:[%s4922 + $0x88] sm:$0xf8]
      %v6155 = vld [vmem:[%s4922 + $0x90] sm:$0x7]
      %v6156 = vld [vmem:[%s4922 + $0x98] sm:$0x7]
      %v6157 = vld [vmem:[%s4922 + $0xa0] sm:$0xf8]
      %v6158 = vld [vmem:[%s4922 + $0xa8] sm:$0xf8]
      %v6159 = vld [vmem:[%s4922 + $0xb0] sm:$0x7]
      %v6160 = vld [vmem:[%s4922 + $0xb8] sm:$0x7]
      %v6161 = vld [vmem:[%s4922 + $0xc0] sm:$0xf8]
      %v6162 = vld [vmem:[%s4922 + $0xc8] sm:$0xf8]
      %v6163 = vld [vmem:[%s4922 + $0xd0] sm:$0x7]
      %v6164 = vld [vmem:[%s4922 + $0xd8] sm:$0x7]
      %v6165 = vld [vmem:[%s4922 + $0xe0] sm:$0xf8]
      %v6166 = vld [vmem:[%s4922 + $0xe8] sm:$0xf8]
      %v6167 = vld [vmem:[%s4922 + $0xf0] sm:$0x7]
      %v6168 = vld [vmem:[%s4922 + $0xf8] sm:$0x7]
      %s6169 = scalar_lea.vmem %s1, 50
      %v6170 = vld [vmem:[%s6169] ss:$8 sm:$0x3]
      %v6172 = vlaneseq
      %v6173 = vshrl.u32 %v6172, 7
      %v6174 = vsub.s32 0, %v6173
      %v6175 = vrot.slane %v6170, %v6174
      %v6176 = vlaneseq
      %v6177 = vshrl.u32 %v6176, 7
      %v6178 = vsub.s32 1, %v6177
      %v6179 = vrot.slane %v6170, %v6178
      %v6182 = vmul.f32 %v6137, %v6175
      %v6183 = vmul.f32 %v6138, %v6179
      %v6184 = vmul.f32 %v6139, %v6175
      %v6185 = vmul.f32 %v6140, %v6179
      %v6186 = vmul.f32 %v6141, %v6175
      %v6187 = vmul.f32 %v6142, %v6179
      %v6188 = vmul.f32 %v6143, %v6175
      %v6189 = vmul.f32 %v6144, %v6179
      %v6190 = vmul.f32 %v6145, %v6175
      %v6191 = vmul.f32 %v6146, %v6179
      %v6192 = vmul.f32 %v6147, %v6175
      %v6193 = vmul.f32 %v6148, %v6179
      %v6194 = vmul.f32 %v6149, %v6175
      %v6195 = vmul.f32 %v6150, %v6179
      %v6196 = vmul.f32 %v6151, %v6175
      %v6197 = vmul.f32 %v6152, %v6179
      %v6198 = vmul.f32 %v6153, %v6175
      %v6199 = vmul.f32 %v6154, %v6179
      %v6200 = vmul.f32 %v6155, %v6175
      %v6201 = vmul.f32 %v6156, %v6179
      %v6202 = vmul.f32 %v6157, %v6175
      %v6203 = vmul.f32 %v6158, %v6179
      %v6204 = vmul.f32 %v6159, %v6175
      %v6205 = vmul.f32 %v6160, %v6179
      %v6206 = vmul.f32 %v6161, %v6175
      %v6207 = vmul.f32 %v6162, %v6179
      %v6208 = vmul.f32 %v6163, %v6175
      %v6209 = vmul.f32 %v6164, %v6179
      %v6210 = vmul.f32 %v6165, %v6175
      %v6211 = vmul.f32 %v6166, %v6179
      %v6212 = vmul.f32 %v6167, %v6175
      %v6213 = vmul.f32 %v6168, %v6179
      %v6246 = vrot.slane %v6182, 2
      %v6247 = vrot.slane %v6184, 2
      %v6248 = vsel %vm2494, %v6246, %v6247
      %v6249 = vrot.slane %v6183, 2
      %v6250 = vrot.slane %v6185, 2
      %v6251 = vsel %vm2494, %v6249, %v6250
      %v6252 = vrot.slane %v6186, 2
      %v6253 = vrot.slane %v6188, 2
      %v6254 = vsel %vm2494, %v6252, %v6253
      %v6255 = vrot.slane %v6187, 2
      %v6256 = vrot.slane %v6189, 2
      %v6257 = vsel %vm2494, %v6255, %v6256
      %v6258 = vrot.slane %v6190, 2
      %v6259 = vrot.slane %v6192, 2
      %v6260 = vsel %vm2494, %v6258, %v6259
      %v6261 = vrot.slane %v6191, 2
      %v6262 = vrot.slane %v6193, 2
      %v6263 = vsel %vm2494, %v6261, %v6262
      %v6264 = vrot.slane %v6194, 2
      %v6265 = vrot.slane %v6196, 2
      %v6266 = vsel %vm2494, %v6264, %v6265
      %v6267 = vrot.slane %v6195, 2
      %v6268 = vrot.slane %v6197, 2
      %v6269 = vsel %vm2494, %v6267, %v6268
      %v6270 = vrot.slane %v6198, 2
      %v6271 = vrot.slane %v6200, 2
      %v6272 = vsel %vm2494, %v6270, %v6271
      %v6273 = vrot.slane %v6199, 2
      %v6274 = vrot.slane %v6201, 2
      %v6275 = vsel %vm2494, %v6273, %v6274
      %v6276 = vrot.slane %v6202, 2
      %v6277 = vrot.slane %v6204, 2
      %v6278 = vsel %vm2494, %v6276, %v6277
      %v6279 = vrot.slane %v6203, 2
      %v6280 = vrot.slane %v6205, 2
      %v6281 = vsel %vm2494, %v6279, %v6280
      %v6282 = vrot.slane %v6206, 2
      %v6283 = vrot.slane %v6208, 2
      %v6284 = vsel %vm2494, %v6282, %v6283
      %v6285 = vrot.slane %v6207, 2
      %v6286 = vrot.slane %v6209, 2
      %v6287 = vsel %vm2494, %v6285, %v6286
      %v6288 = vrot.slane %v6210, 2
      %v6289 = vrot.slane %v6212, 2
      %v6290 = vsel %vm2494, %v6288, %v6289
      %v6291 = vrot.slane %v6211, 2
      %v6292 = vrot.slane %v6213, 2
      %v6293 = vsel %vm2494, %v6291, %v6292
      %v6326 = vadd.f32 %v6105, %v6248
      %v6327 = vadd.f32 %v6106, %v6251
      %v6328 = vadd.f32 %v6107, %v6247
      %v6329 = vadd.f32 %v6108, %v6250
      %v6330 = vadd.f32 %v6109, %v6254
      %v6331 = vadd.f32 %v6110, %v6257
      %v6332 = vadd.f32 %v6111, %v6253
      %v6333 = vadd.f32 %v6112, %v6256
      %v6334 = vadd.f32 %v6113, %v6260
      %v6335 = vadd.f32 %v6114, %v6263
      %v6336 = vadd.f32 %v6115, %v6259
      %v6337 = vadd.f32 %v6116, %v6262
      %v6338 = vadd.f32 %v6117, %v6266
      %v6339 = vadd.f32 %v6118, %v6269
      %v6340 = vadd.f32 %v6119, %v6265
      %v6341 = vadd.f32 %v6120, %v6268
      %v6342 = vadd.f32 %v6121, %v6272
      %v6343 = vadd.f32 %v6122, %v6275
      %v6344 = vadd.f32 %v6123, %v6271
      %v6345 = vadd.f32 %v6124, %v6274
      %v6346 = vadd.f32 %v6125, %v6278
      %v6347 = vadd.f32 %v6126, %v6281
      %v6348 = vadd.f32 %v6127, %v6277
      %v6349 = vadd.f32 %v6128, %v6280
      %v6350 = vadd.f32 %v6129, %v6284
      %v6351 = vadd.f32 %v6130, %v6287
      %v6352 = vadd.f32 %v6131, %v6283
      %v6353 = vadd.f32 %v6132, %v6286
      %v6354 = vadd.f32 %v6133, %v6290
      %v6355 = vadd.f32 %v6134, %v6293
      %v6356 = vadd.f32 %v6135, %v6289
      %v6357 = vadd.f32 %v6136, %v6292
      %v6358 = vld [vmem:[%s3] sm:$0x3]
      %v6360 = vlaneseq
      %v6361 = vshrl.u32 %v6360, 7
      %v6362 = vsub.s32 0, %v6361
      %v6363 = vrot.slane %v6358, %v6362
      %v6364 = vlaneseq
      %v6365 = vshrl.u32 %v6364, 7
      %v6366 = vsub.s32 1, %v6365
      %v6367 = vrot.slane %v6358, %v6366
      %v6370 = vmul.f32 %v6326, %v6363
      %v6371 = vmul.f32 %v6327, %v6367
      %v6372 = vmul.f32 %v6328, %v6363
      %v6373 = vmul.f32 %v6329, %v6367
      %v6374 = vmul.f32 %v6330, %v6363
      %v6375 = vmul.f32 %v6331, %v6367
      %v6376 = vmul.f32 %v6332, %v6363
      %v6377 = vmul.f32 %v6333, %v6367
      %v6378 = vmul.f32 %v6334, %v6363
      %v6379 = vmul.f32 %v6335, %v6367
      %v6380 = vmul.f32 %v6336, %v6363
      %v6381 = vmul.f32 %v6337, %v6367
      %v6382 = vmul.f32 %v6338, %v6363
      %v6383 = vmul.f32 %v6339, %v6367
      %v6384 = vmul.f32 %v6340, %v6363
      %v6385 = vmul.f32 %v6341, %v6367
      %v6386 = vmul.f32 %v6342, %v6363
      %v6387 = vmul.f32 %v6343, %v6367
      %v6388 = vmul.f32 %v6344, %v6363
      %v6389 = vmul.f32 %v6345, %v6367
      %v6390 = vmul.f32 %v6346, %v6363
      %v6391 = vmul.f32 %v6347, %v6367
      %v6392 = vmul.f32 %v6348, %v6363
      %v6393 = vmul.f32 %v6349, %v6367
      %v6394 = vmul.f32 %v6350, %v6363
      %v6395 = vmul.f32 %v6351, %v6367
      %v6396 = vmul.f32 %v6352, %v6363
      %v6397 = vmul.f32 %v6353, %v6367
      %v6398 = vmul.f32 %v6354, %v6363
      %v6399 = vmul.f32 %v6355, %v6367
      %v6400 = vmul.f32 %v6356, %v6363
      %v6401 = vmul.f32 %v6357, %v6367
      %v6402 = vld [vmem:[%s4] sm:$0x3]
      %v6404 = vlaneseq
      %v6405 = vshrl.u32 %v6404, 7
      %v6406 = vsub.s32 0, %v6405
      %v6407 = vrot.slane %v6402, %v6406
      %v6408 = vlaneseq
      %v6409 = vshrl.u32 %v6408, 7
      %v6410 = vsub.s32 1, %v6409
      %v6411 = vrot.slane %v6402, %v6410
      %v6414 = vadd.f32 %v6370, %v6407
      %v6415 = vadd.f32 %v6371, %v6411
      %v6416 = vadd.f32 %v6372, %v6407
      %v6417 = vadd.f32 %v6373, %v6411
      %v6418 = vadd.f32 %v6374, %v6407
      %v6419 = vadd.f32 %v6375, %v6411
      %v6420 = vadd.f32 %v6376, %v6407
      %v6421 = vadd.f32 %v6377, %v6411
      %v6422 = vadd.f32 %v6378, %v6407
      %v6423 = vadd.f32 %v6379, %v6411
      %v6424 = vadd.f32 %v6380, %v6407
      %v6425 = vadd.f32 %v6381, %v6411
      %v6426 = vadd.f32 %v6382, %v6407
      %v6427 = vadd.f32 %v6383, %v6411
      %v6428 = vadd.f32 %v6384, %v6407
      %v6429 = vadd.f32 %v6385, %v6411
      %v6430 = vadd.f32 %v6386, %v6407
      %v6431 = vadd.f32 %v6387, %v6411
      %v6432 = vadd.f32 %v6388, %v6407
      %v6433 = vadd.f32 %v6389, %v6411
      %v6434 = vadd.f32 %v6390, %v6407
      %v6435 = vadd.f32 %v6391, %v6411
      %v6436 = vadd.f32 %v6392, %v6407
      %v6437 = vadd.f32 %v6393, %v6411
      %v6438 = vadd.f32 %v6394, %v6407
      %v6439 = vadd.f32 %v6395, %v6411
      %v6440 = vadd.f32 %v6396, %v6407
      %v6441 = vadd.f32 %v6397, %v6411
      %v6442 = vadd.f32 %v6398, %v6407
      %v6443 = vadd.f32 %v6399, %v6411
      %v6444 = vadd.f32 %v6400, %v6407
      %v6445 = vadd.f32 %v6401, %v6411
      %vm6446 = vcmp.ge.f32.partialorder %v6414, 0.0
      %vm6447 = vcmp.ge.f32.partialorder %v6415, 0.0
      %vm6448 = vcmp.ge.f32.partialorder %v6416, 0.0
      %vm6449 = vcmp.ge.f32.partialorder %v6417, 0.0
      %vm6450 = vcmp.ge.f32.partialorder %v6418, 0.0
      %vm6451 = vcmp.ge.f32.partialorder %v6419, 0.0
      %vm6452 = vcmp.ge.f32.partialorder %v6420, 0.0
      %vm6453 = vcmp.ge.f32.partialorder %v6421, 0.0
      %vm6454 = vcmp.ge.f32.partialorder %v6422, 0.0
      %vm6455 = vcmp.ge.f32.partialorder %v6423, 0.0
      %vm6456 = vcmp.ge.f32.partialorder %v6424, 0.0
      %vm6457 = vcmp.ge.f32.partialorder %v6425, 0.0
      %vm6458 = vcmp.ge.f32.partialorder %v6426, 0.0
      %vm6459 = vcmp.ge.f32.partialorder %v6427, 0.0
      %vm6460 = vcmp.ge.f32.partialorder %v6428, 0.0
      %vm6461 = vcmp.ge.f32.partialorder %v6429, 0.0
      %vm6462 = vcmp.ge.f32.partialorder %v6430, 0.0
      %vm6463 = vcmp.ge.f32.partialorder %v6431, 0.0
      %vm6464 = vcmp.ge.f32.partialorder %v6432, 0.0
      %vm6465 = vcmp.ge.f32.partialorder %v6433, 0.0
      %vm6466 = vcmp.ge.f32.partialorder %v6434, 0.0
      %vm6467 = vcmp.ge.f32.partialorder %v6435, 0.0
      %vm6468 = vcmp.ge.f32.partialorder %v6436, 0.0
      %vm6469 = vcmp.ge.f32.partialorder %v6437, 0.0
      %vm6470 = vcmp.ge.f32.partialorder %v6438, 0.0
      %vm6471 = vcmp.ge.f32.partialorder %v6439, 0.0
      %vm6472 = vcmp.ge.f32.partialorder %v6440, 0.0
      %vm6473 = vcmp.ge.f32.partialorder %v6441, 0.0
      %vm6474 = vcmp.ge.f32.partialorder %v6442, 0.0
      %vm6475 = vcmp.ge.f32.partialorder %v6443, 0.0
      %vm6476 = vcmp.ge.f32.partialorder %v6444, 0.0
      %vm6477 = vcmp.ge.f32.partialorder %v6445, 0.0
      %v6478 = vmul.f32 %v6414, 0.01
      %v6479 = vmul.f32 %v6415, 0.01
      %v6480 = vmul.f32 %v6416, 0.01
      %v6481 = vmul.f32 %v6417, 0.01
      %v6482 = vmul.f32 %v6418, 0.01
      %v6483 = vmul.f32 %v6419, 0.01
      %v6484 = vmul.f32 %v6420, 0.01
      %v6485 = vmul.f32 %v6421, 0.01
      %v6486 = vmul.f32 %v6422, 0.01
      %v6487 = vmul.f32 %v6423, 0.01
      %v6488 = vmul.f32 %v6424, 0.01
      %v6489 = vmul.f32 %v6425, 0.01
      %v6490 = vmul.f32 %v6426, 0.01
      %v6491 = vmul.f32 %v6427, 0.01
      %v6492 = vmul.f32 %v6428, 0.01
      %v6493 = vmul.f32 %v6429, 0.01
      %v6494 = vmul.f32 %v6430, 0.01
      %v6495 = vmul.f32 %v6431, 0.01
      %v6496 = vmul.f32 %v6432, 0.01
      %v6497 = vmul.f32 %v6433, 0.01
      %v6498 = vmul.f32 %v6434, 0.01
      %v6499 = vmul.f32 %v6435, 0.01
      %v6500 = vmul.f32 %v6436, 0.01
      %v6501 = vmul.f32 %v6437, 0.01
      %v6502 = vmul.f32 %v6438, 0.01
      %v6503 = vmul.f32 %v6439, 0.01
      %v6504 = vmul.f32 %v6440, 0.01
      %v6505 = vmul.f32 %v6441, 0.01
      %v6506 = vmul.f32 %v6442, 0.01
      %v6507 = vmul.f32 %v6443, 0.01
      %v6508 = vmul.f32 %v6444, 0.01
      %v6509 = vmul.f32 %v6445, 0.01
      %v6510 = vsel %vm6446, %v6414, %v6478
      %v6511 = vsel %vm6447, %v6415, %v6479
      %v6512 = vsel %vm6448, %v6416, %v6480
      %v6513 = vsel %vm6449, %v6417, %v6481
      %v6514 = vsel %vm6450, %v6418, %v6482
      %v6515 = vsel %vm6451, %v6419, %v6483
      %v6516 = vsel %vm6452, %v6420, %v6484
      %v6517 = vsel %vm6453, %v6421, %v6485
      %v6518 = vsel %vm6454, %v6422, %v6486
      %v6519 = vsel %vm6455, %v6423, %v6487
      %v6520 = vsel %vm6456, %v6424, %v6488
      %v6521 = vsel %vm6457, %v6425, %v6489
      %v6522 = vsel %vm6458, %v6426, %v6490
      %v6523 = vsel %vm6459, %v6427, %v6491
      %v6524 = vsel %vm6460, %v6428, %v6492
      %v6525 = vsel %vm6461, %v6429, %v6493
      %v6526 = vsel %vm6462, %v6430, %v6494
      %v6527 = vsel %vm6463, %v6431, %v6495
      %v6528 = vsel %vm6464, %v6432, %v6496
      %v6529 = vsel %vm6465, %v6433, %v6497
      %v6530 = vsel %vm6466, %v6434, %v6498
      %v6531 = vsel %vm6467, %v6435, %v6499
      %v6532 = vsel %vm6468, %v6436, %v6500
      %v6533 = vsel %vm6469, %v6437, %v6501
      %v6534 = vsel %vm6470, %v6438, %v6502
      %v6535 = vsel %vm6471, %v6439, %v6503
      %v6536 = vsel %vm6472, %v6440, %v6504
      %v6537 = vsel %vm6473, %v6441, %v6505
      %v6538 = vsel %vm6474, %v6442, %v6506
      %v6539 = vsel %vm6475, %v6443, %v6507
      %v6540 = vsel %vm6476, %v6444, %v6508
      %v6541 = vsel %vm6477, %v6445, %v6509
      %v6574 = vrot.slane %v6510, 1
      %v6575 = vrot.slane %v6512, 1
      %v6576 = vsel %vm1830, %v6574, %v6575
      %v6577 = vrot.slane %v6511, 1
      %v6578 = vrot.slane %v6513, 1
      %v6579 = vsel %vm1830, %v6577, %v6578
      %v6580 = vrot.slane %v6514, 1
      %v6581 = vrot.slane %v6516, 1
      %v6582 = vsel %vm1830, %v6580, %v6581
      %v6583 = vrot.slane %v6515, 1
      %v6584 = vrot.slane %v6517, 1
      %v6585 = vsel %vm1830, %v6583, %v6584
      %v6586 = vrot.slane %v6518, 1
      %v6587 = vrot.slane %v6520, 1
      %v6588 = vsel %vm1830, %v6586, %v6587
      %v6589 = vrot.slane %v6519, 1
      %v6590 = vrot.slane %v6521, 1
      %v6591 = vsel %vm1830, %v6589, %v6590
      %v6592 = vrot.slane %v6522, 1
      %v6593 = vrot.slane %v6524, 1
      %v6594 = vsel %vm1830, %v6592, %v6593
      %v6595 = vrot.slane %v6523, 1
      %v6596 = vrot.slane %v6525, 1
      %v6597 = vsel %vm1830, %v6595, %v6596
      %v6598 = vrot.slane %v6526, 1
      %v6599 = vrot.slane %v6528, 1
      %v6600 = vsel %vm1830, %v6598, %v6599
      %v6601 = vrot.slane %v6527, 1
      %v6602 = vrot.slane %v6529, 1
      %v6603 = vsel %vm1830, %v6601, %v6602
      %v6604 = vrot.slane %v6530, 1
      %v6605 = vrot.slane %v6532, 1
      %v6606 = vsel %vm1830, %v6604, %v6605
      %v6607 = vrot.slane %v6531, 1
      %v6608 = vrot.slane %v6533, 1
      %v6609 = vsel %vm1830, %v6607, %v6608
      %v6610 = vrot.slane %v6534, 1
      %v6611 = vrot.slane %v6536, 1
      %v6612 = vsel %vm1830, %v6610, %v6611
      %v6613 = vrot.slane %v6535, 1
      %v6614 = vrot.slane %v6537, 1
      %v6615 = vsel %vm1830, %v6613, %v6614
      %v6616 = vrot.slane %v6538, 1
      %v6617 = vrot.slane %v6540, 1
      %v6618 = vsel %vm1830, %v6616, %v6617
      %v6619 = vrot.slane %v6539, 1
      %v6620 = vrot.slane %v6541, 1
      %v6621 = vsel %vm1830, %v6619, %v6620
      %6638 = vst [vmem:[#allocation3] sm:$0xff] %v6576
      %6639 = vst [vmem:[#allocation3 + $0x8] sm:$0xff] %v6579
      %6640 = vst [vmem:[#allocation3 + $0x10] sm:$0xff] %v6582
      %6641 = vst [vmem:[#allocation3 + $0x18] sm:$0xff] %v6585
      %6642 = vst [vmem:[#allocation3 + $0x20] sm:$0xff] %v6588
      %6643 = vst [vmem:[#allocation3 + $0x28] sm:$0xff] %v6591
      %6644 = vst [vmem:[#allocation3 + $0x30] sm:$0xff] %v6594
      %6645 = vst [vmem:[#allocation3 + $0x38] sm:$0xff] %v6597
      %6646 = vst [vmem:[#allocation3 + $0x40] sm:$0xff] %v6600
      %6647 = vst [vmem:[#allocation3 + $0x48] sm:$0xff] %v6603
      %6648 = vst [vmem:[#allocation3 + $0x50] sm:$0xff] %v6606
      %6649 = vst [vmem:[#allocation3 + $0x58] sm:$0xff] %v6609
      %6650 = vst [vmem:[#allocation3 + $0x60] sm:$0xff] %v6612
      %6651 = vst [vmem:[#allocation3 + $0x68] sm:$0xff] %v6615
      %6652 = vst [vmem:[#allocation3 + $0x70] sm:$0xff] %v6618
      %6653 = vst [vmem:[#allocation3 + $0x78] sm:$0xff] %v6621
      %v6654 = vld [vmem:[#allocation2] sm:$0xff]
      %v6655 = vld [vmem:[#allocation2 + $0x8] sm:$0xff]
      %v6656 = vld [vmem:[#allocation2 + $0x20] sm:$0xff]
      %v6657 = vld [vmem:[#allocation2 + $0x28] sm:$0xff]
      %v6658 = vld [vmem:[#allocation2 + $0x40] sm:$0xff]
      %v6659 = vld [vmem:[#allocation2 + $0x48] sm:$0xff]
      %v6660 = vld [vmem:[#allocation2 + $0x60] sm:$0xff]
      %v6661 = vld [vmem:[#allocation2 + $0x68] sm:$0xff]
      %v6662 = vld [vmem:[#allocation2 + $0x80] sm:$0xff]
      %v6663 = vld [vmem:[#allocation2 + $0x88] sm:$0xff]
      %v6664 = vld [vmem:[#allocation2 + $0xa0] sm:$0xff]
      %v6665 = vld [vmem:[#allocation2 + $0xa8] sm:$0xff]
      %v6666 = vld [vmem:[#allocation2 + $0xc0] sm:$0xff]
      %v6667 = vld [vmem:[#allocation2 + $0xc8] sm:$0xff]
      %v6668 = vld [vmem:[#allocation2 + $0xe0] sm:$0xff]
      %v6669 = vld [vmem:[#allocation2 + $0xe8] sm:$0xff]
      %v6670 = vld [vmem:[%s2] ss:$8 sm:$0x3]
      %v6672 = vlaneseq
      %v6673 = vshrl.u32 %v6672, 7
      %v6674 = vsub.s32 0, %v6673
      %v6675 = vrot.slane %v6670, %v6674
      %v6676 = vlaneseq
      %v6677 = vshrl.u32 %v6676, 7
      %v6678 = vsub.s32 1, %v6677
      %v6679 = vrot.slane %v6670, %v6678
      %v6682 = vmul.f32 %v6654, %v6675
      %v6683 = vmul.f32 %v6655, %v6679
      %v6684 = vmul.f32 %v6656, %v6675
      %v6685 = vmul.f32 %v6657, %v6679
      %v6686 = vmul.f32 %v6658, %v6675
      %v6687 = vmul.f32 %v6659, %v6679
      %v6688 = vmul.f32 %v6660, %v6675
      %v6689 = vmul.f32 %v6661, %v6679
      %v6690 = vmul.f32 %v6662, %v6675
      %v6691 = vmul.f32 %v6663, %v6679
      %v6692 = vmul.f32 %v6664, %v6675
      %v6693 = vmul.f32 %v6665, %v6679
      %v6694 = vmul.f32 %v6666, %v6675
      %v6695 = vmul.f32 %v6667, %v6679
      %v6696 = vmul.f32 %v6668, %v6675
      %v6697 = vmul.f32 %v6669, %v6679
      %v6698 = vadd.f32 %v6682, 0.0
      %v6699 = vadd.f32 %v6683, 0.0
      %v6700 = vadd.f32 %v6684, 0.0
      %v6701 = vadd.f32 %v6685, 0.0
      %v6702 = vadd.f32 %v6686, 0.0
      %v6703 = vadd.f32 %v6687, 0.0
      %v6704 = vadd.f32 %v6688, 0.0
      %v6705 = vadd.f32 %v6689, 0.0
      %v6706 = vadd.f32 %v6690, 0.0
      %v6707 = vadd.f32 %v6691, 0.0
      %v6708 = vadd.f32 %v6692, 0.0
      %v6709 = vadd.f32 %v6693, 0.0
      %v6710 = vadd.f32 %v6694, 0.0
      %v6711 = vadd.f32 %v6695, 0.0
      %v6712 = vadd.f32 %v6696, 0.0
      %v6713 = vadd.f32 %v6697, 0.0
      %s6714 = scalar_lea.vmem [#allocation2], 768
      %v6715 = vld [vmem:[%s6714] sm:$0xff]
      %v6716 = vld [vmem:[%s6714 + $0x8] sm:$0xff]
      %v6717 = vld [vmem:[%s6714 + $0x20] sm:$0xff]
      %v6718 = vld [vmem:[%s6714 + $0x28] sm:$0xff]
      %v6719 = vld [vmem:[%s6714 + $0x40] sm:$0xff]
      %v6720 = vld [vmem:[%s6714 + $0x48] sm:$0xff]
      %v6721 = vld [vmem:[%s6714 + $0x60] sm:$0xff]
      %v6722 = vld [vmem:[%s6714 + $0x68] sm:$0xff]
      %v6723 = vld [vmem:[%s6714 + $0x80] sm:$0xff]
      %v6724 = vld [vmem:[%s6714 + $0x88] sm:$0xff]
      %v6725 = vld [vmem:[%s6714 + $0xa0] sm:$0xff]
      %v6726 = vld [vmem:[%s6714 + $0xa8] sm:$0xff]
      %v6727 = vld [vmem:[%s6714 + $0xc0] sm:$0xff]
      %v6728 = vld [vmem:[%s6714 + $0xc8] sm:$0xff]
      %v6729 = vld [vmem:[%s6714 + $0xe0] sm:$0xff]
      %v6730 = vld [vmem:[%s6714 + $0xe8] sm:$0xff]
      %s6731 = scalar_lea.vmem %s2, 1
      %v6732 = vld [vmem:[%s6731] ss:$8 sm:$0x3]
      %v6734 = vlaneseq
      %v6735 = vshrl.u32 %v6734, 7
      %v6736 = vsub.s32 0, %v6735
      %v6737 = vrot.slane %v6732, %v6736
      %v6738 = vlaneseq
      %v6739 = vshrl.u32 %v6738, 7
      %v6740 = vsub.s32 1, %v6739
      %v6741 = vrot.slane %v6732, %v6740
      %v6744 = vmul.f32 %v6715, %v6737
      %v6745 = vmul.f32 %v6716, %v6741
      %v6746 = vmul.f32 %v6717, %v6737
      %v6747 = vmul.f32 %v6718, %v6741
      %v6748 = vmul.f32 %v6719, %v6737
      %v6749 = vmul.f32 %v6720, %v6741
      %v6750 = vmul.f32 %v6721, %v6737
      %v6751 = vmul.f32 %v6722, %v6741
      %v6752 = vmul.f32 %v6723, %v6737
      %v6753 = vmul.f32 %v6724, %v6741
      %v6754 = vmul.f32 %v6725, %v6737
      %v6755 = vmul.f32 %v6726, %v6741
      %v6756 = vmul.f32 %v6727, %v6737
      %v6757 = vmul.f32 %v6728, %v6741
      %v6758 = vmul.f32 %v6729, %v6737
      %v6759 = vmul.f32 %v6730, %v6741
      %v6760 = vadd.f32 %v6698, %v6744
      %v6761 = vadd.f32 %v6699, %v6745
      %v6762 = vadd.f32 %v6700, %v6746
      %v6763 = vadd.f32 %v6701, %v6747
      %v6764 = vadd.f32 %v6702, %v6748
      %v6765 = vadd.f32 %v6703, %v6749
      %v6766 = vadd.f32 %v6704, %v6750
      %v6767 = vadd.f32 %v6705, %v6751
      %v6768 = vadd.f32 %v6706, %v6752
      %v6769 = vadd.f32 %v6707, %v6753
      %v6770 = vadd.f32 %v6708, %v6754
      %v6771 = vadd.f32 %v6709, %v6755
      %v6772 = vadd.f32 %v6710, %v6756
      %v6773 = vadd.f32 %v6711, %v6757
      %v6774 = vadd.f32 %v6712, %v6758
      %v6775 = vadd.f32 %v6713, %v6759
      %s6776 = scalar_lea.vmem [#allocation2], 1536
      %v6777 = vld [vmem:[%s6776] sm:$0xff]
      %v6778 = vld [vmem:[%s6776 + $0x8] sm:$0xff]
      %v6779 = vld [vmem:[%s6776 + $0x20] sm:$0xff]
      %v6780 = vld [vmem:[%s6776 + $0x28] sm:$0xff]
      %v6781 = vld [vmem:[%s6776 + $0x40] sm:$0xff]
      %v6782 = vld [vmem:[%s6776 + $0x48] sm:$0xff]
      %v6783 = vld [vmem:[%s6776 + $0x60] sm:$0xff]
      %v6784 = vld [vmem:[%s6776 + $0x68] sm:$0xff]
      %v6785 = vld [vmem:[%s6776 + $0x80] sm:$0xff]
      %v6786 = vld [vmem:[%s6776 + $0x88] sm:$0xff]
      %v6787 = vld [vmem:[%s6776 + $0xa0] sm:$0xff]
      %v6788 = vld [vmem:[%s6776 + $0xa8] sm:$0xff]
      %v6789 = vld [vmem:[%s6776 + $0xc0] sm:$0xff]
      %v6790 = vld [vmem:[%s6776 + $0xc8] sm:$0xff]
      %v6791 = vld [vmem:[%s6776 + $0xe0] sm:$0xff]
      %v6792 = vld [vmem:[%s6776 + $0xe8] sm:$0xff]
      %s6793 = scalar_lea.vmem %s2, 2
      %v6794 = vld [vmem:[%s6793] ss:$8 sm:$0x3]
      %v6796 = vlaneseq
      %v6797 = vshrl.u32 %v6796, 7
      %v6798 = vsub.s32 0, %v6797
      %v6799 = vrot.slane %v6794, %v6798
      %v6800 = vlaneseq
      %v6801 = vshrl.u32 %v6800, 7
      %v6802 = vsub.s32 1, %v6801
      %v6803 = vrot.slane %v6794, %v6802
      %v6806 = vmul.f32 %v6777, %v6799
      %v6807 = vmul.f32 %v6778, %v6803
      %v6808 = vmul.f32 %v6779, %v6799
      %v6809 = vmul.f32 %v6780, %v6803
      %v6810 = vmul.f32 %v6781, %v6799
      %v6811 = vmul.f32 %v6782, %v6803
      %v6812 = vmul.f32 %v6783, %v6799
      %v6813 = vmul.f32 %v6784, %v6803
      %v6814 = vmul.f32 %v6785, %v6799
      %v6815 = vmul.f32 %v6786, %v6803
      %v6816 = vmul.f32 %v6787, %v6799
      %v6817 = vmul.f32 %v6788, %v6803
      %v6818 = vmul.f32 %v6789, %v6799
      %v6819 = vmul.f32 %v6790, %v6803
      %v6820 = vmul.f32 %v6791, %v6799
      %v6821 = vmul.f32 %v6792, %v6803
      %v6822 = vadd.f32 %v6760, %v6806
      %v6823 = vadd.f32 %v6761, %v6807
      %v6824 = vadd.f32 %v6762, %v6808
      %v6825 = vadd.f32 %v6763, %v6809
      %v6826 = vadd.f32 %v6764, %v6810
      %v6827 = vadd.f32 %v6765, %v6811
      %v6828 = vadd.f32 %v6766, %v6812
      %v6829 = vadd.f32 %v6767, %v6813
      %v6830 = vadd.f32 %v6768, %v6814
      %v6831 = vadd.f32 %v6769, %v6815
      %v6832 = vadd.f32 %v6770, %v6816
      %v6833 = vadd.f32 %v6771, %v6817
      %v6834 = vadd.f32 %v6772, %v6818
      %v6835 = vadd.f32 %v6773, %v6819
      %v6836 = vadd.f32 %v6774, %v6820
      %v6837 = vadd.f32 %v6775, %v6821
      %v6838 = vld [vmem:[#allocation2] sm:$0xfc]
      %v6839 = vld [vmem:[#allocation2 + $0x8] sm:$0xfc]
      %v6840 = vld [vmem:[#allocation2 + $0x10] sm:$0x3]
      %v6841 = vld [vmem:[#allocation2 + $0x18] sm:$0x3]
      %v6842 = vld [vmem:[#allocation2 + $0x20] sm:$0xfc]
      %v6843 = vld [vmem:[#allocation2 + $0x28] sm:$0xfc]
      %v6844 = vld [vmem:[#allocation2 + $0x30] sm:$0x3]
      %v6845 = vld [vmem:[#allocation2 + $0x38] sm:$0x3]
      %v6846 = vld [vmem:[#allocation2 + $0x40] sm:$0xfc]
      %v6847 = vld [vmem:[#allocation2 + $0x48] sm:$0xfc]
      %v6848 = vld [vmem:[#allocation2 + $0x50] sm:$0x3]
      %v6849 = vld [vmem:[#allocation2 + $0x58] sm:$0x3]
      %v6850 = vld [vmem:[#allocation2 + $0x60] sm:$0xfc]
      %v6851 = vld [vmem:[#allocation2 + $0x68] sm:$0xfc]
      %v6852 = vld [vmem:[#allocation2 + $0x70] sm:$0x3]
      %v6853 = vld [vmem:[#allocation2 + $0x78] sm:$0x3]
      %v6854 = vld [vmem:[#allocation2 + $0x80] sm:$0xfc]
      %v6855 = vld [vmem:[#allocation2 + $0x88] sm:$0xfc]
      %v6856 = vld [vmem:[#allocation2 + $0x90] sm:$0x3]
      %v6857 = vld [vmem:[#allocation2 + $0x98] sm:$0x3]
      %v6858 = vld [vmem:[#allocation2 + $0xa0] sm:$0xfc]
      %v6859 = vld [vmem:[#allocation2 + $0xa8] sm:$0xfc]
      %v6860 = vld [vmem:[#allocation2 + $0xb0] sm:$0x3]
      %v6861 = vld [vmem:[#allocation2 + $0xb8] sm:$0x3]
      %v6862 = vld [vmem:[#allocation2 + $0xc0] sm:$0xfc]
      %v6863 = vld [vmem:[#allocation2 + $0xc8] sm:$0xfc]
      %v6864 = vld [vmem:[#allocation2 + $0xd0] sm:$0x3]
      %v6865 = vld [vmem:[#allocation2 + $0xd8] sm:$0x3]
      %v6866 = vld [vmem:[#allocation2 + $0xe0] sm:$0xfc]
      %v6867 = vld [vmem:[#allocation2 + $0xe8] sm:$0xfc]
      %v6868 = vld [vmem:[#allocation2 + $0xf0] sm:$0x3]
      %v6869 = vld [vmem:[#allocation2 + $0xf8] sm:$0x3]
      %s6870 = scalar_lea.vmem %s2, 3
      %v6871 = vld [vmem:[%s6870] ss:$8 sm:$0x3]
      %v6873 = vlaneseq
      %v6874 = vshrl.u32 %v6873, 7
      %v6875 = vsub.s32 0, %v6874
      %v6876 = vrot.slane %v6871, %v6875
      %v6877 = vlaneseq
      %v6878 = vshrl.u32 %v6877, 7
      %v6879 = vsub.s32 1, %v6878
      %v6880 = vrot.slane %v6871, %v6879
      %v6883 = vmul.f32 %v6838, %v6876
      %v6884 = vmul.f32 %v6839, %v6880
      %v6885 = vmul.f32 %v6840, %v6876
      %v6886 = vmul.f32 %v6841, %v6880
      %v6887 = vmul.f32 %v6842, %v6876
      %v6888 = vmul.f32 %v6843, %v6880
      %v6889 = vmul.f32 %v6844, %v6876
      %v6890 = vmul.f32 %v6845, %v6880
      %v6891 = vmul.f32 %v6846, %v6876
      %v6892 = vmul.f32 %v6847, %v6880
      %v6893 = vmul.f32 %v6848, %v6876
      %v6894 = vmul.f32 %v6849, %v6880
      %v6895 = vmul.f32 %v6850, %v6876
      %v6896 = vmul.f32 %v6851, %v6880
      %v6897 = vmul.f32 %v6852, %v6876
      %v6898 = vmul.f32 %v6853, %v6880
      %v6899 = vmul.f32 %v6854, %v6876
      %v6900 = vmul.f32 %v6855, %v6880
      %v6901 = vmul.f32 %v6856, %v6876
      %v6902 = vmul.f32 %v6857, %v6880
      %v6903 = vmul.f32 %v6858, %v6876
      %v6904 = vmul.f32 %v6859, %v6880
      %v6905 = vmul.f32 %v6860, %v6876
      %v6906 = vmul.f32 %v6861, %v6880
      %v6907 = vmul.f32 %v6862, %v6876
      %v6908 = vmul.f32 %v6863, %v6880
      %v6909 = vmul.f32 %v6864, %v6876
      %v6910 = vmul.f32 %v6865, %v6880
      %v6911 = vmul.f32 %v6866, %v6876
      %v6912 = vmul.f32 %v6867, %v6880
      %v6913 = vmul.f32 %v6868, %v6876
      %v6914 = vmul.f32 %v6869, %v6880
      %v6947 = vrot.slane %v6883, 2
      %v6948 = vrot.slane %v6885, 2
      %v6949 = vsel %vm2494, %v6947, %v6948
      %v6950 = vrot.slane %v6884, 2
      %v6951 = vrot.slane %v6886, 2
      %v6952 = vsel %vm2494, %v6950, %v6951
      %v6953 = vrot.slane %v6887, 2
      %v6954 = vrot.slane %v6889, 2
      %v6955 = vsel %vm2494, %v6953, %v6954
      %v6956 = vrot.slane %v6888, 2
      %v6957 = vrot.slane %v6890, 2
      %v6958 = vsel %vm2494, %v6956, %v6957
      %v6959 = vrot.slane %v6891, 2
      %v6960 = vrot.slane %v6893, 2
      %v6961 = vsel %vm2494, %v6959, %v6960
      %v6962 = vrot.slane %v6892, 2
      %v6963 = vrot.slane %v6894, 2
      %v6964 = vsel %vm2494, %v6962, %v6963
      %v6965 = vrot.slane %v6895, 2
      %v6966 = vrot.slane %v6897, 2
      %v6967 = vsel %vm2494, %v6965, %v6966
      %v6968 = vrot.slane %v6896, 2
      %v6969 = vrot.slane %v6898, 2
      %v6970 = vsel %vm2494, %v6968, %v6969
      %v6971 = vrot.slane %v6899, 2
      %v6972 = vrot.slane %v6901, 2
      %v6973 = vsel %vm2494, %v6971, %v6972
      %v6974 = vrot.slane %v6900, 2
      %v6975 = vrot.slane %v6902, 2
      %v6976 = vsel %vm2494, %v6974, %v6975
      %v6977 = vrot.slane %v6903, 2
      %v6978 = vrot.slane %v6905, 2
      %v6979 = vsel %vm2494, %v6977, %v6978
      %v6980 = vrot.slane %v6904, 2
      %v6981 = vrot.slane %v6906, 2
      %v6982 = vsel %vm2494, %v6980, %v6981
      %v6983 = vrot.slane %v6907, 2
      %v6984 = vrot.slane %v6909, 2
      %v6985 = vsel %vm2494, %v6983, %v6984
      %v6986 = vrot.slane %v6908, 2
      %v6987 = vrot.slane %v6910, 2
      %v6988 = vsel %vm2494, %v6986, %v6987
      %v6989 = vrot.slane %v6911, 2
      %v6990 = vrot.slane %v6913, 2
      %v6991 = vsel %vm2494, %v6989, %v6990
      %v6992 = vrot.slane %v6912, 2
      %v6993 = vrot.slane %v6914, 2
      %v6994 = vsel %vm2494, %v6992, %v6993
      %v7011 = vadd.f32 %v6822, %v6949
      %v7012 = vadd.f32 %v6823, %v6952
      %v7013 = vadd.f32 %v6824, %v6955
      %v7014 = vadd.f32 %v6825, %v6958
      %v7015 = vadd.f32 %v6826, %v6961
      %v7016 = vadd.f32 %v6827, %v6964
      %v7017 = vadd.f32 %v6828, %v6967
      %v7018 = vadd.f32 %v6829, %v6970
      %v7019 = vadd.f32 %v6830, %v6973
      %v7020 = vadd.f32 %v6831, %v6976
      %v7021 = vadd.f32 %v6832, %v6979
      %v7022 = vadd.f32 %v6833, %v6982
      %v7023 = vadd.f32 %v6834, %v6985
      %v7024 = vadd.f32 %v6835, %v6988
      %v7025 = vadd.f32 %v6836, %v6991
      %v7026 = vadd.f32 %v6837, %v6994
      %v7027 = vld [vmem:[%s6714] sm:$0xfc]
      %v7028 = vld [vmem:[%s6714 + $0x8] sm:$0xfc]
      %v7029 = vld [vmem:[%s6714 + $0x10] sm:$0x3]
      %v7030 = vld [vmem:[%s6714 + $0x18] sm:$0x3]
      %v7031 = vld [vmem:[%s6714 + $0x20] sm:$0xfc]
      %v7032 = vld [vmem:[%s6714 + $0x28] sm:$0xfc]
      %v7033 = vld [vmem:[%s6714 + $0x30] sm:$0x3]
      %v7034 = vld [vmem:[%s6714 + $0x38] sm:$0x3]
      %v7035 = vld [vmem:[%s6714 + $0x40] sm:$0xfc]
      %v7036 = vld [vmem:[%s6714 + $0x48] sm:$0xfc]
      %v7037 = vld [vmem:[%s6714 + $0x50] sm:$0x3]
      %v7038 = vld [vmem:[%s6714 + $0x58] sm:$0x3]
      %v7039 = vld [vmem:[%s6714 + $0x60] sm:$0xfc]
      %v7040 = vld [vmem:[%s6714 + $0x68] sm:$0xfc]
      %v7041 = vld [vmem:[%s6714 + $0x70] sm:$0x3]
      %v7042 = vld [vmem:[%s6714 + $0x78] sm:$0x3]
      %v7043 = vld [vmem:[%s6714 + $0x80] sm:$0xfc]
      %v7044 = vld [vmem:[%s6714 + $0x88] sm:$0xfc]
      %v7045 = vld [vmem:[%s6714 + $0x90] sm:$0x3]
      %v7046 = vld [vmem:[%s6714 + $0x98] sm:$0x3]
      %v7047 = vld [vmem:[%s6714 + $0xa0] sm:$0xfc]
      %v7048 = vld [vmem:[%s6714 + $0xa8] sm:$0xfc]
      %v7049 = vld [vmem:[%s6714 + $0xb0] sm:$0x3]
      %v7050 = vld [vmem:[%s6714 + $0xb8] sm:$0x3]
      %v7051 = vld [vmem:[%s6714 + $0xc0] sm:$0xfc]
      %v7052 = vld [vmem:[%s6714 + $0xc8] sm:$0xfc]
      %v7053 = vld [vmem:[%s6714 + $0xd0] sm:$0x3]
      %v7054 = vld [vmem:[%s6714 + $0xd8] sm:$0x3]
      %v7055 = vld [vmem:[%s6714 + $0xe0] sm:$0xfc]
      %v7056 = vld [vmem:[%s6714 + $0xe8] sm:$0xfc]
      %v7057 = vld [vmem:[%s6714 + $0xf0] sm:$0x3]
      %v7058 = vld [vmem:[%s6714 + $0xf8] sm:$0x3]
      %s7059 = scalar_lea.vmem %s2, 4
      %v7060 = vld [vmem:[%s7059] ss:$8 sm:$0x3]
      %v7062 = vlaneseq
      %v7063 = vshrl.u32 %v7062, 7
      %v7064 = vsub.s32 0, %v7063
      %v7065 = vrot.slane %v7060, %v7064
      %v7066 = vlaneseq
      %v7067 = vshrl.u32 %v7066, 7
      %v7068 = vsub.s32 1, %v7067
      %v7069 = vrot.slane %v7060, %v7068
      %v7072 = vmul.f32 %v7027, %v7065
      %v7073 = vmul.f32 %v7028, %v7069
      %v7074 = vmul.f32 %v7029, %v7065
      %v7075 = vmul.f32 %v7030, %v7069
      %v7076 = vmul.f32 %v7031, %v7065
      %v7077 = vmul.f32 %v7032, %v7069
      %v7078 = vmul.f32 %v7033, %v7065
      %v7079 = vmul.f32 %v7034, %v7069
      %v7080 = vmul.f32 %v7035, %v7065
      %v7081 = vmul.f32 %v7036, %v7069
      %v7082 = vmul.f32 %v7037, %v7065
      %v7083 = vmul.f32 %v7038, %v7069
      %v7084 = vmul.f32 %v7039, %v7065
      %v7085 = vmul.f32 %v7040, %v7069
      %v7086 = vmul.f32 %v7041, %v7065
      %v7087 = vmul.f32 %v7042, %v7069
      %v7088 = vmul.f32 %v7043, %v7065
      %v7089 = vmul.f32 %v7044, %v7069
      %v7090 = vmul.f32 %v7045, %v7065
      %v7091 = vmul.f32 %v7046, %v7069
      %v7092 = vmul.f32 %v7047, %v7065
      %v7093 = vmul.f32 %v7048, %v7069
      %v7094 = vmul.f32 %v7049, %v7065
      %v7095 = vmul.f32 %v7050, %v7069
      %v7096 = vmul.f32 %v7051, %v7065
      %v7097 = vmul.f32 %v7052, %v7069
      %v7098 = vmul.f32 %v7053, %v7065
      %v7099 = vmul.f32 %v7054, %v7069
      %v7100 = vmul.f32 %v7055, %v7065
      %v7101 = vmul.f32 %v7056, %v7069
      %v7102 = vmul.f32 %v7057, %v7065
      %v7103 = vmul.f32 %v7058, %v7069
      %v7136 = vrot.slane %v7072, 2
      %v7137 = vrot.slane %v7074, 2
      %v7138 = vsel %vm2494, %v7136, %v7137
      %v7139 = vrot.slane %v7073, 2
      %v7140 = vrot.slane %v7075, 2
      %v7141 = vsel %vm2494, %v7139, %v7140
      %v7142 = vrot.slane %v7076, 2
      %v7143 = vrot.slane %v7078, 2
      %v7144 = vsel %vm2494, %v7142, %v7143
      %v7145 = vrot.slane %v7077, 2
      %v7146 = vrot.slane %v7079, 2
      %v7147 = vsel %vm2494, %v7145, %v7146
      %v7148 = vrot.slane %v7080, 2
      %v7149 = vrot.slane %v7082, 2
      %v7150 = vsel %vm2494, %v7148, %v7149
      %v7151 = vrot.slane %v7081, 2
      %v7152 = vrot.slane %v7083, 2
      %v7153 = vsel %vm2494, %v7151, %v7152
      %v7154 = vrot.slane %v7084, 2
      %v7155 = vrot.slane %v7086, 2
      %v7156 = vsel %vm2494, %v7154, %v7155
      %v7157 = vrot.slane %v7085, 2
      %v7158 = vrot.slane %v7087, 2
      %v7159 = vsel %vm2494, %v7157, %v7158
      %v7160 = vrot.slane %v7088, 2
      %v7161 = vrot.slane %v7090, 2
      %v7162 = vsel %vm2494, %v7160, %v7161
      %v7163 = vrot.slane %v7089, 2
      %v7164 = vrot.slane %v7091, 2
      %v7165 = vsel %vm2494, %v7163, %v7164
      %v7166 = vrot.slane %v7092, 2
      %v7167 = vrot.slane %v7094, 2
      %v7168 = vsel %vm2494, %v7166, %v7167
      %v7169 = vrot.slane %v7093, 2
      %v7170 = vrot.slane %v7095, 2
      %v7171 = vsel %vm2494, %v7169, %v7170
      %v7172 = vrot.slane %v7096, 2
      %v7173 = vrot.slane %v7098, 2
      %v7174 = vsel %vm2494, %v7172, %v7173
      %v7175 = vrot.slane %v7097, 2
      %v7176 = vrot.slane %v7099, 2
      %v7177 = vsel %vm2494, %v7175, %v7176
      %v7178 = vrot.slane %v7100, 2
      %v7179 = vrot.slane %v7102, 2
      %v7180 = vsel %vm2494, %v7178, %v7179
      %v7181 = vrot.slane %v7101, 2
      %v7182 = vrot.slane %v7103, 2
      %v7183 = vsel %vm2494, %v7181, %v7182
      %v7200 = vadd.f32 %v7011, %v7138
      %v7201 = vadd.f32 %v7012, %v7141
      %v7202 = vadd.f32 %v7013, %v7144
      %v7203 = vadd.f32 %v7014, %v7147
      %v7204 = vadd.f32 %v7015, %v7150
      %v7205 = vadd.f32 %v7016, %v7153
      %v7206 = vadd.f32 %v7017, %v7156
      %v7207 = vadd.f32 %v7018, %v7159
      %v7208 = vadd.f32 %v7019, %v7162
      %v7209 = vadd.f32 %v7020, %v7165
      %v7210 = vadd.f32 %v7021, %v7168
      %v7211 = vadd.f32 %v7022, %v7171
      %v7212 = vadd.f32 %v7023, %v7174
      %v7213 = vadd.f32 %v7024, %v7177
      %v7214 = vadd.f32 %v7025, %v7180
      %v7215 = vadd.f32 %v7026, %v7183
      %v7216 = vld [vmem:[%s6776] sm:$0xfc]
      %v7217 = vld [vmem:[%s6776 + $0x8] sm:$0xfc]
      %v7218 = vld [vmem:[%s6776 + $0x10] sm:$0x3]
      %v7219 = vld [vmem:[%s6776 + $0x18] sm:$0x3]
      %v7220 = vld [vmem:[%s6776 + $0x20] sm:$0xfc]
      %v7221 = vld [vmem:[%s6776 + $0x28] sm:$0xfc]
      %v7222 = vld [vmem:[%s6776 + $0x30] sm:$0x3]
      %v7223 = vld [vmem:[%s6776 + $0x38] sm:$0x3]
      %v7224 = vld [vmem:[%s6776 + $0x40] sm:$0xfc]
      %v7225 = vld [vmem:[%s6776 + $0x48] sm:$0xfc]
      %v7226 = vld [vmem:[%s6776 + $0x50] sm:$0x3]
      %v7227 = vld [vmem:[%s6776 + $0x58] sm:$0x3]
      %v7228 = vld [vmem:[%s6776 + $0x60] sm:$0xfc]
      %v7229 = vld [vmem:[%s6776 + $0x68] sm:$0xfc]
      %v7230 = vld [vmem:[%s6776 + $0x70] sm:$0x3]
      %v7231 = vld [vmem:[%s6776 + $0x78] sm:$0x3]
      %v7232 = vld [vmem:[%s6776 + $0x80] sm:$0xfc]
      %v7233 = vld [vmem:[%s6776 + $0x88] sm:$0xfc]
      %v7234 = vld [vmem:[%s6776 + $0x90] sm:$0x3]
      %v7235 = vld [vmem:[%s6776 + $0x98] sm:$0x3]
      %v7236 = vld [vmem:[%s6776 + $0xa0] sm:$0xfc]
      %v7237 = vld [vmem:[%s6776 + $0xa8] sm:$0xfc]
      %v7238 = vld [vmem:[%s6776 + $0xb0] sm:$0x3]
      %v7239 = vld [vmem:[%s6776 + $0xb8] sm:$0x3]
      %v7240 = vld [vmem:[%s6776 + $0xc0] sm:$0xfc]
      %v7241 = vld [vmem:[%s6776 + $0xc8] sm:$0xfc]
      %v7242 = vld [vmem:[%s6776 + $0xd0] sm:$0x3]
      %v7243 = vld [vmem:[%s6776 + $0xd8] sm:$0x3]
      %v7244 = vld [vmem:[%s6776 + $0xe0] sm:$0xfc]
      %v7245 = vld [vmem:[%s6776 + $0xe8] sm:$0xfc]
      %v7246 = vld [vmem:[%s6776 + $0xf0] sm:$0x3]
      %v7247 = vld [vmem:[%s6776 + $0xf8] sm:$0x3]
      %s7248 = scalar_lea.vmem %s2, 5
      %v7249 = vld [vmem:[%s7248] ss:$8 sm:$0x3]
      %v7251 = vlaneseq
      %v7252 = vshrl.u32 %v7251, 7
      %v7253 = vsub.s32 0, %v7252
      %v7254 = vrot.slane %v7249, %v7253
      %v7255 = vlaneseq
      %v7256 = vshrl.u32 %v7255, 7
      %v7257 = vsub.s32 1, %v7256
      %v7258 = vrot.slane %v7249, %v7257
      %v7261 = vmul.f32 %v7216, %v7254
      %v7262 = vmul.f32 %v7217, %v7258
      %v7263 = vmul.f32 %v7218, %v7254
      %v7264 = vmul.f32 %v7219, %v7258
      %v7265 = vmul.f32 %v7220, %v7254
      %v7266 = vmul.f32 %v7221, %v7258
      %v7267 = vmul.f32 %v7222, %v7254
      %v7268 = vmul.f32 %v7223, %v7258
      %v7269 = vmul.f32 %v7224, %v7254
      %v7270 = vmul.f32 %v7225, %v7258
      %v7271 = vmul.f32 %v7226, %v7254
      %v7272 = vmul.f32 %v7227, %v7258
      %v7273 = vmul.f32 %v7228, %v7254
      %v7274 = vmul.f32 %v7229, %v7258
      %v7275 = vmul.f32 %v7230, %v7254
      %v7276 = vmul.f32 %v7231, %v7258
      %v7277 = vmul.f32 %v7232, %v7254
      %v7278 = vmul.f32 %v7233, %v7258
      %v7279 = vmul.f32 %v7234, %v7254
      %v7280 = vmul.f32 %v7235, %v7258
      %v7281 = vmul.f32 %v7236, %v7254
      %v7282 = vmul.f32 %v7237, %v7258
      %v7283 = vmul.f32 %v7238, %v7254
      %v7284 = vmul.f32 %v7239, %v7258
      %v7285 = vmul.f32 %v7240, %v7254
      %v7286 = vmul.f32 %v7241, %v7258
      %v7287 = vmul.f32 %v7242, %v7254
      %v7288 = vmul.f32 %v7243, %v7258
      %v7289 = vmul.f32 %v7244, %v7254
      %v7290 = vmul.f32 %v7245, %v7258
      %v7291 = vmul.f32 %v7246, %v7254
      %v7292 = vmul.f32 %v7247, %v7258
      %v7325 = vrot.slane %v7261, 2
      %v7326 = vrot.slane %v7263, 2
      %v7327 = vsel %vm2494, %v7325, %v7326
      %v7328 = vrot.slane %v7262, 2
      %v7329 = vrot.slane %v7264, 2
      %v7330 = vsel %vm2494, %v7328, %v7329
      %v7331 = vrot.slane %v7265, 2
      %v7332 = vrot.slane %v7267, 2
      %v7333 = vsel %vm2494, %v7331, %v7332
      %v7334 = vrot.slane %v7266, 2
      %v7335 = vrot.slane %v7268, 2
      %v7336 = vsel %vm2494, %v7334, %v7335
      %v7337 = vrot.slane %v7269, 2
      %v7338 = vrot.slane %v7271, 2
      %v7339 = vsel %vm2494, %v7337, %v7338
      %v7340 = vrot.slane %v7270, 2
      %v7341 = vrot.slane %v7272, 2
      %v7342 = vsel %vm2494, %v7340, %v7341
      %v7343 = vrot.slane %v7273, 2
      %v7344 = vrot.slane %v7275, 2
      %v7345 = vsel %vm2494, %v7343, %v7344
      %v7346 = vrot.slane %v7274, 2
      %v7347 = vrot.slane %v7276, 2
      %v7348 = vsel %vm2494, %v7346, %v7347
      %v7349 = vrot.slane %v7277, 2
      %v7350 = vrot.slane %v7279, 2
      %v7351 = vsel %vm2494, %v7349, %v7350
      %v7352 = vrot.slane %v7278, 2
      %v7353 = vrot.slane %v7280, 2
      %v7354 = vsel %vm2494, %v7352, %v7353
      %v7355 = vrot.slane %v7281, 2
      %v7356 = vrot.slane %v7283, 2
      %v7357 = vsel %vm2494, %v7355, %v7356
      %v7358 = vrot.slane %v7282, 2
      %v7359 = vrot.slane %v7284, 2
      %v7360 = vsel %vm2494, %v7358, %v7359
      %v7361 = vrot.slane %v7285, 2
      %v7362 = vrot.slane %v7287, 2
      %v7363 = vsel %vm2494, %v7361, %v7362
      %v7364 = vrot.slane %v7286, 2
      %v7365 = vrot.slane %v7288, 2
      %v7366 = vsel %vm2494, %v7364, %v7365
      %v7367 = vrot.slane %v7289, 2
      %v7368 = vrot.slane %v7291, 2
      %v7369 = vsel %vm2494, %v7367, %v7368
      %v7370 = vrot.slane %v7290, 2
      %v7371 = vrot.slane %v7292, 2
      %v7372 = vsel %vm2494, %v7370, %v7371
      %v7389 = vadd.f32 %v7200, %v7327
      %v7390 = vadd.f32 %v7201, %v7330
      %v7391 = vadd.f32 %v7202, %v7333
      %v7392 = vadd.f32 %v7203, %v7336
      %v7393 = vadd.f32 %v7204, %v7339
      %v7394 = vadd.f32 %v7205, %v7342
      %v7395 = vadd.f32 %v7206, %v7345
      %v7396 = vadd.f32 %v7207, %v7348
      %v7397 = vadd.f32 %v7208, %v7351
      %v7398 = vadd.f32 %v7209, %v7354
      %v7399 = vadd.f32 %v7210, %v7357
      %v7400 = vadd.f32 %v7211, %v7360
      %v7401 = vadd.f32 %v7212, %v7363
      %v7402 = vadd.f32 %v7213, %v7366
      %v7403 = vadd.f32 %v7214, %v7369
      %v7404 = vadd.f32 %v7215, %v7372
      %v7405 = vld [vmem:[#allocation2] sm:$0xf0]
      %v7406 = vld [vmem:[#allocation2 + $0x8] sm:$0xf0]
      %v7407 = vld [vmem:[#allocation2 + $0x10] sm:$0xf]
      %v7408 = vld [vmem:[#allocation2 + $0x18] sm:$0xf]
      %v7409 = vld [vmem:[#allocation2 + $0x20] sm:$0xf0]
      %v7410 = vld [vmem:[#allocation2 + $0x28] sm:$0xf0]
      %v7411 = vld [vmem:[#allocation2 + $0x30] sm:$0xf]
      %v7412 = vld [vmem:[#allocation2 + $0x38] sm:$0xf]
      %v7413 = vld [vmem:[#allocation2 + $0x40] sm:$0xf0]
      %v7414 = vld [vmem:[#allocation2 + $0x48] sm:$0xf0]
      %v7415 = vld [vmem:[#allocation2 + $0x50] sm:$0xf]
      %v7416 = vld [vmem:[#allocation2 + $0x58] sm:$0xf]
      %v7417 = vld [vmem:[#allocation2 + $0x60] sm:$0xf0]
      %v7418 = vld [vmem:[#allocation2 + $0x68] sm:$0xf0]
      %v7419 = vld [vmem:[#allocation2 + $0x70] sm:$0xf]
      %v7420 = vld [vmem:[#allocation2 + $0x78] sm:$0xf]
      %v7421 = vld [vmem:[#allocation2 + $0x80] sm:$0xf0]
      %v7422 = vld [vmem:[#allocation2 + $0x88] sm:$0xf0]
      %v7423 = vld [vmem:[#allocation2 + $0x90] sm:$0xf]
      %v7424 = vld [vmem:[#allocation2 + $0x98] sm:$0xf]
      %v7425 = vld [vmem:[#allocation2 + $0xa0] sm:$0xf0]
      %v7426 = vld [vmem:[#allocation2 + $0xa8] sm:$0xf0]
      %v7427 = vld [vmem:[#allocation2 + $0xb0] sm:$0xf]
      %v7428 = vld [vmem:[#allocation2 + $0xb8] sm:$0xf]
      %v7429 = vld [vmem:[#allocation2 + $0xc0] sm:$0xf0]
      %v7430 = vld [vmem:[#allocation2 + $0xc8] sm:$0xf0]
      %v7431 = vld [vmem:[#allocation2 + $0xd0] sm:$0xf]
      %v7432 = vld [vmem:[#allocation2 + $0xd8] sm:$0xf]
      %v7433 = vld [vmem:[#allocation2 + $0xe0] sm:$0xf0]
      %v7434 = vld [vmem:[#allocation2 + $0xe8] sm:$0xf0]
      %v7435 = vld [vmem:[#allocation2 + $0xf0] sm:$0xf]
      %v7436 = vld [vmem:[#allocation2 + $0xf8] sm:$0xf]
      %s7437 = scalar_lea.vmem %s2, 6
      %v7438 = vld [vmem:[%s7437] ss:$8 sm:$0x3]
      %v7440 = vlaneseq
      %v7441 = vshrl.u32 %v7440, 7
      %v7442 = vsub.s32 0, %v7441
      %v7443 = vrot.slane %v7438, %v7442
      %v7444 = vlaneseq
      %v7445 = vshrl.u32 %v7444, 7
      %v7446 = vsub.s32 1, %v7445
      %v7447 = vrot.slane %v7438, %v7446
      %v7450 = vmul.f32 %v7405, %v7443
      %v7451 = vmul.f32 %v7406, %v7447
      %v7452 = vmul.f32 %v7407, %v7443
      %v7453 = vmul.f32 %v7408, %v7447
      %v7454 = vmul.f32 %v7409, %v7443
      %v7455 = vmul.f32 %v7410, %v7447
      %v7456 = vmul.f32 %v7411, %v7443
      %v7457 = vmul.f32 %v7412, %v7447
      %v7458 = vmul.f32 %v7413, %v7443
      %v7459 = vmul.f32 %v7414, %v7447
      %v7460 = vmul.f32 %v7415, %v7443
      %v7461 = vmul.f32 %v7416, %v7447
      %v7462 = vmul.f32 %v7417, %v7443
      %v7463 = vmul.f32 %v7418, %v7447
      %v7464 = vmul.f32 %v7419, %v7443
      %v7465 = vmul.f32 %v7420, %v7447
      %v7466 = vmul.f32 %v7421, %v7443
      %v7467 = vmul.f32 %v7422, %v7447
      %v7468 = vmul.f32 %v7423, %v7443
      %v7469 = vmul.f32 %v7424, %v7447
      %v7470 = vmul.f32 %v7425, %v7443
      %v7471 = vmul.f32 %v7426, %v7447
      %v7472 = vmul.f32 %v7427, %v7443
      %v7473 = vmul.f32 %v7428, %v7447
      %v7474 = vmul.f32 %v7429, %v7443
      %v7475 = vmul.f32 %v7430, %v7447
      %v7476 = vmul.f32 %v7431, %v7443
      %v7477 = vmul.f32 %v7432, %v7447
      %v7478 = vmul.f32 %v7433, %v7443
      %v7479 = vmul.f32 %v7434, %v7447
      %v7480 = vmul.f32 %v7435, %v7443
      %v7481 = vmul.f32 %v7436, %v7447
      %vm7514 = vcmask 1043456
      %v7515 = vrot.slane %v7450, 4
      %v7516 = vrot.slane %v7452, 4
      %v7517 = vsel %vm7514, %v7515, %v7516
      %v7518 = vrot.slane %v7451, 4
      %v7519 = vrot.slane %v7453, 4
      %v7520 = vsel %vm7514, %v7518, %v7519
      %v7521 = vrot.slane %v7454, 4
      %v7522 = vrot.slane %v7456, 4
      %v7523 = vsel %vm7514, %v7521, %v7522
      %v7524 = vrot.slane %v7455, 4
      %v7525 = vrot.slane %v7457, 4
      %v7526 = vsel %vm7514, %v7524, %v7525
      %v7527 = vrot.slane %v7458, 4
      %v7528 = vrot.slane %v7460, 4
      %v7529 = vsel %vm7514, %v7527, %v7528
      %v7530 = vrot.slane %v7459, 4
      %v7531 = vrot.slane %v7461, 4
      %v7532 = vsel %vm7514, %v7530, %v7531
      %v7533 = vrot.slane %v7462, 4
      %v7534 = vrot.slane %v7464, 4
      %v7535 = vsel %vm7514, %v7533, %v7534
      %v7536 = vrot.slane %v7463, 4
      %v7537 = vrot.slane %v7465, 4
      %v7538 = vsel %vm7514, %v7536, %v7537
      %v7539 = vrot.slane %v7466, 4
      %v7540 = vrot.slane %v7468, 4
      %v7541 = vsel %vm7514, %v7539, %v7540
      %v7542 = vrot.slane %v7467, 4
      %v7543 = vrot.slane %v7469, 4
      %v7544 = vsel %vm7514, %v7542, %v7543
      %v7545 = vrot.slane %v7470, 4
      %v7546 = vrot.slane %v7472, 4
      %v7547 = vsel %vm7514, %v7545, %v7546
      %v7548 = vrot.slane %v7471, 4
      %v7549 = vrot.slane %v7473, 4
      %v7550 = vsel %vm7514, %v7548, %v7549
      %v7551 = vrot.slane %v7474, 4
      %v7552 = vrot.slane %v7476, 4
      %v7553 = vsel %vm7514, %v7551, %v7552
      %v7554 = vrot.slane %v7475, 4
      %v7555 = vrot.slane %v7477, 4
      %v7556 = vsel %vm7514, %v7554, %v7555
      %v7557 = vrot.slane %v7478, 4
      %v7558 = vrot.slane %v7480, 4
      %v7559 = vsel %vm7514, %v7557, %v7558
      %v7560 = vrot.slane %v7479, 4
      %v7561 = vrot.slane %v7481, 4
      %v7562 = vsel %vm7514, %v7560, %v7561
      %v7579 = vadd.f32 %v7389, %v7517
      %v7580 = vadd.f32 %v7390, %v7520
      %v7581 = vadd.f32 %v7391, %v7523
      %v7582 = vadd.f32 %v7392, %v7526
      %v7583 = vadd.f32 %v7393, %v7529
      %v7584 = vadd.f32 %v7394, %v7532
      %v7585 = vadd.f32 %v7395, %v7535
      %v7586 = vadd.f32 %v7396, %v7538
      %v7587 = vadd.f32 %v7397, %v7541
      %v7588 = vadd.f32 %v7398, %v7544
      %v7589 = vadd.f32 %v7399, %v7547
      %v7590 = vadd.f32 %v7400, %v7550
      %v7591 = vadd.f32 %v7401, %v7553
      %v7592 = vadd.f32 %v7402, %v7556
      %v7593 = vadd.f32 %v7403, %v7559
      %v7594 = vadd.f32 %v7404, %v7562
      %v7595 = vld [vmem:[%s6714] sm:$0xf0]
      %v7596 = vld [vmem:[%s6714 + $0x8] sm:$0xf0]
      %v7597 = vld [vmem:[%s6714 + $0x10] sm:$0xf]
      %v7598 = vld [vmem:[%s6714 + $0x18] sm:$0xf]
      %v7599 = vld [vmem:[%s6714 + $0x20] sm:$0xf0]
      %v7600 = vld [vmem:[%s6714 + $0x28] sm:$0xf0]
      %v7601 = vld [vmem:[%s6714 + $0x30] sm:$0xf]
      %v7602 = vld [vmem:[%s6714 + $0x38] sm:$0xf]
      %v7603 = vld [vmem:[%s6714 + $0x40] sm:$0xf0]
      %v7604 = vld [vmem:[%s6714 + $0x48] sm:$0xf0]
      %v7605 = vld [vmem:[%s6714 + $0x50] sm:$0xf]
      %v7606 = vld [vmem:[%s6714 + $0x58] sm:$0xf]
      %v7607 = vld [vmem:[%s6714 + $0x60] sm:$0xf0]
      %v7608 = vld [vmem:[%s6714 + $0x68] sm:$0xf0]
      %v7609 = vld [vmem:[%s6714 + $0x70] sm:$0xf]
      %v7610 = vld [vmem:[%s6714 + $0x78] sm:$0xf]
      %v7611 = vld [vmem:[%s6714 + $0x80] sm:$0xf0]
      %v7612 = vld [vmem:[%s6714 + $0x88] sm:$0xf0]
      %v7613 = vld [vmem:[%s6714 + $0x90] sm:$0xf]
      %v7614 = vld [vmem:[%s6714 + $0x98] sm:$0xf]
      %v7615 = vld [vmem:[%s6714 + $0xa0] sm:$0xf0]
      %v7616 = vld [vmem:[%s6714 + $0xa8] sm:$0xf0]
      %v7617 = vld [vmem:[%s6714 + $0xb0] sm:$0xf]
      %v7618 = vld [vmem:[%s6714 + $0xb8] sm:$0xf]
      %v7619 = vld [vmem:[%s6714 + $0xc0] sm:$0xf0]
      %v7620 = vld [vmem:[%s6714 + $0xc8] sm:$0xf0]
      %v7621 = vld [vmem:[%s6714 + $0xd0] sm:$0xf]
      %v7622 = vld [vmem:[%s6714 + $0xd8] sm:$0xf]
      %v7623 = vld [vmem:[%s6714 + $0xe0] sm:$0xf0]
      %v7624 = vld [vmem:[%s6714 + $0xe8] sm:$0xf0]
      %v7625 = vld [vmem:[%s6714 + $0xf0] sm:$0xf]
      %v7626 = vld [vmem:[%s6714 + $0xf8] sm:$0xf]
      %s7627 = scalar_lea.vmem %s2, 7
      %v7628 = vld [vmem:[%s7627] ss:$8 sm:$0x3]
      %v7630 = vlaneseq
      %v7631 = vshrl.u32 %v7630, 7
      %v7632 = vsub.s32 0, %v7631
      %v7633 = vrot.slane %v7628, %v7632
      %v7634 = vlaneseq
      %v7635 = vshrl.u32 %v7634, 7
      %v7636 = vsub.s32 1, %v7635
      %v7637 = vrot.slane %v7628, %v7636
      %v7640 = vmul.f32 %v7595, %v7633
      %v7641 = vmul.f32 %v7596, %v7637
      %v7642 = vmul.f32 %v7597, %v7633
      %v7643 = vmul.f32 %v7598, %v7637
      %v7644 = vmul.f32 %v7599, %v7633
      %v7645 = vmul.f32 %v7600, %v7637
      %v7646 = vmul.f32 %v7601, %v7633
      %v7647 = vmul.f32 %v7602, %v7637
      %v7648 = vmul.f32 %v7603, %v7633
      %v7649 = vmul.f32 %v7604, %v7637
      %v7650 = vmul.f32 %v7605, %v7633
      %v7651 = vmul.f32 %v7606, %v7637
      %v7652 = vmul.f32 %v7607, %v7633
      %v7653 = vmul.f32 %v7608, %v7637
      %v7654 = vmul.f32 %v7609, %v7633
      %v7655 = vmul.f32 %v7610, %v7637
      %v7656 = vmul.f32 %v7611, %v7633
      %v7657 = vmul.f32 %v7612, %v7637
      %v7658 = vmul.f32 %v7613, %v7633
      %v7659 = vmul.f32 %v7614, %v7637
      %v7660 = vmul.f32 %v7615, %v7633
      %v7661 = vmul.f32 %v7616, %v7637
      %v7662 = vmul.f32 %v7617, %v7633
      %v7663 = vmul.f32 %v7618, %v7637
      %v7664 = vmul.f32 %v7619, %v7633
      %v7665 = vmul.f32 %v7620, %v7637
      %v7666 = vmul.f32 %v7621, %v7633
      %v7667 = vmul.f32 %v7622, %v7637
      %v7668 = vmul.f32 %v7623, %v7633
      %v7669 = vmul.f32 %v7624, %v7637
      %v7670 = vmul.f32 %v7625, %v7633
      %v7671 = vmul.f32 %v7626, %v7637
      %v7704 = vrot.slane %v7640, 4
      %v7705 = vrot.slane %v7642, 4
      %v7706 = vsel %vm7514, %v7704, %v7705
      %v7707 = vrot.slane %v7641, 4
      %v7708 = vrot.slane %v7643, 4
      %v7709 = vsel %vm7514, %v7707, %v7708
      %v7710 = vrot.slane %v7644, 4
      %v7711 = vrot.slane %v7646, 4
      %v7712 = vsel %vm7514, %v7710, %v7711
      %v7713 = vrot.slane %v7645, 4
      %v7714 = vrot.slane %v7647, 4
      %v7715 = vsel %vm7514, %v7713, %v7714
      %v7716 = vrot.slane %v7648, 4
      %v7717 = vrot.slane %v7650, 4
      %v7718 = vsel %vm7514, %v7716, %v7717
      %v7719 = vrot.slane %v7649, 4
      %v7720 = vrot.slane %v7651, 4
      %v7721 = vsel %vm7514, %v7719, %v7720
      %v7722 = vrot.slane %v7652, 4
      %v7723 = vrot.slane %v7654, 4
      %v7724 = vsel %vm7514, %v7722, %v7723
      %v7725 = vrot.slane %v7653, 4
      %v7726 = vrot.slane %v7655, 4
      %v7727 = vsel %vm7514, %v7725, %v7726
      %v7728 = vrot.slane %v7656, 4
      %v7729 = vrot.slane %v7658, 4
      %v7730 = vsel %vm7514, %v7728, %v7729
      %v7731 = vrot.slane %v7657, 4
      %v7732 = vrot.slane %v7659, 4
      %v7733 = vsel %vm7514, %v7731, %v7732
      %v7734 = vrot.slane %v7660, 4
      %v7735 = vrot.slane %v7662, 4
      %v7736 = vsel %vm7514, %v7734, %v7735
      %v7737 = vrot.slane %v7661, 4
      %v7738 = vrot.slane %v7663, 4
      %v7739 = vsel %vm7514, %v7737, %v7738
      %v7740 = vrot.slane %v7664, 4
      %v7741 = vrot.slane %v7666, 4
      %v7742 = vsel %vm7514, %v7740, %v7741
      %v7743 = vrot.slane %v7665, 4
      %v7744 = vrot.slane %v7667, 4
      %v7745 = vsel %vm7514, %v7743, %v7744
      %v7746 = vrot.slane %v7668, 4
      %v7747 = vrot.slane %v7670, 4
      %v7748 = vsel %vm7514, %v7746, %v7747
      %v7749 = vrot.slane %v7669, 4
      %v7750 = vrot.slane %v7671, 4
      %v7751 = vsel %vm7514, %v7749, %v7750
      %v7768 = vadd.f32 %v7579, %v7706
      %v7769 = vadd.f32 %v7580, %v7709
      %v7770 = vadd.f32 %v7581, %v7712
      %v7771 = vadd.f32 %v7582, %v7715
      %v7772 = vadd.f32 %v7583, %v7718
      %v7773 = vadd.f32 %v7584, %v7721
      %v7774 = vadd.f32 %v7585, %v7724
      %v7775 = vadd.f32 %v7586, %v7727
      %v7776 = vadd.f32 %v7587, %v7730
      %v7777 = vadd.f32 %v7588, %v7733
      %v7778 = vadd.f32 %v7589, %v7736
      %v7779 = vadd.f32 %v7590, %v7739
      %v7780 = vadd.f32 %v7591, %v7742
      %v7781 = vadd.f32 %v7592, %v7745
      %v7782 = vadd.f32 %v7593, %v7748
      %v7783 = vadd.f32 %v7594, %v7751
      %v7784 = vld [vmem:[%s6776] sm:$0xf0]
      %v7785 = vld [vmem:[%s6776 + $0x8] sm:$0xf0]
      %v7786 = vld [vmem:[%s6776 + $0x10] sm:$0xf]
      %v7787 = vld [vmem:[%s6776 + $0x18] sm:$0xf]
      %v7788 = vld [vmem:[%s6776 + $0x20] sm:$0xf0]
      %v7789 = vld [vmem:[%s6776 + $0x28] sm:$0xf0]
      %v7790 = vld [vmem:[%s6776 + $0x30] sm:$0xf]
      %v7791 = vld [vmem:[%s6776 + $0x38] sm:$0xf]
      %v7792 = vld [vmem:[%s6776 + $0x40] sm:$0xf0]
      %v7793 = vld [vmem:[%s6776 + $0x48] sm:$0xf0]
      %v7794 = vld [vmem:[%s6776 + $0x50] sm:$0xf]
      %v7795 = vld [vmem:[%s6776 + $0x58] sm:$0xf]
      %v7796 = vld [vmem:[%s6776 + $0x60] sm:$0xf0]
      %v7797 = vld [vmem:[%s6776 + $0x68] sm:$0xf0]
      %v7798 = vld [vmem:[%s6776 + $0x70] sm:$0xf]
      %v7799 = vld [vmem:[%s6776 + $0x78] sm:$0xf]
      %v7800 = vld [vmem:[%s6776 + $0x80] sm:$0xf0]
      %v7801 = vld [vmem:[%s6776 + $0x88] sm:$0xf0]
      %v7802 = vld [vmem:[%s6776 + $0x90] sm:$0xf]
      %v7803 = vld [vmem:[%s6776 + $0x98] sm:$0xf]
      %v7804 = vld [vmem:[%s6776 + $0xa0] sm:$0xf0]
      %v7805 = vld [vmem:[%s6776 + $0xa8] sm:$0xf0]
      %v7806 = vld [vmem:[%s6776 + $0xb0] sm:$0xf]
      %v7807 = vld [vmem:[%s6776 + $0xb8] sm:$0xf]
      %v7808 = vld [vmem:[%s6776 + $0xc0] sm:$0xf0]
      %v7809 = vld [vmem:[%s6776 + $0xc8] sm:$0xf0]
      %v7810 = vld [vmem:[%s6776 + $0xd0] sm:$0xf]
      %v7811 = vld [vmem:[%s6776 + $0xd8] sm:$0xf]
      %v7812 = vld [vmem:[%s6776 + $0xe0] sm:$0xf0]
      %v7813 = vld [vmem:[%s6776 + $0xe8] sm:$0xf0]
      %v7814 = vld [vmem:[%s6776 + $0xf0] sm:$0xf]
      %v7815 = vld [vmem:[%s6776 + $0xf8] sm:$0xf]
      %s7816 = scalar_lea.vmem %s2, 16
      %v7817 = vld [vmem:[%s7816] ss:$8 sm:$0x3]
      %v7819 = vlaneseq
      %v7820 = vshrl.u32 %v7819, 7
      %v7821 = vsub.s32 0, %v7820
      %v7822 = vrot.slane %v7817, %v7821
      %v7823 = vlaneseq
      %v7824 = vshrl.u32 %v7823, 7
      %v7825 = vsub.s32 1, %v7824
      %v7826 = vrot.slane %v7817, %v7825
      %v7829 = vmul.f32 %v7784, %v7822
      %v7830 = vmul.f32 %v7785, %v7826
      %v7831 = vmul.f32 %v7786, %v7822
      %v7832 = vmul.f32 %v7787, %v7826
      %v7833 = vmul.f32 %v7788, %v7822
      %v7834 = vmul.f32 %v7789, %v7826
      %v7835 = vmul.f32 %v7790, %v7822
      %v7836 = vmul.f32 %v7791, %v7826
      %v7837 = vmul.f32 %v7792, %v7822
      %v7838 = vmul.f32 %v7793, %v7826
      %v7839 = vmul.f32 %v7794, %v7822
      %v7840 = vmul.f32 %v7795, %v7826
      %v7841 = vmul.f32 %v7796, %v7822
      %v7842 = vmul.f32 %v7797, %v7826
      %v7843 = vmul.f32 %v7798, %v7822
      %v7844 = vmul.f32 %v7799, %v7826
      %v7845 = vmul.f32 %v7800, %v7822
      %v7846 = vmul.f32 %v7801, %v7826
      %v7847 = vmul.f32 %v7802, %v7822
      %v7848 = vmul.f32 %v7803, %v7826
      %v7849 = vmul.f32 %v7804, %v7822
      %v7850 = vmul.f32 %v7805, %v7826
      %v7851 = vmul.f32 %v7806, %v7822
      %v7852 = vmul.f32 %v7807, %v7826
      %v7853 = vmul.f32 %v7808, %v7822
      %v7854 = vmul.f32 %v7809, %v7826
      %v7855 = vmul.f32 %v7810, %v7822
      %v7856 = vmul.f32 %v7811, %v7826
      %v7857 = vmul.f32 %v7812, %v7822
      %v7858 = vmul.f32 %v7813, %v7826
      %v7859 = vmul.f32 %v7814, %v7822
      %v7860 = vmul.f32 %v7815, %v7826
      %v7893 = vrot.slane %v7829, 4
      %v7894 = vrot.slane %v7831, 4
      %v7895 = vsel %vm7514, %v7893, %v7894
      %v7896 = vrot.slane %v7830, 4
      %v7897 = vrot.slane %v7832, 4
      %v7898 = vsel %vm7514, %v7896, %v7897
      %v7899 = vrot.slane %v7833, 4
      %v7900 = vrot.slane %v7835, 4
      %v7901 = vsel %vm7514, %v7899, %v7900
      %v7902 = vrot.slane %v7834, 4
      %v7903 = vrot.slane %v7836, 4
      %v7904 = vsel %vm7514, %v7902, %v7903
      %v7905 = vrot.slane %v7837, 4
      %v7906 = vrot.slane %v7839, 4
      %v7907 = vsel %vm7514, %v7905, %v7906
      %v7908 = vrot.slane %v7838, 4
      %v7909 = vrot.slane %v7840, 4
      %v7910 = vsel %vm7514, %v7908, %v7909
      %v7911 = vrot.slane %v7841, 4
      %v7912 = vrot.slane %v7843, 4
      %v7913 = vsel %vm7514, %v7911, %v7912
      %v7914 = vrot.slane %v7842, 4
      %v7915 = vrot.slane %v7844, 4
      %v7916 = vsel %vm7514, %v7914, %v7915
      %v7917 = vrot.slane %v7845, 4
      %v7918 = vrot.slane %v7847, 4
      %v7919 = vsel %vm7514, %v7917, %v7918
      %v7920 = vrot.slane %v7846, 4
      %v7921 = vrot.slane %v7848, 4
      %v7922 = vsel %vm7514, %v7920, %v7921
      %v7923 = vrot.slane %v7849, 4
      %v7924 = vrot.slane %v7851, 4
      %v7925 = vsel %vm7514, %v7923, %v7924
      %v7926 = vrot.slane %v7850, 4
      %v7927 = vrot.slane %v7852, 4
      %v7928 = vsel %vm7514, %v7926, %v7927
      %v7929 = vrot.slane %v7853, 4
      %v7930 = vrot.slane %v7855, 4
      %v7931 = vsel %vm7514, %v7929, %v7930
      %v7932 = vrot.slane %v7854, 4
      %v7933 = vrot.slane %v7856, 4
      %v7934 = vsel %vm7514, %v7932, %v7933
      %v7935 = vrot.slane %v7857, 4
      %v7936 = vrot.slane %v7859, 4
      %v7937 = vsel %vm7514, %v7935, %v7936
      %v7938 = vrot.slane %v7858, 4
      %v7939 = vrot.slane %v7860, 4
      %v7940 = vsel %vm7514, %v7938, %v7939
      %v7957 = vadd.f32 %v7768, %v7895
      %v7958 = vadd.f32 %v7769, %v7898
      %v7959 = vadd.f32 %v7770, %v7901
      %v7960 = vadd.f32 %v7771, %v7904
      %v7961 = vadd.f32 %v7772, %v7907
      %v7962 = vadd.f32 %v7773, %v7910
      %v7963 = vadd.f32 %v7774, %v7913
      %v7964 = vadd.f32 %v7775, %v7916
      %v7965 = vadd.f32 %v7776, %v7919
      %v7966 = vadd.f32 %v7777, %v7922
      %v7967 = vadd.f32 %v7778, %v7925
      %v7968 = vadd.f32 %v7779, %v7928
      %v7969 = vadd.f32 %v7780, %v7931
      %v7970 = vadd.f32 %v7781, %v7934
      %v7971 = vadd.f32 %v7782, %v7937
      %v7972 = vadd.f32 %v7783, %v7940
      %v7973 = vld [vmem:[%s872] sm:$0xff]
      %v7974 = vld [vmem:[%s872 + $0x8] sm:$0xff]
      %v7975 = vld [vmem:[%s872 + $0x20] sm:$0xff]
      %v7976 = vld [vmem:[%s872 + $0x28] sm:$0xff]
      %v7977 = vld [vmem:[%s872 + $0x40] sm:$0xff]
      %v7978 = vld [vmem:[%s872 + $0x48] sm:$0xff]
      %v7979 = vld [vmem:[%s872 + $0x60] sm:$0xff]
      %v7980 = vld [vmem:[%s872 + $0x68] sm:$0xff]
      %v7981 = vld [vmem:[%s872 + $0x80] sm:$0xff]
      %v7982 = vld [vmem:[%s872 + $0x88] sm:$0xff]
      %v7983 = vld [vmem:[%s872 + $0xa0] sm:$0xff]
      %v7984 = vld [vmem:[%s872 + $0xa8] sm:$0xff]
      %v7985 = vld [vmem:[%s872 + $0xc0] sm:$0xff]
      %v7986 = vld [vmem:[%s872 + $0xc8] sm:$0xff]
      %v7987 = vld [vmem:[%s872 + $0xe0] sm:$0xff]
      %v7988 = vld [vmem:[%s872 + $0xe8] sm:$0xff]
      %s7989 = scalar_lea.vmem %s2, 17
      %v7990 = vld [vmem:[%s7989] ss:$8 sm:$0x3]
      %v7992 = vlaneseq
      %v7993 = vshrl.u32 %v7992, 7
      %v7994 = vsub.s32 0, %v7993
      %v7995 = vrot.slane %v7990, %v7994
      %v7996 = vlaneseq
      %v7997 = vshrl.u32 %v7996, 7
      %v7998 = vsub.s32 1, %v7997
      %v7999 = vrot.slane %v7990, %v7998
      %v8002 = vmul.f32 %v7973, %v7995
      %v8003 = vmul.f32 %v7974, %v7999
      %v8004 = vmul.f32 %v7975, %v7995
      %v8005 = vmul.f32 %v7976, %v7999
      %v8006 = vmul.f32 %v7977, %v7995
      %v8007 = vmul.f32 %v7978, %v7999
      %v8008 = vmul.f32 %v7979, %v7995
      %v8009 = vmul.f32 %v7980, %v7999
      %v8010 = vmul.f32 %v7981, %v7995
      %v8011 = vmul.f32 %v7982, %v7999
      %v8012 = vmul.f32 %v7983, %v7995
      %v8013 = vmul.f32 %v7984, %v7999
      %v8014 = vmul.f32 %v7985, %v7995
      %v8015 = vmul.f32 %v7986, %v7999
      %v8016 = vmul.f32 %v7987, %v7995
      %v8017 = vmul.f32 %v7988, %v7999
      %v8018 = vadd.f32 %v7957, %v8002
      %v8019 = vadd.f32 %v7958, %v8003
      %v8020 = vadd.f32 %v7959, %v8004
      %v8021 = vadd.f32 %v7960, %v8005
      %v8022 = vadd.f32 %v7961, %v8006
      %v8023 = vadd.f32 %v7962, %v8007
      %v8024 = vadd.f32 %v7963, %v8008
      %v8025 = vadd.f32 %v7964, %v8009
      %v8026 = vadd.f32 %v7965, %v8010
      %v8027 = vadd.f32 %v7966, %v8011
      %v8028 = vadd.f32 %v7967, %v8012
      %v8029 = vadd.f32 %v7968, %v8013
      %v8030 = vadd.f32 %v7969, %v8014
      %v8031 = vadd.f32 %v7970, %v8015
      %v8032 = vadd.f32 %v7971, %v8016
      %v8033 = vadd.f32 %v7972, %v8017
      %v8034 = vld [vmem:[%s1104] sm:$0xff]
      %v8035 = vld [vmem:[%s1104 + $0x8] sm:$0xff]
      %v8036 = vld [vmem:[%s1104 + $0x20] sm:$0xff]
      %v8037 = vld [vmem:[%s1104 + $0x28] sm:$0xff]
      %v8038 = vld [vmem:[%s1104 + $0x40] sm:$0xff]
      %v8039 = vld [vmem:[%s1104 + $0x48] sm:$0xff]
      %v8040 = vld [vmem:[%s1104 + $0x60] sm:$0xff]
      %v8041 = vld [vmem:[%s1104 + $0x68] sm:$0xff]
      %v8042 = vld [vmem:[%s1104 + $0x80] sm:$0xff]
      %v8043 = vld [vmem:[%s1104 + $0x88] sm:$0xff]
      %v8044 = vld [vmem:[%s1104 + $0xa0] sm:$0xff]
      %v8045 = vld [vmem:[%s1104 + $0xa8] sm:$0xff]
      %v8046 = vld [vmem:[%s1104 + $0xc0] sm:$0xff]
      %v8047 = vld [vmem:[%s1104 + $0xc8] sm:$0xff]
      %v8048 = vld [vmem:[%s1104 + $0xe0] sm:$0xff]
      %v8049 = vld [vmem:[%s1104 + $0xe8] sm:$0xff]
      %s8050 = scalar_lea.vmem %s2, 18
      %v8051 = vld [vmem:[%s8050] ss:$8 sm:$0x3]
      %v8053 = vlaneseq
      %v8054 = vshrl.u32 %v8053, 7
      %v8055 = vsub.s32 0, %v8054
      %v8056 = vrot.slane %v8051, %v8055
      %v8057 = vlaneseq
      %v8058 = vshrl.u32 %v8057, 7
      %v8059 = vsub.s32 1, %v8058
      %v8060 = vrot.slane %v8051, %v8059
      %v8063 = vmul.f32 %v8034, %v8056
      %v8064 = vmul.f32 %v8035, %v8060
      %v8065 = vmul.f32 %v8036, %v8056
      %v8066 = vmul.f32 %v8037, %v8060
      %v8067 = vmul.f32 %v8038, %v8056
      %v8068 = vmul.f32 %v8039, %v8060
      %v8069 = vmul.f32 %v8040, %v8056
      %v8070 = vmul.f32 %v8041, %v8060
      %v8071 = vmul.f32 %v8042, %v8056
      %v8072 = vmul.f32 %v8043, %v8060
      %v8073 = vmul.f32 %v8044, %v8056
      %v8074 = vmul.f32 %v8045, %v8060
      %v8075 = vmul.f32 %v8046, %v8056
      %v8076 = vmul.f32 %v8047, %v8060
      %v8077 = vmul.f32 %v8048, %v8056
      %v8078 = vmul.f32 %v8049, %v8060
      %v8079 = vadd.f32 %v8018, %v8063
      %v8080 = vadd.f32 %v8019, %v8064
      %v8081 = vadd.f32 %v8020, %v8065
      %v8082 = vadd.f32 %v8021, %v8066
      %v8083 = vadd.f32 %v8022, %v8067
      %v8084 = vadd.f32 %v8023, %v8068
      %v8085 = vadd.f32 %v8024, %v8069
      %v8086 = vadd.f32 %v8025, %v8070
      %v8087 = vadd.f32 %v8026, %v8071
      %v8088 = vadd.f32 %v8027, %v8072
      %v8089 = vadd.f32 %v8028, %v8073
      %v8090 = vadd.f32 %v8029, %v8074
      %v8091 = vadd.f32 %v8030, %v8075
      %v8092 = vadd.f32 %v8031, %v8076
      %v8093 = vadd.f32 %v8032, %v8077
      %v8094 = vadd.f32 %v8033, %v8078
      %v8095 = vld [vmem:[%s1359] sm:$0xff]
      %v8096 = vld [vmem:[%s1359 + $0x8] sm:$0xff]
      %v8097 = vld [vmem:[%s1359 + $0x20] sm:$0xff]
      %v8098 = vld [vmem:[%s1359 + $0x28] sm:$0xff]
      %v8099 = vld [vmem:[%s1359 + $0x40] sm:$0xff]
      %v8100 = vld [vmem:[%s1359 + $0x48] sm:$0xff]
      %v8101 = vld [vmem:[%s1359 + $0x60] sm:$0xff]
      %v8102 = vld [vmem:[%s1359 + $0x68] sm:$0xff]
      %v8103 = vld [vmem:[%s1359 + $0x80] sm:$0xff]
      %v8104 = vld [vmem:[%s1359 + $0x88] sm:$0xff]
      %v8105 = vld [vmem:[%s1359 + $0xa0] sm:$0xff]
      %v8106 = vld [vmem:[%s1359 + $0xa8] sm:$0xff]
      %v8107 = vld [vmem:[%s1359 + $0xc0] sm:$0xff]
      %v8108 = vld [vmem:[%s1359 + $0xc8] sm:$0xff]
      %v8109 = vld [vmem:[%s1359 + $0xe0] sm:$0xff]
      %v8110 = vld [vmem:[%s1359 + $0xe8] sm:$0xff]
      %s8111 = scalar_lea.vmem %s2, 19
      %v8112 = vld [vmem:[%s8111] ss:$8 sm:$0x3]
      %v8114 = vlaneseq
      %v8115 = vshrl.u32 %v8114, 7
      %v8116 = vsub.s32 0, %v8115
      %v8117 = vrot.slane %v8112, %v8116
      %v8118 = vlaneseq
      %v8119 = vshrl.u32 %v8118, 7
      %v8120 = vsub.s32 1, %v8119
      %v8121 = vrot.slane %v8112, %v8120
      %v8124 = vmul.f32 %v8095, %v8117
      %v8125 = vmul.f32 %v8096, %v8121
      %v8126 = vmul.f32 %v8097, %v8117
      %v8127 = vmul.f32 %v8098, %v8121
      %v8128 = vmul.f32 %v8099, %v8117
      %v8129 = vmul.f32 %v8100, %v8121
      %v8130 = vmul.f32 %v8101, %v8117
      %v8131 = vmul.f32 %v8102, %v8121
      %v8132 = vmul.f32 %v8103, %v8117
      %v8133 = vmul.f32 %v8104, %v8121
      %v8134 = vmul.f32 %v8105, %v8117
      %v8135 = vmul.f32 %v8106, %v8121
      %v8136 = vmul.f32 %v8107, %v8117
      %v8137 = vmul.f32 %v8108, %v8121
      %v8138 = vmul.f32 %v8109, %v8117
      %v8139 = vmul.f32 %v8110, %v8121
      %v8140 = vadd.f32 %v8079, %v8124
      %v8141 = vadd.f32 %v8080, %v8125
      %v8142 = vadd.f32 %v8081, %v8126
      %v8143 = vadd.f32 %v8082, %v8127
      %v8144 = vadd.f32 %v8083, %v8128
      %v8145 = vadd.f32 %v8084, %v8129
      %v8146 = vadd.f32 %v8085, %v8130
      %v8147 = vadd.f32 %v8086, %v8131
      %v8148 = vadd.f32 %v8087, %v8132
      %v8149 = vadd.f32 %v8088, %v8133
      %v8150 = vadd.f32 %v8089, %v8134
      %v8151 = vadd.f32 %v8090, %v8135
      %v8152 = vadd.f32 %v8091, %v8136
      %v8153 = vadd.f32 %v8092, %v8137
      %v8154 = vadd.f32 %v8093, %v8138
      %v8155 = vadd.f32 %v8094, %v8139
      %v8156 = vld [vmem:[%s872] sm:$0xfc]
      %v8157 = vld [vmem:[%s872 + $0x8] sm:$0xfc]
      %v8158 = vld [vmem:[%s872 + $0x10] sm:$0x3]
      %v8159 = vld [vmem:[%s872 + $0x18] sm:$0x3]
      %v8160 = vld [vmem:[%s872 + $0x20] sm:$0xfc]
      %v8161 = vld [vmem:[%s872 + $0x28] sm:$0xfc]
      %v8162 = vld [vmem:[%s872 + $0x30] sm:$0x3]
      %v8163 = vld [vmem:[%s872 + $0x38] sm:$0x3]
      %v8164 = vld [vmem:[%s872 + $0x40] sm:$0xfc]
      %v8165 = vld [vmem:[%s872 + $0x48] sm:$0xfc]
      %v8166 = vld [vmem:[%s872 + $0x50] sm:$0x3]
      %v8167 = vld [vmem:[%s872 + $0x58] sm:$0x3]
      %v8168 = vld [vmem:[%s872 + $0x60] sm:$0xfc]
      %v8169 = vld [vmem:[%s872 + $0x68] sm:$0xfc]
      %v8170 = vld [vmem:[%s872 + $0x70] sm:$0x3]
      %v8171 = vld [vmem:[%s872 + $0x78] sm:$0x3]
      %v8172 = vld [vmem:[%s872 + $0x80] sm:$0xfc]
      %v8173 = vld [vmem:[%s872 + $0x88] sm:$0xfc]
      %v8174 = vld [vmem:[%s872 + $0x90] sm:$0x3]
      %v8175 = vld [vmem:[%s872 + $0x98] sm:$0x3]
      %v8176 = vld [vmem:[%s872 + $0xa0] sm:$0xfc]
      %v8177 = vld [vmem:[%s872 + $0xa8] sm:$0xfc]
      %v8178 = vld [vmem:[%s872 + $0xb0] sm:$0x3]
      %v8179 = vld [vmem:[%s872 + $0xb8] sm:$0x3]
      %v8180 = vld [vmem:[%s872 + $0xc0] sm:$0xfc]
      %v8181 = vld [vmem:[%s872 + $0xc8] sm:$0xfc]
      %v8182 = vld [vmem:[%s872 + $0xd0] sm:$0x3]
      %v8183 = vld [vmem:[%s872 + $0xd8] sm:$0x3]
      %v8184 = vld [vmem:[%s872 + $0xe0] sm:$0xfc]
      %v8185 = vld [vmem:[%s872 + $0xe8] sm:$0xfc]
      %v8186 = vld [vmem:[%s872 + $0xf0] sm:$0x3]
      %v8187 = vld [vmem:[%s872 + $0xf8] sm:$0x3]
      %s8188 = scalar_lea.vmem %s2, 20
      %v8189 = vld [vmem:[%s8188] ss:$8 sm:$0x3]
      %v8191 = vlaneseq
      %v8192 = vshrl.u32 %v8191, 7
      %v8193 = vsub.s32 0, %v8192
      %v8194 = vrot.slane %v8189, %v8193
      %v8195 = vlaneseq
      %v8196 = vshrl.u32 %v8195, 7
      %v8197 = vsub.s32 1, %v8196
      %v8198 = vrot.slane %v8189, %v8197
      %v8201 = vmul.f32 %v8156, %v8194
      %v8202 = vmul.f32 %v8157, %v8198
      %v8203 = vmul.f32 %v8158, %v8194
      %v8204 = vmul.f32 %v8159, %v8198
      %v8205 = vmul.f32 %v8160, %v8194
      %v8206 = vmul.f32 %v8161, %v8198
      %v8207 = vmul.f32 %v8162, %v8194
      %v8208 = vmul.f32 %v8163, %v8198
      %v8209 = vmul.f32 %v8164, %v8194
      %v8210 = vmul.f32 %v8165, %v8198
      %v8211 = vmul.f32 %v8166, %v8194
      %v8212 = vmul.f32 %v8167, %v8198
      %v8213 = vmul.f32 %v8168, %v8194
      %v8214 = vmul.f32 %v8169, %v8198
      %v8215 = vmul.f32 %v8170, %v8194
      %v8216 = vmul.f32 %v8171, %v8198
      %v8217 = vmul.f32 %v8172, %v8194
      %v8218 = vmul.f32 %v8173, %v8198
      %v8219 = vmul.f32 %v8174, %v8194
      %v8220 = vmul.f32 %v8175, %v8198
      %v8221 = vmul.f32 %v8176, %v8194
      %v8222 = vmul.f32 %v8177, %v8198
      %v8223 = vmul.f32 %v8178, %v8194
      %v8224 = vmul.f32 %v8179, %v8198
      %v8225 = vmul.f32 %v8180, %v8194
      %v8226 = vmul.f32 %v8181, %v8198
      %v8227 = vmul.f32 %v8182, %v8194
      %v8228 = vmul.f32 %v8183, %v8198
      %v8229 = vmul.f32 %v8184, %v8194
      %v8230 = vmul.f32 %v8185, %v8198
      %v8231 = vmul.f32 %v8186, %v8194
      %v8232 = vmul.f32 %v8187, %v8198
      %v8265 = vrot.slane %v8201, 2
      %v8266 = vrot.slane %v8203, 2
      %v8267 = vsel %vm2494, %v8265, %v8266
      %v8268 = vrot.slane %v8202, 2
      %v8269 = vrot.slane %v8204, 2
      %v8270 = vsel %vm2494, %v8268, %v8269
      %v8271 = vrot.slane %v8205, 2
      %v8272 = vrot.slane %v8207, 2
      %v8273 = vsel %vm2494, %v8271, %v8272
      %v8274 = vrot.slane %v8206, 2
      %v8275 = vrot.slane %v8208, 2
      %v8276 = vsel %vm2494, %v8274, %v8275
      %v8277 = vrot.slane %v8209, 2
      %v8278 = vrot.slane %v8211, 2
      %v8279 = vsel %vm2494, %v8277, %v8278
      %v8280 = vrot.slane %v8210, 2
      %v8281 = vrot.slane %v8212, 2
      %v8282 = vsel %vm2494, %v8280, %v8281
      %v8283 = vrot.slane %v8213, 2
      %v8284 = vrot.slane %v8215, 2
      %v8285 = vsel %vm2494, %v8283, %v8284
      %v8286 = vrot.slane %v8214, 2
      %v8287 = vrot.slane %v8216, 2
      %v8288 = vsel %vm2494, %v8286, %v8287
      %v8289 = vrot.slane %v8217, 2
      %v8290 = vrot.slane %v8219, 2
      %v8291 = vsel %vm2494, %v8289, %v8290
      %v8292 = vrot.slane %v8218, 2
      %v8293 = vrot.slane %v8220, 2
      %v8294 = vsel %vm2494, %v8292, %v8293
      %v8295 = vrot.slane %v8221, 2
      %v8296 = vrot.slane %v8223, 2
      %v8297 = vsel %vm2494, %v8295, %v8296
      %v8298 = vrot.slane %v8222, 2
      %v8299 = vrot.slane %v8224, 2
      %v8300 = vsel %vm2494, %v8298, %v8299
      %v8301 = vrot.slane %v8225, 2
      %v8302 = vrot.slane %v8227, 2
      %v8303 = vsel %vm2494, %v8301, %v8302
      %v8304 = vrot.slane %v8226, 2
      %v8305 = vrot.slane %v8228, 2
      %v8306 = vsel %vm2494, %v8304, %v8305
      %v8307 = vrot.slane %v8229, 2
      %v8308 = vrot.slane %v8231, 2
      %v8309 = vsel %vm2494, %v8307, %v8308
      %v8310 = vrot.slane %v8230, 2
      %v8311 = vrot.slane %v8232, 2
      %v8312 = vsel %vm2494, %v8310, %v8311
      %v8329 = vadd.f32 %v8140, %v8267
      %v8330 = vadd.f32 %v8141, %v8270
      %v8331 = vadd.f32 %v8142, %v8273
      %v8332 = vadd.f32 %v8143, %v8276
      %v8333 = vadd.f32 %v8144, %v8279
      %v8334 = vadd.f32 %v8145, %v8282
      %v8335 = vadd.f32 %v8146, %v8285
      %v8336 = vadd.f32 %v8147, %v8288
      %v8337 = vadd.f32 %v8148, %v8291
      %v8338 = vadd.f32 %v8149, %v8294
      %v8339 = vadd.f32 %v8150, %v8297
      %v8340 = vadd.f32 %v8151, %v8300
      %v8341 = vadd.f32 %v8152, %v8303
      %v8342 = vadd.f32 %v8153, %v8306
      %v8343 = vadd.f32 %v8154, %v8309
      %v8344 = vadd.f32 %v8155, %v8312
      %v8345 = vld [vmem:[%s1104] sm:$0xfc]
      %v8346 = vld [vmem:[%s1104 + $0x8] sm:$0xfc]
      %v8347 = vld [vmem:[%s1104 + $0x10] sm:$0x3]
      %v8348 = vld [vmem:[%s1104 + $0x18] sm:$0x3]
      %v8349 = vld [vmem:[%s1104 + $0x20] sm:$0xfc]
      %v8350 = vld [vmem:[%s1104 + $0x28] sm:$0xfc]
      %v8351 = vld [vmem:[%s1104 + $0x30] sm:$0x3]
      %v8352 = vld [vmem:[%s1104 + $0x38] sm:$0x3]
      %v8353 = vld [vmem:[%s1104 + $0x40] sm:$0xfc]
      %v8354 = vld [vmem:[%s1104 + $0x48] sm:$0xfc]
      %v8355 = vld [vmem:[%s1104 + $0x50] sm:$0x3]
      %v8356 = vld [vmem:[%s1104 + $0x58] sm:$0x3]
      %v8357 = vld [vmem:[%s1104 + $0x60] sm:$0xfc]
      %v8358 = vld [vmem:[%s1104 + $0x68] sm:$0xfc]
      %v8359 = vld [vmem:[%s1104 + $0x70] sm:$0x3]
      %v8360 = vld [vmem:[%s1104 + $0x78] sm:$0x3]
      %v8361 = vld [vmem:[%s1104 + $0x80] sm:$0xfc]
      %v8362 = vld [vmem:[%s1104 + $0x88] sm:$0xfc]
      %v8363 = vld [vmem:[%s1104 + $0x90] sm:$0x3]
      %v8364 = vld [vmem:[%s1104 + $0x98] sm:$0x3]
      %v8365 = vld [vmem:[%s1104 + $0xa0] sm:$0xfc]
      %v8366 = vld [vmem:[%s1104 + $0xa8] sm:$0xfc]
      %v8367 = vld [vmem:[%s1104 + $0xb0] sm:$0x3]
      %v8368 = vld [vmem:[%s1104 + $0xb8] sm:$0x3]
      %v8369 = vld [vmem:[%s1104 + $0xc0] sm:$0xfc]
      %v8370 = vld [vmem:[%s1104 + $0xc8] sm:$0xfc]
      %v8371 = vld [vmem:[%s1104 + $0xd0] sm:$0x3]
      %v8372 = vld [vmem:[%s1104 + $0xd8] sm:$0x3]
      %v8373 = vld [vmem:[%s1104 + $0xe0] sm:$0xfc]
      %v8374 = vld [vmem:[%s1104 + $0xe8] sm:$0xfc]
      %v8375 = vld [vmem:[%s1104 + $0xf0] sm:$0x3]
      %v8376 = vld [vmem:[%s1104 + $0xf8] sm:$0x3]
      %s8377 = scalar_lea.vmem %s2, 21
      %v8378 = vld [vmem:[%s8377] ss:$8 sm:$0x3]
      %v8380 = vlaneseq
      %v8381 = vshrl.u32 %v8380, 7
      %v8382 = vsub.s32 0, %v8381
      %v8383 = vrot.slane %v8378, %v8382
      %v8384 = vlaneseq
      %v8385 = vshrl.u32 %v8384, 7
      %v8386 = vsub.s32 1, %v8385
      %v8387 = vrot.slane %v8378, %v8386
      %v8390 = vmul.f32 %v8345, %v8383
      %v8391 = vmul.f32 %v8346, %v8387
      %v8392 = vmul.f32 %v8347, %v8383
      %v8393 = vmul.f32 %v8348, %v8387
      %v8394 = vmul.f32 %v8349, %v8383
      %v8395 = vmul.f32 %v8350, %v8387
      %v8396 = vmul.f32 %v8351, %v8383
      %v8397 = vmul.f32 %v8352, %v8387
      %v8398 = vmul.f32 %v8353, %v8383
      %v8399 = vmul.f32 %v8354, %v8387
      %v8400 = vmul.f32 %v8355, %v8383
      %v8401 = vmul.f32 %v8356, %v8387
      %v8402 = vmul.f32 %v8357, %v8383
      %v8403 = vmul.f32 %v8358, %v8387
      %v8404 = vmul.f32 %v8359, %v8383
      %v8405 = vmul.f32 %v8360, %v8387
      %v8406 = vmul.f32 %v8361, %v8383
      %v8407 = vmul.f32 %v8362, %v8387
      %v8408 = vmul.f32 %v8363, %v8383
      %v8409 = vmul.f32 %v8364, %v8387
      %v8410 = vmul.f32 %v8365, %v8383
      %v8411 = vmul.f32 %v8366, %v8387
      %v8412 = vmul.f32 %v8367, %v8383
      %v8413 = vmul.f32 %v8368, %v8387
      %v8414 = vmul.f32 %v8369, %v8383
      %v8415 = vmul.f32 %v8370, %v8387
      %v8416 = vmul.f32 %v8371, %v8383
      %v8417 = vmul.f32 %v8372, %v8387
      %v8418 = vmul.f32 %v8373, %v8383
      %v8419 = vmul.f32 %v8374, %v8387
      %v8420 = vmul.f32 %v8375, %v8383
      %v8421 = vmul.f32 %v8376, %v8387
      %v8454 = vrot.slane %v8390, 2
      %v8455 = vrot.slane %v8392, 2
      %v8456 = vsel %vm2494, %v8454, %v8455
      %v8457 = vrot.slane %v8391, 2
      %v8458 = vrot.slane %v8393, 2
      %v8459 = vsel %vm2494, %v8457, %v8458
      %v8460 = vrot.slane %v8394, 2
      %v8461 = vrot.slane %v8396, 2
      %v8462 = vsel %vm2494, %v8460, %v8461
      %v8463 = vrot.slane %v8395, 2
      %v8464 = vrot.slane %v8397, 2
      %v8465 = vsel %vm2494, %v8463, %v8464
      %v8466 = vrot.slane %v8398, 2
      %v8467 = vrot.slane %v8400, 2
      %v8468 = vsel %vm2494, %v8466, %v8467
      %v8469 = vrot.slane %v8399, 2
      %v8470 = vrot.slane %v8401, 2
      %v8471 = vsel %vm2494, %v8469, %v8470
      %v8472 = vrot.slane %v8402, 2
      %v8473 = vrot.slane %v8404, 2
      %v8474 = vsel %vm2494, %v8472, %v8473
      %v8475 = vrot.slane %v8403, 2
      %v8476 = vrot.slane %v8405, 2
      %v8477 = vsel %vm2494, %v8475, %v8476
      %v8478 = vrot.slane %v8406, 2
      %v8479 = vrot.slane %v8408, 2
      %v8480 = vsel %vm2494, %v8478, %v8479
      %v8481 = vrot.slane %v8407, 2
      %v8482 = vrot.slane %v8409, 2
      %v8483 = vsel %vm2494, %v8481, %v8482
      %v8484 = vrot.slane %v8410, 2
      %v8485 = vrot.slane %v8412, 2
      %v8486 = vsel %vm2494, %v8484, %v8485
      %v8487 = vrot.slane %v8411, 2
      %v8488 = vrot.slane %v8413, 2
      %v8489 = vsel %vm2494, %v8487, %v8488
      %v8490 = vrot.slane %v8414, 2
      %v8491 = vrot.slane %v8416, 2
      %v8492 = vsel %vm2494, %v8490, %v8491
      %v8493 = vrot.slane %v8415, 2
      %v8494 = vrot.slane %v8417, 2
      %v8495 = vsel %vm2494, %v8493, %v8494
      %v8496 = vrot.slane %v8418, 2
      %v8497 = vrot.slane %v8420, 2
      %v8498 = vsel %vm2494, %v8496, %v8497
      %v8499 = vrot.slane %v8419, 2
      %v8500 = vrot.slane %v8421, 2
      %v8501 = vsel %vm2494, %v8499, %v8500
      %v8518 = vadd.f32 %v8329, %v8456
      %v8519 = vadd.f32 %v8330, %v8459
      %v8520 = vadd.f32 %v8331, %v8462
      %v8521 = vadd.f32 %v8332, %v8465
      %v8522 = vadd.f32 %v8333, %v8468
      %v8523 = vadd.f32 %v8334, %v8471
      %v8524 = vadd.f32 %v8335, %v8474
      %v8525 = vadd.f32 %v8336, %v8477
      %v8526 = vadd.f32 %v8337, %v8480
      %v8527 = vadd.f32 %v8338, %v8483
      %v8528 = vadd.f32 %v8339, %v8486
      %v8529 = vadd.f32 %v8340, %v8489
      %v8530 = vadd.f32 %v8341, %v8492
      %v8531 = vadd.f32 %v8342, %v8495
      %v8532 = vadd.f32 %v8343, %v8498
      %v8533 = vadd.f32 %v8344, %v8501
      %v8534 = vld [vmem:[%s1359] sm:$0xfc]
      %v8535 = vld [vmem:[%s1359 + $0x8] sm:$0xfc]
      %v8536 = vld [vmem:[%s1359 + $0x10] sm:$0x3]
      %v8537 = vld [vmem:[%s1359 + $0x18] sm:$0x3]
      %v8538 = vld [vmem:[%s1359 + $0x20] sm:$0xfc]
      %v8539 = vld [vmem:[%s1359 + $0x28] sm:$0xfc]
      %v8540 = vld [vmem:[%s1359 + $0x30] sm:$0x3]
      %v8541 = vld [vmem:[%s1359 + $0x38] sm:$0x3]
      %v8542 = vld [vmem:[%s1359 + $0x40] sm:$0xfc]
      %v8543 = vld [vmem:[%s1359 + $0x48] sm:$0xfc]
      %v8544 = vld [vmem:[%s1359 + $0x50] sm:$0x3]
      %v8545 = vld [vmem:[%s1359 + $0x58] sm:$0x3]
      %v8546 = vld [vmem:[%s1359 + $0x60] sm:$0xfc]
      %v8547 = vld [vmem:[%s1359 + $0x68] sm:$0xfc]
      %v8548 = vld [vmem:[%s1359 + $0x70] sm:$0x3]
      %v8549 = vld [vmem:[%s1359 + $0x78] sm:$0x3]
      %v8550 = vld [vmem:[%s1359 + $0x80] sm:$0xfc]
      %v8551 = vld [vmem:[%s1359 + $0x88] sm:$0xfc]
      %v8552 = vld [vmem:[%s1359 + $0x90] sm:$0x3]
      %v8553 = vld [vmem:[%s1359 + $0x98] sm:$0x3]
      %v8554 = vld [vmem:[%s1359 + $0xa0] sm:$0xfc]
      %v8555 = vld [vmem:[%s1359 + $0xa8] sm:$0xfc]
      %v8556 = vld [vmem:[%s1359 + $0xb0] sm:$0x3]
      %v8557 = vld [vmem:[%s1359 + $0xb8] sm:$0x3]
      %v8558 = vld [vmem:[%s1359 + $0xc0] sm:$0xfc]
      %v8559 = vld [vmem:[%s1359 + $0xc8] sm:$0xfc]
      %v8560 = vld [vmem:[%s1359 + $0xd0] sm:$0x3]
      %v8561 = vld [vmem:[%s1359 + $0xd8] sm:$0x3]
      %v8562 = vld [vmem:[%s1359 + $0xe0] sm:$0xfc]
      %v8563 = vld [vmem:[%s1359 + $0xe8] sm:$0xfc]
      %v8564 = vld [vmem:[%s1359 + $0xf0] sm:$0x3]
      %v8565 = vld [vmem:[%s1359 + $0xf8] sm:$0x3]
      %s8566 = scalar_lea.vmem %s2, 22
      %v8567 = vld [vmem:[%s8566] ss:$8 sm:$0x3]
      %v8569 = vlaneseq
      %v8570 = vshrl.u32 %v8569, 7
      %v8571 = vsub.s32 0, %v8570
      %v8572 = vrot.slane %v8567, %v8571
      %v8573 = vlaneseq
      %v8574 = vshrl.u32 %v8573, 7
      %v8575 = vsub.s32 1, %v8574
      %v8576 = vrot.slane %v8567, %v8575
      %v8579 = vmul.f32 %v8534, %v8572
      %v8580 = vmul.f32 %v8535, %v8576
      %v8581 = vmul.f32 %v8536, %v8572
      %v8582 = vmul.f32 %v8537, %v8576
      %v8583 = vmul.f32 %v8538, %v8572
      %v8584 = vmul.f32 %v8539, %v8576
      %v8585 = vmul.f32 %v8540, %v8572
      %v8586 = vmul.f32 %v8541, %v8576
      %v8587 = vmul.f32 %v8542, %v8572
      %v8588 = vmul.f32 %v8543, %v8576
      %v8589 = vmul.f32 %v8544, %v8572
      %v8590 = vmul.f32 %v8545, %v8576
      %v8591 = vmul.f32 %v8546, %v8572
      %v8592 = vmul.f32 %v8547, %v8576
      %v8593 = vmul.f32 %v8548, %v8572
      %v8594 = vmul.f32 %v8549, %v8576
      %v8595 = vmul.f32 %v8550, %v8572
      %v8596 = vmul.f32 %v8551, %v8576
      %v8597 = vmul.f32 %v8552, %v8572
      %v8598 = vmul.f32 %v8553, %v8576
      %v8599 = vmul.f32 %v8554, %v8572
      %v8600 = vmul.f32 %v8555, %v8576
      %v8601 = vmul.f32 %v8556, %v8572
      %v8602 = vmul.f32 %v8557, %v8576
      %v8603 = vmul.f32 %v8558, %v8572
      %v8604 = vmul.f32 %v8559, %v8576
      %v8605 = vmul.f32 %v8560, %v8572
      %v8606 = vmul.f32 %v8561, %v8576
      %v8607 = vmul.f32 %v8562, %v8572
      %v8608 = vmul.f32 %v8563, %v8576
      %v8609 = vmul.f32 %v8564, %v8572
      %v8610 = vmul.f32 %v8565, %v8576
      %v8643 = vrot.slane %v8579, 2
      %v8644 = vrot.slane %v8581, 2
      %v8645 = vsel %vm2494, %v8643, %v8644
      %v8646 = vrot.slane %v8580, 2
      %v8647 = vrot.slane %v8582, 2
      %v8648 = vsel %vm2494, %v8646, %v8647
      %v8649 = vrot.slane %v8583, 2
      %v8650 = vrot.slane %v8585, 2
      %v8651 = vsel %vm2494, %v8649, %v8650
      %v8652 = vrot.slane %v8584, 2
      %v8653 = vrot.slane %v8586, 2
      %v8654 = vsel %vm2494, %v8652, %v8653
      %v8655 = vrot.slane %v8587, 2
      %v8656 = vrot.slane %v8589, 2
      %v8657 = vsel %vm2494, %v8655, %v8656
      %v8658 = vrot.slane %v8588, 2
      %v8659 = vrot.slane %v8590, 2
      %v8660 = vsel %vm2494, %v8658, %v8659
      %v8661 = vrot.slane %v8591, 2
      %v8662 = vrot.slane %v8593, 2
      %v8663 = vsel %vm2494, %v8661, %v8662
      %v8664 = vrot.slane %v8592, 2
      %v8665 = vrot.slane %v8594, 2
      %v8666 = vsel %vm2494, %v8664, %v8665
      %v8667 = vrot.slane %v8595, 2
      %v8668 = vrot.slane %v8597, 2
      %v8669 = vsel %vm2494, %v8667, %v8668
      %v8670 = vrot.slane %v8596, 2
      %v8671 = vrot.slane %v8598, 2
      %v8672 = vsel %vm2494, %v8670, %v8671
      %v8673 = vrot.slane %v8599, 2
      %v8674 = vrot.slane %v8601, 2
      %v8675 = vsel %vm2494, %v8673, %v8674
      %v8676 = vrot.slane %v8600, 2
      %v8677 = vrot.slane %v8602, 2
      %v8678 = vsel %vm2494, %v8676, %v8677
      %v8679 = vrot.slane %v8603, 2
      %v8680 = vrot.slane %v8605, 2
      %v8681 = vsel %vm2494, %v8679, %v8680
      %v8682 = vrot.slane %v8604, 2
      %v8683 = vrot.slane %v8606, 2
      %v8684 = vsel %vm2494, %v8682, %v8683
      %v8685 = vrot.slane %v8607, 2
      %v8686 = vrot.slane %v8609, 2
      %v8687 = vsel %vm2494, %v8685, %v8686
      %v8688 = vrot.slane %v8608, 2
      %v8689 = vrot.slane %v8610, 2
      %v8690 = vsel %vm2494, %v8688, %v8689
      %v8707 = vadd.f32 %v8518, %v8645
      %v8708 = vadd.f32 %v8519, %v8648
      %v8709 = vadd.f32 %v8520, %v8651
      %v8710 = vadd.f32 %v8521, %v8654
      %v8711 = vadd.f32 %v8522, %v8657
      %v8712 = vadd.f32 %v8523, %v8660
      %v8713 = vadd.f32 %v8524, %v8663
      %v8714 = vadd.f32 %v8525, %v8666
      %v8715 = vadd.f32 %v8526, %v8669
      %v8716 = vadd.f32 %v8527, %v8672
      %v8717 = vadd.f32 %v8528, %v8675
      %v8718 = vadd.f32 %v8529, %v8678
      %v8719 = vadd.f32 %v8530, %v8681
      %v8720 = vadd.f32 %v8531, %v8684
      %v8721 = vadd.f32 %v8532, %v8687
      %v8722 = vadd.f32 %v8533, %v8690
      %v8723 = vld [vmem:[%s872] sm:$0xf0]
      %v8724 = vld [vmem:[%s872 + $0x8] sm:$0xf0]
      %v8725 = vld [vmem:[%s872 + $0x10] sm:$0xf]
      %v8726 = vld [vmem:[%s872 + $0x18] sm:$0xf]
      %v8727 = vld [vmem:[%s872 + $0x20] sm:$0xf0]
      %v8728 = vld [vmem:[%s872 + $0x28] sm:$0xf0]
      %v8729 = vld [vmem:[%s872 + $0x30] sm:$0xf]
      %v8730 = vld [vmem:[%s872 + $0x38] sm:$0xf]
      %v8731 = vld [vmem:[%s872 + $0x40] sm:$0xf0]
      %v8732 = vld [vmem:[%s872 + $0x48] sm:$0xf0]
      %v8733 = vld [vmem:[%s872 + $0x50] sm:$0xf]
      %v8734 = vld [vmem:[%s872 + $0x58] sm:$0xf]
      %v8735 = vld [vmem:[%s872 + $0x60] sm:$0xf0]
      %v8736 = vld [vmem:[%s872 + $0x68] sm:$0xf0]
      %v8737 = vld [vmem:[%s872 + $0x70] sm:$0xf]
      %v8738 = vld [vmem:[%s872 + $0x78] sm:$0xf]
      %v8739 = vld [vmem:[%s872 + $0x80] sm:$0xf0]
      %v8740 = vld [vmem:[%s872 + $0x88] sm:$0xf0]
      %v8741 = vld [vmem:[%s872 + $0x90] sm:$0xf]
      %v8742 = vld [vmem:[%s872 + $0x98] sm:$0xf]
      %v8743 = vld [vmem:[%s872 + $0xa0] sm:$0xf0]
      %v8744 = vld [vmem:[%s872 + $0xa8] sm:$0xf0]
      %v8745 = vld [vmem:[%s872 + $0xb0] sm:$0xf]
      %v8746 = vld [vmem:[%s872 + $0xb8] sm:$0xf]
      %v8747 = vld [vmem:[%s872 + $0xc0] sm:$0xf0]
      %v8748 = vld [vmem:[%s872 + $0xc8] sm:$0xf0]
      %v8749 = vld [vmem:[%s872 + $0xd0] sm:$0xf]
      %v8750 = vld [vmem:[%s872 + $0xd8] sm:$0xf]
      %v8751 = vld [vmem:[%s872 + $0xe0] sm:$0xf0]
      %v8752 = vld [vmem:[%s872 + $0xe8] sm:$0xf0]
      %v8753 = vld [vmem:[%s872 + $0xf0] sm:$0xf]
      %v8754 = vld [vmem:[%s872 + $0xf8] sm:$0xf]
      %s8755 = scalar_lea.vmem %s2, 23
      %v8756 = vld [vmem:[%s8755] ss:$8 sm:$0x3]
      %v8758 = vlaneseq
      %v8759 = vshrl.u32 %v8758, 7
      %v8760 = vsub.s32 0, %v8759
      %v8761 = vrot.slane %v8756, %v8760
      %v8762 = vlaneseq
      %v8763 = vshrl.u32 %v8762, 7
      %v8764 = vsub.s32 1, %v8763
      %v8765 = vrot.slane %v8756, %v8764
      %v8768 = vmul.f32 %v8723, %v8761
      %v8769 = vmul.f32 %v8724, %v8765
      %v8770 = vmul.f32 %v8725, %v8761
      %v8771 = vmul.f32 %v8726, %v8765
      %v8772 = vmul.f32 %v8727, %v8761
      %v8773 = vmul.f32 %v8728, %v8765
      %v8774 = vmul.f32 %v8729, %v8761
      %v8775 = vmul.f32 %v8730, %v8765
      %v8776 = vmul.f32 %v8731, %v8761
      %v8777 = vmul.f32 %v8732, %v8765
      %v8778 = vmul.f32 %v8733, %v8761
      %v8779 = vmul.f32 %v8734, %v8765
      %v8780 = vmul.f32 %v8735, %v8761
      %v8781 = vmul.f32 %v8736, %v8765
      %v8782 = vmul.f32 %v8737, %v8761
      %v8783 = vmul.f32 %v8738, %v8765
      %v8784 = vmul.f32 %v8739, %v8761
      %v8785 = vmul.f32 %v8740, %v8765
      %v8786 = vmul.f32 %v8741, %v8761
      %v8787 = vmul.f32 %v8742, %v8765
      %v8788 = vmul.f32 %v8743, %v8761
      %v8789 = vmul.f32 %v8744, %v8765
      %v8790 = vmul.f32 %v8745, %v8761
      %v8791 = vmul.f32 %v8746, %v8765
      %v8792 = vmul.f32 %v8747, %v8761
      %v8793 = vmul.f32 %v8748, %v8765
      %v8794 = vmul.f32 %v8749, %v8761
      %v8795 = vmul.f32 %v8750, %v8765
      %v8796 = vmul.f32 %v8751, %v8761
      %v8797 = vmul.f32 %v8752, %v8765
      %v8798 = vmul.f32 %v8753, %v8761
      %v8799 = vmul.f32 %v8754, %v8765
      %v8832 = vrot.slane %v8768, 4
      %v8833 = vrot.slane %v8770, 4
      %v8834 = vsel %vm7514, %v8832, %v8833
      %v8835 = vrot.slane %v8769, 4
      %v8836 = vrot.slane %v8771, 4
      %v8837 = vsel %vm7514, %v8835, %v8836
      %v8838 = vrot.slane %v8772, 4
      %v8839 = vrot.slane %v8774, 4
      %v8840 = vsel %vm7514, %v8838, %v8839
      %v8841 = vrot.slane %v8773, 4
      %v8842 = vrot.slane %v8775, 4
      %v8843 = vsel %vm7514, %v8841, %v8842
      %v8844 = vrot.slane %v8776, 4
      %v8845 = vrot.slane %v8778, 4
      %v8846 = vsel %vm7514, %v8844, %v8845
      %v8847 = vrot.slane %v8777, 4
      %v8848 = vrot.slane %v8779, 4
      %v8849 = vsel %vm7514, %v8847, %v8848
      %v8850 = vrot.slane %v8780, 4
      %v8851 = vrot.slane %v8782, 4
      %v8852 = vsel %vm7514, %v8850, %v8851
      %v8853 = vrot.slane %v8781, 4
      %v8854 = vrot.slane %v8783, 4
      %v8855 = vsel %vm7514, %v8853, %v8854
      %v8856 = vrot.slane %v8784, 4
      %v8857 = vrot.slane %v8786, 4
      %v8858 = vsel %vm7514, %v8856, %v8857
      %v8859 = vrot.slane %v8785, 4
      %v8860 = vrot.slane %v8787, 4
      %v8861 = vsel %vm7514, %v8859, %v8860
      %v8862 = vrot.slane %v8788, 4
      %v8863 = vrot.slane %v8790, 4
      %v8864 = vsel %vm7514, %v8862, %v8863
      %v8865 = vrot.slane %v8789, 4
      %v8866 = vrot.slane %v8791, 4
      %v8867 = vsel %vm7514, %v8865, %v8866
      %v8868 = vrot.slane %v8792, 4
      %v8869 = vrot.slane %v8794, 4
      %v8870 = vsel %vm7514, %v8868, %v8869
      %v8871 = vrot.slane %v8793, 4
      %v8872 = vrot.slane %v8795, 4
      %v8873 = vsel %vm7514, %v8871, %v8872
      %v8874 = vrot.slane %v8796, 4
      %v8875 = vrot.slane %v8798, 4
      %v8876 = vsel %vm7514, %v8874, %v8875
      %v8877 = vrot.slane %v8797, 4
      %v8878 = vrot.slane %v8799, 4
      %v8879 = vsel %vm7514, %v8877, %v8878
      %v8896 = vadd.f32 %v8707, %v8834
      %v8897 = vadd.f32 %v8708, %v8837
      %v8898 = vadd.f32 %v8709, %v8840
      %v8899 = vadd.f32 %v8710, %v8843
      %v8900 = vadd.f32 %v8711, %v8846
      %v8901 = vadd.f32 %v8712, %v8849
      %v8902 = vadd.f32 %v8713, %v8852
      %v8903 = vadd.f32 %v8714, %v8855
      %v8904 = vadd.f32 %v8715, %v8858
      %v8905 = vadd.f32 %v8716, %v8861
      %v8906 = vadd.f32 %v8717, %v8864
      %v8907 = vadd.f32 %v8718, %v8867
      %v8908 = vadd.f32 %v8719, %v8870
      %v8909 = vadd.f32 %v8720, %v8873
      %v8910 = vadd.f32 %v8721, %v8876
      %v8911 = vadd.f32 %v8722, %v8879
      %v8912 = vld [vmem:[%s1104] sm:$0xf0]
      %v8913 = vld [vmem:[%s1104 + $0x8] sm:$0xf0]
      %v8914 = vld [vmem:[%s1104 + $0x10] sm:$0xf]
      %v8915 = vld [vmem:[%s1104 + $0x18] sm:$0xf]
      %v8916 = vld [vmem:[%s1104 + $0x20] sm:$0xf0]
      %v8917 = vld [vmem:[%s1104 + $0x28] sm:$0xf0]
      %v8918 = vld [vmem:[%s1104 + $0x30] sm:$0xf]
      %v8919 = vld [vmem:[%s1104 + $0x38] sm:$0xf]
      %v8920 = vld [vmem:[%s1104 + $0x40] sm:$0xf0]
      %v8921 = vld [vmem:[%s1104 + $0x48] sm:$0xf0]
      %v8922 = vld [vmem:[%s1104 + $0x50] sm:$0xf]
      %v8923 = vld [vmem:[%s1104 + $0x58] sm:$0xf]
      %v8924 = vld [vmem:[%s1104 + $0x60] sm:$0xf0]
      %v8925 = vld [vmem:[%s1104 + $0x68] sm:$0xf0]
      %v8926 = vld [vmem:[%s1104 + $0x70] sm:$0xf]
      %v8927 = vld [vmem:[%s1104 + $0x78] sm:$0xf]
      %v8928 = vld [vmem:[%s1104 + $0x80] sm:$0xf0]
      %v8929 = vld [vmem:[%s1104 + $0x88] sm:$0xf0]
      %v8930 = vld [vmem:[%s1104 + $0x90] sm:$0xf]
      %v8931 = vld [vmem:[%s1104 + $0x98] sm:$0xf]
      %v8932 = vld [vmem:[%s1104 + $0xa0] sm:$0xf0]
      %v8933 = vld [vmem:[%s1104 + $0xa8] sm:$0xf0]
      %v8934 = vld [vmem:[%s1104 + $0xb0] sm:$0xf]
      %v8935 = vld [vmem:[%s1104 + $0xb8] sm:$0xf]
      %v8936 = vld [vmem:[%s1104 + $0xc0] sm:$0xf0]
      %v8937 = vld [vmem:[%s1104 + $0xc8] sm:$0xf0]
      %v8938 = vld [vmem:[%s1104 + $0xd0] sm:$0xf]
      %v8939 = vld [vmem:[%s1104 + $0xd8] sm:$0xf]
      %v8940 = vld [vmem:[%s1104 + $0xe0] sm:$0xf0]
      %v8941 = vld [vmem:[%s1104 + $0xe8] sm:$0xf0]
      %v8942 = vld [vmem:[%s1104 + $0xf0] sm:$0xf]
      %v8943 = vld [vmem:[%s1104 + $0xf8] sm:$0xf]
      %s8944 = scalar_lea.vmem %s2, 32
      %v8945 = vld [vmem:[%s8944] ss:$8 sm:$0x3]
      %v8947 = vlaneseq
      %v8948 = vshrl.u32 %v8947, 7
      %v8949 = vsub.s32 0, %v8948
      %v8950 = vrot.slane %v8945, %v8949
      %v8951 = vlaneseq
      %v8952 = vshrl.u32 %v8951, 7
      %v8953 = vsub.s32 1, %v8952
      %v8954 = vrot.slane %v8945, %v8953
      %v8957 = vmul.f32 %v8912, %v8950
      %v8958 = vmul.f32 %v8913, %v8954
      %v8959 = vmul.f32 %v8914, %v8950
      %v8960 = vmul.f32 %v8915, %v8954
      %v8961 = vmul.f32 %v8916, %v8950
      %v8962 = vmul.f32 %v8917, %v8954
      %v8963 = vmul.f32 %v8918, %v8950
      %v8964 = vmul.f32 %v8919, %v8954
      %v8965 = vmul.f32 %v8920, %v8950
      %v8966 = vmul.f32 %v8921, %v8954
      %v8967 = vmul.f32 %v8922, %v8950
      %v8968 = vmul.f32 %v8923, %v8954
      %v8969 = vmul.f32 %v8924, %v8950
      %v8970 = vmul.f32 %v8925, %v8954
      %v8971 = vmul.f32 %v8926, %v8950
      %v8972 = vmul.f32 %v8927, %v8954
      %v8973 = vmul.f32 %v8928, %v8950
      %v8974 = vmul.f32 %v8929, %v8954
      %v8975 = vmul.f32 %v8930, %v8950
      %v8976 = vmul.f32 %v8931, %v8954
      %v8977 = vmul.f32 %v8932, %v8950
      %v8978 = vmul.f32 %v8933, %v8954
      %v8979 = vmul.f32 %v8934, %v8950
      %v8980 = vmul.f32 %v8935, %v8954
      %v8981 = vmul.f32 %v8936, %v8950
      %v8982 = vmul.f32 %v8937, %v8954
      %v8983 = vmul.f32 %v8938, %v8950
      %v8984 = vmul.f32 %v8939, %v8954
      %v8985 = vmul.f32 %v8940, %v8950
      %v8986 = vmul.f32 %v8941, %v8954
      %v8987 = vmul.f32 %v8942, %v8950
      %v8988 = vmul.f32 %v8943, %v8954
      %v9021 = vrot.slane %v8957, 4
      %v9022 = vrot.slane %v8959, 4
      %v9023 = vsel %vm7514, %v9021, %v9022
      %v9024 = vrot.slane %v8958, 4
      %v9025 = vrot.slane %v8960, 4
      %v9026 = vsel %vm7514, %v9024, %v9025
      %v9027 = vrot.slane %v8961, 4
      %v9028 = vrot.slane %v8963, 4
      %v9029 = vsel %vm7514, %v9027, %v9028
      %v9030 = vrot.slane %v8962, 4
      %v9031 = vrot.slane %v8964, 4
      %v9032 = vsel %vm7514, %v9030, %v9031
      %v9033 = vrot.slane %v8965, 4
      %v9034 = vrot.slane %v8967, 4
      %v9035 = vsel %vm7514, %v9033, %v9034
      %v9036 = vrot.slane %v8966, 4
      %v9037 = vrot.slane %v8968, 4
      %v9038 = vsel %vm7514, %v9036, %v9037
      %v9039 = vrot.slane %v8969, 4
      %v9040 = vrot.slane %v8971, 4
      %v9041 = vsel %vm7514, %v9039, %v9040
      %v9042 = vrot.slane %v8970, 4
      %v9043 = vrot.slane %v8972, 4
      %v9044 = vsel %vm7514, %v9042, %v9043
      %v9045 = vrot.slane %v8973, 4
      %v9046 = vrot.slane %v8975, 4
      %v9047 = vsel %vm7514, %v9045, %v9046
      %v9048 = vrot.slane %v8974, 4
      %v9049 = vrot.slane %v8976, 4
      %v9050 = vsel %vm7514, %v9048, %v9049
      %v9051 = vrot.slane %v8977, 4
      %v9052 = vrot.slane %v8979, 4
      %v9053 = vsel %vm7514, %v9051, %v9052
      %v9054 = vrot.slane %v8978, 4
      %v9055 = vrot.slane %v8980, 4
      %v9056 = vsel %vm7514, %v9054, %v9055
      %v9057 = vrot.slane %v8981, 4
      %v9058 = vrot.slane %v8983, 4
      %v9059 = vsel %vm7514, %v9057, %v9058
      %v9060 = vrot.slane %v8982, 4
      %v9061 = vrot.slane %v8984, 4
      %v9062 = vsel %vm7514, %v9060, %v9061
      %v9063 = vrot.slane %v8985, 4
      %v9064 = vrot.slane %v8987, 4
      %v9065 = vsel %vm7514, %v9063, %v9064
      %v9066 = vrot.slane %v8986, 4
      %v9067 = vrot.slane %v8988, 4
      %v9068 = vsel %vm7514, %v9066, %v9067
      %v9085 = vadd.f32 %v8896, %v9023
      %v9086 = vadd.f32 %v8897, %v9026
      %v9087 = vadd.f32 %v8898, %v9029
      %v9088 = vadd.f32 %v8899, %v9032
      %v9089 = vadd.f32 %v8900, %v9035
      %v9090 = vadd.f32 %v8901, %v9038
      %v9091 = vadd.f32 %v8902, %v9041
      %v9092 = vadd.f32 %v8903, %v9044
      %v9093 = vadd.f32 %v8904, %v9047
      %v9094 = vadd.f32 %v8905, %v9050
      %v9095 = vadd.f32 %v8906, %v9053
      %v9096 = vadd.f32 %v8907, %v9056
      %v9097 = vadd.f32 %v8908, %v9059
      %v9098 = vadd.f32 %v8909, %v9062
      %v9099 = vadd.f32 %v8910, %v9065
      %v9100 = vadd.f32 %v8911, %v9068
      %v9101 = vld [vmem:[%s1359] sm:$0xf0]
      %v9102 = vld [vmem:[%s1359 + $0x8] sm:$0xf0]
      %v9103 = vld [vmem:[%s1359 + $0x10] sm:$0xf]
      %v9104 = vld [vmem:[%s1359 + $0x18] sm:$0xf]
      %v9105 = vld [vmem:[%s1359 + $0x20] sm:$0xf0]
      %v9106 = vld [vmem:[%s1359 + $0x28] sm:$0xf0]
      %v9107 = vld [vmem:[%s1359 + $0x30] sm:$0xf]
      %v9108 = vld [vmem:[%s1359 + $0x38] sm:$0xf]
      %v9109 = vld [vmem:[%s1359 + $0x40] sm:$0xf0]
      %v9110 = vld [vmem:[%s1359 + $0x48] sm:$0xf0]
      %v9111 = vld [vmem:[%s1359 + $0x50] sm:$0xf]
      %v9112 = vld [vmem:[%s1359 + $0x58] sm:$0xf]
      %v9113 = vld [vmem:[%s1359 + $0x60] sm:$0xf0]
      %v9114 = vld [vmem:[%s1359 + $0x68] sm:$0xf0]
      %v9115 = vld [vmem:[%s1359 + $0x70] sm:$0xf]
      %v9116 = vld [vmem:[%s1359 + $0x78] sm:$0xf]
      %v9117 = vld [vmem:[%s1359 + $0x80] sm:$0xf0]
      %v9118 = vld [vmem:[%s1359 + $0x88] sm:$0xf0]
      %v9119 = vld [vmem:[%s1359 + $0x90] sm:$0xf]
      %v9120 = vld [vmem:[%s1359 + $0x98] sm:$0xf]
      %v9121 = vld [vmem:[%s1359 + $0xa0] sm:$0xf0]
      %v9122 = vld [vmem:[%s1359 + $0xa8] sm:$0xf0]
      %v9123 = vld [vmem:[%s1359 + $0xb0] sm:$0xf]
      %v9124 = vld [vmem:[%s1359 + $0xb8] sm:$0xf]
      %v9125 = vld [vmem:[%s1359 + $0xc0] sm:$0xf0]
      %v9126 = vld [vmem:[%s1359 + $0xc8] sm:$0xf0]
      %v9127 = vld [vmem:[%s1359 + $0xd0] sm:$0xf]
      %v9128 = vld [vmem:[%s1359 + $0xd8] sm:$0xf]
      %v9129 = vld [vmem:[%s1359 + $0xe0] sm:$0xf0]
      %v9130 = vld [vmem:[%s1359 + $0xe8] sm:$0xf0]
      %v9131 = vld [vmem:[%s1359 + $0xf0] sm:$0xf]
      %v9132 = vld [vmem:[%s1359 + $0xf8] sm:$0xf]
      %s9133 = scalar_lea.vmem %s2, 33
      %v9134 = vld [vmem:[%s9133] ss:$8 sm:$0x3]
      %v9136 = vlaneseq
      %v9137 = vshrl.u32 %v9136, 7
      %v9138 = vsub.s32 0, %v9137
      %v9139 = vrot.slane %v9134, %v9138
      %v9140 = vlaneseq
      %v9141 = vshrl.u32 %v9140, 7
      %v9142 = vsub.s32 1, %v9141
      %v9143 = vrot.slane %v9134, %v9142
      %v9146 = vmul.f32 %v9101, %v9139
      %v9147 = vmul.f32 %v9102, %v9143
      %v9148 = vmul.f32 %v9103, %v9139
      %v9149 = vmul.f32 %v9104, %v9143
      %v9150 = vmul.f32 %v9105, %v9139
      %v9151 = vmul.f32 %v9106, %v9143
      %v9152 = vmul.f32 %v9107, %v9139
      %v9153 = vmul.f32 %v9108, %v9143
      %v9154 = vmul.f32 %v9109, %v9139
      %v9155 = vmul.f32 %v9110, %v9143
      %v9156 = vmul.f32 %v9111, %v9139
      %v9157 = vmul.f32 %v9112, %v9143
      %v9158 = vmul.f32 %v9113, %v9139
      %v9159 = vmul.f32 %v9114, %v9143
      %v9160 = vmul.f32 %v9115, %v9139
      %v9161 = vmul.f32 %v9116, %v9143
      %v9162 = vmul.f32 %v9117, %v9139
      %v9163 = vmul.f32 %v9118, %v9143
      %v9164 = vmul.f32 %v9119, %v9139
      %v9165 = vmul.f32 %v9120, %v9143
      %v9166 = vmul.f32 %v9121, %v9139
      %v9167 = vmul.f32 %v9122, %v9143
      %v9168 = vmul.f32 %v9123, %v9139
      %v9169 = vmul.f32 %v9124, %v9143
      %v9170 = vmul.f32 %v9125, %v9139
      %v9171 = vmul.f32 %v9126, %v9143
      %v9172 = vmul.f32 %v9127, %v9139
      %v9173 = vmul.f32 %v9128, %v9143
      %v9174 = vmul.f32 %v9129, %v9139
      %v9175 = vmul.f32 %v9130, %v9143
      %v9176 = vmul.f32 %v9131, %v9139
      %v9177 = vmul.f32 %v9132, %v9143
      %v9210 = vrot.slane %v9146, 4
      %v9211 = vrot.slane %v9148, 4
      %v9212 = vsel %vm7514, %v9210, %v9211
      %v9213 = vrot.slane %v9147, 4
      %v9214 = vrot.slane %v9149, 4
      %v9215 = vsel %vm7514, %v9213, %v9214
      %v9216 = vrot.slane %v9150, 4
      %v9217 = vrot.slane %v9152, 4
      %v9218 = vsel %vm7514, %v9216, %v9217
      %v9219 = vrot.slane %v9151, 4
      %v9220 = vrot.slane %v9153, 4
      %v9221 = vsel %vm7514, %v9219, %v9220
      %v9222 = vrot.slane %v9154, 4
      %v9223 = vrot.slane %v9156, 4
      %v9224 = vsel %vm7514, %v9222, %v9223
      %v9225 = vrot.slane %v9155, 4
      %v9226 = vrot.slane %v9157, 4
      %v9227 = vsel %vm7514, %v9225, %v9226
      %v9228 = vrot.slane %v9158, 4
      %v9229 = vrot.slane %v9160, 4
      %v9230 = vsel %vm7514, %v9228, %v9229
      %v9231 = vrot.slane %v9159, 4
      %v9232 = vrot.slane %v9161, 4
      %v9233 = vsel %vm7514, %v9231, %v9232
      %v9234 = vrot.slane %v9162, 4
      %v9235 = vrot.slane %v9164, 4
      %v9236 = vsel %vm7514, %v9234, %v9235
      %v9237 = vrot.slane %v9163, 4
      %v9238 = vrot.slane %v9165, 4
      %v9239 = vsel %vm7514, %v9237, %v9238
      %v9240 = vrot.slane %v9166, 4
      %v9241 = vrot.slane %v9168, 4
      %v9242 = vsel %vm7514, %v9240, %v9241
      %v9243 = vrot.slane %v9167, 4
      %v9244 = vrot.slane %v9169, 4
      %v9245 = vsel %vm7514, %v9243, %v9244
      %v9246 = vrot.slane %v9170, 4
      %v9247 = vrot.slane %v9172, 4
      %v9248 = vsel %vm7514, %v9246, %v9247
      %v9249 = vrot.slane %v9171, 4
      %v9250 = vrot.slane %v9173, 4
      %v9251 = vsel %vm7514, %v9249, %v9250
      %v9252 = vrot.slane %v9174, 4
      %v9253 = vrot.slane %v9176, 4
      %v9254 = vsel %vm7514, %v9252, %v9253
      %v9255 = vrot.slane %v9175, 4
      %v9256 = vrot.slane %v9177, 4
      %v9257 = vsel %vm7514, %v9255, %v9256
      %v9274 = vadd.f32 %v9085, %v9212
      %v9275 = vadd.f32 %v9086, %v9215
      %v9276 = vadd.f32 %v9087, %v9218
      %v9277 = vadd.f32 %v9088, %v9221
      %v9278 = vadd.f32 %v9089, %v9224
      %v9279 = vadd.f32 %v9090, %v9227
      %v9280 = vadd.f32 %v9091, %v9230
      %v9281 = vadd.f32 %v9092, %v9233
      %v9282 = vadd.f32 %v9093, %v9236
      %v9283 = vadd.f32 %v9094, %v9239
      %v9284 = vadd.f32 %v9095, %v9242
      %v9285 = vadd.f32 %v9096, %v9245
      %v9286 = vadd.f32 %v9097, %v9248
      %v9287 = vadd.f32 %v9098, %v9251
      %v9288 = vadd.f32 %v9099, %v9254
      %v9289 = vadd.f32 %v9100, %v9257
      %s9290 = scalar_lea.vmem [#allocation2], 128
      %v9291 = vld [vmem:[%s9290] sm:$0xff]
      %v9292 = vld [vmem:[%s9290 + $0x8] sm:$0xff]
      %v9293 = vld [vmem:[%s9290 + $0x20] sm:$0xff]
      %v9294 = vld [vmem:[%s9290 + $0x28] sm:$0xff]
      %v9295 = vld [vmem:[%s9290 + $0x40] sm:$0xff]
      %v9296 = vld [vmem:[%s9290 + $0x48] sm:$0xff]
      %v9297 = vld [vmem:[%s9290 + $0x60] sm:$0xff]
      %v9298 = vld [vmem:[%s9290 + $0x68] sm:$0xff]
      %v9299 = vld [vmem:[%s9290 + $0x80] sm:$0xff]
      %v9300 = vld [vmem:[%s9290 + $0x88] sm:$0xff]
      %v9301 = vld [vmem:[%s9290 + $0xa0] sm:$0xff]
      %v9302 = vld [vmem:[%s9290 + $0xa8] sm:$0xff]
      %v9303 = vld [vmem:[%s9290 + $0xc0] sm:$0xff]
      %v9304 = vld [vmem:[%s9290 + $0xc8] sm:$0xff]
      %v9305 = vld [vmem:[%s9290 + $0xe0] sm:$0xff]
      %v9306 = vld [vmem:[%s9290 + $0xe8] sm:$0xff]
      %s9307 = scalar_lea.vmem %s2, 34
      %v9308 = vld [vmem:[%s9307] ss:$8 sm:$0x3]
      %v9310 = vlaneseq
      %v9311 = vshrl.u32 %v9310, 7
      %v9312 = vsub.s32 0, %v9311
      %v9313 = vrot.slane %v9308, %v9312
      %v9314 = vlaneseq
      %v9315 = vshrl.u32 %v9314, 7
      %v9316 = vsub.s32 1, %v9315
      %v9317 = vrot.slane %v9308, %v9316
      %v9320 = vmul.f32 %v9291, %v9313
      %v9321 = vmul.f32 %v9292, %v9317
      %v9322 = vmul.f32 %v9293, %v9313
      %v9323 = vmul.f32 %v9294, %v9317
      %v9324 = vmul.f32 %v9295, %v9313
      %v9325 = vmul.f32 %v9296, %v9317
      %v9326 = vmul.f32 %v9297, %v9313
      %v9327 = vmul.f32 %v9298, %v9317
      %v9328 = vmul.f32 %v9299, %v9313
      %v9329 = vmul.f32 %v9300, %v9317
      %v9330 = vmul.f32 %v9301, %v9313
      %v9331 = vmul.f32 %v9302, %v9317
      %v9332 = vmul.f32 %v9303, %v9313
      %v9333 = vmul.f32 %v9304, %v9317
      %v9334 = vmul.f32 %v9305, %v9313
      %v9335 = vmul.f32 %v9306, %v9317
      %v9336 = vadd.f32 %v9274, %v9320
      %v9337 = vadd.f32 %v9275, %v9321
      %v9338 = vadd.f32 %v9276, %v9322
      %v9339 = vadd.f32 %v9277, %v9323
      %v9340 = vadd.f32 %v9278, %v9324
      %v9341 = vadd.f32 %v9279, %v9325
      %v9342 = vadd.f32 %v9280, %v9326
      %v9343 = vadd.f32 %v9281, %v9327
      %v9344 = vadd.f32 %v9282, %v9328
      %v9345 = vadd.f32 %v9283, %v9329
      %v9346 = vadd.f32 %v9284, %v9330
      %v9347 = vadd.f32 %v9285, %v9331
      %v9348 = vadd.f32 %v9286, %v9332
      %v9349 = vadd.f32 %v9287, %v9333
      %v9350 = vadd.f32 %v9288, %v9334
      %v9351 = vadd.f32 %v9289, %v9335
      %s9352 = scalar_lea.vmem [#allocation2], 896
      %v9353 = vld [vmem:[%s9352] sm:$0xff]
      %v9354 = vld [vmem:[%s9352 + $0x8] sm:$0xff]
      %v9355 = vld [vmem:[%s9352 + $0x20] sm:$0xff]
      %v9356 = vld [vmem:[%s9352 + $0x28] sm:$0xff]
      %v9357 = vld [vmem:[%s9352 + $0x40] sm:$0xff]
      %v9358 = vld [vmem:[%s9352 + $0x48] sm:$0xff]
      %v9359 = vld [vmem:[%s9352 + $0x60] sm:$0xff]
      %v9360 = vld [vmem:[%s9352 + $0x68] sm:$0xff]
      %v9361 = vld [vmem:[%s9352 + $0x80] sm:$0xff]
      %v9362 = vld [vmem:[%s9352 + $0x88] sm:$0xff]
      %v9363 = vld [vmem:[%s9352 + $0xa0] sm:$0xff]
      %v9364 = vld [vmem:[%s9352 + $0xa8] sm:$0xff]
      %v9365 = vld [vmem:[%s9352 + $0xc0] sm:$0xff]
      %v9366 = vld [vmem:[%s9352 + $0xc8] sm:$0xff]
      %v9367 = vld [vmem:[%s9352 + $0xe0] sm:$0xff]
      %v9368 = vld [vmem:[%s9352 + $0xe8] sm:$0xff]
      %s9369 = scalar_lea.vmem %s2, 35
      %v9370 = vld [vmem:[%s9369] ss:$8 sm:$0x3]
      %v9372 = vlaneseq
      %v9373 = vshrl.u32 %v9372, 7
      %v9374 = vsub.s32 0, %v9373
      %v9375 = vrot.slane %v9370, %v9374
      %v9376 = vlaneseq
      %v9377 = vshrl.u32 %v9376, 7
      %v9378 = vsub.s32 1, %v9377
      %v9379 = vrot.slane %v9370, %v9378
      %v9382 = vmul.f32 %v9353, %v9375
      %v9383 = vmul.f32 %v9354, %v9379
      %v9384 = vmul.f32 %v9355, %v9375
      %v9385 = vmul.f32 %v9356, %v9379
      %v9386 = vmul.f32 %v9357, %v9375
      %v9387 = vmul.f32 %v9358, %v9379
      %v9388 = vmul.f32 %v9359, %v9375
      %v9389 = vmul.f32 %v9360, %v9379
      %v9390 = vmul.f32 %v9361, %v9375
      %v9391 = vmul.f32 %v9362, %v9379
      %v9392 = vmul.f32 %v9363, %v9375
      %v9393 = vmul.f32 %v9364, %v9379
      %v9394 = vmul.f32 %v9365, %v9375
      %v9395 = vmul.f32 %v9366, %v9379
      %v9396 = vmul.f32 %v9367, %v9375
      %v9397 = vmul.f32 %v9368, %v9379
      %v9398 = vadd.f32 %v9336, %v9382
      %v9399 = vadd.f32 %v9337, %v9383
      %v9400 = vadd.f32 %v9338, %v9384
      %v9401 = vadd.f32 %v9339, %v9385
      %v9402 = vadd.f32 %v9340, %v9386
      %v9403 = vadd.f32 %v9341, %v9387
      %v9404 = vadd.f32 %v9342, %v9388
      %v9405 = vadd.f32 %v9343, %v9389
      %v9406 = vadd.f32 %v9344, %v9390
      %v9407 = vadd.f32 %v9345, %v9391
      %v9408 = vadd.f32 %v9346, %v9392
      %v9409 = vadd.f32 %v9347, %v9393
      %v9410 = vadd.f32 %v9348, %v9394
      %v9411 = vadd.f32 %v9349, %v9395
      %v9412 = vadd.f32 %v9350, %v9396
      %v9413 = vadd.f32 %v9351, %v9397
      %s9414 = scalar_lea.vmem [#allocation2], 1664
      %v9415 = vld [vmem:[%s9414] sm:$0xff]
      %v9416 = vld [vmem:[%s9414 + $0x8] sm:$0xff]
      %v9417 = vld [vmem:[%s9414 + $0x20] sm:$0xff]
      %v9418 = vld [vmem:[%s9414 + $0x28] sm:$0xff]
      %v9419 = vld [vmem:[%s9414 + $0x40] sm:$0xff]
      %v9420 = vld [vmem:[%s9414 + $0x48] sm:$0xff]
      %v9421 = vld [vmem:[%s9414 + $0x60] sm:$0xff]
      %v9422 = vld [vmem:[%s9414 + $0x68] sm:$0xff]
      %v9423 = vld [vmem:[%s9414 + $0x80] sm:$0xff]
      %v9424 = vld [vmem:[%s9414 + $0x88] sm:$0xff]
      %v9425 = vld [vmem:[%s9414 + $0xa0] sm:$0xff]
      %v9426 = vld [vmem:[%s9414 + $0xa8] sm:$0xff]
      %v9427 = vld [vmem:[%s9414 + $0xc0] sm:$0xff]
      %v9428 = vld [vmem:[%s9414 + $0xc8] sm:$0xff]
      %v9429 = vld [vmem:[%s9414 + $0xe0] sm:$0xff]
      %v9430 = vld [vmem:[%s9414 + $0xe8] sm:$0xff]
      %s9431 = scalar_lea.vmem %s2, 36
      %v9432 = vld [vmem:[%s9431] ss:$8 sm:$0x3]
      %v9434 = vlaneseq
      %v9435 = vshrl.u32 %v9434, 7
      %v9436 = vsub.s32 0, %v9435
      %v9437 = vrot.slane %v9432, %v9436
      %v9438 = vlaneseq
      %v9439 = vshrl.u32 %v9438, 7
      %v9440 = vsub.s32 1, %v9439
      %v9441 = vrot.slane %v9432, %v9440
      %v9444 = vmul.f32 %v9415, %v9437
      %v9445 = vmul.f32 %v9416, %v9441
      %v9446 = vmul.f32 %v9417, %v9437
      %v9447 = vmul.f32 %v9418, %v9441
      %v9448 = vmul.f32 %v9419, %v9437
      %v9449 = vmul.f32 %v9420, %v9441
      %v9450 = vmul.f32 %v9421, %v9437
      %v9451 = vmul.f32 %v9422, %v9441
      %v9452 = vmul.f32 %v9423, %v9437
      %v9453 = vmul.f32 %v9424, %v9441
      %v9454 = vmul.f32 %v9425, %v9437
      %v9455 = vmul.f32 %v9426, %v9441
      %v9456 = vmul.f32 %v9427, %v9437
      %v9457 = vmul.f32 %v9428, %v9441
      %v9458 = vmul.f32 %v9429, %v9437
      %v9459 = vmul.f32 %v9430, %v9441
      %v9460 = vadd.f32 %v9398, %v9444
      %v9461 = vadd.f32 %v9399, %v9445
      %v9462 = vadd.f32 %v9400, %v9446
      %v9463 = vadd.f32 %v9401, %v9447
      %v9464 = vadd.f32 %v9402, %v9448
      %v9465 = vadd.f32 %v9403, %v9449
      %v9466 = vadd.f32 %v9404, %v9450
      %v9467 = vadd.f32 %v9405, %v9451
      %v9468 = vadd.f32 %v9406, %v9452
      %v9469 = vadd.f32 %v9407, %v9453
      %v9470 = vadd.f32 %v9408, %v9454
      %v9471 = vadd.f32 %v9409, %v9455
      %v9472 = vadd.f32 %v9410, %v9456
      %v9473 = vadd.f32 %v9411, %v9457
      %v9474 = vadd.f32 %v9412, %v9458
      %v9475 = vadd.f32 %v9413, %v9459
      %v9476 = vld [vmem:[%s9290] sm:$0xfc]
      %v9477 = vld [vmem:[%s9290 + $0x8] sm:$0xfc]
      %v9478 = vld [vmem:[%s9290 + $0x10] sm:$0x3]
      %v9479 = vld [vmem:[%s9290 + $0x18] sm:$0x3]
      %v9480 = vld [vmem:[%s9290 + $0x20] sm:$0xfc]
      %v9481 = vld [vmem:[%s9290 + $0x28] sm:$0xfc]
      %v9482 = vld [vmem:[%s9290 + $0x30] sm:$0x3]
      %v9483 = vld [vmem:[%s9290 + $0x38] sm:$0x3]
      %v9484 = vld [vmem:[%s9290 + $0x40] sm:$0xfc]
      %v9485 = vld [vmem:[%s9290 + $0x48] sm:$0xfc]
      %v9486 = vld [vmem:[%s9290 + $0x50] sm:$0x3]
      %v9487 = vld [vmem:[%s9290 + $0x58] sm:$0x3]
      %v9488 = vld [vmem:[%s9290 + $0x60] sm:$0xfc]
      %v9489 = vld [vmem:[%s9290 + $0x68] sm:$0xfc]
      %v9490 = vld [vmem:[%s9290 + $0x70] sm:$0x3]
      %v9491 = vld [vmem:[%s9290 + $0x78] sm:$0x3]
      %v9492 = vld [vmem:[%s9290 + $0x80] sm:$0xfc]
      %v9493 = vld [vmem:[%s9290 + $0x88] sm:$0xfc]
      %v9494 = vld [vmem:[%s9290 + $0x90] sm:$0x3]
      %v9495 = vld [vmem:[%s9290 + $0x98] sm:$0x3]
      %v9496 = vld [vmem:[%s9290 + $0xa0] sm:$0xfc]
      %v9497 = vld [vmem:[%s9290 + $0xa8] sm:$0xfc]
      %v9498 = vld [vmem:[%s9290 + $0xb0] sm:$0x3]
      %v9499 = vld [vmem:[%s9290 + $0xb8] sm:$0x3]
      %v9500 = vld [vmem:[%s9290 + $0xc0] sm:$0xfc]
      %v9501 = vld [vmem:[%s9290 + $0xc8] sm:$0xfc]
      %v9502 = vld [vmem:[%s9290 + $0xd0] sm:$0x3]
      %v9503 = vld [vmem:[%s9290 + $0xd8] sm:$0x3]
      %v9504 = vld [vmem:[%s9290 + $0xe0] sm:$0xfc]
      %v9505 = vld [vmem:[%s9290 + $0xe8] sm:$0xfc]
      %v9506 = vld [vmem:[%s9290 + $0xf0] sm:$0x3]
      %v9507 = vld [vmem:[%s9290 + $0xf8] sm:$0x3]
      %s9508 = scalar_lea.vmem %s2, 37
      %v9509 = vld [vmem:[%s9508] ss:$8 sm:$0x3]
      %v9511 = vlaneseq
      %v9512 = vshrl.u32 %v9511, 7
      %v9513 = vsub.s32 0, %v9512
      %v9514 = vrot.slane %v9509, %v9513
      %v9515 = vlaneseq
      %v9516 = vshrl.u32 %v9515, 7
      %v9517 = vsub.s32 1, %v9516
      %v9518 = vrot.slane %v9509, %v9517
      %v9521 = vmul.f32 %v9476, %v9514
      %v9522 = vmul.f32 %v9477, %v9518
      %v9523 = vmul.f32 %v9478, %v9514
      %v9524 = vmul.f32 %v9479, %v9518
      %v9525 = vmul.f32 %v9480, %v9514
      %v9526 = vmul.f32 %v9481, %v9518
      %v9527 = vmul.f32 %v9482, %v9514
      %v9528 = vmul.f32 %v9483, %v9518
      %v9529 = vmul.f32 %v9484, %v9514
      %v9530 = vmul.f32 %v9485, %v9518
      %v9531 = vmul.f32 %v9486, %v9514
      %v9532 = vmul.f32 %v9487, %v9518
      %v9533 = vmul.f32 %v9488, %v9514
      %v9534 = vmul.f32 %v9489, %v9518
      %v9535 = vmul.f32 %v9490, %v9514
      %v9536 = vmul.f32 %v9491, %v9518
      %v9537 = vmul.f32 %v9492, %v9514
      %v9538 = vmul.f32 %v9493, %v9518
      %v9539 = vmul.f32 %v9494, %v9514
      %v9540 = vmul.f32 %v9495, %v9518
      %v9541 = vmul.f32 %v9496, %v9514
      %v9542 = vmul.f32 %v9497, %v9518
      %v9543 = vmul.f32 %v9498, %v9514
      %v9544 = vmul.f32 %v9499, %v9518
      %v9545 = vmul.f32 %v9500, %v9514
      %v9546 = vmul.f32 %v9501, %v9518
      %v9547 = vmul.f32 %v9502, %v9514
      %v9548 = vmul.f32 %v9503, %v9518
      %v9549 = vmul.f32 %v9504, %v9514
      %v9550 = vmul.f32 %v9505, %v9518
      %v9551 = vmul.f32 %v9506, %v9514
      %v9552 = vmul.f32 %v9507, %v9518
      %v9585 = vrot.slane %v9521, 2
      %v9586 = vrot.slane %v9523, 2
      %v9587 = vsel %vm2494, %v9585, %v9586
      %v9588 = vrot.slane %v9522, 2
      %v9589 = vrot.slane %v9524, 2
      %v9590 = vsel %vm2494, %v9588, %v9589
      %v9591 = vrot.slane %v9525, 2
      %v9592 = vrot.slane %v9527, 2
      %v9593 = vsel %vm2494, %v9591, %v9592
      %v9594 = vrot.slane %v9526, 2
      %v9595 = vrot.slane %v9528, 2
      %v9596 = vsel %vm2494, %v9594, %v9595
      %v9597 = vrot.slane %v9529, 2
      %v9598 = vrot.slane %v9531, 2
      %v9599 = vsel %vm2494, %v9597, %v9598
      %v9600 = vrot.slane %v9530, 2
      %v9601 = vrot.slane %v9532, 2
      %v9602 = vsel %vm2494, %v9600, %v9601
      %v9603 = vrot.slane %v9533, 2
      %v9604 = vrot.slane %v9535, 2
      %v9605 = vsel %vm2494, %v9603, %v9604
      %v9606 = vrot.slane %v9534, 2
      %v9607 = vrot.slane %v9536, 2
      %v9608 = vsel %vm2494, %v9606, %v9607
      %v9609 = vrot.slane %v9537, 2
      %v9610 = vrot.slane %v9539, 2
      %v9611 = vsel %vm2494, %v9609, %v9610
      %v9612 = vrot.slane %v9538, 2
      %v9613 = vrot.slane %v9540, 2
      %v9614 = vsel %vm2494, %v9612, %v9613
      %v9615 = vrot.slane %v9541, 2
      %v9616 = vrot.slane %v9543, 2
      %v9617 = vsel %vm2494, %v9615, %v9616
      %v9618 = vrot.slane %v9542, 2
      %v9619 = vrot.slane %v9544, 2
      %v9620 = vsel %vm2494, %v9618, %v9619
      %v9621 = vrot.slane %v9545, 2
      %v9622 = vrot.slane %v9547, 2
      %v9623 = vsel %vm2494, %v9621, %v9622
      %v9624 = vrot.slane %v9546, 2
      %v9625 = vrot.slane %v9548, 2
      %v9626 = vsel %vm2494, %v9624, %v9625
      %v9627 = vrot.slane %v9549, 2
      %v9628 = vrot.slane %v9551, 2
      %v9629 = vsel %vm2494, %v9627, %v9628
      %v9630 = vrot.slane %v9550, 2
      %v9631 = vrot.slane %v9552, 2
      %v9632 = vsel %vm2494, %v9630, %v9631
      %v9649 = vadd.f32 %v9460, %v9587
      %v9650 = vadd.f32 %v9461, %v9590
      %v9651 = vadd.f32 %v9462, %v9593
      %v9652 = vadd.f32 %v9463, %v9596
      %v9653 = vadd.f32 %v9464, %v9599
      %v9654 = vadd.f32 %v9465, %v9602
      %v9655 = vadd.f32 %v9466, %v9605
      %v9656 = vadd.f32 %v9467, %v9608
      %v9657 = vadd.f32 %v9468, %v9611
      %v9658 = vadd.f32 %v9469, %v9614
      %v9659 = vadd.f32 %v9470, %v9617
      %v9660 = vadd.f32 %v9471, %v9620
      %v9661 = vadd.f32 %v9472, %v9623
      %v9662 = vadd.f32 %v9473, %v9626
      %v9663 = vadd.f32 %v9474, %v9629
      %v9664 = vadd.f32 %v9475, %v9632
      %v9665 = vld [vmem:[%s9352] sm:$0xfc]
      %v9666 = vld [vmem:[%s9352 + $0x8] sm:$0xfc]
      %v9667 = vld [vmem:[%s9352 + $0x10] sm:$0x3]
      %v9668 = vld [vmem:[%s9352 + $0x18] sm:$0x3]
      %v9669 = vld [vmem:[%s9352 + $0x20] sm:$0xfc]
      %v9670 = vld [vmem:[%s9352 + $0x28] sm:$0xfc]
      %v9671 = vld [vmem:[%s9352 + $0x30] sm:$0x3]
      %v9672 = vld [vmem:[%s9352 + $0x38] sm:$0x3]
      %v9673 = vld [vmem:[%s9352 + $0x40] sm:$0xfc]
      %v9674 = vld [vmem:[%s9352 + $0x48] sm:$0xfc]
      %v9675 = vld [vmem:[%s9352 + $0x50] sm:$0x3]
      %v9676 = vld [vmem:[%s9352 + $0x58] sm:$0x3]
      %v9677 = vld [vmem:[%s9352 + $0x60] sm:$0xfc]
      %v9678 = vld [vmem:[%s9352 + $0x68] sm:$0xfc]
      %v9679 = vld [vmem:[%s9352 + $0x70] sm:$0x3]
      %v9680 = vld [vmem:[%s9352 + $0x78] sm:$0x3]
      %v9681 = vld [vmem:[%s9352 + $0x80] sm:$0xfc]
      %v9682 = vld [vmem:[%s9352 + $0x88] sm:$0xfc]
      %v9683 = vld [vmem:[%s9352 + $0x90] sm:$0x3]
      %v9684 = vld [vmem:[%s9352 + $0x98] sm:$0x3]
      %v9685 = vld [vmem:[%s9352 + $0xa0] sm:$0xfc]
      %v9686 = vld [vmem:[%s9352 + $0xa8] sm:$0xfc]
      %v9687 = vld [vmem:[%s9352 + $0xb0] sm:$0x3]
      %v9688 = vld [vmem:[%s9352 + $0xb8] sm:$0x3]
      %v9689 = vld [vmem:[%s9352 + $0xc0] sm:$0xfc]
      %v9690 = vld [vmem:[%s9352 + $0xc8] sm:$0xfc]
      %v9691 = vld [vmem:[%s9352 + $0xd0] sm:$0x3]
      %v9692 = vld [vmem:[%s9352 + $0xd8] sm:$0x3]
      %v9693 = vld [vmem:[%s9352 + $0xe0] sm:$0xfc]
      %v9694 = vld [vmem:[%s9352 + $0xe8] sm:$0xfc]
      %v9695 = vld [vmem:[%s9352 + $0xf0] sm:$0x3]
      %v9696 = vld [vmem:[%s9352 + $0xf8] sm:$0x3]
      %s9697 = scalar_lea.vmem %s2, 38
      %v9698 = vld [vmem:[%s9697] ss:$8 sm:$0x3]
      %v9700 = vlaneseq
      %v9701 = vshrl.u32 %v9700, 7
      %v9702 = vsub.s32 0, %v9701
      %v9703 = vrot.slane %v9698, %v9702
      %v9704 = vlaneseq
      %v9705 = vshrl.u32 %v9704, 7
      %v9706 = vsub.s32 1, %v9705
      %v9707 = vrot.slane %v9698, %v9706
      %v9710 = vmul.f32 %v9665, %v9703
      %v9711 = vmul.f32 %v9666, %v9707
      %v9712 = vmul.f32 %v9667, %v9703
      %v9713 = vmul.f32 %v9668, %v9707
      %v9714 = vmul.f32 %v9669, %v9703
      %v9715 = vmul.f32 %v9670, %v9707
      %v9716 = vmul.f32 %v9671, %v9703
      %v9717 = vmul.f32 %v9672, %v9707
      %v9718 = vmul.f32 %v9673, %v9703
      %v9719 = vmul.f32 %v9674, %v9707
      %v9720 = vmul.f32 %v9675, %v9703
      %v9721 = vmul.f32 %v9676, %v9707
      %v9722 = vmul.f32 %v9677, %v9703
      %v9723 = vmul.f32 %v9678, %v9707
      %v9724 = vmul.f32 %v9679, %v9703
      %v9725 = vmul.f32 %v9680, %v9707
      %v9726 = vmul.f32 %v9681, %v9703
      %v9727 = vmul.f32 %v9682, %v9707
      %v9728 = vmul.f32 %v9683, %v9703
      %v9729 = vmul.f32 %v9684, %v9707
      %v9730 = vmul.f32 %v9685, %v9703
      %v9731 = vmul.f32 %v9686, %v9707
      %v9732 = vmul.f32 %v9687, %v9703
      %v9733 = vmul.f32 %v9688, %v9707
      %v9734 = vmul.f32 %v9689, %v9703
      %v9735 = vmul.f32 %v9690, %v9707
      %v9736 = vmul.f32 %v9691, %v9703
      %v9737 = vmul.f32 %v9692, %v9707
      %v9738 = vmul.f32 %v9693, %v9703
      %v9739 = vmul.f32 %v9694, %v9707
      %v9740 = vmul.f32 %v9695, %v9703
      %v9741 = vmul.f32 %v9696, %v9707
      %v9774 = vrot.slane %v9710, 2
      %v9775 = vrot.slane %v9712, 2
      %v9776 = vsel %vm2494, %v9774, %v9775
      %v9777 = vrot.slane %v9711, 2
      %v9778 = vrot.slane %v9713, 2
      %v9779 = vsel %vm2494, %v9777, %v9778
      %v9780 = vrot.slane %v9714, 2
      %v9781 = vrot.slane %v9716, 2
      %v9782 = vsel %vm2494, %v9780, %v9781
      %v9783 = vrot.slane %v9715, 2
      %v9784 = vrot.slane %v9717, 2
      %v9785 = vsel %vm2494, %v9783, %v9784
      %v9786 = vrot.slane %v9718, 2
      %v9787 = vrot.slane %v9720, 2
      %v9788 = vsel %vm2494, %v9786, %v9787
      %v9789 = vrot.slane %v9719, 2
      %v9790 = vrot.slane %v9721, 2
      %v9791 = vsel %vm2494, %v9789, %v9790
      %v9792 = vrot.slane %v9722, 2
      %v9793 = vrot.slane %v9724, 2
      %v9794 = vsel %vm2494, %v9792, %v9793
      %v9795 = vrot.slane %v9723, 2
      %v9796 = vrot.slane %v9725, 2
      %v9797 = vsel %vm2494, %v9795, %v9796
      %v9798 = vrot.slane %v9726, 2
      %v9799 = vrot.slane %v9728, 2
      %v9800 = vsel %vm2494, %v9798, %v9799
      %v9801 = vrot.slane %v9727, 2
      %v9802 = vrot.slane %v9729, 2
      %v9803 = vsel %vm2494, %v9801, %v9802
      %v9804 = vrot.slane %v9730, 2
      %v9805 = vrot.slane %v9732, 2
      %v9806 = vsel %vm2494, %v9804, %v9805
      %v9807 = vrot.slane %v9731, 2
      %v9808 = vrot.slane %v9733, 2
      %v9809 = vsel %vm2494, %v9807, %v9808
      %v9810 = vrot.slane %v9734, 2
      %v9811 = vrot.slane %v9736, 2
      %v9812 = vsel %vm2494, %v9810, %v9811
      %v9813 = vrot.slane %v9735, 2
      %v9814 = vrot.slane %v9737, 2
      %v9815 = vsel %vm2494, %v9813, %v9814
      %v9816 = vrot.slane %v9738, 2
      %v9817 = vrot.slane %v9740, 2
      %v9818 = vsel %vm2494, %v9816, %v9817
      %v9819 = vrot.slane %v9739, 2
      %v9820 = vrot.slane %v9741, 2
      %v9821 = vsel %vm2494, %v9819, %v9820
      %v9838 = vadd.f32 %v9649, %v9776
      %v9839 = vadd.f32 %v9650, %v9779
      %v9840 = vadd.f32 %v9651, %v9782
      %v9841 = vadd.f32 %v9652, %v9785
      %v9842 = vadd.f32 %v9653, %v9788
      %v9843 = vadd.f32 %v9654, %v9791
      %v9844 = vadd.f32 %v9655, %v9794
      %v9845 = vadd.f32 %v9656, %v9797
      %v9846 = vadd.f32 %v9657, %v9800
      %v9847 = vadd.f32 %v9658, %v9803
      %v9848 = vadd.f32 %v9659, %v9806
      %v9849 = vadd.f32 %v9660, %v9809
      %v9850 = vadd.f32 %v9661, %v9812
      %v9851 = vadd.f32 %v9662, %v9815
      %v9852 = vadd.f32 %v9663, %v9818
      %v9853 = vadd.f32 %v9664, %v9821
      %v9854 = vld [vmem:[%s9414] sm:$0xfc]
      %v9855 = vld [vmem:[%s9414 + $0x8] sm:$0xfc]
      %v9856 = vld [vmem:[%s9414 + $0x10] sm:$0x3]
      %v9857 = vld [vmem:[%s9414 + $0x18] sm:$0x3]
      %v9858 = vld [vmem:[%s9414 + $0x20] sm:$0xfc]
      %v9859 = vld [vmem:[%s9414 + $0x28] sm:$0xfc]
      %v9860 = vld [vmem:[%s9414 + $0x30] sm:$0x3]
      %v9861 = vld [vmem:[%s9414 + $0x38] sm:$0x3]
      %v9862 = vld [vmem:[%s9414 + $0x40] sm:$0xfc]
      %v9863 = vld [vmem:[%s9414 + $0x48] sm:$0xfc]
      %v9864 = vld [vmem:[%s9414 + $0x50] sm:$0x3]
      %v9865 = vld [vmem:[%s9414 + $0x58] sm:$0x3]
      %v9866 = vld [vmem:[%s9414 + $0x60] sm:$0xfc]
      %v9867 = vld [vmem:[%s9414 + $0x68] sm:$0xfc]
      %v9868 = vld [vmem:[%s9414 + $0x70] sm:$0x3]
      %v9869 = vld [vmem:[%s9414 + $0x78] sm:$0x3]
      %v9870 = vld [vmem:[%s9414 + $0x80] sm:$0xfc]
      %v9871 = vld [vmem:[%s9414 + $0x88] sm:$0xfc]
      %v9872 = vld [vmem:[%s9414 + $0x90] sm:$0x3]
      %v9873 = vld [vmem:[%s9414 + $0x98] sm:$0x3]
      %v9874 = vld [vmem:[%s9414 + $0xa0] sm:$0xfc]
      %v9875 = vld [vmem:[%s9414 + $0xa8] sm:$0xfc]
      %v9876 = vld [vmem:[%s9414 + $0xb0] sm:$0x3]
      %v9877 = vld [vmem:[%s9414 + $0xb8] sm:$0x3]
      %v9878 = vld [vmem:[%s9414 + $0xc0] sm:$0xfc]
      %v9879 = vld [vmem:[%s9414 + $0xc8] sm:$0xfc]
      %v9880 = vld [vmem:[%s9414 + $0xd0] sm:$0x3]
      %v9881 = vld [vmem:[%s9414 + $0xd8] sm:$0x3]
      %v9882 = vld [vmem:[%s9414 + $0xe0] sm:$0xfc]
      %v9883 = vld [vmem:[%s9414 + $0xe8] sm:$0xfc]
      %v9884 = vld [vmem:[%s9414 + $0xf0] sm:$0x3]
      %v9885 = vld [vmem:[%s9414 + $0xf8] sm:$0x3]
      %s9886 = scalar_lea.vmem %s2, 39
      %v9887 = vld [vmem:[%s9886] ss:$8 sm:$0x3]
      %v9889 = vlaneseq
      %v9890 = vshrl.u32 %v9889, 7
      %v9891 = vsub.s32 0, %v9890
      %v9892 = vrot.slane %v9887, %v9891
      %v9893 = vlaneseq
      %v9894 = vshrl.u32 %v9893, 7
      %v9895 = vsub.s32 1, %v9894
      %v9896 = vrot.slane %v9887, %v9895
      %v9899 = vmul.f32 %v9854, %v9892
      %v9900 = vmul.f32 %v9855, %v9896
      %v9901 = vmul.f32 %v9856, %v9892
      %v9902 = vmul.f32 %v9857, %v9896
      %v9903 = vmul.f32 %v9858, %v9892
      %v9904 = vmul.f32 %v9859, %v9896
      %v9905 = vmul.f32 %v9860, %v9892
      %v9906 = vmul.f32 %v9861, %v9896
      %v9907 = vmul.f32 %v9862, %v9892
      %v9908 = vmul.f32 %v9863, %v9896
      %v9909 = vmul.f32 %v9864, %v9892
      %v9910 = vmul.f32 %v9865, %v9896
      %v9911 = vmul.f32 %v9866, %v9892
      %v9912 = vmul.f32 %v9867, %v9896
      %v9913 = vmul.f32 %v9868, %v9892
      %v9914 = vmul.f32 %v9869, %v9896
      %v9915 = vmul.f32 %v9870, %v9892
      %v9916 = vmul.f32 %v9871, %v9896
      %v9917 = vmul.f32 %v9872, %v9892
      %v9918 = vmul.f32 %v9873, %v9896
      %v9919 = vmul.f32 %v9874, %v9892
      %v9920 = vmul.f32 %v9875, %v9896
      %v9921 = vmul.f32 %v9876, %v9892
      %v9922 = vmul.f32 %v9877, %v9896
      %v9923 = vmul.f32 %v9878, %v9892
      %v9924 = vmul.f32 %v9879, %v9896
      %v9925 = vmul.f32 %v9880, %v9892
      %v9926 = vmul.f32 %v9881, %v9896
      %v9927 = vmul.f32 %v9882, %v9892
      %v9928 = vmul.f32 %v9883, %v9896
      %v9929 = vmul.f32 %v9884, %v9892
      %v9930 = vmul.f32 %v9885, %v9896
      %v9963 = vrot.slane %v9899, 2
      %v9964 = vrot.slane %v9901, 2
      %v9965 = vsel %vm2494, %v9963, %v9964
      %v9966 = vrot.slane %v9900, 2
      %v9967 = vrot.slane %v9902, 2
      %v9968 = vsel %vm2494, %v9966, %v9967
      %v9969 = vrot.slane %v9903, 2
      %v9970 = vrot.slane %v9905, 2
      %v9971 = vsel %vm2494, %v9969, %v9970
      %v9972 = vrot.slane %v9904, 2
      %v9973 = vrot.slane %v9906, 2
      %v9974 = vsel %vm2494, %v9972, %v9973
      %v9975 = vrot.slane %v9907, 2
      %v9976 = vrot.slane %v9909, 2
      %v9977 = vsel %vm2494, %v9975, %v9976
      %v9978 = vrot.slane %v9908, 2
      %v9979 = vrot.slane %v9910, 2
      %v9980 = vsel %vm2494, %v9978, %v9979
      %v9981 = vrot.slane %v9911, 2
      %v9982 = vrot.slane %v9913, 2
      %v9983 = vsel %vm2494, %v9981, %v9982
      %v9984 = vrot.slane %v9912, 2
      %v9985 = vrot.slane %v9914, 2
      %v9986 = vsel %vm2494, %v9984, %v9985
      %v9987 = vrot.slane %v9915, 2
      %v9988 = vrot.slane %v9917, 2
      %v9989 = vsel %vm2494, %v9987, %v9988
      %v9990 = vrot.slane %v9916, 2
      %v9991 = vrot.slane %v9918, 2
      %v9992 = vsel %vm2494, %v9990, %v9991
      %v9993 = vrot.slane %v9919, 2
      %v9994 = vrot.slane %v9921, 2
      %v9995 = vsel %vm2494, %v9993, %v9994
      %v9996 = vrot.slane %v9920, 2
      %v9997 = vrot.slane %v9922, 2
      %v9998 = vsel %vm2494, %v9996, %v9997
      %v9999 = vrot.slane %v9923, 2
      %v10000 = vrot.slane %v9925, 2
      %v10001 = vsel %vm2494, %v9999, %v10000
      %v10002 = vrot.slane %v9924, 2
      %v10003 = vrot.slane %v9926, 2
      %v10004 = vsel %vm2494, %v10002, %v10003
      %v10005 = vrot.slane %v9927, 2
      %v10006 = vrot.slane %v9929, 2
      %v10007 = vsel %vm2494, %v10005, %v10006
      %v10008 = vrot.slane %v9928, 2
      %v10009 = vrot.slane %v9930, 2
      %v10010 = vsel %vm2494, %v10008, %v10009
      %v10027 = vadd.f32 %v9838, %v9965
      %v10028 = vadd.f32 %v9839, %v9968
      %v10029 = vadd.f32 %v9840, %v9971
      %v10030 = vadd.f32 %v9841, %v9974
      %v10031 = vadd.f32 %v9842, %v9977
      %v10032 = vadd.f32 %v9843, %v9980
      %v10033 = vadd.f32 %v9844, %v9983
      %v10034 = vadd.f32 %v9845, %v9986
      %v10035 = vadd.f32 %v9846, %v9989
      %v10036 = vadd.f32 %v9847, %v9992
      %v10037 = vadd.f32 %v9848, %v9995
      %v10038 = vadd.f32 %v9849, %v9998
      %v10039 = vadd.f32 %v9850, %v10001
      %v10040 = vadd.f32 %v9851, %v10004
      %v10041 = vadd.f32 %v9852, %v10007
      %v10042 = vadd.f32 %v9853, %v10010
      %v10043 = vld [vmem:[%s9290] sm:$0xf0]
      %v10044 = vld [vmem:[%s9290 + $0x8] sm:$0xf0]
      %v10045 = vld [vmem:[%s9290 + $0x10] sm:$0xf]
      %v10046 = vld [vmem:[%s9290 + $0x18] sm:$0xf]
      %v10047 = vld [vmem:[%s9290 + $0x20] sm:$0xf0]
      %v10048 = vld [vmem:[%s9290 + $0x28] sm:$0xf0]
      %v10049 = vld [vmem:[%s9290 + $0x30] sm:$0xf]
      %v10050 = vld [vmem:[%s9290 + $0x38] sm:$0xf]
      %v10051 = vld [vmem:[%s9290 + $0x40] sm:$0xf0]
      %v10052 = vld [vmem:[%s9290 + $0x48] sm:$0xf0]
      %v10053 = vld [vmem:[%s9290 + $0x50] sm:$0xf]
      %v10054 = vld [vmem:[%s9290 + $0x58] sm:$0xf]
      %v10055 = vld [vmem:[%s9290 + $0x60] sm:$0xf0]
      %v10056 = vld [vmem:[%s9290 + $0x68] sm:$0xf0]
      %v10057 = vld [vmem:[%s9290 + $0x70] sm:$0xf]
      %v10058 = vld [vmem:[%s9290 + $0x78] sm:$0xf]
      %v10059 = vld [vmem:[%s9290 + $0x80] sm:$0xf0]
      %v10060 = vld [vmem:[%s9290 + $0x88] sm:$0xf0]
      %v10061 = vld [vmem:[%s9290 + $0x90] sm:$0xf]
      %v10062 = vld [vmem:[%s9290 + $0x98] sm:$0xf]
      %v10063 = vld [vmem:[%s9290 + $0xa0] sm:$0xf0]
      %v10064 = vld [vmem:[%s9290 + $0xa8] sm:$0xf0]
      %v10065 = vld [vmem:[%s9290 + $0xb0] sm:$0xf]
      %v10066 = vld [vmem:[%s9290 + $0xb8] sm:$0xf]
      %v10067 = vld [vmem:[%s9290 + $0xc0] sm:$0xf0]
      %v10068 = vld [vmem:[%s9290 + $0xc8] sm:$0xf0]
      %v10069 = vld [vmem:[%s9290 + $0xd0] sm:$0xf]
      %v10070 = vld [vmem:[%s9290 + $0xd8] sm:$0xf]
      %v10071 = vld [vmem:[%s9290 + $0xe0] sm:$0xf0]
      %v10072 = vld [vmem:[%s9290 + $0xe8] sm:$0xf0]
      %v10073 = vld [vmem:[%s9290 + $0xf0] sm:$0xf]
      %v10074 = vld [vmem:[%s9290 + $0xf8] sm:$0xf]
      %s10075 = scalar_lea.vmem %s2, 48
      %v10076 = vld [vmem:[%s10075] ss:$8 sm:$0x3]
      %v10078 = vlaneseq
      %v10079 = vshrl.u32 %v10078, 7
      %v10080 = vsub.s32 0, %v10079
      %v10081 = vrot.slane %v10076, %v10080
      %v10082 = vlaneseq
      %v10083 = vshrl.u32 %v10082, 7
      %v10084 = vsub.s32 1, %v10083
      %v10085 = vrot.slane %v10076, %v10084
      %v10088 = vmul.f32 %v10043, %v10081
      %v10089 = vmul.f32 %v10044, %v10085
      %v10090 = vmul.f32 %v10045, %v10081
      %v10091 = vmul.f32 %v10046, %v10085
      %v10092 = vmul.f32 %v10047, %v10081
      %v10093 = vmul.f32 %v10048, %v10085
      %v10094 = vmul.f32 %v10049, %v10081
      %v10095 = vmul.f32 %v10050, %v10085
      %v10096 = vmul.f32 %v10051, %v10081
      %v10097 = vmul.f32 %v10052, %v10085
      %v10098 = vmul.f32 %v10053, %v10081
      %v10099 = vmul.f32 %v10054, %v10085
      %v10100 = vmul.f32 %v10055, %v10081
      %v10101 = vmul.f32 %v10056, %v10085
      %v10102 = vmul.f32 %v10057, %v10081
      %v10103 = vmul.f32 %v10058, %v10085
      %v10104 = vmul.f32 %v10059, %v10081
      %v10105 = vmul.f32 %v10060, %v10085
      %v10106 = vmul.f32 %v10061, %v10081
      %v10107 = vmul.f32 %v10062, %v10085
      %v10108 = vmul.f32 %v10063, %v10081
      %v10109 = vmul.f32 %v10064, %v10085
      %v10110 = vmul.f32 %v10065, %v10081
      %v10111 = vmul.f32 %v10066, %v10085
      %v10112 = vmul.f32 %v10067, %v10081
      %v10113 = vmul.f32 %v10068, %v10085
      %v10114 = vmul.f32 %v10069, %v10081
      %v10115 = vmul.f32 %v10070, %v10085
      %v10116 = vmul.f32 %v10071, %v10081
      %v10117 = vmul.f32 %v10072, %v10085
      %v10118 = vmul.f32 %v10073, %v10081
      %v10119 = vmul.f32 %v10074, %v10085
      %v10152 = vrot.slane %v10088, 4
      %v10153 = vrot.slane %v10090, 4
      %v10154 = vsel %vm7514, %v10152, %v10153
      %v10155 = vrot.slane %v10089, 4
      %v10156 = vrot.slane %v10091, 4
      %v10157 = vsel %vm7514, %v10155, %v10156
      %v10158 = vrot.slane %v10092, 4
      %v10159 = vrot.slane %v10094, 4
      %v10160 = vsel %vm7514, %v10158, %v10159
      %v10161 = vrot.slane %v10093, 4
      %v10162 = vrot.slane %v10095, 4
      %v10163 = vsel %vm7514, %v10161, %v10162
      %v10164 = vrot.slane %v10096, 4
      %v10165 = vrot.slane %v10098, 4
      %v10166 = vsel %vm7514, %v10164, %v10165
      %v10167 = vrot.slane %v10097, 4
      %v10168 = vrot.slane %v10099, 4
      %v10169 = vsel %vm7514, %v10167, %v10168
      %v10170 = vrot.slane %v10100, 4
      %v10171 = vrot.slane %v10102, 4
      %v10172 = vsel %vm7514, %v10170, %v10171
      %v10173 = vrot.slane %v10101, 4
      %v10174 = vrot.slane %v10103, 4
      %v10175 = vsel %vm7514, %v10173, %v10174
      %v10176 = vrot.slane %v10104, 4
      %v10177 = vrot.slane %v10106, 4
      %v10178 = vsel %vm7514, %v10176, %v10177
      %v10179 = vrot.slane %v10105, 4
      %v10180 = vrot.slane %v10107, 4
      %v10181 = vsel %vm7514, %v10179, %v10180
      %v10182 = vrot.slane %v10108, 4
      %v10183 = vrot.slane %v10110, 4
      %v10184 = vsel %vm7514, %v10182, %v10183
      %v10185 = vrot.slane %v10109, 4
      %v10186 = vrot.slane %v10111, 4
      %v10187 = vsel %vm7514, %v10185, %v10186
      %v10188 = vrot.slane %v10112, 4
      %v10189 = vrot.slane %v10114, 4
      %v10190 = vsel %vm7514, %v10188, %v10189
      %v10191 = vrot.slane %v10113, 4
      %v10192 = vrot.slane %v10115, 4
      %v10193 = vsel %vm7514, %v10191, %v10192
      %v10194 = vrot.slane %v10116, 4
      %v10195 = vrot.slane %v10118, 4
      %v10196 = vsel %vm7514, %v10194, %v10195
      %v10197 = vrot.slane %v10117, 4
      %v10198 = vrot.slane %v10119, 4
      %v10199 = vsel %vm7514, %v10197, %v10198
      %v10216 = vadd.f32 %v10027, %v10154
      %v10217 = vadd.f32 %v10028, %v10157
      %v10218 = vadd.f32 %v10029, %v10160
      %v10219 = vadd.f32 %v10030, %v10163
      %v10220 = vadd.f32 %v10031, %v10166
      %v10221 = vadd.f32 %v10032, %v10169
      %v10222 = vadd.f32 %v10033, %v10172
      %v10223 = vadd.f32 %v10034, %v10175
      %v10224 = vadd.f32 %v10035, %v10178
      %v10225 = vadd.f32 %v10036, %v10181
      %v10226 = vadd.f32 %v10037, %v10184
      %v10227 = vadd.f32 %v10038, %v10187
      %v10228 = vadd.f32 %v10039, %v10190
      %v10229 = vadd.f32 %v10040, %v10193
      %v10230 = vadd.f32 %v10041, %v10196
      %v10231 = vadd.f32 %v10042, %v10199
      %v10232 = vld [vmem:[%s9352] sm:$0xf0]
      %v10233 = vld [vmem:[%s9352 + $0x8] sm:$0xf0]
      %v10234 = vld [vmem:[%s9352 + $0x10] sm:$0xf]
      %v10235 = vld [vmem:[%s9352 + $0x18] sm:$0xf]
      %v10236 = vld [vmem:[%s9352 + $0x20] sm:$0xf0]
      %v10237 = vld [vmem:[%s9352 + $0x28] sm:$0xf0]
      %v10238 = vld [vmem:[%s9352 + $0x30] sm:$0xf]
      %v10239 = vld [vmem:[%s9352 + $0x38] sm:$0xf]
      %v10240 = vld [vmem:[%s9352 + $0x40] sm:$0xf0]
      %v10241 = vld [vmem:[%s9352 + $0x48] sm:$0xf0]
      %v10242 = vld [vmem:[%s9352 + $0x50] sm:$0xf]
      %v10243 = vld [vmem:[%s9352 + $0x58] sm:$0xf]
      %v10244 = vld [vmem:[%s9352 + $0x60] sm:$0xf0]
      %v10245 = vld [vmem:[%s9352 + $0x68] sm:$0xf0]
      %v10246 = vld [vmem:[%s9352 + $0x70] sm:$0xf]
      %v10247 = vld [vmem:[%s9352 + $0x78] sm:$0xf]
      %v10248 = vld [vmem:[%s9352 + $0x80] sm:$0xf0]
      %v10249 = vld [vmem:[%s9352 + $0x88] sm:$0xf0]
      %v10250 = vld [vmem:[%s9352 + $0x90] sm:$0xf]
      %v10251 = vld [vmem:[%s9352 + $0x98] sm:$0xf]
      %v10252 = vld [vmem:[%s9352 + $0xa0] sm:$0xf0]
      %v10253 = vld [vmem:[%s9352 + $0xa8] sm:$0xf0]
      %v10254 = vld [vmem:[%s9352 + $0xb0] sm:$0xf]
      %v10255 = vld [vmem:[%s9352 + $0xb8] sm:$0xf]
      %v10256 = vld [vmem:[%s9352 + $0xc0] sm:$0xf0]
      %v10257 = vld [vmem:[%s9352 + $0xc8] sm:$0xf0]
      %v10258 = vld [vmem:[%s9352 + $0xd0] sm:$0xf]
      %v10259 = vld [vmem:[%s9352 + $0xd8] sm:$0xf]
      %v10260 = vld [vmem:[%s9352 + $0xe0] sm:$0xf0]
      %v10261 = vld [vmem:[%s9352 + $0xe8] sm:$0xf0]
      %v10262 = vld [vmem:[%s9352 + $0xf0] sm:$0xf]
      %v10263 = vld [vmem:[%s9352 + $0xf8] sm:$0xf]
      %s10264 = scalar_lea.vmem %s2, 49
      %v10265 = vld [vmem:[%s10264] ss:$8 sm:$0x3]
      %v10267 = vlaneseq
      %v10268 = vshrl.u32 %v10267, 7
      %v10269 = vsub.s32 0, %v10268
      %v10270 = vrot.slane %v10265, %v10269
      %v10271 = vlaneseq
      %v10272 = vshrl.u32 %v10271, 7
      %v10273 = vsub.s32 1, %v10272
      %v10274 = vrot.slane %v10265, %v10273
      %v10277 = vmul.f32 %v10232, %v10270
      %v10278 = vmul.f32 %v10233, %v10274
      %v10279 = vmul.f32 %v10234, %v10270
      %v10280 = vmul.f32 %v10235, %v10274
      %v10281 = vmul.f32 %v10236, %v10270
      %v10282 = vmul.f32 %v10237, %v10274
      %v10283 = vmul.f32 %v10238, %v10270
      %v10284 = vmul.f32 %v10239, %v10274
      %v10285 = vmul.f32 %v10240, %v10270
      %v10286 = vmul.f32 %v10241, %v10274
      %v10287 = vmul.f32 %v10242, %v10270
      %v10288 = vmul.f32 %v10243, %v10274
      %v10289 = vmul.f32 %v10244, %v10270
      %v10290 = vmul.f32 %v10245, %v10274
      %v10291 = vmul.f32 %v10246, %v10270
      %v10292 = vmul.f32 %v10247, %v10274
      %v10293 = vmul.f32 %v10248, %v10270
      %v10294 = vmul.f32 %v10249, %v10274
      %v10295 = vmul.f32 %v10250, %v10270
      %v10296 = vmul.f32 %v10251, %v10274
      %v10297 = vmul.f32 %v10252, %v10270
      %v10298 = vmul.f32 %v10253, %v10274
      %v10299 = vmul.f32 %v10254, %v10270
      %v10300 = vmul.f32 %v10255, %v10274
      %v10301 = vmul.f32 %v10256, %v10270
      %v10302 = vmul.f32 %v10257, %v10274
      %v10303 = vmul.f32 %v10258, %v10270
      %v10304 = vmul.f32 %v10259, %v10274
      %v10305 = vmul.f32 %v10260, %v10270
      %v10306 = vmul.f32 %v10261, %v10274
      %v10307 = vmul.f32 %v10262, %v10270
      %v10308 = vmul.f32 %v10263, %v10274
      %v10341 = vrot.slane %v10277, 4
      %v10342 = vrot.slane %v10279, 4
      %v10343 = vsel %vm7514, %v10341, %v10342
      %v10344 = vrot.slane %v10278, 4
      %v10345 = vrot.slane %v10280, 4
      %v10346 = vsel %vm7514, %v10344, %v10345
      %v10347 = vrot.slane %v10281, 4
      %v10348 = vrot.slane %v10283, 4
      %v10349 = vsel %vm7514, %v10347, %v10348
      %v10350 = vrot.slane %v10282, 4
      %v10351 = vrot.slane %v10284, 4
      %v10352 = vsel %vm7514, %v10350, %v10351
      %v10353 = vrot.slane %v10285, 4
      %v10354 = vrot.slane %v10287, 4
      %v10355 = vsel %vm7514, %v10353, %v10354
      %v10356 = vrot.slane %v10286, 4
      %v10357 = vrot.slane %v10288, 4
      %v10358 = vsel %vm7514, %v10356, %v10357
      %v10359 = vrot.slane %v10289, 4
      %v10360 = vrot.slane %v10291, 4
      %v10361 = vsel %vm7514, %v10359, %v10360
      %v10362 = vrot.slane %v10290, 4
      %v10363 = vrot.slane %v10292, 4
      %v10364 = vsel %vm7514, %v10362, %v10363
      %v10365 = vrot.slane %v10293, 4
      %v10366 = vrot.slane %v10295, 4
      %v10367 = vsel %vm7514, %v10365, %v10366
      %v10368 = vrot.slane %v10294, 4
      %v10369 = vrot.slane %v10296, 4
      %v10370 = vsel %vm7514, %v10368, %v10369
      %v10371 = vrot.slane %v10297, 4
      %v10372 = vrot.slane %v10299, 4
      %v10373 = vsel %vm7514, %v10371, %v10372
      %v10374 = vrot.slane %v10298, 4
      %v10375 = vrot.slane %v10300, 4
      %v10376 = vsel %vm7514, %v10374, %v10375
      %v10377 = vrot.slane %v10301, 4
      %v10378 = vrot.slane %v10303, 4
      %v10379 = vsel %vm7514, %v10377, %v10378
      %v10380 = vrot.slane %v10302, 4
      %v10381 = vrot.slane %v10304, 4
      %v10382 = vsel %vm7514, %v10380, %v10381
      %v10383 = vrot.slane %v10305, 4
      %v10384 = vrot.slane %v10307, 4
      %v10385 = vsel %vm7514, %v10383, %v10384
      %v10386 = vrot.slane %v10306, 4
      %v10387 = vrot.slane %v10308, 4
      %v10388 = vsel %vm7514, %v10386, %v10387
      %v10405 = vadd.f32 %v10216, %v10343
      %v10406 = vadd.f32 %v10217, %v10346
      %v10407 = vadd.f32 %v10218, %v10349
      %v10408 = vadd.f32 %v10219, %v10352
      %v10409 = vadd.f32 %v10220, %v10355
      %v10410 = vadd.f32 %v10221, %v10358
      %v10411 = vadd.f32 %v10222, %v10361
      %v10412 = vadd.f32 %v10223, %v10364
      %v10413 = vadd.f32 %v10224, %v10367
      %v10414 = vadd.f32 %v10225, %v10370
      %v10415 = vadd.f32 %v10226, %v10373
      %v10416 = vadd.f32 %v10227, %v10376
      %v10417 = vadd.f32 %v10228, %v10379
      %v10418 = vadd.f32 %v10229, %v10382
      %v10419 = vadd.f32 %v10230, %v10385
      %v10420 = vadd.f32 %v10231, %v10388
      %v10421 = vld [vmem:[%s9414] sm:$0xf0]
      %v10422 = vld [vmem:[%s9414 + $0x8] sm:$0xf0]
      %v10423 = vld [vmem:[%s9414 + $0x10] sm:$0xf]
      %v10424 = vld [vmem:[%s9414 + $0x18] sm:$0xf]
      %v10425 = vld [vmem:[%s9414 + $0x20] sm:$0xf0]
      %v10426 = vld [vmem:[%s9414 + $0x28] sm:$0xf0]
      %v10427 = vld [vmem:[%s9414 + $0x30] sm:$0xf]
      %v10428 = vld [vmem:[%s9414 + $0x38] sm:$0xf]
      %v10429 = vld [vmem:[%s9414 + $0x40] sm:$0xf0]
      %v10430 = vld [vmem:[%s9414 + $0x48] sm:$0xf0]
      %v10431 = vld [vmem:[%s9414 + $0x50] sm:$0xf]
      %v10432 = vld [vmem:[%s9414 + $0x58] sm:$0xf]
      %v10433 = vld [vmem:[%s9414 + $0x60] sm:$0xf0]
      %v10434 = vld [vmem:[%s9414 + $0x68] sm:$0xf0]
      %v10435 = vld [vmem:[%s9414 + $0x70] sm:$0xf]
      %v10436 = vld [vmem:[%s9414 + $0x78] sm:$0xf]
      %v10437 = vld [vmem:[%s9414 + $0x80] sm:$0xf0]
      %v10438 = vld [vmem:[%s9414 + $0x88] sm:$0xf0]
      %v10439 = vld [vmem:[%s9414 + $0x90] sm:$0xf]
      %v10440 = vld [vmem:[%s9414 + $0x98] sm:$0xf]
      %v10441 = vld [vmem:[%s9414 + $0xa0] sm:$0xf0]
      %v10442 = vld [vmem:[%s9414 + $0xa8] sm:$0xf0]
      %v10443 = vld [vmem:[%s9414 + $0xb0] sm:$0xf]
      %v10444 = vld [vmem:[%s9414 + $0xb8] sm:$0xf]
      %v10445 = vld [vmem:[%s9414 + $0xc0] sm:$0xf0]
      %v10446 = vld [vmem:[%s9414 + $0xc8] sm:$0xf0]
      %v10447 = vld [vmem:[%s9414 + $0xd0] sm:$0xf]
      %v10448 = vld [vmem:[%s9414 + $0xd8] sm:$0xf]
      %v10449 = vld [vmem:[%s9414 + $0xe0] sm:$0xf0]
      %v10450 = vld [vmem:[%s9414 + $0xe8] sm:$0xf0]
      %v10451 = vld [vmem:[%s9414 + $0xf0] sm:$0xf]
      %v10452 = vld [vmem:[%s9414 + $0xf8] sm:$0xf]
      %s10453 = scalar_lea.vmem %s2, 50
      %v10454 = vld [vmem:[%s10453] ss:$8 sm:$0x3]
      %v10456 = vlaneseq
      %v10457 = vshrl.u32 %v10456, 7
      %v10458 = vsub.s32 0, %v10457
      %v10459 = vrot.slane %v10454, %v10458
      %v10460 = vlaneseq
      %v10461 = vshrl.u32 %v10460, 7
      %v10462 = vsub.s32 1, %v10461
      %v10463 = vrot.slane %v10454, %v10462
      %v10466 = vmul.f32 %v10421, %v10459
      %v10467 = vmul.f32 %v10422, %v10463
      %v10468 = vmul.f32 %v10423, %v10459
      %v10469 = vmul.f32 %v10424, %v10463
      %v10470 = vmul.f32 %v10425, %v10459
      %v10471 = vmul.f32 %v10426, %v10463
      %v10472 = vmul.f32 %v10427, %v10459
      %v10473 = vmul.f32 %v10428, %v10463
      %v10474 = vmul.f32 %v10429, %v10459
      %v10475 = vmul.f32 %v10430, %v10463
      %v10476 = vmul.f32 %v10431, %v10459
      %v10477 = vmul.f32 %v10432, %v10463
      %v10478 = vmul.f32 %v10433, %v10459
      %v10479 = vmul.f32 %v10434, %v10463
      %v10480 = vmul.f32 %v10435, %v10459
      %v10481 = vmul.f32 %v10436, %v10463
      %v10482 = vmul.f32 %v10437, %v10459
      %v10483 = vmul.f32 %v10438, %v10463
      %v10484 = vmul.f32 %v10439, %v10459
      %v10485 = vmul.f32 %v10440, %v10463
      %v10486 = vmul.f32 %v10441, %v10459
      %v10487 = vmul.f32 %v10442, %v10463
      %v10488 = vmul.f32 %v10443, %v10459
      %v10489 = vmul.f32 %v10444, %v10463
      %v10490 = vmul.f32 %v10445, %v10459
      %v10491 = vmul.f32 %v10446, %v10463
      %v10492 = vmul.f32 %v10447, %v10459
      %v10493 = vmul.f32 %v10448, %v10463
      %v10494 = vmul.f32 %v10449, %v10459
      %v10495 = vmul.f32 %v10450, %v10463
      %v10496 = vmul.f32 %v10451, %v10459
      %v10497 = vmul.f32 %v10452, %v10463
      %v10530 = vrot.slane %v10466, 4
      %v10531 = vrot.slane %v10468, 4
      %v10532 = vsel %vm7514, %v10530, %v10531
      %v10533 = vrot.slane %v10467, 4
      %v10534 = vrot.slane %v10469, 4
      %v10535 = vsel %vm7514, %v10533, %v10534
      %v10536 = vrot.slane %v10470, 4
      %v10537 = vrot.slane %v10472, 4
      %v10538 = vsel %vm7514, %v10536, %v10537
      %v10539 = vrot.slane %v10471, 4
      %v10540 = vrot.slane %v10473, 4
      %v10541 = vsel %vm7514, %v10539, %v10540
      %v10542 = vrot.slane %v10474, 4
      %v10543 = vrot.slane %v10476, 4
      %v10544 = vsel %vm7514, %v10542, %v10543
      %v10545 = vrot.slane %v10475, 4
      %v10546 = vrot.slane %v10477, 4
      %v10547 = vsel %vm7514, %v10545, %v10546
      %v10548 = vrot.slane %v10478, 4
      %v10549 = vrot.slane %v10480, 4
      %v10550 = vsel %vm7514, %v10548, %v10549
      %v10551 = vrot.slane %v10479, 4
      %v10552 = vrot.slane %v10481, 4
      %v10553 = vsel %vm7514, %v10551, %v10552
      %v10554 = vrot.slane %v10482, 4
      %v10555 = vrot.slane %v10484, 4
      %v10556 = vsel %vm7514, %v10554, %v10555
      %v10557 = vrot.slane %v10483, 4
      %v10558 = vrot.slane %v10485, 4
      %v10559 = vsel %vm7514, %v10557, %v10558
      %v10560 = vrot.slane %v10486, 4
      %v10561 = vrot.slane %v10488, 4
      %v10562 = vsel %vm7514, %v10560, %v10561
      %v10563 = vrot.slane %v10487, 4
      %v10564 = vrot.slane %v10489, 4
      %v10565 = vsel %vm7514, %v10563, %v10564
      %v10566 = vrot.slane %v10490, 4
      %v10567 = vrot.slane %v10492, 4
      %v10568 = vsel %vm7514, %v10566, %v10567
      %v10569 = vrot.slane %v10491, 4
      %v10570 = vrot.slane %v10493, 4
      %v10571 = vsel %vm7514, %v10569, %v10570
      %v10572 = vrot.slane %v10494, 4
      %v10573 = vrot.slane %v10496, 4
      %v10574 = vsel %vm7514, %v10572, %v10573
      %v10575 = vrot.slane %v10495, 4
      %v10576 = vrot.slane %v10497, 4
      %v10577 = vsel %vm7514, %v10575, %v10576
      %v10594 = vadd.f32 %v10405, %v10532
      %v10595 = vadd.f32 %v10406, %v10535
      %v10596 = vadd.f32 %v10407, %v10538
      %v10597 = vadd.f32 %v10408, %v10541
      %v10598 = vadd.f32 %v10409, %v10544
      %v10599 = vadd.f32 %v10410, %v10547
      %v10600 = vadd.f32 %v10411, %v10550
      %v10601 = vadd.f32 %v10412, %v10553
      %v10602 = vadd.f32 %v10413, %v10556
      %v10603 = vadd.f32 %v10414, %v10559
      %v10604 = vadd.f32 %v10415, %v10562
      %v10605 = vadd.f32 %v10416, %v10565
      %v10606 = vadd.f32 %v10417, %v10568
      %v10607 = vadd.f32 %v10418, %v10571
      %v10608 = vadd.f32 %v10419, %v10574
      %v10609 = vadd.f32 %v10420, %v10577
      %v10610 = vld [vmem:[%s5] sm:$0x3]
      %v10612 = vlaneseq
      %v10613 = vshrl.u32 %v10612, 7
      %v10614 = vsub.s32 0, %v10613
      %v10615 = vrot.slane %v10610, %v10614
      %v10616 = vlaneseq
      %v10617 = vshrl.u32 %v10616, 7
      %v10618 = vsub.s32 1, %v10617
      %v10619 = vrot.slane %v10610, %v10618
      %v10622 = vmul.f32 %v10594, %v10615
      %v10623 = vmul.f32 %v10595, %v10619
      %v10624 = vmul.f32 %v10596, %v10615
      %v10625 = vmul.f32 %v10597, %v10619
      %v10626 = vmul.f32 %v10598, %v10615
      %v10627 = vmul.f32 %v10599, %v10619
      %v10628 = vmul.f32 %v10600, %v10615
      %v10629 = vmul.f32 %v10601, %v10619
      %v10630 = vmul.f32 %v10602, %v10615
      %v10631 = vmul.f32 %v10603, %v10619
      %v10632 = vmul.f32 %v10604, %v10615
      %v10633 = vmul.f32 %v10605, %v10619
      %v10634 = vmul.f32 %v10606, %v10615
      %v10635 = vmul.f32 %v10607, %v10619
      %v10636 = vmul.f32 %v10608, %v10615
      %v10637 = vmul.f32 %v10609, %v10619
      %v10638 = vld [vmem:[%s6] sm:$0x3]
      %v10640 = vlaneseq
      %v10641 = vshrl.u32 %v10640, 7
      %v10642 = vsub.s32 0, %v10641
      %v10643 = vrot.slane %v10638, %v10642
      %v10644 = vlaneseq
      %v10645 = vshrl.u32 %v10644, 7
      %v10646 = vsub.s32 1, %v10645
      %v10647 = vrot.slane %v10638, %v10646
      %v10650 = vadd.f32 %v10622, %v10643
      %v10651 = vadd.f32 %v10623, %v10647
      %v10652 = vadd.f32 %v10624, %v10643
      %v10653 = vadd.f32 %v10625, %v10647
      %v10654 = vadd.f32 %v10626, %v10643
      %v10655 = vadd.f32 %v10627, %v10647
      %v10656 = vadd.f32 %v10628, %v10643
      %v10657 = vadd.f32 %v10629, %v10647
      %v10658 = vadd.f32 %v10630, %v10643
      %v10659 = vadd.f32 %v10631, %v10647
      %v10660 = vadd.f32 %v10632, %v10643
      %v10661 = vadd.f32 %v10633, %v10647
      %v10662 = vadd.f32 %v10634, %v10643
      %v10663 = vadd.f32 %v10635, %v10647
      %v10664 = vadd.f32 %v10636, %v10643
      %v10665 = vadd.f32 %v10637, %v10647
      %vm10666 = vcmp.ge.f32.partialorder %v10650, 0.0
      %vm10667 = vcmp.ge.f32.partialorder %v10651, 0.0
      %vm10668 = vcmp.ge.f32.partialorder %v10652, 0.0
      %vm10669 = vcmp.ge.f32.partialorder %v10653, 0.0
      %vm10670 = vcmp.ge.f32.partialorder %v10654, 0.0
      %vm10671 = vcmp.ge.f32.partialorder %v10655, 0.0
      %vm10672 = vcmp.ge.f32.partialorder %v10656, 0.0
      %vm10673 = vcmp.ge.f32.partialorder %v10657, 0.0
      %vm10674 = vcmp.ge.f32.partialorder %v10658, 0.0
      %vm10675 = vcmp.ge.f32.partialorder %v10659, 0.0
      %vm10676 = vcmp.ge.f32.partialorder %v10660, 0.0
      %vm10677 = vcmp.ge.f32.partialorder %v10661, 0.0
      %vm10678 = vcmp.ge.f32.partialorder %v10662, 0.0
      %vm10679 = vcmp.ge.f32.partialorder %v10663, 0.0
      %vm10680 = vcmp.ge.f32.partialorder %v10664, 0.0
      %vm10681 = vcmp.ge.f32.partialorder %v10665, 0.0
      %v10682 = vmul.f32 %v10650, 0.01
      %v10683 = vmul.f32 %v10651, 0.01
      %v10684 = vmul.f32 %v10652, 0.01
      %v10685 = vmul.f32 %v10653, 0.01
      %v10686 = vmul.f32 %v10654, 0.01
      %v10687 = vmul.f32 %v10655, 0.01
      %v10688 = vmul.f32 %v10656, 0.01
      %v10689 = vmul.f32 %v10657, 0.01
      %v10690 = vmul.f32 %v10658, 0.01
      %v10691 = vmul.f32 %v10659, 0.01
      %v10692 = vmul.f32 %v10660, 0.01
      %v10693 = vmul.f32 %v10661, 0.01
      %v10694 = vmul.f32 %v10662, 0.01
      %v10695 = vmul.f32 %v10663, 0.01
      %v10696 = vmul.f32 %v10664, 0.01
      %v10697 = vmul.f32 %v10665, 0.01
      %v10698 = vsel %vm10666, %v10650, %v10682
      %v10699 = vsel %vm10667, %v10651, %v10683
      %v10700 = vsel %vm10668, %v10652, %v10684
      %v10701 = vsel %vm10669, %v10653, %v10685
      %v10702 = vsel %vm10670, %v10654, %v10686
      %v10703 = vsel %vm10671, %v10655, %v10687
      %v10704 = vsel %vm10672, %v10656, %v10688
      %v10705 = vsel %vm10673, %v10657, %v10689
      %v10706 = vsel %vm10674, %v10658, %v10690
      %v10707 = vsel %vm10675, %v10659, %v10691
      %v10708 = vsel %vm10676, %v10660, %v10692
      %v10709 = vsel %vm10677, %v10661, %v10693
      %v10710 = vsel %vm10678, %v10662, %v10694
      %v10711 = vsel %vm10679, %v10663, %v10695
      %v10712 = vsel %vm10680, %v10664, %v10696
      %v10713 = vsel %vm10681, %v10665, %v10697
      %v10714 = vld [vmem:[#allocation3] sm:$0xff]
      %v10715 = vld [vmem:[#allocation3 + $0x8] sm:$0xff]
      %v10716 = vld [vmem:[#allocation3 + $0x10] sm:$0xff]
      %v10717 = vld [vmem:[#allocation3 + $0x18] sm:$0xff]
      %v10718 = vld [vmem:[#allocation3 + $0x20] sm:$0xff]
      %v10719 = vld [vmem:[#allocation3 + $0x28] sm:$0xff]
      %v10720 = vld [vmem:[#allocation3 + $0x30] sm:$0xff]
      %v10721 = vld [vmem:[#allocation3 + $0x38] sm:$0xff]
      %v10722 = vld [vmem:[#allocation3 + $0x40] sm:$0xff]
      %v10723 = vld [vmem:[#allocation3 + $0x48] sm:$0xff]
      %v10724 = vld [vmem:[#allocation3 + $0x50] sm:$0xff]
      %v10725 = vld [vmem:[#allocation3 + $0x58] sm:$0xff]
      %v10726 = vld [vmem:[#allocation3 + $0x60] sm:$0xff]
      %v10727 = vld [vmem:[#allocation3 + $0x68] sm:$0xff]
      %v10728 = vld [vmem:[#allocation3 + $0x70] sm:$0xff]
      %v10729 = vld [vmem:[#allocation3 + $0x78] sm:$0xff]
      %v10730 = vadd.f32 %v10714, %v10698
      %v10731 = vadd.f32 %v10715, %v10699
      %v10732 = vadd.f32 %v10716, %v10700
      %v10733 = vadd.f32 %v10717, %v10701
      %v10734 = vadd.f32 %v10718, %v10702
      %v10735 = vadd.f32 %v10719, %v10703
      %v10736 = vadd.f32 %v10720, %v10704
      %v10737 = vadd.f32 %v10721, %v10705
      %v10738 = vadd.f32 %v10722, %v10706
      %v10739 = vadd.f32 %v10723, %v10707
      %v10740 = vadd.f32 %v10724, %v10708
      %v10741 = vadd.f32 %v10725, %v10709
      %v10742 = vadd.f32 %v10726, %v10710
      %v10743 = vadd.f32 %v10727, %v10711
      %v10744 = vadd.f32 %v10728, %v10712
      %v10745 = vadd.f32 %v10729, %v10713
      %v10746 = vadd.f32 %v10730, %v10732
      %v10747 = vadd.f32 %v10746, %v10734
      %v10748 = vadd.f32 %v10747, %v10736
      %v10749 = vadd.f32 %v10748, %v10738
      %v10750 = vadd.f32 %v10749, %v10740
      %v10751 = vadd.f32 %v10750, %v10742
      %v10752 = vadd.f32 %v10751, %v10744
      %v10753 = vrot.slane %v10752, 4
      %v10754 = vadd.f32 %v10752, %v10753
      %v10755 = vrot.slane %v10754, 2
      %v10756 = vadd.f32 %v10754, %v10755
      %v10757 = vrot.slane %v10756, 1
      %v10758 = vadd.f32 %v10756, %v10757
      %v10759 = vadd.f32 %v10731, %v10733
      %v10760 = vadd.f32 %v10759, %v10735
      %v10761 = vadd.f32 %v10760, %v10737
      %v10762 = vadd.f32 %v10761, %v10739
      %v10763 = vadd.f32 %v10762, %v10741
      %v10764 = vadd.f32 %v10763, %v10743
      %v10765 = vadd.f32 %v10764, %v10745
      %v10766 = vrot.slane %v10765, 4
      %v10767 = vadd.f32 %v10765, %v10766
      %v10768 = vrot.slane %v10767, 2
      %v10769 = vadd.f32 %v10767, %v10768
      %v10770 = vrot.slane %v10769, 1
      %v10771 = vadd.f32 %v10769, %v10770
      %v10772 = vmul.f32 %v10758, 0.001953125
      %v10773 = vmul.f32 %v10771, 0.001953125
      %v10774 = vld [vmem:[%s7] sm:$0xff]
      %v10775 = vld [vmem:[%s7 + $0x8] sm:$0xff]
      %v10776 = vld [vmem:[%s7 + $0x10] sm:$0xff]
      %v10777 = vld [vmem:[%s7 + $0x18] sm:$0xff]
      %v10778 = vld [vmem:[%s7 + $0x20] sm:$0xff]
      %v10779 = vld [vmem:[%s7 + $0x28] sm:$0xff]
      %v10780 = vld [vmem:[%s7 + $0x30] sm:$0xff]
      %v10781 = vld [vmem:[%s7 + $0x38] sm:$0xff]
      %v10782 = vld [vmem:[%s7 + $0x40] sm:$0xff]
      %v10783 = vld [vmem:[%s7 + $0x48] sm:$0xff]
      %v10784 = vld [vmem:[%s7 + $0x50] sm:$0xff]
      %v10785 = vld [vmem:[%s7 + $0x58] sm:$0xff]
      %v10786 = vld [vmem:[%s7 + $0x60] sm:$0xff]
      %v10787 = vld [vmem:[%s7 + $0x68] sm:$0xff]
      %v10788 = vld [vmem:[%s7 + $0x70] sm:$0xff]
      %v10789 = vld [vmem:[%s7 + $0x78] sm:$0xff]
      %v10790 = vld [vmem:[%s7 + $0x80] sm:$0xff]
      %v10791 = vld [vmem:[%s7 + $0x88] sm:$0xff]
      %v10792 = vld [vmem:[%s7 + $0x90] sm:$0xff]
      %v10793 = vld [vmem:[%s7 + $0x98] sm:$0xff]
      %v10794 = vld [vmem:[%s7 + $0xa0] sm:$0xff]
      %v10795 = vld [vmem:[%s7 + $0xa8] sm:$0xff]
      %v10796 = vld [vmem:[%s7 + $0xb0] sm:$0xff]
      %v10797 = vld [vmem:[%s7 + $0xb8] sm:$0xff]
      %v10798 = vld [vmem:[%s7 + $0xc0] sm:$0xff]
      %v10799 = vld [vmem:[%s7 + $0xc8] sm:$0xff]
      %v10800 = vld [vmem:[%s7 + $0xd0] sm:$0xff]
      %v10801 = vld [vmem:[%s7 + $0xd8] sm:$0xff]
      %v10802 = vld [vmem:[%s7 + $0xe0] sm:$0xff]
      %v10803 = vld [vmem:[%s7 + $0xe8] sm:$0xff]
      %v10804 = vld [vmem:[%s7 + $0xf0] sm:$0xff]
      %v10805 = vld [vmem:[%s7 + $0xf8] sm:$0xff]
      %v10806 = vld [vmem:[%s8] sm:$0x1]
      %10807 = vmatprep.subr.mxu0 0.0
      %10808 = vmatpush1.msra.mxu0 %v10774
      %10809 = vmatprep.subr.mxu0 0.0
      %10810 = vmatpush1.msra.mxu0 %v10775
      %10811 = vmatprep.subr.mxu0 0.0
      %10812 = vmatpush1.msra.mxu0 %v10776
      %10813 = vmatprep.subr.mxu0 0.0
      %10814 = vmatpush1.msra.mxu0 %v10777
      %10815 = vmatprep.subr.mxu0 0.0
      %10816 = vmatpush1.msra.mxu0 %v10778
      %10817 = vmatprep.subr.mxu0 0.0
      %10818 = vmatpush1.msra.mxu0 %v10779
      %10819 = vmatprep.subr.mxu0 0.0
      %10820 = vmatpush1.msra.mxu0 %v10780
      %10821 = vmatprep.subr.mxu0 0.0
      %10822 = vmatpush1.msra.mxu0 %v10781
      %10823 = vmatprep.subr.mxu0 0.0
      %10824 = vmatpush1.msra.mxu0 %v10782
      %10825 = vmatprep.subr.mxu0 0.0
      %10826 = vmatpush1.msra.mxu0 %v10783
      %10827 = vmatprep.subr.mxu0 0.0
      %10828 = vmatpush1.msra.mxu0 %v10784
      %10829 = vmatprep.subr.mxu0 0.0
      %10830 = vmatpush1.msra.mxu0 %v10785
      %10831 = vmatprep.subr.mxu0 0.0
      %10832 = vmatpush1.msra.mxu0 %v10786
      %10833 = vmatprep.subr.mxu0 0.0
      %10834 = vmatpush1.msra.mxu0 %v10787
      %10835 = vmatprep.subr.mxu0 0.0
      %10836 = vmatpush1.msra.mxu0 %v10788
      %10837 = vmatprep.subr.mxu0 0.0
      %10838 = vmatpush1.msra.mxu0 %v10789
      %10839 = vmatprep.subr.mxu0 0.0
      %10840 = vmatpush1.msra.mxu0 %v10790
      %10841 = vmatprep.subr.mxu0 0.0
      %10842 = vmatpush1.msra.mxu0 %v10791
      %10843 = vmatprep.subr.mxu0 0.0
      %10844 = vmatpush1.msra.mxu0 %v10792
      %10845 = vmatprep.subr.mxu0 0.0
      %10846 = vmatpush1.msra.mxu0 %v10793
      %10847 = vmatprep.subr.mxu0 0.0
      %10848 = vmatpush1.msra.mxu0 %v10794
      %10849 = vmatprep.subr.mxu0 0.0
      %10850 = vmatpush1.msra.mxu0 %v10795
      %10851 = vmatprep.subr.mxu0 0.0
      %10852 = vmatpush1.msra.mxu0 %v10796
      %10853 = vmatprep.subr.mxu0 0.0
      %10854 = vmatpush1.msra.mxu0 %v10797
      %10855 = vmatprep.subr.mxu0 0.0
      %10856 = vmatpush1.msra.mxu0 %v10798
      %10857 = vmatprep.subr.mxu0 0.0
      %10858 = vmatpush1.msra.mxu0 %v10799
      %10859 = vmatprep.subr.mxu0 0.0
      %10860 = vmatpush1.msra.mxu0 %v10800
      %10861 = vmatprep.subr.mxu0 0.0
      %10862 = vmatpush1.msra.mxu0 %v10801
      %10863 = vmatprep.subr.mxu0 0.0
      %10864 = vmatpush1.msra.mxu0 %v10802
      %10865 = vmatprep.subr.mxu0 0.0
      %10866 = vmatpush1.msra.mxu0 %v10803
      %10867 = vmatprep.subr.mxu0 0.0
      %10868 = vmatpush1.msra.mxu0 %v10804
      %10869 = vmatprep.subr.mxu0 0.0
      %10870 = vmatpush1.msra.mxu0 %v10805
      %10871 = vmatprep.mubr.f32.mxu0 %v10773
      %10872 = vmatmul.mubr.f32.gmra.mrb[0].mxu0 %v10772
      %v10873 = vpop.f32.mrb[0].mxu0
      %v10874 = vadd.f32 %v10806, %v10873
      %v10875 = vpop.f32.mrb[0].mxu0
      %10876 = vdwg.mxu0
      %v10877 = vld [vmem:[%s9] sm:$0x1]
      %v10878 = vmul.f32 %v10874, %v10877
      %v10879 = vld [vmem:[%s10] sm:$0x1]
      %v10880 = vadd.f32 %v10878, %v10879
      %vm10881 = vcmp.ge.f32.partialorder %v10880, 0.0
      %v10882 = vmul.f32 %v10880, 0.01
      %v10883 = vsel %vm10881, %v10880, %v10882
      %v10884 = vld [vmem:[%s11] sm:$0xff]
      %v10885 = vld [vmem:[%s11 + $0x8] sm:$0xff]
      %v10886 = vld [vmem:[%s11 + $0x10] sm:$0xff]
      %v10887 = vld [vmem:[%s11 + $0x18] sm:$0xff]
      %v10888 = vld [vmem:[%s11 + $0x20] sm:$0xff]
      %v10889 = vld [vmem:[%s11 + $0x28] sm:$0xff]
      %v10890 = vld [vmem:[%s11 + $0x30] sm:$0xff]
      %v10891 = vld [vmem:[%s11 + $0x38] sm:$0xff]
      %v10892 = vld [vmem:[%s12] sm:$0x3]
      %v10894 = vlaneseq
      %v10895 = vshrl.u32 %v10894, 7
      %v10896 = vsub.s32 0, %v10895
      %v10897 = vrot.slane %v10892, %v10896
      %v10898 = vlaneseq
      %v10899 = vshrl.u32 %v10898, 7
      %v10900 = vsub.s32 1, %v10899
      %v10901 = vrot.slane %v10892, %v10900
      %vm10904 = vcmask 261120
      %v10906 = vsel %vm10904, %v10883, 0
      %10908 = vmatprep.subr.mxu0 %v10885
      %10909 = vmatpush1.msra.mxu0 %v10884
      %10910 = vmatprep.subr.mxu0 %v10887
      %10911 = vmatpush1.msra.mxu0 %v10886
      %10912 = vmatprep.subr.mxu0 %v10889
      %10913 = vmatpush1.msra.mxu0 %v10888
      %10914 = vmatprep.subr.mxu0 %v10891
      %10915 = vmatpush1.msra.mxu0 %v10890
      %10916 = vmatprep.subr.mxu0 0.0
      %10917 = vmatpush1.msra.mxu0 0.0
      %10918 = vmatprep.subr.mxu0 0.0
      %10919 = vmatpush1.msra.mxu0 0.0
      %10920 = vmatprep.subr.mxu0 0.0
      %10921 = vmatpush1.msra.mxu0 0.0
      %10922 = vmatprep.subr.mxu0 0.0
      %10923 = vmatpush1.msra.mxu0 0.0
      %10924 = vmatprep.subr.mxu0 0.0
      %10925 = vmatpush1.msra.mxu0 0.0
      %10926 = vmatprep.subr.mxu0 0.0
      %10927 = vmatpush1.msra.mxu0 0.0
      %10928 = vmatprep.subr.mxu0 0.0
      %10929 = vmatpush1.msra.mxu0 0.0
      %10930 = vmatprep.subr.mxu0 0.0
      %10931 = vmatpush1.msra.mxu0 0.0
      %10932 = vmatprep.subr.mxu0 0.0
      %10933 = vmatpush1.msra.mxu0 0.0
      %10934 = vmatprep.subr.mxu0 0.0
      %10935 = vmatpush1.msra.mxu0 0.0
      %10936 = vmatprep.subr.mxu0 0.0
      %10937 = vmatpush1.msra.mxu0 0.0
      %10938 = vmatprep.subr.mxu0 0.0
      %10939 = vmatpush1.msra.mxu0 0.0
      %10940 = vmatprep.subr.mxu0 0.0
      %10941 = vmatpush1.msra.mxu0 0.0
      %10942 = vmatprep.subr.mxu0 0.0
      %10943 = vmatpush1.msra.mxu0 0.0
      %10944 = vmatprep.subr.mxu0 0.0
      %10945 = vmatpush1.msra.mxu0 0.0
      %10946 = vmatprep.subr.mxu0 0.0
      %10947 = vmatpush1.msra.mxu0 0.0
      %10948 = vmatprep.subr.mxu0 0.0
      %10949 = vmatpush1.msra.mxu0 0.0
      %10950 = vmatprep.subr.mxu0 0.0
      %10951 = vmatpush1.msra.mxu0 0.0
      %10952 = vmatprep.subr.mxu0 0.0
      %10953 = vmatpush1.msra.mxu0 0.0
      %10954 = vmatprep.subr.mxu0 0.0
      %10955 = vmatpush1.msra.mxu0 0.0
      %10956 = vmatprep.subr.mxu0 0.0
      %10957 = vmatpush1.msra.mxu0 0.0
      %10958 = vmatprep.subr.mxu0 0.0
      %10959 = vmatpush1.msra.mxu0 0.0
      %10960 = vmatprep.subr.mxu0 0.0
      %10961 = vmatpush1.msra.mxu0 0.0
      %10962 = vmatprep.subr.mxu0 0.0
      %10963 = vmatpush1.msra.mxu0 0.0
      %10964 = vmatprep.subr.mxu0 0.0
      %10965 = vmatpush1.msra.mxu0 0.0
      %10966 = vmatprep.subr.mxu0 0.0
      %10967 = vmatpush1.msra.mxu0 0.0
      %10968 = vmatprep.subr.mxu0 0.0
      %10969 = vmatpush1.msra.mxu0 0.0
      %10970 = vmatprep.subr.mxu0 0.0
      %10971 = vmatpush1.msra.mxu0 0.0
      %10972 = vmatprep.mubr.f32.mxu0 0.0
      %10973 = vmatmul.mubr.f32.gmra.mrb[0].mxu0 %v10906
      %v10974 = vpop.f32.mrb[0].mxu0
      %v10975 = vadd.f32 %v10897, %v10974
      %v10976 = vpop.f32.mrb[0].mxu0
      %v10977 = vadd.f32 %v10901, %v10976
      %10978 = vdwg.mxu0
      %v10979 = vld [vmem:[%s13] sm:$0xff]
      %v10980 = vld [vmem:[%s13 + $0x8] sm:$0xff]
      %v10981 = vld [vmem:[%s13 + $0x10] sm:$0xff]
      %v10982 = vld [vmem:[%s13 + $0x18] sm:$0xff]
      %v10983 = vld [vmem:[%s13 + $0x20] sm:$0xff]
      %v10984 = vld [vmem:[%s13 + $0x28] sm:$0xff]
      %v10985 = vld [vmem:[%s13 + $0x30] sm:$0xff]
      %v10986 = vld [vmem:[%s13 + $0x38] sm:$0xff]
      %v10987 = vld [vmem:[%s14] sm:$0x3]
      %v10989 = vlaneseq
      %v10990 = vshrl.u32 %v10989, 7
      %v10991 = vsub.s32 0, %v10990
      %v10992 = vrot.slane %v10987, %v10991
      %v10993 = vlaneseq
      %v10994 = vshrl.u32 %v10993, 7
      %v10995 = vsub.s32 1, %v10994
      %v10996 = vrot.slane %v10987, %v10995
      %10999 = vmatprep.subr.mxu0 %v10980
      %11000 = vmatpush1.msra.mxu0 %v10979
      %11001 = vmatprep.subr.mxu0 %v10982
      %11002 = vmatpush1.msra.mxu0 %v10981
      %11003 = vmatprep.subr.mxu0 %v10984
      %11004 = vmatpush1.msra.mxu0 %v10983
      %11005 = vmatprep.subr.mxu0 %v10986
      %11006 = vmatpush1.msra.mxu0 %v10985
      %11007 = vmatprep.subr.mxu0 0.0
      %11008 = vmatpush1.msra.mxu0 0.0
      %11009 = vmatprep.subr.mxu0 0.0
      %11010 = vmatpush1.msra.mxu0 0.0
      %11011 = vmatprep.subr.mxu0 0.0
      %11012 = vmatpush1.msra.mxu0 0.0
      %11013 = vmatprep.subr.mxu0 0.0
      %11014 = vmatpush1.msra.mxu0 0.0
      %11015 = vmatprep.subr.mxu0 0.0
      %11016 = vmatpush1.msra.mxu0 0.0
      %11017 = vmatprep.subr.mxu0 0.0
      %11018 = vmatpush1.msra.mxu0 0.0
      %11019 = vmatprep.subr.mxu0 0.0
      %11020 = vmatpush1.msra.mxu0 0.0
      %11021 = vmatprep.subr.mxu0 0.0
      %11022 = vmatpush1.msra.mxu0 0.0
      %11023 = vmatprep.subr.mxu0 0.0
      %11024 = vmatpush1.msra.mxu0 0.0
      %11025 = vmatprep.subr.mxu0 0.0
      %11026 = vmatpush1.msra.mxu0 0.0
      %11027 = vmatprep.subr.mxu0 0.0
      %11028 = vmatpush1.msra.mxu0 0.0
      %11029 = vmatprep.subr.mxu0 0.0
      %11030 = vmatpush1.msra.mxu0 0.0
      %11031 = vmatprep.subr.mxu0 0.0
      %11032 = vmatpush1.msra.mxu0 0.0
      %11033 = vmatprep.subr.mxu0 0.0
      %11034 = vmatpush1.msra.mxu0 0.0
      %11035 = vmatprep.subr.mxu0 0.0
      %11036 = vmatpush1.msra.mxu0 0.0
      %11037 = vmatprep.subr.mxu0 0.0
      %11038 = vmatpush1.msra.mxu0 0.0
      %11039 = vmatprep.subr.mxu0 0.0
      %11040 = vmatpush1.msra.mxu0 0.0
      %11041 = vmatprep.subr.mxu0 0.0
      %11042 = vmatpush1.msra.mxu0 0.0
      %11043 = vmatprep.subr.mxu0 0.0
      %11044 = vmatpush1.msra.mxu0 0.0
      %11045 = vmatprep.subr.mxu0 0.0
      %11046 = vmatpush1.msra.mxu0 0.0
      %11047 = vmatprep.subr.mxu0 0.0
      %11048 = vmatpush1.msra.mxu0 0.0
      %11049 = vmatprep.subr.mxu0 0.0
      %11050 = vmatpush1.msra.mxu0 0.0
      %11051 = vmatprep.subr.mxu0 0.0
      %11052 = vmatpush1.msra.mxu0 0.0
      %11053 = vmatprep.subr.mxu0 0.0
      %11054 = vmatpush1.msra.mxu0 0.0
      %11055 = vmatprep.subr.mxu0 0.0
      %11056 = vmatpush1.msra.mxu0 0.0
      %11057 = vmatprep.subr.mxu0 0.0
      %11058 = vmatpush1.msra.mxu0 0.0
      %11059 = vmatprep.subr.mxu0 0.0
      %11060 = vmatpush1.msra.mxu0 0.0
      %11061 = vmatprep.subr.mxu0 0.0
      %11062 = vmatpush1.msra.mxu0 0.0
      %11063 = vmatprep.mubr.f32.mxu0 0.0
      %11064 = vmatmul.mubr.f32.gmra.mrb[0].mxu0 %v10906
      %v11065 = vpop.f32.mrb[0].mxu0
      %v11066 = vadd.f32 %v10992, %v11065
      %v11067 = vpop.f32.mrb[0].mxu0
      %v11068 = vadd.f32 %v10996, %v11067
      %11069 = vdwg.mxu0
      %v11070 = vmax.f32 %v10975, %v11066
      %v11071 = vmax.f32 %v10977, %v11068
      %v11072 = vsub.f32 %v10975, %v11070
      %v11073 = vsub.f32 %v10977, %v11071
      %v11074 = vmul.f32 %v11072, 1.442695
      %v11075 = vpow.pop %v11074
      %v11076 = vmul.f32 %v11073, 1.442695
      %v11077 = vpow.pop %v11076
      %v11078 = vsub.f32 %v11066, %v11070
      %v11079 = vsub.f32 %v11068, %v11071
      %v11080 = vmul.f32 %v11078, 1.442695
      %v11081 = vpow.pop %v11080
      %v11082 = vmul.f32 %v11079, 1.442695
      %v11083 = vpow.pop %v11082
      %v11084 = vadd.f32 %v11075, %v11081
      %v11085 = vadd.f32 %v11077, %v11083
      %v11086 = vrcp.pop %v11084
      %v11087 = vmul.f32 1.0, %v11086
      %v11088 = vrcp.pop %v11085
      %v11089 = vmul.f32 1.0, %v11088
      %v11090 = vmul.f32 %v11075, %v11087
      %v11091 = vmul.f32 %v11077, %v11089
      %v11092 = vmul.f32 %v11081, %v11087
      %v11093 = vmul.f32 %v11083, %v11089
      %v11094 = vlaneseq
      %v11095 = vshrl.u32 %v11094, 7
      %v11096 = vsub.s32 0, %v11095
      %v11097 = vrot.slane %v11090, %v11096
      %v11098 = vlaneseq
      %v11099 = vshrl.u32 %v11098, 7
      %v11100 = vsub.s32 0, %v11099
      %v11101 = vrot.slane %v11091, %v11100
      %v11102 = vmul.f32 %v10714, %v11097
      %v11103 = vmul.f32 %v10715, %v11101
      %v11104 = vmul.f32 %v10716, %v11097
      %v11105 = vmul.f32 %v10717, %v11101
      %v11106 = vmul.f32 %v10718, %v11097
      %v11107 = vmul.f32 %v10719, %v11101
      %v11108 = vmul.f32 %v10720, %v11097
      %v11109 = vmul.f32 %v10721, %v11101
      %v11110 = vmul.f32 %v10722, %v11097
      %v11111 = vmul.f32 %v10723, %v11101
      %v11112 = vmul.f32 %v10724, %v11097
      %v11113 = vmul.f32 %v10725, %v11101
      %v11114 = vmul.f32 %v10726, %v11097
      %v11115 = vmul.f32 %v10727, %v11101
      %v11116 = vmul.f32 %v10728, %v11097
      %v11117 = vmul.f32 %v10729, %v11101
      %v11118 = vlaneseq
      %v11119 = vshrl.u32 %v11118, 7
      %v11120 = vsub.s32 0, %v11119
      %v11121 = vrot.slane %v11092, %v11120
      %v11122 = vlaneseq
      %v11123 = vshrl.u32 %v11122, 7
      %v11124 = vsub.s32 0, %v11123
      %v11125 = vrot.slane %v11093, %v11124
      %v11126 = vmul.f32 %v10698, %v11121
      %v11127 = vmul.f32 %v10699, %v11125
      %v11128 = vmul.f32 %v10700, %v11121
      %v11129 = vmul.f32 %v10701, %v11125
      %v11130 = vmul.f32 %v10702, %v11121
      %v11131 = vmul.f32 %v10703, %v11125
      %v11132 = vmul.f32 %v10704, %v11121
      %v11133 = vmul.f32 %v10705, %v11125
      %v11134 = vmul.f32 %v10706, %v11121
      %v11135 = vmul.f32 %v10707, %v11125
      %v11136 = vmul.f32 %v10708, %v11121
      %v11137 = vmul.f32 %v10709, %v11125
      %v11138 = vmul.f32 %v10710, %v11121
      %v11139 = vmul.f32 %v10711, %v11125
      %v11140 = vmul.f32 %v10712, %v11121
      %v11141 = vmul.f32 %v10713, %v11125
      %v11142 = vadd.f32 %v11102, %v11126
      %v11143 = vadd.f32 %v11103, %v11127
      %v11144 = vadd.f32 %v11104, %v11128
      %v11145 = vadd.f32 %v11105, %v11129
      %v11146 = vadd.f32 %v11106, %v11130
      %v11147 = vadd.f32 %v11107, %v11131
      %v11148 = vadd.f32 %v11108, %v11132
      %v11149 = vadd.f32 %v11109, %v11133
      %v11150 = vadd.f32 %v11110, %v11134
      %v11151 = vadd.f32 %v11111, %v11135
      %v11152 = vadd.f32 %v11112, %v11136
      %v11153 = vadd.f32 %v11113, %v11137
      %v11154 = vadd.f32 %v11114, %v11138
      %v11155 = vadd.f32 %v11115, %v11139
      %v11156 = vadd.f32 %v11116, %v11140
      %v11157 = vadd.f32 %v11117, %v11141
      %11158 = vst [vmem:[%s494] sm:$0xff] %v11142
      %11159 = vst [vmem:[%s494 + $0x8] sm:$0xff] %v11143
      %11160 = vst [vmem:[%s494 + $0x10] sm:$0xff] %v11144
      %11161 = vst [vmem:[%s494 + $0x18] sm:$0xff] %v11145
      %11162 = vst [vmem:[%s494 + $0x20] sm:$0xff] %v11146
      %11163 = vst [vmem:[%s494 + $0x28] sm:$0xff] %v11147
      %11164 = vst [vmem:[%s494 + $0x30] sm:$0xff] %v11148
      %11165 = vst [vmem:[%s494 + $0x38] sm:$0xff] %v11149
      %11166 = vst [vmem:[%s494 + $0x40] sm:$0xff] %v11150
      %11167 = vst [vmem:[%s494 + $0x48] sm:$0xff] %v11151
      %11168 = vst [vmem:[%s494 + $0x50] sm:$0xff] %v11152
      %11169 = vst [vmem:[%s494 + $0x58] sm:$0xff] %v11153
      %11170 = vst [vmem:[%s494 + $0x60] sm:$0xff] %v11154
      %11171 = vst [vmem:[%s494 + $0x68] sm:$0xff] %v11155
      %11172 = vst [vmem:[%s494 + $0x70] sm:$0xff] %v11156
      %11173 = vst [vmem:[%s494 + $0x78] sm:$0xff] %v11157
      %p11174 = scmp.lt.s32.totalorder %s26, 1
      %s11175 = scalar_select %p11174, %s26, 1
      %s11176 = smul.addr %s11175, 16
      %s11177 = smul.addr %s11176, 8
      %s11178 = scalar_lea.vmem %s15, %s11177
      // Predicated region
      $region81: #{sk_attention_forward.1} parent=79 // pred_check
        %p11179 = pneg %p364
      $region82: #{sk_attention_forward.1} parent=79 // pred_check_branch
        %11181 = sbr.rel (%p11179) target = $region84
      $region83: #{sk_attention_forward.1} parent=79 // pred_region
        _
      $region84: #{sk_attention_forward.1} parent=79 // pred_fallthru
        _
    $region80: #{sk_attention_forward.1} parent=5 // pred_fallthru
      _
    %p11182 = scmp.le.s32.totalorder 2, %s21
    // Predicated region
    $region85: #{sk_attention_forward.1} parent=5 // pred_check
      %p11183 = pneg %p11182
    $region86: #{sk_attention_forward.1} parent=5 // pred_check_branch
      %11185 = sbr.rel (%p11183) target = $region88
    $region87: #{sk_attention_forward.1} parent=5 // pred_region
      %s11186 = ssub.s32 %s21, 2
      // Predicated region
      $region89: #{sk_attention_forward.1} parent=87 // pred_check
        %p11187 = pneg %p370
      $region90: #{sk_attention_forward.1} parent=87 // pred_check_branch
        %11189 = sbr.rel (%p11187) target = $region92
      $region91: #{sk_attention_forward.1} parent=87 // pred_region
        %p11190 = scmp.lt.s32.totalorder %s27, 1
        %s11191 = scalar_select %p11190, %s27, 1
        %s11192 = smul.addr %s11191, 16
        %s11193 = smul.addr %s11192, 8
        %s11194 = scalar_lea.vmem %s15, %s11193
      $region92: #{sk_attention_forward.1} parent=87 // pred_fallthru
        _
    $region88: #{sk_attention_forward.1} parent=5 // pred_fallthru
      _
  $region6: #{sk_attention_forward.1} parent=0 // loop_footer
    %s25 = sadd.s32 1, %s21
  $region7: #{sk_attention_forward.1} parent=0 // loop_footer_branch
    %20 = sbr.rel target = $region3
  $region8: #{sk_attention_forward.1} parent=0 // loop_exit
    _

</llo_original>
